<compile_context>
chip_gen: v6e
topology: v6e:2x2x1
jax: 0.10.0
libtpu: 0.0.40
codegen_flags: <defaults>
</compile_context>

<pallas_src>
import functools

import jax
import jax.numpy as jnp
from jax.experimental import pallas as pl
from jax.experimental.pallas import tpu as pltpu


def latent_hyper_rnn_kernel(
    # time-major activations (full arrays, resident in VMEM)
    xw_ref, eps_ref,
    # initial recurrent state
    h0_ref, lat0_ref,
    # resident weights
    w_hgru_x_ref, w_hgru_h_ref, w_lfc1_ref, w_lfc2_ref, w_wb_ref,
    w_mgru_x_ref, w_mgru_h_ref, rep_ref, sel_ref,
    # resident biases / BN affine (all (1, dim))
    b_hgru_ref, b_lfc1_ref, b_lfc2_ref, b_wb_ref, b_mgru_ref,
    bn_g_ref, bn_b_ref,
    # outputs (full arrays, resident in VMEM)
    q_ref, h_out_ref, lat_out_ref,
    *, latent_dim, hidden_dim, n_actions, n_rows, num_steps, t_offset,
):
    L, H, A, N = latent_dim, hidden_dim, n_actions, n_rows
    f32 = jnp.float32

    # ---- load weights/biases once; reused by every unrolled step -------------
    w_hgru_x = w_hgru_x_ref[...]
    w_hgru_h = w_hgru_h_ref[...]
    w_lfc1 = w_lfc1_ref[...]
    w_lfc2 = w_lfc2_ref[...]
    w_wb = w_wb_ref[...]
    w_mgru_x = w_mgru_x_ref[...]
    w_mgru_h = w_mgru_h_ref[...]
    rep = rep_ref[...]
    sel = sel_ref[...]
    b_hgru = b_hgru_ref[...]
    b_lfc1 = b_lfc1_ref[...]
    b_lfc2 = b_lfc2_ref[...]
    b_wb = b_wb_ref[...]
    b_mgru = b_mgru_ref[...]
    bn_g = bn_g_ref[...]
    bn_b = bn_b_ref[...]

    inv_n = jnp.full((1, N), 1.0 / N, f32)   # MXU row for batch statistics

    def step(t, carry):
        h_prev, lat_carry = carry

        xw = xw_ref[t]                       # (N, 2L + H): [embed_fc | relu(fc1)]
        eps = eps_ref[t]                     # (N, L)
        obs_post = xw[:, :2 * L]
        x1 = xw[:, 2 * L:]

        # PyTorch: if t == 0: self.latent = obs_post.detach()
        if t_offset == 0:
            lat_prev = jnp.where(t == 0, obs_post, lat_carry)
        else:
            lat_prev = lat_carry

        # ---- hyper_bn: training-mode batch stats via MXU ----------------------
        mean = jnp.dot(inv_n, lat_prev, preferred_element_type=f32)    # (1, 2L)
        d = lat_prev - mean
        var = jnp.dot(inv_n, d * d, preferred_element_type=f32)        # (1, 2L)
        bn_h = d * jax.lax.rsqrt(var + 1e-5) * bn_g + bn_b             # (N, 2L)

        # ---- hyper_rnn: GRUCell(2L -> 2L) via split x/h block matmuls ---------
        hd = 2 * L
        g = (jnp.dot(obs_post, w_hgru_x, preferred_element_type=f32)
             + jnp.dot(bn_h, w_hgru_h, preferred_element_type=f32)
             + b_hgru)                                                  # (N, 8L)
        r = jax.nn.sigmoid(g[:, :hd])
        z = jax.nn.sigmoid(g[:, hd:2 * hd])
        n = jnp.tanh(g[:, 2 * hd:3 * hd] + r * g[:, 3 * hd:4 * hd])
        lat_h = (1.0 - z) * n + z * bn_h                                # (N, 2L)

        # ---- latent[:, L:] = exp(latent[:, L:]) (lane mask, no concat) --------
        e_all = jnp.exp(lat_h)
        lane = jax.lax.broadcasted_iota(jnp.int32, lat_h.shape, 1)
        latent_new = jnp.where(lane >= L, e_all, lat_h)                 # (N, 2L)

        # ---- reparameterized sample of Normal(mu, sigma) -----------------------
        mu = lat_h[:, :L]
        sigma = e_all[:, L:2 * L]
        z_samp = mu + sigma * eps                                       # (N, L)

        # ---- latent_fc1 (relu) -> latent_fc2 -----------------------------------
        l1 = jnp.maximum(
            jnp.dot(z_samp, w_lfc1, preferred_element_type=f32) + b_lfc1, 0.0)
        l2 = jnp.dot(l1, w_lfc2, preferred_element_type=f32) + b_lfc2   # (N, 4L)

        # ---- hyper head: action-major fc2 weight fused with fc2 bias -----------
        wb = jnp.dot(l2, w_wb, preferred_element_type=f32) + b_wb       # (N, HA+A)
        w_flat = wb[:, :H * A]                                          # (N, 128)
        fc2_b = wb[:, H * A:]                                           # (N, A)

        # ---- main rnn: GRUCell(H -> H) via split x/h block matmuls -------------
        g2 = (jnp.dot(x1, w_mgru_x, preferred_element_type=f32)
              + jnp.dot(h_prev, w_mgru_h, preferred_element_type=f32)
              + b_mgru)                                                 # (N, 4H)
        r2 = jax.nn.sigmoid(g2[:, :H])
        z2 = jax.nn.sigmoid(g2[:, H:2 * H])
        n2 = jnp.tanh(g2[:, 2 * H:3 * H] + r2 * g2[:, 3 * H:4 * H])
        h_new = (1.0 - z2) * n2 + z2 * h_prev                           # (N, H)

        # ---- q = bmm(h, fc2_w) + fc2_b: MXU replication + selector matmul ------
        h_rep = jnp.dot(h_new, rep, preferred_element_type=f32)         # (N, A*H)
        q = (jnp.dot(w_flat * h_rep, sel, preferred_element_type=f32)
             + fc2_b)                                                   # (N, A)

        q_ref[t] = q
        h_out_ref[t] = h_new
        lat_out_ref[t] = latent_new
        return (h_new, latent_new)

    jax.lax.fori_loop(0, num_steps, step, (h0_ref[...], lat0_ref[...]),
                      unroll=True)


def _split_gru_block(w_ih, w_hh, b_ih, b_hh, in_dim, hid):
    """Block weights so x @ Wx + h @ Wh + b yields [r_pre | z_pre | i_n | h_n]."""
    w_x = jnp.concatenate(
        [w_ih[:, :2 * hid], w_ih[:, 2 * hid:], jnp.zeros((in_dim, hid), jnp.float32)],
        axis=1)                                   # (in, 4*hid)
    w_h = jnp.concatenate(
        [w_hh[:, :2 * hid], jnp.zeros((hid, hid), jnp.float32), w_hh[:, 2 * hid:]],
        axis=1)                                   # (hid, 4*hid)
    b = jnp.concatenate(
        [b_ih[:2 * hid] + b_hh[:2 * hid], b_ih[2 * hid:], b_hh[2 * hid:]])
    return w_x, w_h, b


def latent_hyper_rnn_forward(params, inputs_all, hidden_state, latent_state,
                             eps_all, *, latent_dim, hidden_dim, n_actions,
                             t_offset=0):
    """Run T timesteps of LatentHyperRNNAgent.forward in ONE pallas_call.

    inputs_all: (T, N, input_shape), eps_all: (T, N, L), hidden_state: (N, H),
    latent_state: (N, 2L) (only used when t_offset != 0).
    Returns q: (T, N, A), h: (T, N, H), latent: (T, N, 2L).
    """
    T, N, input_shape = inputs_all.shape
    L, H, A = latent_dim, hidden_dim, n_actions
    hp = jax.lax.Precision.HIGHEST

    # --- hoist the non-recurrent layers (embed_fc, fc1) over time -------------
    w_ef1 = jnp.concatenate([params["embed_w"], params["fc1_w"]], axis=1)
    b_ef1 = jnp.concatenate([params["embed_b"], params["fc1_b"]])
    xw = jnp.dot(inputs_all.reshape(T * N, input_shape), w_ef1, precision=hp) + b_ef1
    xw = jnp.concatenate([xw[:, :2 * L], jax.nn.relu(xw[:, 2 * L:])], axis=1)
    xw_all = xw.reshape(T, N, 2 * L + H)

    # --- split GRU block weights ----------------------------------------------
    w_hgru_x, w_hgru_h, b_hgru = _split_gru_block(
        params["hyp_wih"], params["hyp_whh"], params["hyp_bih"], params["hyp_bhh"],
        2 * L, 2 * L)
    w_mgru_x, w_mgru_h, b_mgru = _split_gru_block(
        params["rnn_wih"], params["rnn_whh"], params["rnn_bih"], params["rnn_bhh"],
        H, H)

    # --- fc2_w_nn rearranged action-major, fused with fc2_b_nn -----------------
    w_w = params["wnn_w"].reshape(4 * L, H, A).transpose(0, 2, 1).reshape(4 * L, A * H)
    b_w = params["wnn_b"].reshape(H, A).T.reshape(A * H)
    w_wb = jnp.concatenate([w_w, params["bnn_w"]], axis=1)           # (4L, A*H+A)
    b_wb = jnp.concatenate([b_w, params["bnn_b"]])

    # --- MXU replication matrix and block selector for the per-sample bmm ------
    rep = jnp.tile(jnp.eye(H, dtype=jnp.float32), (1, A))            # (H, A*H)
    sel = (jnp.arange(A * H)[:, None] // H
           == jnp.arange(A)[None, :]).astype(jnp.float32)            # (A*H, A)

    kernel = functools.partial(
        latent_hyper_rnn_kernel, latent_dim=L, hidden_dim=H, n_actions=A,
        n_rows=N, num_steps=T, t_offset=t_offset)

    vmem = pl.BlockSpec(memory_space=pltpu.MemorySpace.VMEM)
    n_inputs = 20

    q_all, h_all, lat_all = pl.pallas_call(
        kernel,
        out_shape=(jax.ShapeDtypeStruct((T, N, A), jnp.float32),
                   jax.ShapeDtypeStruct((T, N, H), jnp.float32),
                   jax.ShapeDtypeStruct((T, N, 2 * L), jnp.float32)),
        in_specs=[vmem] * n_inputs,
        out_specs=(vmem, vmem, vmem),
    )(xw_all, eps_all, hidden_state, latent_state,
      w_hgru_x, w_hgru_h, params["lfc1_w"], params["lfc2_w"], w_wb,
      w_mgru_x, w_mgru_h, rep, sel,
      b_hgru.reshape(1, -1), params["lfc1_b"].reshape(1, -1),
      params["lfc2_b"].reshape(1, -1), b_wb.reshape(1, -1),
      b_mgru.reshape(1, -1), params["bn_gamma"].reshape(1, -1),
      params["bn_beta"].reshape(1, -1))

    return q_all, h_all, lat_all


def init_params(key, input_shape, latent_dim, hidden_dim, n_actions):
    """Deterministic synthetic parameters, PyTorch-default-like uniform init."""
    L, H, A = latent_dim, hidden_dim, n_actions

    def lin(k, fan_in, fan_out):
        kw, kb = jax.random.split(k)
        bound = 1.0 / jnp.sqrt(fan_in)
        w = jax.random.uniform(kw, (fan_in, fan_out), jnp.float32, -bound, bound)
        b = jax.random.uniform(kb, (fan_out,), jnp.float32, -bound, bound)
        return w, b

    ks = jax.random.split(key, 12)
    p = {}
    p["embed_w"], p["embed_b"] = lin(ks[0], input_shape, 2 * L)
    p["hyp_wih"], p["hyp_bih"] = lin(ks[1], 2 * L, 6 * L)
    p["hyp_whh"], p["hyp_bhh"] = lin(ks[2], 2 * L, 6 * L)
    p["bn_gamma"] = jnp.ones((2 * L,), jnp.float32)
    p["bn_beta"] = jnp.zeros((2 * L,), jnp.float32)
    p["lfc1_w"], p["lfc1_b"] = lin(ks[3], L, 4 * L)
    p["lfc2_w"], p["lfc2_b"] = lin(ks[4], 4 * L, 4 * L)
    p["wnn_w"], p["wnn_b"] = lin(ks[5], 4 * L, H * A)
    p["bnn_w"], p["bnn_b"] = lin(ks[6], 4 * L, A)
    p["fc1_w"], p["fc1_b"] = lin(ks[7], input_shape, H)
    p["rnn_wih"], p["rnn_bih"] = lin(ks[8], H, 3 * H)
    p["rnn_whh"], p["rnn_bhh"] = lin(ks[9], H, 3 * H)
    return p


def reference_forward(params, inputs_all, h0, latent0, eps_all, *,
                      latent_dim, hidden_dim, n_actions, t_offset=0):
    """Pure-JAX transcription of the PyTorch forward, stepped over T."""
    L, H, A = latent_dim, hidden_dim, n_actions
    T, N, _ = inputs_all.shape
    hp = jax.lax.Precision.HIGHEST

    def gru(x, h, w_ih, w_hh, b_ih, b_hh, hid):
        gi = jnp.dot(x, w_ih, precision=hp) + b_ih
        gh = jnp.dot(h, w_hh, precision=hp) + b_hh
        r = jax.nn.sigmoid(gi[:, :hid] + gh[:, :hid])
        z = jax.nn.sigmoid(gi[:, hid:2 * hid] + gh[:, hid:2 * hid])
        n = jnp.tanh(gi[:, 2 * hid:] + r * gh[:, 2 * hid:])
        return (1.0 - z) * n + z * h

    h, latent = h0, latent0
    qs, hs, lats = [], [], []
    for ti in range(T):
        x_in, eps = inputs_all[ti], eps_all[ti]
        obs_post = jnp.dot(x_in, params["embed_w"], precision=hp) + params["embed_b"]
        if ti + t_offset == 0:
            latent = obs_post
        mean = jnp.mean(latent, axis=0, keepdims=True)
        var = jnp.mean((latent - mean) ** 2, axis=0, keepdims=True)
        bn = ((latent - mean) * jax.lax.rsqrt(var + 1e-5)
              * params["bn_gamma"] + params["bn_beta"])
        lat_h = gru(obs_post, bn, params["hyp_wih"], params["hyp_whh"],
                    params["hyp_bih"], params["hyp_bhh"], 2 * L)
        latent = jnp.concatenate([lat_h[:, :L], jnp.exp(lat_h[:, L:])], axis=1)
        z = latent[:, :L] + latent[:, L:] * eps
        l1 = jax.nn.relu(jnp.dot(z, params["lfc1_w"], precision=hp) + params["lfc1_b"])
        l2 = jnp.dot(l1, params["lfc2_w"], precision=hp) + params["lfc2_b"]
        fc2_w = (jnp.dot(l2, params["wnn_w"], precision=hp)
                 + params["wnn_b"]).reshape(N, H, A)
        fc2_b = jnp.dot(l2, params["bnn_w"], precision=hp) + params["bnn_b"]
        x1 = jax.nn.relu(jnp.dot(x_in, params["fc1_w"], precision=hp) + params["fc1_b"])
        h = gru(x1, h, params["rnn_wih"], params["rnn_whh"],
                params["rnn_bih"], params["rnn_bhh"], H)
        q = jnp.einsum("nh,nha->na", h, fc2_w, precision=hp) + fc2_b
        qs.append(q); hs.append(h); lats.append(latent)
    return jnp.stack(qs), jnp.stack(hs), jnp.stack(lats)


if __name__ == "__main__":
    # args: n_agents=4, batch_size_run=2, input_shape=16, latent_dim=8,
    #       rnn_hidden_dim=32, n_actions=4, T=8 timesteps
    n_agents, bs_run = 4, 2
    N = n_agents * bs_run
    input_shape = 16
    latent_dim = 8
    hidden_dim = 32
    n_actions = 4
    T = 8

    key = jax.random.PRNGKey(0)
    k_param, k_in, k_h, k_lat, k_eps = jax.random.split(key, 5)

    params = init_params(k_param, input_shape, latent_dim, hidden_dim, n_actions)
    inputs_all = jax.random.normal(k_in, (T, N, input_shape), jnp.float32)
    hidden_state = jax.random.normal(k_h, (N, hidden_dim), jnp.float32)
    # __init__: self.latent = th.rand(bs * n_agents, latent_dim * 2)
    latent_state = jax.random.uniform(k_lat, (N, 2 * latent_dim), jnp.float32)
    # reparameterization noise for Normal(mu, sigma).rsample(), per step
    eps_all = jax.random.normal(k_eps, (T, N, latent_dim), jnp.float32)

    q, h, latent_new = latent_hyper_rnn_forward(
        params, inputs_all, hidden_state, latent_state, eps_all, t_offset=0,
        latent_dim=latent_dim, hidden_dim=hidden_dim, n_actions=n_actions)
    jax.block_until_ready((q, h, latent_new))

    assert q.shape == (T, N, n_actions)
    assert h.shape == (T, N, hidden_dim)
    assert latent_new.shape == (T, N, 2 * latent_dim)
    assert bool(jnp.all(jnp.isfinite(q)))

    q_r, h_r, lat_r = reference_forward(
        params, inputs_all, hidden_state, latent_state, eps_all, t_offset=0,
        latent_dim=latent_dim, hidden_dim=hidden_dim, n_actions=n_actions)
    assert bool(jnp.allclose(q, q_r, rtol=5e-3, atol=5e-3))
    assert bool(jnp.allclose(h, h_r, rtol=5e-3, atol=5e-3))
    assert bool(jnp.allclose(latent_new, lat_r, rtol=5e-3, atol=5e-3))

    print("KERNEL_OK")
</pallas_src>

<mosaic_0001>
module attributes {stable_mosaic.version = 11 : i64} {
  func.func @latent_hyper_rnn_kernel(%arg0: memref<8x8x48xf32, #tpu.memory_space<vmem>>, %arg1: memref<8x8x8xf32, #tpu.memory_space<vmem>>, %arg2: memref<8x32xf32, #tpu.memory_space<vmem>>, %arg3: memref<8x16xf32, #tpu.memory_space<vmem>>, %arg4: memref<16x64xf32, #tpu.memory_space<vmem>>, %arg5: memref<16x64xf32, #tpu.memory_space<vmem>>, %arg6: memref<8x32xf32, #tpu.memory_space<vmem>>, %arg7: memref<32x32xf32, #tpu.memory_space<vmem>>, %arg8: memref<32x132xf32, #tpu.memory_space<vmem>>, %arg9: memref<32x128xf32, #tpu.memory_space<vmem>>, %arg10: memref<32x128xf32, #tpu.memory_space<vmem>>, %arg11: memref<32x128xf32, #tpu.memory_space<vmem>>, %arg12: memref<128x4xf32, #tpu.memory_space<vmem>>, %arg13: memref<1x64xf32, #tpu.memory_space<vmem>>, %arg14: memref<1x32xf32, #tpu.memory_space<vmem>>, %arg15: memref<1x32xf32, #tpu.memory_space<vmem>>, %arg16: memref<1x132xf32, #tpu.memory_space<vmem>>, %arg17: memref<1x128xf32, #tpu.memory_space<vmem>>, %arg18: memref<1x16xf32, #tpu.memory_space<vmem>>, %arg19: memref<1x16xf32, #tpu.memory_space<vmem>>, %arg20: memref<8x8x4xf32, #tpu.memory_space<vmem>>, %arg21: memref<8x8x32xf32, #tpu.memory_space<vmem>>, %arg22: memref<8x8x16xf32, #tpu.memory_space<vmem>>) attributes {dimension_semantics = [], scalar_prefetch = 0 : i64, scratch_operands = 0 : i64, tpu.core_type = #tpu.core_type<tc>} {
    %c0 = arith.constant 0 : index
    %c0_0 = arith.constant 0 : index
    %0 = vector.load %arg4[%c0, %c0_0] : memref<16x64xf32, #tpu.memory_space<vmem>>, vector<16x64xf32>
    %c0_1 = arith.constant 0 : index
    %c0_2 = arith.constant 0 : index
    %1 = vector.load %arg5[%c0_1, %c0_2] : memref<16x64xf32, #tpu.memory_space<vmem>>, vector<16x64xf32>
    %c0_3 = arith.constant 0 : index
    %c0_4 = arith.constant 0 : index
    %2 = vector.load %arg6[%c0_3, %c0_4] : memref<8x32xf32, #tpu.memory_space<vmem>>, vector<8x32xf32>
    %c0_5 = arith.constant 0 : index
    %c0_6 = arith.constant 0 : index
    %3 = vector.load %arg7[%c0_5, %c0_6] : memref<32x32xf32, #tpu.memory_space<vmem>>, vector<32x32xf32>
    %c0_7 = arith.constant 0 : index
    %c0_8 = arith.constant 0 : index
    %4 = vector.load %arg8[%c0_7, %c0_8] : memref<32x132xf32, #tpu.memory_space<vmem>>, vector<32x132xf32>
    %c0_9 = arith.constant 0 : index
    %c0_10 = arith.constant 0 : index
    %5 = vector.load %arg9[%c0_9, %c0_10] : memref<32x128xf32, #tpu.memory_space<vmem>>, vector<32x128xf32>
    %c0_11 = arith.constant 0 : index
    %c0_12 = arith.constant 0 : index
    %6 = vector.load %arg10[%c0_11, %c0_12] : memref<32x128xf32, #tpu.memory_space<vmem>>, vector<32x128xf32>
    %c0_13 = arith.constant 0 : index
    %c0_14 = arith.constant 0 : index
    %7 = vector.load %arg11[%c0_13, %c0_14] : memref<32x128xf32, #tpu.memory_space<vmem>>, vector<32x128xf32>
    %c0_15 = arith.constant 0 : index
    %c0_16 = arith.constant 0 : index
    %8 = vector.load %arg12[%c0_15, %c0_16] : memref<128x4xf32, #tpu.memory_space<vmem>>, vector<128x4xf32>
    %c0_17 = arith.constant 0 : index
    %c0_18 = arith.constant 0 : index
    %9 = vector.load %arg13[%c0_17, %c0_18] : memref<1x64xf32, #tpu.memory_space<vmem>>, vector<1x64xf32>
    %c0_19 = arith.constant 0 : index
    %c0_20 = arith.constant 0 : index
    %10 = vector.load %arg14[%c0_19, %c0_20] : memref<1x32xf32, #tpu.memory_space<vmem>>, vector<1x32xf32>
    %c0_21 = arith.constant 0 : index
    %c0_22 = arith.constant 0 : index
    %11 = vector.load %arg15[%c0_21, %c0_22] : memref<1x32xf32, #tpu.memory_space<vmem>>, vector<1x32xf32>
    %c0_23 = arith.constant 0 : index
    %c0_24 = arith.constant 0 : index
    %12 = vector.load %arg16[%c0_23, %c0_24] : memref<1x132xf32, #tpu.memory_space<vmem>>, vector<1x132xf32>
    %c0_25 = arith.constant 0 : index
    %c0_26 = arith.constant 0 : index
    %13 = vector.load %arg17[%c0_25, %c0_26] : memref<1x128xf32, #tpu.memory_space<vmem>>, vector<1x128xf32>
    %c0_27 = arith.constant 0 : index
    %c0_28 = arith.constant 0 : index
    %14 = vector.load %arg18[%c0_27, %c0_28] : memref<1x16xf32, #tpu.memory_space<vmem>>, vector<1x16xf32>
    %c0_29 = arith.constant 0 : index
    %c0_30 = arith.constant 0 : index
    %15 = vector.load %arg19[%c0_29, %c0_30] : memref<1x16xf32, #tpu.memory_space<vmem>>, vector<1x16xf32>
    %cst = arith.constant 1.250000e-01 : f32
    %16 = vector.broadcast %cst : f32 to vector<1x8xf32>
    %c0_31 = arith.constant 0 : index
    %c0_32 = arith.constant 0 : index
    %17 = vector.load %arg2[%c0_31, %c0_32] : memref<8x32xf32, #tpu.memory_space<vmem>>, vector<8x32xf32>
    %c0_33 = arith.constant 0 : index
    %c0_34 = arith.constant 0 : index
    %18 = vector.load %arg3[%c0_33, %c0_34] : memref<8x16xf32, #tpu.memory_space<vmem>>, vector<8x16xf32>
    %c0_i32 = arith.constant 0 : i32
    %19 = arith.index_cast %c0_i32 : i32 to index
    %c0_35 = arith.constant 0 : index
    %c0_36 = arith.constant 0 : index
    %20 = vector.load %arg0[%19, %c0_35, %c0_36] : memref<8x8x48xf32, #tpu.memory_space<vmem>>, vector<1x8x48xf32>
    %21 = vector.shape_cast %20 : vector<1x8x48xf32> to vector<8x48xf32>
    %22 = arith.index_cast %c0_i32 : i32 to index
    %c0_37 = arith.constant 0 : index
    %c0_38 = arith.constant 0 : index
    %23 = vector.load %arg1[%22, %c0_37, %c0_38] : memref<8x8x8xf32, #tpu.memory_space<vmem>>, vector<1x8x8xf32>
    %24 = vector.shape_cast %23 : vector<1x8x8xf32> to vector<8x8xf32>
    %25 = vector.extract_strided_slice %21 {offsets = [0, 0], sizes = [8, 16], strides = [1, 1]} : vector<8x48xf32> to vector<8x16xf32>
    %26 = vector.extract_strided_slice %21 {offsets = [0, 16], sizes = [8, 32], strides = [1, 1]} : vector<8x48xf32> to vector<8x32xf32>
    %c0_i32_39 = arith.constant 0 : i32
    %27 = arith.cmpi eq, %c0_i32, %c0_i32_39 : i32
    %28 = arith.select %27, %25, %18 : vector<8x16xf32>
    %cst_40 = arith.constant dense<0.000000e+00> : vector<1x16xf32>
    %29 = tpu.matmul %16, %28, %cst_40 {dimension_numbers = #tpu.dot_dimension_numbers<[1], [0], [0], [1], [0, 0, 1, 1], [], []>} : vector<1x8xf32>, vector<8x16xf32>, vector<1x16xf32> -> vector<1x16xf32>
    %30 = vector.broadcast %29 : vector<1x16xf32> to vector<8x16xf32>
    %31 = arith.subf %28, %30 : vector<8x16xf32>
    %32 = arith.mulf %31, %31 : vector<8x16xf32>
    %cst_41 = arith.constant dense<0.000000e+00> : vector<1x16xf32>
    %33 = tpu.matmul %16, %32, %cst_41 {dimension_numbers = #tpu.dot_dimension_numbers<[1], [0], [0], [1], [0, 0, 1, 1], [], []>} : vector<1x8xf32>, vector<8x16xf32>, vector<1x16xf32> -> vector<1x16xf32>
    %cst_42 = arith.constant 9.99999974E-6 : f32
    %34 = vector.broadcast %cst_42 : f32 to vector<1x16xf32>
    %35 = arith.addf %33, %34 : vector<1x16xf32>
    %36 = math.rsqrt %35 : vector<1x16xf32>
    %37 = vector.broadcast %36 : vector<1x16xf32> to vector<8x16xf32>
    %38 = arith.mulf %31, %37 : vector<8x16xf32>
    %39 = vector.broadcast %14 : vector<1x16xf32> to vector<8x16xf32>
    %40 = arith.mulf %38, %39 : vector<8x16xf32>
    %41 = vector.broadcast %15 : vector<1x16xf32> to vector<8x16xf32>
    %42 = arith.addf %40, %41 : vector<8x16xf32>
    %cst_43 = arith.constant dense<0.000000e+00> : vector<8x64xf32>
    %43 = tpu.matmul %25, %0, %cst_43 {dimension_numbers = #tpu.dot_dimension_numbers<[1], [0], [0], [1], [0, 0, 1, 1], [], []>} : vector<8x16xf32>, vector<16x64xf32>, vector<8x64xf32> -> vector<8x64xf32>
    %cst_44 = arith.constant dense<0.000000e+00> : vector<8x64xf32>
    %44 = tpu.matmul %42, %1, %cst_44 {dimension_numbers = #tpu.dot_dimension_numbers<[1], [0], [0], [1], [0, 0, 1, 1], [], []>} : vector<8x16xf32>, vector<16x64xf32>, vector<8x64xf32> -> vector<8x64xf32>
    %45 = arith.addf %43, %44 : vector<8x64xf32>
    %46 = vector.broadcast %9 : vector<1x64xf32> to vector<8x64xf32>
    %47 = arith.addf %45, %46 : vector<8x64xf32>
    %48 = vector.extract_strided_slice %47 {offsets = [0, 0], sizes = [8, 16], strides = [1, 1]} : vector<8x64xf32> to vector<8x16xf32>
    %49 = arith.negf %48 : vector<8x16xf32>
    %50 = math.exp %49 : vector<8x16xf32>
    %cst_45 = arith.constant 1.000000e+00 : f32
    %51 = vector.broadcast %cst_45 : f32 to vector<8x16xf32>
    %52 = arith.addf %51, %50 : vector<8x16xf32>
    %53 = arith.divf %51, %52 : vector<8x16xf32>
    %54 = vector.extract_strided_slice %47 {offsets = [0, 16], sizes = [8, 16], strides = [1, 1]} : vector<8x64xf32> to vector<8x16xf32>
    %55 = arith.negf %54 : vector<8x16xf32>
    %56 = math.exp %55 : vector<8x16xf32>
    %cst_46 = arith.constant 1.000000e+00 : f32
    %57 = vector.broadcast %cst_46 : f32 to vector<8x16xf32>
    %58 = arith.addf %57, %56 : vector<8x16xf32>
    %59 = arith.divf %57, %58 : vector<8x16xf32>
    %60 = vector.extract_strided_slice %47 {offsets = [0, 32], sizes = [8, 16], strides = [1, 1]} : vector<8x64xf32> to vector<8x16xf32>
    %61 = vector.extract_strided_slice %47 {offsets = [0, 48], sizes = [8, 16], strides = [1, 1]} : vector<8x64xf32> to vector<8x16xf32>
    %62 = arith.mulf %53, %61 : vector<8x16xf32>
    %63 = arith.addf %60, %62 : vector<8x16xf32>
    %64 = math.tanh %63 : vector<8x16xf32>
    %cst_47 = arith.constant 1.000000e+00 : f32
    %65 = vector.broadcast %cst_47 : f32 to vector<8x16xf32>
    %66 = arith.subf %65, %59 : vector<8x16xf32>
    %67 = arith.mulf %66, %64 : vector<8x16xf32>
    %68 = arith.mulf %59, %42 : vector<8x16xf32>
    %69 = arith.addf %67, %68 : vector<8x16xf32>
    %70 = math.exp %69 : vector<8x16xf32>
    %71 = tpu.iota {dimensions = array<i32: 1>} : vector<8x16xi32>
    %c8_i32 = arith.constant 8 : i32
    %72 = vector.broadcast %c8_i32 : i32 to vector<8x16xi32>
    %73 = arith.cmpi sge, %71, %72 : vector<8x16xi32>
    %74 = arith.select %73, %70, %69 : vector<8x16xi1>, vector<8x16xf32>
    %75 = vector.extract_strided_slice %69 {offsets = [0, 0], sizes = [8, 8], strides = [1, 1]} : vector<8x16xf32> to vector<8x8xf32>
    %76 = vector.extract_strided_slice %70 {offsets = [0, 8], sizes = [8, 8], strides = [1, 1]} : vector<8x16xf32> to vector<8x8xf32>
    %77 = arith.mulf %76, %24 : vector<8x8xf32>
    %78 = arith.addf %75, %77 : vector<8x8xf32>
    %cst_48 = arith.constant dense<0.000000e+00> : vector<8x32xf32>
    %79 = tpu.matmul %78, %2, %cst_48 {dimension_numbers = #tpu.dot_dimension_numbers<[1], [0], [0], [1], [0, 0, 1, 1], [], []>} : vector<8x8xf32>, vector<8x32xf32>, vector<8x32xf32> -> vector<8x32xf32>
    %80 = vector.broadcast %10 : vector<1x32xf32> to vector<8x32xf32>
    %81 = arith.addf %79, %80 : vector<8x32xf32>
    %cst_49 = arith.constant 0.000000e+00 : f32
    %82 = vector.broadcast %cst_49 : f32 to vector<8x32xf32>
    %83 = arith.maximumf %81, %82 : vector<8x32xf32>
    %cst_50 = arith.constant dense<0.000000e+00> : vector<8x32xf32>
    %84 = tpu.matmul %83, %3, %cst_50 {dimension_numbers = #tpu.dot_dimension_numbers<[1], [0], [0], [1], [0, 0, 1, 1], [], []>} : vector<8x32xf32>, vector<32x32xf32>, vector<8x32xf32> -> vector<8x32xf32>
    %85 = vector.broadcast %11 : vector<1x32xf32> to vector<8x32xf32>
    %86 = arith.addf %84, %85 : vector<8x32xf32>
    %cst_51 = arith.constant dense<0.000000e+00> : vector<8x132xf32>
    %87 = tpu.matmul %86, %4, %cst_51 {dimension_numbers = #tpu.dot_dimension_numbers<[1], [0], [0], [1], [0, 0, 1, 1], [], []>} : vector<8x32xf32>, vector<32x132xf32>, vector<8x132xf32> -> vector<8x132xf32>
    %88 = vector.broadcast %12 : vector<1x132xf32> to vector<8x132xf32>
    %89 = arith.addf %87, %88 : vector<8x132xf32>
    %90 = vector.extract_strided_slice %89 {offsets = [0, 0], sizes = [8, 128], strides = [1, 1]} : vector<8x132xf32> to vector<8x128xf32>
    %91 = vector.extract_strided_slice %89 {offsets = [0, 128], sizes = [8, 4], strides = [1, 1]} : vector<8x132xf32> to vector<8x4xf32>
    %cst_52 = arith.constant dense<0.000000e+00> : vector<8x128xf32>
    %92 = tpu.matmul %26, %5, %cst_52 {dimension_numbers = #tpu.dot_dimension_numbers<[1], [0], [0], [1], [0, 0, 1, 1], [], []>} : vector<8x32xf32>, vector<32x128xf32>, vector<8x128xf32> -> vector<8x128xf32>
    %cst_53 = arith.constant dense<0.000000e+00> : vector<8x128xf32>
    %93 = tpu.matmul %17, %6, %cst_53 {dimension_numbers = #tpu.dot_dimension_numbers<[1], [0], [0], [1], [0, 0, 1, 1], [], []>} : vector<8x32xf32>, vector<32x128xf32>, vector<8x128xf32> -> vector<8x128xf32>
    %94 = arith.addf %92, %93 : vector<8x128xf32>
    %95 = vector.broadcast %13 : vector<1x128xf32> to vector<8x128xf32>
    %96 = arith.addf %94, %95 : vector<8x128xf32>
    %97 = vector.extract_strided_slice %96 {offsets = [0, 0], sizes = [8, 32], strides = [1, 1]} : vector<8x128xf32> to vector<8x32xf32>
    %98 = arith.negf %97 : vector<8x32xf32>
    %99 = math.exp %98 : vector<8x32xf32>
    %cst_54 = arith.constant 1.000000e+00 : f32
    %100 = vector.broadcast %cst_54 : f32 to vector<8x32xf32>
    %101 = arith.addf %100, %99 : vector<8x32xf32>
    %102 = arith.divf %100, %101 : vector<8x32xf32>
    %103 = vector.extract_strided_slice %96 {offsets = [0, 32], sizes = [8, 32], strides = [1, 1]} : vector<8x128xf32> to vector<8x32xf32>
    %104 = arith.negf %103 : vector<8x32xf32>
    %105 = math.exp %104 : vector<8x32xf32>
    %cst_55 = arith.constant 1.000000e+00 : f32
    %106 = vector.broadcast %cst_55 : f32 to vector<8x32xf32>
    %107 = arith.addf %106, %105 : vector<8x32xf32>
    %108 = arith.divf %106, %107 : vector<8x32xf32>
    %109 = vector.extract_strided_slice %96 {offsets = [0, 64], sizes = [8, 32], strides = [1, 1]} : vector<8x128xf32> to vector<8x32xf32>
    %110 = vector.extract_strided_slice %96 {offsets = [0, 96], sizes = [8, 32], strides = [1, 1]} : vector<8x128xf32> to vector<8x32xf32>
    %111 = arith.mulf %102, %110 : vector<8x32xf32>
    %112 = arith.addf %109, %111 : vector<8x32xf32>
    %113 = math.tanh %112 : vector<8x32xf32>
    %cst_56 = arith.constant 1.000000e+00 : f32
    %114 = vector.broadcast %cst_56 : f32 to vector<8x32xf32>
    %115 = arith.subf %114, %108 : vector<8x32xf32>
    %116 = arith.mulf %115, %113 : vector<8x32xf32>
    %117 = arith.mulf %108, %17 : vector<8x32xf32>
    %118 = arith.addf %116, %117 : vector<8x32xf32>
    %cst_57 = arith.constant dense<0.000000e+00> : vector<8x128xf32>
    %119 = tpu.matmul %118, %7, %cst_57 {dimension_numbers = #tpu.dot_dimension_numbers<[1], [0], [0], [1], [0, 0, 1, 1], [], []>} : vector<8x32xf32>, vector<32x128xf32>, vector<8x128xf32> -> vector<8x128xf32>
    %120 = arith.mulf %90, %119 : vector<8x128xf32>
    %cst_58 = arith.constant dense<0.000000e+00> : vector<8x4xf32>
    %121 = tpu.matmul %120, %8, %cst_58 {dimension_numbers = #tpu.dot_dimension_numbers<[1], [0], [0], [1], [0, 0, 1, 1], [], []>} : vector<8x128xf32>, vector<128x4xf32>, vector<8x4xf32> -> vector<8x4xf32>
    %122 = arith.addf %121, %91 : vector<8x4xf32>
    %123 = arith.index_cast %c0_i32 : i32 to index
    %c0_59 = arith.constant 0 : index
    %c0_60 = arith.constant 0 : index
    %124 = vector.load %arg20[%123, %c0_59, %c0_60] : memref<8x8x4xf32, #tpu.memory_space<vmem>>, vector<1x8x4xf32>
    %125 = vector.shape_cast %124 : vector<1x8x4xf32> to vector<8x4xf32>
    %126 = vector.shape_cast %122 : vector<8x4xf32> to vector<1x8x4xf32>
    tpu.vector_store %arg20[%123, %c0_59, %c0_60], %126 {strides = array<i32>} : memref<8x8x4xf32, #tpu.memory_space<vmem>>, vector<1x8x4xf32>,
    %127 = arith.index_cast %c0_i32 : i32 to index
    %c0_61 = arith.constant 0 : index
    %c0_62 = arith.constant 0 : index
    %128 = vector.load %arg21[%127, %c0_61, %c0_62] : memref<8x8x32xf32, #tpu.memory_space<vmem>>, vector<1x8x32xf32>
    %129 = vector.shape_cast %128 : vector<1x8x32xf32> to vector<8x32xf32>
    %130 = vector.shape_cast %118 : vector<8x32xf32> to vector<1x8x32xf32>
    tpu.vector_store %arg21[%127, %c0_61, %c0_62], %130 {strides = array<i32>} : memref<8x8x32xf32, #tpu.memory_space<vmem>>, vector<1x8x32xf32>,
    %131 = arith.index_cast %c0_i32 : i32 to index
    %c0_63 = arith.constant 0 : index
    %c0_64 = arith.constant 0 : index
    %132 = vector.load %arg22[%131, %c0_63, %c0_64] : memref<8x8x16xf32, #tpu.memory_space<vmem>>, vector<1x8x16xf32>
    %133 = vector.shape_cast %132 : vector<1x8x16xf32> to vector<8x16xf32>
    %134 = vector.shape_cast %74 : vector<8x16xf32> to vector<1x8x16xf32>
    tpu.vector_store %arg22[%131, %c0_63, %c0_64], %134 {strides = array<i32>} : memref<8x8x16xf32, #tpu.memory_space<vmem>>, vector<1x8x16xf32>,
    %c1_i32 = arith.constant 1 : i32
    %135 = arith.index_cast %c1_i32 : i32 to index
    %c0_65 = arith.constant 0 : index
    %c0_66 = arith.constant 0 : index
    %136 = vector.load %arg0[%135, %c0_65, %c0_66] : memref<8x8x48xf32, #tpu.memory_space<vmem>>, vector<1x8x48xf32>
    %137 = vector.shape_cast %136 : vector<1x8x48xf32> to vector<8x48xf32>
    %138 = arith.index_cast %c1_i32 : i32 to index
    %c0_67 = arith.constant 0 : index
    %c0_68 = arith.constant 0 : index
    %139 = vector.load %arg1[%138, %c0_67, %c0_68] : memref<8x8x8xf32, #tpu.memory_space<vmem>>, vector<1x8x8xf32>
    %140 = vector.shape_cast %139 : vector<1x8x8xf32> to vector<8x8xf32>
    %141 = vector.extract_strided_slice %137 {offsets = [0, 0], sizes = [8, 16], strides = [1, 1]} : vector<8x48xf32> to vector<8x16xf32>
    %142 = vector.extract_strided_slice %137 {offsets = [0, 16], sizes = [8, 32], strides = [1, 1]} : vector<8x48xf32> to vector<8x32xf32>
    %c0_i32_69 = arith.constant 0 : i32
    %143 = arith.cmpi eq, %c1_i32, %c0_i32_69 : i32
    %144 = arith.select %143, %141, %74 : vector<8x16xf32>
    %cst_70 = arith.constant dense<0.000000e+00> : vector<1x16xf32>
    %145 = tpu.matmul %16, %144, %cst_70 {dimension_numbers = #tpu.dot_dimension_numbers<[1], [0], [0], [1], [0, 0, 1, 1], [], []>} : vector<1x8xf32>, vector<8x16xf32>, vector<1x16xf32> -> vector<1x16xf32>
    %146 = vector.broadcast %145 : vector<1x16xf32> to vector<8x16xf32>
    %147 = arith.subf %144, %146 : vector<8x16xf32>
    %148 = arith.mulf %147, %147 : vector<8x16xf32>
    %cst_71 = arith.constant dense<0.000000e+00> : vector<1x16xf32>
    %149 = tpu.matmul %16, %148, %cst_71 {dimension_numbers = #tpu.dot_dimension_numbers<[1], [0], [0], [1], [0, 0, 1, 1], [], []>} : vector<1x8xf32>, vector<8x16xf32>, vector<1x16xf32> -> vector<1x16xf32>
    %cst_72 = arith.constant 9.99999974E-6 : f32
    %150 = vector.broadcast %cst_72 : f32 to vector<1x16xf32>
    %151 = arith.addf %149, %150 : vector<1x16xf32>
    %152 = math.rsqrt %151 : vector<1x16xf32>
    %153 = vector.broadcast %152 : vector<1x16xf32> to vector<8x16xf32>
    %154 = arith.mulf %147, %153 : vector<8x16xf32>
    %155 = vector.broadcast %14 : vector<1x16xf32> to vector<8x16xf32>
    %156 = arith.mulf %154, %155 : vector<8x16xf32>
    %157 = vector.broadcast %15 : vector<1x16xf32> to vector<8x16xf32>
    %158 = arith.addf %156, %157 : vector<8x16xf32>
    %cst_73 = arith.constant dense<0.000000e+00> : vector<8x64xf32>
    %159 = tpu.matmul %141, %0, %cst_73 {dimension_numbers = #tpu.dot_dimension_numbers<[1], [0], [0], [1], [0, 0, 1, 1], [], []>} : vector<8x16xf32>, vector<16x64xf32>, vector<8x64xf32> -> vector<8x64xf32>
    %cst_74 = arith.constant dense<0.000000e+00> : vector<8x64xf32>
    %160 = tpu.matmul %158, %1, %cst_74 {dimension_numbers = #tpu.dot_dimension_numbers<[1], [0], [0], [1], [0, 0, 1, 1], [], []>} : vector<8x16xf32>, vector<16x64xf32>, vector<8x64xf32> -> vector<8x64xf32>
    %161 = arith.addf %159, %160 : vector<8x64xf32>
    %162 = vector.broadcast %9 : vector<1x64xf32> to vector<8x64xf32>
    %163 = arith.addf %161, %162 : vector<8x64xf32>
    %164 = vector.extract_strided_slice %163 {offsets = [0, 0], sizes = [8, 16], strides = [1, 1]} : vector<8x64xf32> to vector<8x16xf32>
    %165 = arith.negf %164 : vector<8x16xf32>
    %166 = math.exp %165 : vector<8x16xf32>
    %cst_75 = arith.constant 1.000000e+00 : f32
    %167 = vector.broadcast %cst_75 : f32 to vector<8x16xf32>
    %168 = arith.addf %167, %166 : vector<8x16xf32>
    %169 = arith.divf %167, %168 : vector<8x16xf32>
    %170 = vector.extract_strided_slice %163 {offsets = [0, 16], sizes = [8, 16], strides = [1, 1]} : vector<8x64xf32> to vector<8x16xf32>
    %171 = arith.negf %170 : vector<8x16xf32>
    %172 = math.exp %171 : vector<8x16xf32>
    %cst_76 = arith.constant 1.000000e+00 : f32
    %173 = vector.broadcast %cst_76 : f32 to vector<8x16xf32>
    %174 = arith.addf %173, %172 : vector<8x16xf32>
    %175 = arith.divf %173, %174 : vector<8x16xf32>
    %176 = vector.extract_strided_slice %163 {offsets = [0, 32], sizes = [8, 16], strides = [1, 1]} : vector<8x64xf32> to vector<8x16xf32>
    %177 = vector.extract_strided_slice %163 {offsets = [0, 48], sizes = [8, 16], strides = [1, 1]} : vector<8x64xf32> to vector<8x16xf32>
    %178 = arith.mulf %169, %177 : vector<8x16xf32>
    %179 = arith.addf %176, %178 : vector<8x16xf32>
    %180 = math.tanh %179 : vector<8x16xf32>
    %cst_77 = arith.constant 1.000000e+00 : f32
    %181 = vector.broadcast %cst_77 : f32 to vector<8x16xf32>
    %182 = arith.subf %181, %175 : vector<8x16xf32>
    %183 = arith.mulf %182, %180 : vector<8x16xf32>
    %184 = arith.mulf %175, %158 : vector<8x16xf32>
    %185 = arith.addf %183, %184 : vector<8x16xf32>
    %186 = math.exp %185 : vector<8x16xf32>
    %187 = tpu.iota {dimensions = array<i32: 1>} : vector<8x16xi32>
    %c8_i32_78 = arith.constant 8 : i32
    %188 = vector.broadcast %c8_i32_78 : i32 to vector<8x16xi32>
    %189 = arith.cmpi sge, %187, %188 : vector<8x16xi32>
    %190 = arith.select %189, %186, %185 : vector<8x16xi1>, vector<8x16xf32>
    %191 = vector.extract_strided_slice %185 {offsets = [0, 0], sizes = [8, 8], strides = [1, 1]} : vector<8x16xf32> to vector<8x8xf32>
    %192 = vector.extract_strided_slice %186 {offsets = [0, 8], sizes = [8, 8], strides = [1, 1]} : vector<8x16xf32> to vector<8x8xf32>
    %193 = arith.mulf %192, %140 : vector<8x8xf32>
    %194 = arith.addf %191, %193 : vector<8x8xf32>
    %cst_79 = arith.constant dense<0.000000e+00> : vector<8x32xf32>
    %195 = tpu.matmul %194, %2, %cst_79 {dimension_numbers = #tpu.dot_dimension_numbers<[1], [0], [0], [1], [0, 0, 1, 1], [], []>} : vector<8x8xf32>, vector<8x32xf32>, vector<8x32xf32> -> vector<8x32xf32>
    %196 = vector.broadcast %10 : vector<1x32xf32> to vector<8x32xf32>
    %197 = arith.addf %195, %196 : vector<8x32xf32>
    %cst_80 = arith.constant 0.000000e+00 : f32
    %198 = vector.broadcast %cst_80 : f32 to vector<8x32xf32>
    %199 = arith.maximumf %197, %198 : vector<8x32xf32>
    %cst_81 = arith.constant dense<0.000000e+00> : vector<8x32xf32>
    %200 = tpu.matmul %199, %3, %cst_81 {dimension_numbers = #tpu.dot_dimension_numbers<[1], [0], [0], [1], [0, 0, 1, 1], [], []>} : vector<8x32xf32>, vector<32x32xf32>, vector<8x32xf32> -> vector<8x32xf32>
    %201 = vector.broadcast %11 : vector<1x32xf32> to vector<8x32xf32>
    %202 = arith.addf %200, %201 : vector<8x32xf32>
    %cst_82 = arith.constant dense<0.000000e+00> : vector<8x132xf32>
    %203 = tpu.matmul %202, %4, %cst_82 {dimension_numbers = #tpu.dot_dimension_numbers<[1], [0], [0], [1], [0, 0, 1, 1], [], []>} : vector<8x32xf32>, vector<32x132xf32>, vector<8x132xf32> -> vector<8x132xf32>
    %204 = vector.broadcast %12 : vector<1x132xf32> to vector<8x132xf32>
    %205 = arith.addf %203, %204 : vector<8x132xf32>
    %206 = vector.extract_strided_slice %205 {offsets = [0, 0], sizes = [8, 128], strides = [1, 1]} : vector<8x132xf32> to vector<8x128xf32>
    %207 = vector.extract_strided_slice %205 {offsets = [0, 128], sizes = [8, 4], strides = [1, 1]} : vector<8x132xf32> to vector<8x4xf32>
    %cst_83 = arith.constant dense<0.000000e+00> : vector<8x128xf32>
    %208 = tpu.matmul %142, %5, %cst_83 {dimension_numbers = #tpu.dot_dimension_numbers<[1], [0], [0], [1], [0, 0, 1, 1], [], []>} : vector<8x32xf32>, vector<32x128xf32>, vector<8x128xf32> -> vector<8x128xf32>
    %cst_84 = arith.constant dense<0.000000e+00> : vector<8x128xf32>
    %209 = tpu.matmul %118, %6, %cst_84 {dimension_numbers = #tpu.dot_dimension_numbers<[1], [0], [0], [1], [0, 0, 1, 1], [], []>} : vector<8x32xf32>, vector<32x128xf32>, vector<8x128xf32> -> vector<8x128xf32>
    %210 = arith.addf %208, %209 : vector<8x128xf32>
    %211 = vector.broadcast %13 : vector<1x128xf32> to vector<8x128xf32>
    %212 = arith.addf %210, %211 : vector<8x128xf32>
    %213 = vector.extract_strided_slice %212 {offsets = [0, 0], sizes = [8, 32], strides = [1, 1]} : vector<8x128xf32> to vector<8x32xf32>
    %214 = arith.negf %213 : vector<8x32xf32>
    %215 = math.exp %214 : vector<8x32xf32>
    %cst_85 = arith.constant 1.000000e+00 : f32
    %216 = vector.broadcast %cst_85 : f32 to vector<8x32xf32>
    %217 = arith.addf %216, %215 : vector<8x32xf32>
    %218 = arith.divf %216, %217 : vector<8x32xf32>
    %219 = vector.extract_strided_slice %212 {offsets = [0, 32], sizes = [8, 32], strides = [1, 1]} : vector<8x128xf32> to vector<8x32xf32>
    %220 = arith.negf %219 : vector<8x32xf32>
    %221 = math.exp %220 : vector<8x32xf32>
    %cst_86 = arith.constant 1.000000e+00 : f32
    %222 = vector.broadcast %cst_86 : f32 to vector<8x32xf32>
    %223 = arith.addf %222, %221 : vector<8x32xf32>
    %224 = arith.divf %222, %223 : vector<8x32xf32>
    %225 = vector.extract_strided_slice %212 {offsets = [0, 64], sizes = [8, 32], strides = [1, 1]} : vector<8x128xf32> to vector<8x32xf32>
    %226 = vector.extract_strided_slice %212 {offsets = [0, 96], sizes = [8, 32], strides = [1, 1]} : vector<8x128xf32> to vector<8x32xf32>
    %227 = arith.mulf %218, %226 : vector<8x32xf32>
    %228 = arith.addf %225, %227 : vector<8x32xf32>
    %229 = math.tanh %228 : vector<8x32xf32>
    %cst_87 = arith.constant 1.000000e+00 : f32
    %230 = vector.broadcast %cst_87 : f32 to vector<8x32xf32>
    %231 = arith.subf %230, %224 : vector<8x32xf32>
    %232 = arith.mulf %231, %229 : vector<8x32xf32>
    %233 = arith.mulf %224, %118 : vector<8x32xf32>
    %234 = arith.addf %232, %233 : vector<8x32xf32>
    %cst_88 = arith.constant dense<0.000000e+00> : vector<8x128xf32>
    %235 = tpu.matmul %234, %7, %cst_88 {dimension_numbers = #tpu.dot_dimension_numbers<[1], [0], [0], [1], [0, 0, 1, 1], [], []>} : vector<8x32xf32>, vector<32x128xf32>, vector<8x128xf32> -> vector<8x128xf32>
    %236 = arith.mulf %206, %235 : vector<8x128xf32>
    %cst_89 = arith.constant dense<0.000000e+00> : vector<8x4xf32>
    %237 = tpu.matmul %236, %8, %cst_89 {dimension_numbers = #tpu.dot_dimension_numbers<[1], [0], [0], [1], [0, 0, 1, 1], [], []>} : vector<8x128xf32>, vector<128x4xf32>, vector<8x4xf32> -> vector<8x4xf32>
    %238 = arith.addf %237, %207 : vector<8x4xf32>
    %239 = arith.index_cast %c1_i32 : i32 to index
    %c0_90 = arith.constant 0 : index
    %c0_91 = arith.constant 0 : index
    %240 = vector.load %arg20[%239, %c0_90, %c0_91] : memref<8x8x4xf32, #tpu.memory_space<vmem>>, vector<1x8x4xf32>
    %241 = vector.shape_cast %240 : vector<1x8x4xf32> to vector<8x4xf32>
    %242 = vector.shape_cast %238 : vector<8x4xf32> to vector<1x8x4xf32>
    tpu.vector_store %arg20[%239, %c0_90, %c0_91], %242 {strides = array<i32>} : memref<8x8x4xf32, #tpu.memory_space<vmem>>, vector<1x8x4xf32>,
    %243 = arith.index_cast %c1_i32 : i32 to index
    %c0_92 = arith.constant 0 : index
    %c0_93 = arith.constant 0 : index
    %244 = vector.load %arg21[%243, %c0_92, %c0_93] : memref<8x8x32xf32, #tpu.memory_space<vmem>>, vector<1x8x32xf32>
    %245 = vector.shape_cast %244 : vector<1x8x32xf32> to vector<8x32xf32>
    %246 = vector.shape_cast %234 : vector<8x32xf32> to vector<1x8x32xf32>
    tpu.vector_store %arg21[%243, %c0_92, %c0_93], %246 {strides = array<i32>} : memref<8x8x32xf32, #tpu.memory_space<vmem>>, vector<1x8x32xf32>,
    %247 = arith.index_cast %c1_i32 : i32 to index
    %c0_94 = arith.constant 0 : index
    %c0_95 = arith.constant 0 : index
    %248 = vector.load %arg22[%247, %c0_94, %c0_95] : memref<8x8x16xf32, #tpu.memory_space<vmem>>, vector<1x8x16xf32>
    %249 = vector.shape_cast %248 : vector<1x8x16xf32> to vector<8x16xf32>
    %250 = vector.shape_cast %190 : vector<8x16xf32> to vector<1x8x16xf32>
    tpu.vector_store %arg22[%247, %c0_94, %c0_95], %250 {strides = array<i32>} : memref<8x8x16xf32, #tpu.memory_space<vmem>>, vector<1x8x16xf32>,
    %c2_i32 = arith.constant 2 : i32
    %251 = arith.index_cast %c2_i32 : i32 to index
    %c0_96 = arith.constant 0 : index
    %c0_97 = arith.constant 0 : index
    %252 = vector.load %arg0[%251, %c0_96, %c0_97] : memref<8x8x48xf32, #tpu.memory_space<vmem>>, vector<1x8x48xf32>
    %253 = vector.shape_cast %252 : vector<1x8x48xf32> to vector<8x48xf32>
    %254 = arith.index_cast %c2_i32 : i32 to index
    %c0_98 = arith.constant 0 : index
    %c0_99 = arith.constant 0 : index
    %255 = vector.load %arg1[%254, %c0_98, %c0_99] : memref<8x8x8xf32, #tpu.memory_space<vmem>>, vector<1x8x8xf32>
    %256 = vector.shape_cast %255 : vector<1x8x8xf32> to vector<8x8xf32>
    %257 = vector.extract_strided_slice %253 {offsets = [0, 0], sizes = [8, 16], strides = [1, 1]} : vector<8x48xf32> to vector<8x16xf32>
    %258 = vector.extract_strided_slice %253 {offsets = [0, 16], sizes = [8, 32], strides = [1, 1]} : vector<8x48xf32> to vector<8x32xf32>
    %c0_i32_100 = arith.constant 0 : i32
    %259 = arith.cmpi eq, %c2_i32, %c0_i32_100 : i32
    %260 = arith.select %259, %257, %190 : vector<8x16xf32>
    %cst_101 = arith.constant dense<0.000000e+00> : vector<1x16xf32>
    %261 = tpu.matmul %16, %260, %cst_101 {dimension_numbers = #tpu.dot_dimension_numbers<[1], [0], [0], [1], [0, 0, 1, 1], [], []>} : vector<1x8xf32>, vector<8x16xf32>, vector<1x16xf32> -> vector<1x16xf32>
    %262 = vector.broadcast %261 : vector<1x16xf32> to vector<8x16xf32>
    %263 = arith.subf %260, %262 : vector<8x16xf32>
    %264 = arith.mulf %263, %263 : vector<8x16xf32>
    %cst_102 = arith.constant dense<0.000000e+00> : vector<1x16xf32>
    %265 = tpu.matmul %16, %264, %cst_102 {dimension_numbers = #tpu.dot_dimension_numbers<[1], [0], [0], [1], [0, 0, 1, 1], [], []>} : vector<1x8xf32>, vector<8x16xf32>, vector<1x16xf32> -> vector<1x16xf32>
    %cst_103 = arith.constant 9.99999974E-6 : f32
    %266 = vector.broadcast %cst_103 : f32 to vector<1x16xf32>
    %267 = arith.addf %265, %266 : vector<1x16xf32>
    %268 = math.rsqrt %267 : vector<1x16xf32>
    %269 = vector.broadcast %268 : vector<1x16xf32> to vector<8x16xf32>
    %270 = arith.mulf %263, %269 : vector<8x16xf32>
    %271 = vector.broadcast %14 : vector<1x16xf32> to vector<8x16xf32>
    %272 = arith.mulf %270, %271 : vector<8x16xf32>
    %273 = vector.broadcast %15 : vector<1x16xf32> to vector<8x16xf32>
    %274 = arith.addf %272, %273 : vector<8x16xf32>
    %cst_104 = arith.constant dense<0.000000e+00> : vector<8x64xf32>
    %275 = tpu.matmul %257, %0, %cst_104 {dimension_numbers = #tpu.dot_dimension_numbers<[1], [0], [0], [1], [0, 0, 1, 1], [], []>} : vector<8x16xf32>, vector<16x64xf32>, vector<8x64xf32> -> vector<8x64xf32>
    %cst_105 = arith.constant dense<0.000000e+00> : vector<8x64xf32>
    %276 = tpu.matmul %274, %1, %cst_105 {dimension_numbers = #tpu.dot_dimension_numbers<[1], [0], [0], [1], [0, 0, 1, 1], [], []>} : vector<8x16xf32>, vector<16x64xf32>, vector<8x64xf32> -> vector<8x64xf32>
    %277 = arith.addf %275, %276 : vector<8x64xf32>
    %278 = vector.broadcast %9 : vector<1x64xf32> to vector<8x64xf32>
    %279 = arith.addf %277, %278 : vector<8x64xf32>
    %280 = vector.extract_strided_slice %279 {offsets = [0, 0], sizes = [8, 16], strides = [1, 1]} : vector<8x64xf32> to vector<8x16xf32>
    %281 = arith.negf %280 : vector<8x16xf32>
    %282 = math.exp %281 : vector<8x16xf32>
    %cst_106 = arith.constant 1.000000e+00 : f32
    %283 = vector.broadcast %cst_106 : f32 to vector<8x16xf32>
    %284 = arith.addf %283, %282 : vector<8x16xf32>
    %285 = arith.divf %283, %284 : vector<8x16xf32>
    %286 = vector.extract_strided_slice %279 {offsets = [0, 16], sizes = [8, 16], strides = [1, 1]} : vector<8x64xf32> to vector<8x16xf32>
    %287 = arith.negf %286 : vector<8x16xf32>
    %288 = math.exp %287 : vector<8x16xf32>
    %cst_107 = arith.constant 1.000000e+00 : f32
    %289 = vector.broadcast %cst_107 : f32 to vector<8x16xf32>
    %290 = arith.addf %289, %288 : vector<8x16xf32>
    %291 = arith.divf %289, %290 : vector<8x16xf32>
    %292 = vector.extract_strided_slice %279 {offsets = [0, 32], sizes = [8, 16], strides = [1, 1]} : vector<8x64xf32> to vector<8x16xf32>
    %293 = vector.extract_strided_slice %279 {offsets = [0, 48], sizes = [8, 16], strides = [1, 1]} : vector<8x64xf32> to vector<8x16xf32>
    %294 = arith.mulf %285, %293 : vector<8x16xf32>
    %295 = arith.addf %292, %294 : vector<8x16xf32>
    %296 = math.tanh %295 : vector<8x16xf32>
    %cst_108 = arith.constant 1.000000e+00 : f32
    %297 = vector.broadcast %cst_108 : f32 to vector<8x16xf32>
    %298 = arith.subf %297, %291 : vector<8x16xf32>
    %299 = arith.mulf %298, %296 : vector<8x16xf32>
    %300 = arith.mulf %291, %274 : vector<8x16xf32>
    %301 = arith.addf %299, %300 : vector<8x16xf32>
    %302 = math.exp %301 : vector<8x16xf32>
    %303 = tpu.iota {dimensions = array<i32: 1>} : vector<8x16xi32>
    %c8_i32_109 = arith.constant 8 : i32
    %304 = vector.broadcast %c8_i32_109 : i32 to vector<8x16xi32>
    %305 = arith.cmpi sge, %303, %304 : vector<8x16xi32>
    %306 = arith.select %305, %302, %301 : vector<8x16xi1>, vector<8x16xf32>
    %307 = vector.extract_strided_slice %301 {offsets = [0, 0], sizes = [8, 8], strides = [1, 1]} : vector<8x16xf32> to vector<8x8xf32>
    %308 = vector.extract_strided_slice %302 {offsets = [0, 8], sizes = [8, 8], strides = [1, 1]} : vector<8x16xf32> to vector<8x8xf32>
    %309 = arith.mulf %308, %256 : vector<8x8xf32>
    %310 = arith.addf %307, %309 : vector<8x8xf32>
    %cst_110 = arith.constant dense<0.000000e+00> : vector<8x32xf32>
    %311 = tpu.matmul %310, %2, %cst_110 {dimension_numbers = #tpu.dot_dimension_numbers<[1], [0], [0], [1], [0, 0, 1, 1], [], []>} : vector<8x8xf32>, vector<8x32xf32>, vector<8x32xf32> -> vector<8x32xf32>
    %312 = vector.broadcast %10 : vector<1x32xf32> to vector<8x32xf32>
    %313 = arith.addf %311, %312 : vector<8x32xf32>
    %cst_111 = arith.constant 0.000000e+00 : f32
    %314 = vector.broadcast %cst_111 : f32 to vector<8x32xf32>
    %315 = arith.maximumf %313, %314 : vector<8x32xf32>
    %cst_112 = arith.constant dense<0.000000e+00> : vector<8x32xf32>
    %316 = tpu.matmul %315, %3, %cst_112 {dimension_numbers = #tpu.dot_dimension_numbers<[1], [0], [0], [1], [0, 0, 1, 1], [], []>} : vector<8x32xf32>, vector<32x32xf32>, vector<8x32xf32> -> vector<8x32xf32>
    %317 = vector.broadcast %11 : vector<1x32xf32> to vector<8x32xf32>
    %318 = arith.addf %316, %317 : vector<8x32xf32>
    %cst_113 = arith.constant dense<0.000000e+00> : vector<8x132xf32>
    %319 = tpu.matmul %318, %4, %cst_113 {dimension_numbers = #tpu.dot_dimension_numbers<[1], [0], [0], [1], [0, 0, 1, 1], [], []>} : vector<8x32xf32>, vector<32x132xf32>, vector<8x132xf32> -> vector<8x132xf32>
    %320 = vector.broadcast %12 : vector<1x132xf32> to vector<8x132xf32>
    %321 = arith.addf %319, %320 : vector<8x132xf32>
    %322 = vector.extract_strided_slice %321 {offsets = [0, 0], sizes = [8, 128], strides = [1, 1]} : vector<8x132xf32> to vector<8x128xf32>
    %323 = vector.extract_strided_slice %321 {offsets = [0, 128], sizes = [8, 4], strides = [1, 1]} : vector<8x132xf32> to vector<8x4xf32>
    %cst_114 = arith.constant dense<0.000000e+00> : vector<8x128xf32>
    %324 = tpu.matmul %258, %5, %cst_114 {dimension_numbers = #tpu.dot_dimension_numbers<[1], [0], [0], [1], [0, 0, 1, 1], [], []>} : vector<8x32xf32>, vector<32x128xf32>, vector<8x128xf32> -> vector<8x128xf32>
    %cst_115 = arith.constant dense<0.000000e+00> : vector<8x128xf32>
    %325 = tpu.matmul %234, %6, %cst_115 {dimension_numbers = #tpu.dot_dimension_numbers<[1], [0], [0], [1], [0, 0, 1, 1], [], []>} : vector<8x32xf32>, vector<32x128xf32>, vector<8x128xf32> -> vector<8x128xf32>
    %326 = arith.addf %324, %325 : vector<8x128xf32>
    %327 = vector.broadcast %13 : vector<1x128xf32> to vector<8x128xf32>
    %328 = arith.addf %326, %327 : vector<8x128xf32>
    %329 = vector.extract_strided_slice %328 {offsets = [0, 0], sizes = [8, 32], strides = [1, 1]} : vector<8x128xf32> to vector<8x32xf32>
    %330 = arith.negf %329 : vector<8x32xf32>
    %331 = math.exp %330 : vector<8x32xf32>
    %cst_116 = arith.constant 1.000000e+00 : f32
    %332 = vector.broadcast %cst_116 : f32 to vector<8x32xf32>
    %333 = arith.addf %332, %331 : vector<8x32xf32>
    %334 = arith.divf %332, %333 : vector<8x32xf32>
    %335 = vector.extract_strided_slice %328 {offsets = [0, 32], sizes = [8, 32], strides = [1, 1]} : vector<8x128xf32> to vector<8x32xf32>
    %336 = arith.negf %335 : vector<8x32xf32>
    %337 = math.exp %336 : vector<8x32xf32>
    %cst_117 = arith.constant 1.000000e+00 : f32
    %338 = vector.broadcast %cst_117 : f32 to vector<8x32xf32>
    %339 = arith.addf %338, %337 : vector<8x32xf32>
    %340 = arith.divf %338, %339 : vector<8x32xf32>
    %341 = vector.extract_strided_slice %328 {offsets = [0, 64], sizes = [8, 32], strides = [1, 1]} : vector<8x128xf32> to vector<8x32xf32>
    %342 = vector.extract_strided_slice %328 {offsets = [0, 96], sizes = [8, 32], strides = [1, 1]} : vector<8x128xf32> to vector<8x32xf32>
    %343 = arith.mulf %334, %342 : vector<8x32xf32>
    %344 = arith.addf %341, %343 : vector<8x32xf32>
    %345 = math.tanh %344 : vector<8x32xf32>
    %cst_118 = arith.constant 1.000000e+00 : f32
    %346 = vector.broadcast %cst_118 : f32 to vector<8x32xf32>
    %347 = arith.subf %346, %340 : vector<8x32xf32>
    %348 = arith.mulf %347, %345 : vector<8x32xf32>
    %349 = arith.mulf %340, %234 : vector<8x32xf32>
    %350 = arith.addf %348, %349 : vector<8x32xf32>
    %cst_119 = arith.constant dense<0.000000e+00> : vector<8x128xf32>
    %351 = tpu.matmul %350, %7, %cst_119 {dimension_numbers = #tpu.dot_dimension_numbers<[1], [0], [0], [1], [0, 0, 1, 1], [], []>} : vector<8x32xf32>, vector<32x128xf32>, vector<8x128xf32> -> vector<8x128xf32>
    %352 = arith.mulf %322, %351 : vector<8x128xf32>
    %cst_120 = arith.constant dense<0.000000e+00> : vector<8x4xf32>
    %353 = tpu.matmul %352, %8, %cst_120 {dimension_numbers = #tpu.dot_dimension_numbers<[1], [0], [0], [1], [0, 0, 1, 1], [], []>} : vector<8x128xf32>, vector<128x4xf32>, vector<8x4xf32> -> vector<8x4xf32>
    %354 = arith.addf %353, %323 : vector<8x4xf32>
    %355 = arith.index_cast %c2_i32 : i32 to index
    %c0_121 = arith.constant 0 : index
    %c0_122 = arith.constant 0 : index
    %356 = vector.load %arg20[%355, %c0_121, %c0_122] : memref<8x8x4xf32, #tpu.memory_space<vmem>>, vector<1x8x4xf32>
    %357 = vector.shape_cast %356 : vector<1x8x4xf32> to vector<8x4xf32>
    %358 = vector.shape_cast %354 : vector<8x4xf32> to vector<1x8x4xf32>
    tpu.vector_store %arg20[%355, %c0_121, %c0_122], %358 {strides = array<i32>} : memref<8x8x4xf32, #tpu.memory_space<vmem>>, vector<1x8x4xf32>,
    %359 = arith.index_cast %c2_i32 : i32 to index
    %c0_123 = arith.constant 0 : index
    %c0_124 = arith.constant 0 : index
    %360 = vector.load %arg21[%359, %c0_123, %c0_124] : memref<8x8x32xf32, #tpu.memory_space<vmem>>, vector<1x8x32xf32>
    %361 = vector.shape_cast %360 : vector<1x8x32xf32> to vector<8x32xf32>
    %362 = vector.shape_cast %350 : vector<8x32xf32> to vector<1x8x32xf32>
    tpu.vector_store %arg21[%359, %c0_123, %c0_124], %362 {strides = array<i32>} : memref<8x8x32xf32, #tpu.memory_space<vmem>>, vector<1x8x32xf32>,
    %363 = arith.index_cast %c2_i32 : i32 to index
    %c0_125 = arith.constant 0 : index
    %c0_126 = arith.constant 0 : index
    %364 = vector.load %arg22[%363, %c0_125, %c0_126] : memref<8x8x16xf32, #tpu.memory_space<vmem>>, vector<1x8x16xf32>
    %365 = vector.shape_cast %364 : vector<1x8x16xf32> to vector<8x16xf32>
    %366 = vector.shape_cast %306 : vector<8x16xf32> to vector<1x8x16xf32>
    tpu.vector_store %arg22[%363, %c0_125, %c0_126], %366 {strides = array<i32>} : memref<8x8x16xf32, #tpu.memory_space<vmem>>, vector<1x8x16xf32>,
    %c3_i32 = arith.constant 3 : i32
    %367 = arith.index_cast %c3_i32 : i32 to index
    %c0_127 = arith.constant 0 : index
    %c0_128 = arith.constant 0 : index
    %368 = vector.load %arg0[%367, %c0_127, %c0_128] : memref<8x8x48xf32, #tpu.memory_space<vmem>>, vector<1x8x48xf32>
    %369 = vector.shape_cast %368 : vector<1x8x48xf32> to vector<8x48xf32>
    %370 = arith.index_cast %c3_i32 : i32 to index
    %c0_129 = arith.constant 0 : index
    %c0_130 = arith.constant 0 : index
    %371 = vector.load %arg1[%370, %c0_129, %c0_130] : memref<8x8x8xf32, #tpu.memory_space<vmem>>, vector<1x8x8xf32>
    %372 = vector.shape_cast %371 : vector<1x8x8xf32> to vector<8x8xf32>
    %373 = vector.extract_strided_slice %369 {offsets = [0, 0], sizes = [8, 16], strides = [1, 1]} : vector<8x48xf32> to vector<8x16xf32>
    %374 = vector.extract_strided_slice %369 {offsets = [0, 16], sizes = [8, 32], strides = [1, 1]} : vector<8x48xf32> to vector<8x32xf32>
    %c0_i32_131 = arith.constant 0 : i32
    %375 = arith.cmpi eq, %c3_i32, %c0_i32_131 : i32
    %376 = arith.select %375, %373, %306 : vector<8x16xf32>
    %cst_132 = arith.constant dense<0.000000e+00> : vector<1x16xf32>
    %377 = tpu.matmul %16, %376, %cst_132 {dimension_numbers = #tpu.dot_dimension_numbers<[1], [0], [0], [1], [0, 0, 1, 1], [], []>} : vector<1x8xf32>, vector<8x16xf32>, vector<1x16xf32> -> vector<1x16xf32>
    %378 = vector.broadcast %377 : vector<1x16xf32> to vector<8x16xf32>
    %379 = arith.subf %376, %378 : vector<8x16xf32>
    %380 = arith.mulf %379, %379 : vector<8x16xf32>
    %cst_133 = arith.constant dense<0.000000e+00> : vector<1x16xf32>
    %381 = tpu.matmul %16, %380, %cst_133 {dimension_numbers = #tpu.dot_dimension_numbers<[1], [0], [0], [1], [0, 0, 1, 1], [], []>} : vector<1x8xf32>, vector<8x16xf32>, vector<1x16xf32> -> vector<1x16xf32>
    %cst_134 = arith.constant 9.99999974E-6 : f32
    %382 = vector.broadcast %cst_134 : f32 to vector<1x16xf32>
    %383 = arith.addf %381, %382 : vector<1x16xf32>
    %384 = math.rsqrt %383 : vector<1x16xf32>
    %385 = vector.broadcast %384 : vector<1x16xf32> to vector<8x16xf32>
    %386 = arith.mulf %379, %385 : vector<8x16xf32>
    %387 = vector.broadcast %14 : vector<1x16xf32> to vector<8x16xf32>
    %388 = arith.mulf %386, %387 : vector<8x16xf32>
    %389 = vector.broadcast %15 : vector<1x16xf32> to vector<8x16xf32>
    %390 = arith.addf %388, %389 : vector<8x16xf32>
    %cst_135 = arith.constant dense<0.000000e+00> : vector<8x64xf32>
    %391 = tpu.matmul %373, %0, %cst_135 {dimension_numbers = #tpu.dot_dimension_numbers<[1], [0], [0], [1], [0, 0, 1, 1], [], []>} : vector<8x16xf32>, vector<16x64xf32>, vector<8x64xf32> -> vector<8x64xf32>
    %cst_136 = arith.constant dense<0.000000e+00> : vector<8x64xf32>
    %392 = tpu.matmul %390, %1, %cst_136 {dimension_numbers = #tpu.dot_dimension_numbers<[1], [0], [0], [1], [0, 0, 1, 1], [], []>} : vector<8x16xf32>, vector<16x64xf32>, vector<8x64xf32> -> vector<8x64xf32>
    %393 = arith.addf %391, %392 : vector<8x64xf32>
    %394 = vector.broadcast %9 : vector<1x64xf32> to vector<8x64xf32>
    %395 = arith.addf %393, %394 : vector<8x64xf32>
    %396 = vector.extract_strided_slice %395 {offsets = [0, 0], sizes = [8, 16], strides = [1, 1]} : vector<8x64xf32> to vector<8x16xf32>
    %397 = arith.negf %396 : vector<8x16xf32>
    %398 = math.exp %397 : vector<8x16xf32>
    %cst_137 = arith.constant 1.000000e+00 : f32
    %399 = vector.broadcast %cst_137 : f32 to vector<8x16xf32>
    %400 = arith.addf %399, %398 : vector<8x16xf32>
    %401 = arith.divf %399, %400 : vector<8x16xf32>
    %402 = vector.extract_strided_slice %395 {offsets = [0, 16], sizes = [8, 16], strides = [1, 1]} : vector<8x64xf32> to vector<8x16xf32>
    %403 = arith.negf %402 : vector<8x16xf32>
    %404 = math.exp %403 : vector<8x16xf32>
    %cst_138 = arith.constant 1.000000e+00 : f32
    %405 = vector.broadcast %cst_138 : f32 to vector<8x16xf32>
    %406 = arith.addf %405, %404 : vector<8x16xf32>
    %407 = arith.divf %405, %406 : vector<8x16xf32>
    %408 = vector.extract_strided_slice %395 {offsets = [0, 32], sizes = [8, 16], strides = [1, 1]} : vector<8x64xf32> to vector<8x16xf32>
    %409 = vector.extract_strided_slice %395 {offsets = [0, 48], sizes = [8, 16], strides = [1, 1]} : vector<8x64xf32> to vector<8x16xf32>
    %410 = arith.mulf %401, %409 : vector<8x16xf32>
    %411 = arith.addf %408, %410 : vector<8x16xf32>
    %412 = math.tanh %411 : vector<8x16xf32>
    %cst_139 = arith.constant 1.000000e+00 : f32
    %413 = vector.broadcast %cst_139 : f32 to vector<8x16xf32>
    %414 = arith.subf %413, %407 : vector<8x16xf32>
    %415 = arith.mulf %414, %412 : vector<8x16xf32>
    %416 = arith.mulf %407, %390 : vector<8x16xf32>
    %417 = arith.addf %415, %416 : vector<8x16xf32>
    %418 = math.exp %417 : vector<8x16xf32>
    %419 = tpu.iota {dimensions = array<i32: 1>} : vector<8x16xi32>
    %c8_i32_140 = arith.constant 8 : i32
    %420 = vector.broadcast %c8_i32_140 : i32 to vector<8x16xi32>
    %421 = arith.cmpi sge, %419, %420 : vector<8x16xi32>
    %422 = arith.select %421, %418, %417 : vector<8x16xi1>, vector<8x16xf32>
    %423 = vector.extract_strided_slice %417 {offsets = [0, 0], sizes = [8, 8], strides = [1, 1]} : vector<8x16xf32> to vector<8x8xf32>
    %424 = vector.extract_strided_slice %418 {offsets = [0, 8], sizes = [8, 8], strides = [1, 1]} : vector<8x16xf32> to vector<8x8xf32>
    %425 = arith.mulf %424, %372 : vector<8x8xf32>
    %426 = arith.addf %423, %425 : vector<8x8xf32>
    %cst_141 = arith.constant dense<0.000000e+00> : vector<8x32xf32>
    %427 = tpu.matmul %426, %2, %cst_141 {dimension_numbers = #tpu.dot_dimension_numbers<[1], [0], [0], [1], [0, 0, 1, 1], [], []>} : vector<8x8xf32>, vector<8x32xf32>, vector<8x32xf32> -> vector<8x32xf32>
    %428 = vector.broadcast %10 : vector<1x32xf32> to vector<8x32xf32>
    %429 = arith.addf %427, %428 : vector<8x32xf32>
    %cst_142 = arith.constant 0.000000e+00 : f32
    %430 = vector.broadcast %cst_142 : f32 to vector<8x32xf32>
    %431 = arith.maximumf %429, %430 : vector<8x32xf32>
    %cst_143 = arith.constant dense<0.000000e+00> : vector<8x32xf32>
    %432 = tpu.matmul %431, %3, %cst_143 {dimension_numbers = #tpu.dot_dimension_numbers<[1], [0], [0], [1], [0, 0, 1, 1], [], []>} : vector<8x32xf32>, vector<32x32xf32>, vector<8x32xf32> -> vector<8x32xf32>
    %433 = vector.broadcast %11 : vector<1x32xf32> to vector<8x32xf32>
    %434 = arith.addf %432, %433 : vector<8x32xf32>
    %cst_144 = arith.constant dense<0.000000e+00> : vector<8x132xf32>
    %435 = tpu.matmul %434, %4, %cst_144 {dimension_numbers = #tpu.dot_dimension_numbers<[1], [0], [0], [1], [0, 0, 1, 1], [], []>} : vector<8x32xf32>, vector<32x132xf32>, vector<8x132xf32> -> vector<8x132xf32>
    %436 = vector.broadcast %12 : vector<1x132xf32> to vector<8x132xf32>
    %437 = arith.addf %435, %436 : vector<8x132xf32>
    %438 = vector.extract_strided_slice %437 {offsets = [0, 0], sizes = [8, 128], strides = [1, 1]} : vector<8x132xf32> to vector<8x128xf32>
    %439 = vector.extract_strided_slice %437 {offsets = [0, 128], sizes = [8, 4], strides = [1, 1]} : vector<8x132xf32> to vector<8x4xf32>
    %cst_145 = arith.constant dense<0.000000e+00> : vector<8x128xf32>
    %440 = tpu.matmul %374, %5, %cst_145 {dimension_numbers = #tpu.dot_dimension_numbers<[1], [0], [0], [1], [0, 0, 1, 1], [], []>} : vector<8x32xf32>, vector<32x128xf32>, vector<8x128xf32> -> vector<8x128xf32>
    %cst_146 = arith.constant dense<0.000000e+00> : vector<8x128xf32>
    %441 = tpu.matmul %350, %6, %cst_146 {dimension_numbers = #tpu.dot_dimension_numbers<[1], [0], [0], [1], [0, 0, 1, 1], [], []>} : vector<8x32xf32>, vector<32x128xf32>, vector<8x128xf32> -> vector<8x128xf32>
    %442 = arith.addf %440, %441 : vector<8x128xf32>
    %443 = vector.broadcast %13 : vector<1x128xf32> to vector<8x128xf32>
    %444 = arith.addf %442, %443 : vector<8x128xf32>
    %445 = vector.extract_strided_slice %444 {offsets = [0, 0], sizes = [8, 32], strides = [1, 1]} : vector<8x128xf32> to vector<8x32xf32>
    %446 = arith.negf %445 : vector<8x32xf32>
    %447 = math.exp %446 : vector<8x32xf32>
    %cst_147 = arith.constant 1.000000e+00 : f32
    %448 = vector.broadcast %cst_147 : f32 to vector<8x32xf32>
    %449 = arith.addf %448, %447 : vector<8x32xf32>
    %450 = arith.divf %448, %449 : vector<8x32xf32>
    %451 = vector.extract_strided_slice %444 {offsets = [0, 32], sizes = [8, 32], strides = [1, 1]} : vector<8x128xf32> to vector<8x32xf32>
    %452 = arith.negf %451 : vector<8x32xf32>
    %453 = math.exp %452 : vector<8x32xf32>
    %cst_148 = arith.constant 1.000000e+00 : f32
    %454 = vector.broadcast %cst_148 : f32 to vector<8x32xf32>
    %455 = arith.addf %454, %453 : vector<8x32xf32>
    %456 = arith.divf %454, %455 : vector<8x32xf32>
    %457 = vector.extract_strided_slice %444 {offsets = [0, 64], sizes = [8, 32], strides = [1, 1]} : vector<8x128xf32> to vector<8x32xf32>
    %458 = vector.extract_strided_slice %444 {offsets = [0, 96], sizes = [8, 32], strides = [1, 1]} : vector<8x128xf32> to vector<8x32xf32>
    %459 = arith.mulf %450, %458 : vector<8x32xf32>
    %460 = arith.addf %457, %459 : vector<8x32xf32>
    %461 = math.tanh %460 : vector<8x32xf32>
    %cst_149 = arith.constant 1.000000e+00 : f32
    %462 = vector.broadcast %cst_149 : f32 to vector<8x32xf32>
    %463 = arith.subf %462, %456 : vector<8x32xf32>
    %464 = arith.mulf %463, %461 : vector<8x32xf32>
    %465 = arith.mulf %456, %350 : vector<8x32xf32>
    %466 = arith.addf %464, %465 : vector<8x32xf32>
    %cst_150 = arith.constant dense<0.000000e+00> : vector<8x128xf32>
    %467 = tpu.matmul %466, %7, %cst_150 {dimension_numbers = #tpu.dot_dimension_numbers<[1], [0], [0], [1], [0, 0, 1, 1], [], []>} : vector<8x32xf32>, vector<32x128xf32>, vector<8x128xf32> -> vector<8x128xf32>
    %468 = arith.mulf %438, %467 : vector<8x128xf32>
    %cst_151 = arith.constant dense<0.000000e+00> : vector<8x4xf32>
    %469 = tpu.matmul %468, %8, %cst_151 {dimension_numbers = #tpu.dot_dimension_numbers<[1], [0], [0], [1], [0, 0, 1, 1], [], []>} : vector<8x128xf32>, vector<128x4xf32>, vector<8x4xf32> -> vector<8x4xf32>
    %470 = arith.addf %469, %439 : vector<8x4xf32>
    %471 = arith.index_cast %c3_i32 : i32 to index
    %c0_152 = arith.constant 0 : index
    %c0_153 = arith.constant 0 : index
    %472 = vector.load %arg20[%471, %c0_152, %c0_153] : memref<8x8x4xf32, #tpu.memory_space<vmem>>, vector<1x8x4xf32>
    %473 = vector.shape_cast %472 : vector<1x8x4xf32> to vector<8x4xf32>
    %474 = vector.shape_cast %470 : vector<8x4xf32> to vector<1x8x4xf32>
    tpu.vector_store %arg20[%471, %c0_152, %c0_153], %474 {strides = array<i32>} : memref<8x8x4xf32, #tpu.memory_space<vmem>>, vector<1x8x4xf32>,
    %475 = arith.index_cast %c3_i32 : i32 to index
    %c0_154 = arith.constant 0 : index
    %c0_155 = arith.constant 0 : index
    %476 = vector.load %arg21[%475, %c0_154, %c0_155] : memref<8x8x32xf32, #tpu.memory_space<vmem>>, vector<1x8x32xf32>
    %477 = vector.shape_cast %476 : vector<1x8x32xf32> to vector<8x32xf32>
    %478 = vector.shape_cast %466 : vector<8x32xf32> to vector<1x8x32xf32>
    tpu.vector_store %arg21[%475, %c0_154, %c0_155], %478 {strides = array<i32>} : memref<8x8x32xf32, #tpu.memory_space<vmem>>, vector<1x8x32xf32>,
    %479 = arith.index_cast %c3_i32 : i32 to index
    %c0_156 = arith.constant 0 : index
    %c0_157 = arith.constant 0 : index
    %480 = vector.load %arg22[%479, %c0_156, %c0_157] : memref<8x8x16xf32, #tpu.memory_space<vmem>>, vector<1x8x16xf32>
    %481 = vector.shape_cast %480 : vector<1x8x16xf32> to vector<8x16xf32>
    %482 = vector.shape_cast %422 : vector<8x16xf32> to vector<1x8x16xf32>
    tpu.vector_store %arg22[%479, %c0_156, %c0_157], %482 {strides = array<i32>} : memref<8x8x16xf32, #tpu.memory_space<vmem>>, vector<1x8x16xf32>,
    %c4_i32 = arith.constant 4 : i32
    %483 = arith.index_cast %c4_i32 : i32 to index
    %c0_158 = arith.constant 0 : index
    %c0_159 = arith.constant 0 : index
    %484 = vector.load %arg0[%483, %c0_158, %c0_159] : memref<8x8x48xf32, #tpu.memory_space<vmem>>, vector<1x8x48xf32>
    %485 = vector.shape_cast %484 : vector<1x8x48xf32> to vector<8x48xf32>
    %486 = arith.index_cast %c4_i32 : i32 to index
    %c0_160 = arith.constant 0 : index
    %c0_161 = arith.constant 0 : index
    %487 = vector.load %arg1[%486, %c0_160, %c0_161] : memref<8x8x8xf32, #tpu.memory_space<vmem>>, vector<1x8x8xf32>
    %488 = vector.shape_cast %487 : vector<1x8x8xf32> to vector<8x8xf32>
    %489 = vector.extract_strided_slice %485 {offsets = [0, 0], sizes = [8, 16], strides = [1, 1]} : vector<8x48xf32> to vector<8x16xf32>
    %490 = vector.extract_strided_slice %485 {offsets = [0, 16], sizes = [8, 32], strides = [1, 1]} : vector<8x48xf32> to vector<8x32xf32>
    %c0_i32_162 = arith.constant 0 : i32
    %491 = arith.cmpi eq, %c4_i32, %c0_i32_162 : i32
    %492 = arith.select %491, %489, %422 : vector<8x16xf32>
    %cst_163 = arith.constant dense<0.000000e+00> : vector<1x16xf32>
    %493 = tpu.matmul %16, %492, %cst_163 {dimension_numbers = #tpu.dot_dimension_numbers<[1], [0], [0], [1], [0, 0, 1, 1], [], []>} : vector<1x8xf32>, vector<8x16xf32>, vector<1x16xf32> -> vector<1x16xf32>
    %494 = vector.broadcast %493 : vector<1x16xf32> to vector<8x16xf32>
    %495 = arith.subf %492, %494 : vector<8x16xf32>
    %496 = arith.mulf %495, %495 : vector<8x16xf32>
    %cst_164 = arith.constant dense<0.000000e+00> : vector<1x16xf32>
    %497 = tpu.matmul %16, %496, %cst_164 {dimension_numbers = #tpu.dot_dimension_numbers<[1], [0], [0], [1], [0, 0, 1, 1], [], []>} : vector<1x8xf32>, vector<8x16xf32>, vector<1x16xf32> -> vector<1x16xf32>
    %cst_165 = arith.constant 9.99999974E-6 : f32
    %498 = vector.broadcast %cst_165 : f32 to vector<1x16xf32>
    %499 = arith.addf %497, %498 : vector<1x16xf32>
    %500 = math.rsqrt %499 : vector<1x16xf32>
    %501 = vector.broadcast %500 : vector<1x16xf32> to vector<8x16xf32>
    %502 = arith.mulf %495, %501 : vector<8x16xf32>
    %503 = vector.broadcast %14 : vector<1x16xf32> to vector<8x16xf32>
    %504 = arith.mulf %502, %503 : vector<8x16xf32>
    %505 = vector.broadcast %15 : vector<1x16xf32> to vector<8x16xf32>
    %506 = arith.addf %504, %505 : vector<8x16xf32>
    %cst_166 = arith.constant dense<0.000000e+00> : vector<8x64xf32>
    %507 = tpu.matmul %489, %0, %cst_166 {dimension_numbers = #tpu.dot_dimension_numbers<[1], [0], [0], [1], [0, 0, 1, 1], [], []>} : vector<8x16xf32>, vector<16x64xf32>, vector<8x64xf32> -> vector<8x64xf32>
    %cst_167 = arith.constant dense<0.000000e+00> : vector<8x64xf32>
    %508 = tpu.matmul %506, %1, %cst_167 {dimension_numbers = #tpu.dot_dimension_numbers<[1], [0], [0], [1], [0, 0, 1, 1], [], []>} : vector<8x16xf32>, vector<16x64xf32>, vector<8x64xf32> -> vector<8x64xf32>
    %509 = arith.addf %507, %508 : vector<8x64xf32>
    %510 = vector.broadcast %9 : vector<1x64xf32> to vector<8x64xf32>
    %511 = arith.addf %509, %510 : vector<8x64xf32>
    %512 = vector.extract_strided_slice %511 {offsets = [0, 0], sizes = [8, 16], strides = [1, 1]} : vector<8x64xf32> to vector<8x16xf32>
    %513 = arith.negf %512 : vector<8x16xf32>
    %514 = math.exp %513 : vector<8x16xf32>
    %cst_168 = arith.constant 1.000000e+00 : f32
    %515 = vector.broadcast %cst_168 : f32 to vector<8x16xf32>
    %516 = arith.addf %515, %514 : vector<8x16xf32>
    %517 = arith.divf %515, %516 : vector<8x16xf32>
    %518 = vector.extract_strided_slice %511 {offsets = [0, 16], sizes = [8, 16], strides = [1, 1]} : vector<8x64xf32> to vector<8x16xf32>
    %519 = arith.negf %518 : vector<8x16xf32>
    %520 = math.exp %519 : vector<8x16xf32>
    %cst_169 = arith.constant 1.000000e+00 : f32
    %521 = vector.broadcast %cst_169 : f32 to vector<8x16xf32>
    %522 = arith.addf %521, %520 : vector<8x16xf32>
    %523 = arith.divf %521, %522 : vector<8x16xf32>
    %524 = vector.extract_strided_slice %511 {offsets = [0, 32], sizes = [8, 16], strides = [1, 1]} : vector<8x64xf32> to vector<8x16xf32>
    %525 = vector.extract_strided_slice %511 {offsets = [0, 48], sizes = [8, 16], strides = [1, 1]} : vector<8x64xf32> to vector<8x16xf32>
    %526 = arith.mulf %517, %525 : vector<8x16xf32>
    %527 = arith.addf %524, %526 : vector<8x16xf32>
    %528 = math.tanh %527 : vector<8x16xf32>
    %cst_170 = arith.constant 1.000000e+00 : f32
    %529 = vector.broadcast %cst_170 : f32 to vector<8x16xf32>
    %530 = arith.subf %529, %523 : vector<8x16xf32>
    %531 = arith.mulf %530, %528 : vector<8x16xf32>
    %532 = arith.mulf %523, %506 : vector<8x16xf32>
    %533 = arith.addf %531, %532 : vector<8x16xf32>
    %534 = math.exp %533 : vector<8x16xf32>
    %535 = tpu.iota {dimensions = array<i32: 1>} : vector<8x16xi32>
    %c8_i32_171 = arith.constant 8 : i32
    %536 = vector.broadcast %c8_i32_171 : i32 to vector<8x16xi32>
    %537 = arith.cmpi sge, %535, %536 : vector<8x16xi32>
    %538 = arith.select %537, %534, %533 : vector<8x16xi1>, vector<8x16xf32>
    %539 = vector.extract_strided_slice %533 {offsets = [0, 0], sizes = [8, 8], strides = [1, 1]} : vector<8x16xf32> to vector<8x8xf32>
    %540 = vector.extract_strided_slice %534 {offsets = [0, 8], sizes = [8, 8], strides = [1, 1]} : vector<8x16xf32> to vector<8x8xf32>
    %541 = arith.mulf %540, %488 : vector<8x8xf32>
    %542 = arith.addf %539, %541 : vector<8x8xf32>
    %cst_172 = arith.constant dense<0.000000e+00> : vector<8x32xf32>
    %543 = tpu.matmul %542, %2, %cst_172 {dimension_numbers = #tpu.dot_dimension_numbers<[1], [0], [0], [1], [0, 0, 1, 1], [], []>} : vector<8x8xf32>, vector<8x32xf32>, vector<8x32xf32> -> vector<8x32xf32>
    %544 = vector.broadcast %10 : vector<1x32xf32> to vector<8x32xf32>
    %545 = arith.addf %543, %544 : vector<8x32xf32>
    %cst_173 = arith.constant 0.000000e+00 : f32
    %546 = vector.broadcast %cst_173 : f32 to vector<8x32xf32>
    %547 = arith.maximumf %545, %546 : vector<8x32xf32>
    %cst_174 = arith.constant dense<0.000000e+00> : vector<8x32xf32>
    %548 = tpu.matmul %547, %3, %cst_174 {dimension_numbers = #tpu.dot_dimension_numbers<[1], [0], [0], [1], [0, 0, 1, 1], [], []>} : vector<8x32xf32>, vector<32x32xf32>, vector<8x32xf32> -> vector<8x32xf32>
    %549 = vector.broadcast %11 : vector<1x32xf32> to vector<8x32xf32>
    %550 = arith.addf %548, %549 : vector<8x32xf32>
    %cst_175 = arith.constant dense<0.000000e+00> : vector<8x132xf32>
    %551 = tpu.matmul %550, %4, %cst_175 {dimension_numbers = #tpu.dot_dimension_numbers<[1], [0], [0], [1], [0, 0, 1, 1], [], []>} : vector<8x32xf32>, vector<32x132xf32>, vector<8x132xf32> -> vector<8x132xf32>
    %552 = vector.broadcast %12 : vector<1x132xf32> to vector<8x132xf32>
    %553 = arith.addf %551, %552 : vector<8x132xf32>
    %554 = vector.extract_strided_slice %553 {offsets = [0, 0], sizes = [8, 128], strides = [1, 1]} : vector<8x132xf32> to vector<8x128xf32>
    %555 = vector.extract_strided_slice %553 {offsets = [0, 128], sizes = [8, 4], strides = [1, 1]} : vector<8x132xf32> to vector<8x4xf32>
    %cst_176 = arith.constant dense<0.000000e+00> : vector<8x128xf32>
    %556 = tpu.matmul %490, %5, %cst_176 {dimension_numbers = #tpu.dot_dimension_numbers<[1], [0], [0], [1], [0, 0, 1, 1], [], []>} : vector<8x32xf32>, vector<32x128xf32>, vector<8x128xf32> -> vector<8x128xf32>
    %cst_177 = arith.constant dense<0.000000e+00> : vector<8x128xf32>
    %557 = tpu.matmul %466, %6, %cst_177 {dimension_numbers = #tpu.dot_dimension_numbers<[1], [0], [0], [1], [0, 0, 1, 1], [], []>} : vector<8x32xf32>, vector<32x128xf32>, vector<8x128xf32> -> vector<8x128xf32>
    %558 = arith.addf %556, %557 : vector<8x128xf32>
    %559 = vector.broadcast %13 : vector<1x128xf32> to vector<8x128xf32>
    %560 = arith.addf %558, %559 : vector<8x128xf32>
    %561 = vector.extract_strided_slice %560 {offsets = [0, 0], sizes = [8, 32], strides = [1, 1]} : vector<8x128xf32> to vector<8x32xf32>
    %562 = arith.negf %561 : vector<8x32xf32>
    %563 = math.exp %562 : vector<8x32xf32>
    %cst_178 = arith.constant 1.000000e+00 : f32
    %564 = vector.broadcast %cst_178 : f32 to vector<8x32xf32>
    %565 = arith.addf %564, %563 : vector<8x32xf32>
    %566 = arith.divf %564, %565 : vector<8x32xf32>
    %567 = vector.extract_strided_slice %560 {offsets = [0, 32], sizes = [8, 32], strides = [1, 1]} : vector<8x128xf32> to vector<8x32xf32>
    %568 = arith.negf %567 : vector<8x32xf32>
    %569 = math.exp %568 : vector<8x32xf32>
    %cst_179 = arith.constant 1.000000e+00 : f32
    %570 = vector.broadcast %cst_179 : f32 to vector<8x32xf32>
    %571 = arith.addf %570, %569 : vector<8x32xf32>
    %572 = arith.divf %570, %571 : vector<8x32xf32>
    %573 = vector.extract_strided_slice %560 {offsets = [0, 64], sizes = [8, 32], strides = [1, 1]} : vector<8x128xf32> to vector<8x32xf32>
    %574 = vector.extract_strided_slice %560 {offsets = [0, 96], sizes = [8, 32], strides = [1, 1]} : vector<8x128xf32> to vector<8x32xf32>
    %575 = arith.mulf %566, %574 : vector<8x32xf32>
    %576 = arith.addf %573, %575 : vector<8x32xf32>
    %577 = math.tanh %576 : vector<8x32xf32>
    %cst_180 = arith.constant 1.000000e+00 : f32
    %578 = vector.broadcast %cst_180 : f32 to vector<8x32xf32>
    %579 = arith.subf %578, %572 : vector<8x32xf32>
    %580 = arith.mulf %579, %577 : vector<8x32xf32>
    %581 = arith.mulf %572, %466 : vector<8x32xf32>
    %582 = arith.addf %580, %581 : vector<8x32xf32>
    %cst_181 = arith.constant dense<0.000000e+00> : vector<8x128xf32>
    %583 = tpu.matmul %582, %7, %cst_181 {dimension_numbers = #tpu.dot_dimension_numbers<[1], [0], [0], [1], [0, 0, 1, 1], [], []>} : vector<8x32xf32>, vector<32x128xf32>, vector<8x128xf32> -> vector<8x128xf32>
    %584 = arith.mulf %554, %583 : vector<8x128xf32>
    %cst_182 = arith.constant dense<0.000000e+00> : vector<8x4xf32>
    %585 = tpu.matmul %584, %8, %cst_182 {dimension_numbers = #tpu.dot_dimension_numbers<[1], [0], [0], [1], [0, 0, 1, 1], [], []>} : vector<8x128xf32>, vector<128x4xf32>, vector<8x4xf32> -> vector<8x4xf32>
    %586 = arith.addf %585, %555 : vector<8x4xf32>
    %587 = arith.index_cast %c4_i32 : i32 to index
    %c0_183 = arith.constant 0 : index
    %c0_184 = arith.constant 0 : index
    %588 = vector.load %arg20[%587, %c0_183, %c0_184] : memref<8x8x4xf32, #tpu.memory_space<vmem>>, vector<1x8x4xf32>
    %589 = vector.shape_cast %588 : vector<1x8x4xf32> to vector<8x4xf32>
    %590 = vector.shape_cast %586 : vector<8x4xf32> to vector<1x8x4xf32>
    tpu.vector_store %arg20[%587, %c0_183, %c0_184], %590 {strides = array<i32>} : memref<8x8x4xf32, #tpu.memory_space<vmem>>, vector<1x8x4xf32>,
    %591 = arith.index_cast %c4_i32 : i32 to index
    %c0_185 = arith.constant 0 : index
    %c0_186 = arith.constant 0 : index
    %592 = vector.load %arg21[%591, %c0_185, %c0_186] : memref<8x8x32xf32, #tpu.memory_space<vmem>>, vector<1x8x32xf32>
    %593 = vector.shape_cast %592 : vector<1x8x32xf32> to vector<8x32xf32>
    %594 = vector.shape_cast %582 : vector<8x32xf32> to vector<1x8x32xf32>
    tpu.vector_store %arg21[%591, %c0_185, %c0_186], %594 {strides = array<i32>} : memref<8x8x32xf32, #tpu.memory_space<vmem>>, vector<1x8x32xf32>,
    %595 = arith.index_cast %c4_i32 : i32 to index
    %c0_187 = arith.constant 0 : index
    %c0_188 = arith.constant 0 : index
    %596 = vector.load %arg22[%595, %c0_187, %c0_188] : memref<8x8x16xf32, #tpu.memory_space<vmem>>, vector<1x8x16xf32>
    %597 = vector.shape_cast %596 : vector<1x8x16xf32> to vector<8x16xf32>
    %598 = vector.shape_cast %538 : vector<8x16xf32> to vector<1x8x16xf32>
    tpu.vector_store %arg22[%595, %c0_187, %c0_188], %598 {strides = array<i32>} : memref<8x8x16xf32, #tpu.memory_space<vmem>>, vector<1x8x16xf32>,
    %c5_i32 = arith.constant 5 : i32
    %599 = arith.index_cast %c5_i32 : i32 to index
    %c0_189 = arith.constant 0 : index
    %c0_190 = arith.constant 0 : index
    %600 = vector.load %arg0[%599, %c0_189, %c0_190] : memref<8x8x48xf32, #tpu.memory_space<vmem>>, vector<1x8x48xf32>
    %601 = vector.shape_cast %600 : vector<1x8x48xf32> to vector<8x48xf32>
    %602 = arith.index_cast %c5_i32 : i32 to index
    %c0_191 = arith.constant 0 : index
    %c0_192 = arith.constant 0 : index
    %603 = vector.load %arg1[%602, %c0_191, %c0_192] : memref<8x8x8xf32, #tpu.memory_space<vmem>>, vector<1x8x8xf32>
    %604 = vector.shape_cast %603 : vector<1x8x8xf32> to vector<8x8xf32>
    %605 = vector.extract_strided_slice %601 {offsets = [0, 0], sizes = [8, 16], strides = [1, 1]} : vector<8x48xf32> to vector<8x16xf32>
    %606 = vector.extract_strided_slice %601 {offsets = [0, 16], sizes = [8, 32], strides = [1, 1]} : vector<8x48xf32> to vector<8x32xf32>
    %c0_i32_193 = arith.constant 0 : i32
    %607 = arith.cmpi eq, %c5_i32, %c0_i32_193 : i32
    %608 = arith.select %607, %605, %538 : vector<8x16xf32>
    %cst_194 = arith.constant dense<0.000000e+00> : vector<1x16xf32>
    %609 = tpu.matmul %16, %608, %cst_194 {dimension_numbers = #tpu.dot_dimension_numbers<[1], [0], [0], [1], [0, 0, 1, 1], [], []>} : vector<1x8xf32>, vector<8x16xf32>, vector<1x16xf32> -> vector<1x16xf32>
    %610 = vector.broadcast %609 : vector<1x16xf32> to vector<8x16xf32>
    %611 = arith.subf %608, %610 : vector<8x16xf32>
    %612 = arith.mulf %611, %611 : vector<8x16xf32>
    %cst_195 = arith.constant dense<0.000000e+00> : vector<1x16xf32>
    %613 = tpu.matmul %16, %612, %cst_195 {dimension_numbers = #tpu.dot_dimension_numbers<[1], [0], [0], [1], [0, 0, 1, 1], [], []>} : vector<1x8xf32>, vector<8x16xf32>, vector<1x16xf32> -> vector<1x16xf32>
    %cst_196 = arith.constant 9.99999974E-6 : f32
    %614 = vector.broadcast %cst_196 : f32 to vector<1x16xf32>
    %615 = arith.addf %613, %614 : vector<1x16xf32>
    %616 = math.rsqrt %615 : vector<1x16xf32>
    %617 = vector.broadcast %616 : vector<1x16xf32> to vector<8x16xf32>
    %618 = arith.mulf %611, %617 : vector<8x16xf32>
    %619 = vector.broadcast %14 : vector<1x16xf32> to vector<8x16xf32>
    %620 = arith.mulf %618, %619 : vector<8x16xf32>
    %621 = vector.broadcast %15 : vector<1x16xf32> to vector<8x16xf32>
    %622 = arith.addf %620, %621 : vector<8x16xf32>
    %cst_197 = arith.constant dense<0.000000e+00> : vector<8x64xf32>
    %623 = tpu.matmul %605, %0, %cst_197 {dimension_numbers = #tpu.dot_dimension_numbers<[1], [0], [0], [1], [0, 0, 1, 1], [], []>} : vector<8x16xf32>, vector<16x64xf32>, vector<8x64xf32> -> vector<8x64xf32>
    %cst_198 = arith.constant dense<0.000000e+00> : vector<8x64xf32>
    %624 = tpu.matmul %622, %1, %cst_198 {dimension_numbers = #tpu.dot_dimension_numbers<[1], [0], [0], [1], [0, 0, 1, 1], [], []>} : vector<8x16xf32>, vector<16x64xf32>, vector<8x64xf32> -> vector<8x64xf32>
    %625 = arith.addf %623, %624 : vector<8x64xf32>
    %626 = vector.broadcast %9 : vector<1x64xf32> to vector<8x64xf32>
    %627 = arith.addf %625, %626 : vector<8x64xf32>
    %628 = vector.extract_strided_slice %627 {offsets = [0, 0], sizes = [8, 16], strides = [1, 1]} : vector<8x64xf32> to vector<8x16xf32>
    %629 = arith.negf %628 : vector<8x16xf32>
    %630 = math.exp %629 : vector<8x16xf32>
    %cst_199 = arith.constant 1.000000e+00 : f32
    %631 = vector.broadcast %cst_199 : f32 to vector<8x16xf32>
    %632 = arith.addf %631, %630 : vector<8x16xf32>
    %633 = arith.divf %631, %632 : vector<8x16xf32>
    %634 = vector.extract_strided_slice %627 {offsets = [0, 16], sizes = [8, 16], strides = [1, 1]} : vector<8x64xf32> to vector<8x16xf32>
    %635 = arith.negf %634 : vector<8x16xf32>
    %636 = math.exp %635 : vector<8x16xf32>
    %cst_200 = arith.constant 1.000000e+00 : f32
    %637 = vector.broadcast %cst_200 : f32 to vector<8x16xf32>
    %638 = arith.addf %637, %636 : vector<8x16xf32>
    %639 = arith.divf %637, %638 : vector<8x16xf32>
    %640 = vector.extract_strided_slice %627 {offsets = [0, 32], sizes = [8, 16], strides = [1, 1]} : vector<8x64xf32> to vector<8x16xf32>
    %641 = vector.extract_strided_slice %627 {offsets = [0, 48], sizes = [8, 16], strides = [1, 1]} : vector<8x64xf32> to vector<8x16xf32>
    %642 = arith.mulf %633, %641 : vector<8x16xf32>
    %643 = arith.addf %640, %642 : vector<8x16xf32>
    %644 = math.tanh %643 : vector<8x16xf32>
    %cst_201 = arith.constant 1.000000e+00 : f32
    %645 = vector.broadcast %cst_201 : f32 to vector<8x16xf32>
    %646 = arith.subf %645, %639 : vector<8x16xf32>
    %647 = arith.mulf %646, %644 : vector<8x16xf32>
    %648 = arith.mulf %639, %622 : vector<8x16xf32>
    %649 = arith.addf %647, %648 : vector<8x16xf32>
    %650 = math.exp %649 : vector<8x16xf32>
    %651 = tpu.iota {dimensions = array<i32: 1>} : vector<8x16xi32>
    %c8_i32_202 = arith.constant 8 : i32
    %652 = vector.broadcast %c8_i32_202 : i32 to vector<8x16xi32>
    %653 = arith.cmpi sge, %651, %652 : vector<8x16xi32>
    %654 = arith.select %653, %650, %649 : vector<8x16xi1>, vector<8x16xf32>
    %655 = vector.extract_strided_slice %649 {offsets = [0, 0], sizes = [8, 8], strides = [1, 1]} : vector<8x16xf32> to vector<8x8xf32>
    %656 = vector.extract_strided_slice %650 {offsets = [0, 8], sizes = [8, 8], strides = [1, 1]} : vector<8x16xf32> to vector<8x8xf32>
    %657 = arith.mulf %656, %604 : vector<8x8xf32>
    %658 = arith.addf %655, %657 : vector<8x8xf32>
    %cst_203 = arith.constant dense<0.000000e+00> : vector<8x32xf32>
    %659 = tpu.matmul %658, %2, %cst_203 {dimension_numbers = #tpu.dot_dimension_numbers<[1], [0], [0], [1], [0, 0, 1, 1], [], []>} : vector<8x8xf32>, vector<8x32xf32>, vector<8x32xf32> -> vector<8x32xf32>
    %660 = vector.broadcast %10 : vector<1x32xf32> to vector<8x32xf32>
    %661 = arith.addf %659, %660 : vector<8x32xf32>
    %cst_204 = arith.constant 0.000000e+00 : f32
    %662 = vector.broadcast %cst_204 : f32 to vector<8x32xf32>
    %663 = arith.maximumf %661, %662 : vector<8x32xf32>
    %cst_205 = arith.constant dense<0.000000e+00> : vector<8x32xf32>
    %664 = tpu.matmul %663, %3, %cst_205 {dimension_numbers = #tpu.dot_dimension_numbers<[1], [0], [0], [1], [0, 0, 1, 1], [], []>} : vector<8x32xf32>, vector<32x32xf32>, vector<8x32xf32> -> vector<8x32xf32>
    %665 = vector.broadcast %11 : vector<1x32xf32> to vector<8x32xf32>
    %666 = arith.addf %664, %665 : vector<8x32xf32>
    %cst_206 = arith.constant dense<0.000000e+00> : vector<8x132xf32>
    %667 = tpu.matmul %666, %4, %cst_206 {dimension_numbers = #tpu.dot_dimension_numbers<[1], [0], [0], [1], [0, 0, 1, 1], [], []>} : vector<8x32xf32>, vector<32x132xf32>, vector<8x132xf32> -> vector<8x132xf32>
    %668 = vector.broadcast %12 : vector<1x132xf32> to vector<8x132xf32>
    %669 = arith.addf %667, %668 : vector<8x132xf32>
    %670 = vector.extract_strided_slice %669 {offsets = [0, 0], sizes = [8, 128], strides = [1, 1]} : vector<8x132xf32> to vector<8x128xf32>
    %671 = vector.extract_strided_slice %669 {offsets = [0, 128], sizes = [8, 4], strides = [1, 1]} : vector<8x132xf32> to vector<8x4xf32>
    %cst_207 = arith.constant dense<0.000000e+00> : vector<8x128xf32>
    %672 = tpu.matmul %606, %5, %cst_207 {dimension_numbers = #tpu.dot_dimension_numbers<[1], [0], [0], [1], [0, 0, 1, 1], [], []>} : vector<8x32xf32>, vector<32x128xf32>, vector<8x128xf32> -> vector<8x128xf32>
    %cst_208 = arith.constant dense<0.000000e+00> : vector<8x128xf32>
    %673 = tpu.matmul %582, %6, %cst_208 {dimension_numbers = #tpu.dot_dimension_numbers<[1], [0], [0], [1], [0, 0, 1, 1], [], []>} : vector<8x32xf32>, vector<32x128xf32>, vector<8x128xf32> -> vector<8x128xf32>
    %674 = arith.addf %672, %673 : vector<8x128xf32>
    %675 = vector.broadcast %13 : vector<1x128xf32> to vector<8x128xf32>
    %676 = arith.addf %674, %675 : vector<8x128xf32>
    %677 = vector.extract_strided_slice %676 {offsets = [0, 0], sizes = [8, 32], strides = [1, 1]} : vector<8x128xf32> to vector<8x32xf32>
    %678 = arith.negf %677 : vector<8x32xf32>
    %679 = math.exp %678 : vector<8x32xf32>
    %cst_209 = arith.constant 1.000000e+00 : f32
    %680 = vector.broadcast %cst_209 : f32 to vector<8x32xf32>
    %681 = arith.addf %680, %679 : vector<8x32xf32>
    %682 = arith.divf %680, %681 : vector<8x32xf32>
    %683 = vector.extract_strided_slice %676 {offsets = [0, 32], sizes = [8, 32], strides = [1, 1]} : vector<8x128xf32> to vector<8x32xf32>
    %684 = arith.negf %683 : vector<8x32xf32>
    %685 = math.exp %684 : vector<8x32xf32>
    %cst_210 = arith.constant 1.000000e+00 : f32
    %686 = vector.broadcast %cst_210 : f32 to vector<8x32xf32>
    %687 = arith.addf %686, %685 : vector<8x32xf32>
    %688 = arith.divf %686, %687 : vector<8x32xf32>
    %689 = vector.extract_strided_slice %676 {offsets = [0, 64], sizes = [8, 32], strides = [1, 1]} : vector<8x128xf32> to vector<8x32xf32>
    %690 = vector.extract_strided_slice %676 {offsets = [0, 96], sizes = [8, 32], strides = [1, 1]} : vector<8x128xf32> to vector<8x32xf32>
    %691 = arith.mulf %682, %690 : vector<8x32xf32>
    %692 = arith.addf %689, %691 : vector<8x32xf32>
    %693 = math.tanh %692 : vector<8x32xf32>
    %cst_211 = arith.constant 1.000000e+00 : f32
    %694 = vector.broadcast %cst_211 : f32 to vector<8x32xf32>
    %695 = arith.subf %694, %688 : vector<8x32xf32>
    %696 = arith.mulf %695, %693 : vector<8x32xf32>
    %697 = arith.mulf %688, %582 : vector<8x32xf32>
    %698 = arith.addf %696, %697 : vector<8x32xf32>
    %cst_212 = arith.constant dense<0.000000e+00> : vector<8x128xf32>
    %699 = tpu.matmul %698, %7, %cst_212 {dimension_numbers = #tpu.dot_dimension_numbers<[1], [0], [0], [1], [0, 0, 1, 1], [], []>} : vector<8x32xf32>, vector<32x128xf32>, vector<8x128xf32> -> vector<8x128xf32>
    %700 = arith.mulf %670, %699 : vector<8x128xf32>
    %cst_213 = arith.constant dense<0.000000e+00> : vector<8x4xf32>
    %701 = tpu.matmul %700, %8, %cst_213 {dimension_numbers = #tpu.dot_dimension_numbers<[1], [0], [0], [1], [0, 0, 1, 1], [], []>} : vector<8x128xf32>, vector<128x4xf32>, vector<8x4xf32> -> vector<8x4xf32>
    %702 = arith.addf %701, %671 : vector<8x4xf32>
    %703 = arith.index_cast %c5_i32 : i32 to index
    %c0_214 = arith.constant 0 : index
    %c0_215 = arith.constant 0 : index
    %704 = vector.load %arg20[%703, %c0_214, %c0_215] : memref<8x8x4xf32, #tpu.memory_space<vmem>>, vector<1x8x4xf32>
    %705 = vector.shape_cast %704 : vector<1x8x4xf32> to vector<8x4xf32>
    %706 = vector.shape_cast %702 : vector<8x4xf32> to vector<1x8x4xf32>
    tpu.vector_store %arg20[%703, %c0_214, %c0_215], %706 {strides = array<i32>} : memref<8x8x4xf32, #tpu.memory_space<vmem>>, vector<1x8x4xf32>,
    %707 = arith.index_cast %c5_i32 : i32 to index
    %c0_216 = arith.constant 0 : index
    %c0_217 = arith.constant 0 : index
    %708 = vector.load %arg21[%707, %c0_216, %c0_217] : memref<8x8x32xf32, #tpu.memory_space<vmem>>, vector<1x8x32xf32>
    %709 = vector.shape_cast %708 : vector<1x8x32xf32> to vector<8x32xf32>
    %710 = vector.shape_cast %698 : vector<8x32xf32> to vector<1x8x32xf32>
    tpu.vector_store %arg21[%707, %c0_216, %c0_217], %710 {strides = array<i32>} : memref<8x8x32xf32, #tpu.memory_space<vmem>>, vector<1x8x32xf32>,
    %711 = arith.index_cast %c5_i32 : i32 to index
    %c0_218 = arith.constant 0 : index
    %c0_219 = arith.constant 0 : index
    %712 = vector.load %arg22[%711, %c0_218, %c0_219] : memref<8x8x16xf32, #tpu.memory_space<vmem>>, vector<1x8x16xf32>
    %713 = vector.shape_cast %712 : vector<1x8x16xf32> to vector<8x16xf32>
    %714 = vector.shape_cast %654 : vector<8x16xf32> to vector<1x8x16xf32>
    tpu.vector_store %arg22[%711, %c0_218, %c0_219], %714 {strides = array<i32>} : memref<8x8x16xf32, #tpu.memory_space<vmem>>, vector<1x8x16xf32>,
    %c6_i32 = arith.constant 6 : i32
    %715 = arith.index_cast %c6_i32 : i32 to index
    %c0_220 = arith.constant 0 : index
    %c0_221 = arith.constant 0 : index
    %716 = vector.load %arg0[%715, %c0_220, %c0_221] : memref<8x8x48xf32, #tpu.memory_space<vmem>>, vector<1x8x48xf32>
    %717 = vector.shape_cast %716 : vector<1x8x48xf32> to vector<8x48xf32>
    %718 = arith.index_cast %c6_i32 : i32 to index
    %c0_222 = arith.constant 0 : index
    %c0_223 = arith.constant 0 : index
    %719 = vector.load %arg1[%718, %c0_222, %c0_223] : memref<8x8x8xf32, #tpu.memory_space<vmem>>, vector<1x8x8xf32>
    %720 = vector.shape_cast %719 : vector<1x8x8xf32> to vector<8x8xf32>
    %721 = vector.extract_strided_slice %717 {offsets = [0, 0], sizes = [8, 16], strides = [1, 1]} : vector<8x48xf32> to vector<8x16xf32>
    %722 = vector.extract_strided_slice %717 {offsets = [0, 16], sizes = [8, 32], strides = [1, 1]} : vector<8x48xf32> to vector<8x32xf32>
    %c0_i32_224 = arith.constant 0 : i32
    %723 = arith.cmpi eq, %c6_i32, %c0_i32_224 : i32
    %724 = arith.select %723, %721, %654 : vector<8x16xf32>
    %cst_225 = arith.constant dense<0.000000e+00> : vector<1x16xf32>
    %725 = tpu.matmul %16, %724, %cst_225 {dimension_numbers = #tpu.dot_dimension_numbers<[1], [0], [0], [1], [0, 0, 1, 1], [], []>} : vector<1x8xf32>, vector<8x16xf32>, vector<1x16xf32> -> vector<1x16xf32>
    %726 = vector.broadcast %725 : vector<1x16xf32> to vector<8x16xf32>
    %727 = arith.subf %724, %726 : vector<8x16xf32>
    %728 = arith.mulf %727, %727 : vector<8x16xf32>
    %cst_226 = arith.constant dense<0.000000e+00> : vector<1x16xf32>
    %729 = tpu.matmul %16, %728, %cst_226 {dimension_numbers = #tpu.dot_dimension_numbers<[1], [0], [0], [1], [0, 0, 1, 1], [], []>} : vector<1x8xf32>, vector<8x16xf32>, vector<1x16xf32> -> vector<1x16xf32>
    %cst_227 = arith.constant 9.99999974E-6 : f32
    %730 = vector.broadcast %cst_227 : f32 to vector<1x16xf32>
    %731 = arith.addf %729, %730 : vector<1x16xf32>
    %732 = math.rsqrt %731 : vector<1x16xf32>
    %733 = vector.broadcast %732 : vector<1x16xf32> to vector<8x16xf32>
    %734 = arith.mulf %727, %733 : vector<8x16xf32>
    %735 = vector.broadcast %14 : vector<1x16xf32> to vector<8x16xf32>
    %736 = arith.mulf %734, %735 : vector<8x16xf32>
    %737 = vector.broadcast %15 : vector<1x16xf32> to vector<8x16xf32>
    %738 = arith.addf %736, %737 : vector<8x16xf32>
    %cst_228 = arith.constant dense<0.000000e+00> : vector<8x64xf32>
    %739 = tpu.matmul %721, %0, %cst_228 {dimension_numbers = #tpu.dot_dimension_numbers<[1], [0], [0], [1], [0, 0, 1, 1], [], []>} : vector<8x16xf32>, vector<16x64xf32>, vector<8x64xf32> -> vector<8x64xf32>
    %cst_229 = arith.constant dense<0.000000e+00> : vector<8x64xf32>
    %740 = tpu.matmul %738, %1, %cst_229 {dimension_numbers = #tpu.dot_dimension_numbers<[1], [0], [0], [1], [0, 0, 1, 1], [], []>} : vector<8x16xf32>, vector<16x64xf32>, vector<8x64xf32> -> vector<8x64xf32>
    %741 = arith.addf %739, %740 : vector<8x64xf32>
    %742 = vector.broadcast %9 : vector<1x64xf32> to vector<8x64xf32>
    %743 = arith.addf %741, %742 : vector<8x64xf32>
    %744 = vector.extract_strided_slice %743 {offsets = [0, 0], sizes = [8, 16], strides = [1, 1]} : vector<8x64xf32> to vector<8x16xf32>
    %745 = arith.negf %744 : vector<8x16xf32>
    %746 = math.exp %745 : vector<8x16xf32>
    %cst_230 = arith.constant 1.000000e+00 : f32
    %747 = vector.broadcast %cst_230 : f32 to vector<8x16xf32>
    %748 = arith.addf %747, %746 : vector<8x16xf32>
    %749 = arith.divf %747, %748 : vector<8x16xf32>
    %750 = vector.extract_strided_slice %743 {offsets = [0, 16], sizes = [8, 16], strides = [1, 1]} : vector<8x64xf32> to vector<8x16xf32>
    %751 = arith.negf %750 : vector<8x16xf32>
    %752 = math.exp %751 : vector<8x16xf32>
    %cst_231 = arith.constant 1.000000e+00 : f32
    %753 = vector.broadcast %cst_231 : f32 to vector<8x16xf32>
    %754 = arith.addf %753, %752 : vector<8x16xf32>
    %755 = arith.divf %753, %754 : vector<8x16xf32>
    %756 = vector.extract_strided_slice %743 {offsets = [0, 32], sizes = [8, 16], strides = [1, 1]} : vector<8x64xf32> to vector<8x16xf32>
    %757 = vector.extract_strided_slice %743 {offsets = [0, 48], sizes = [8, 16], strides = [1, 1]} : vector<8x64xf32> to vector<8x16xf32>
    %758 = arith.mulf %749, %757 : vector<8x16xf32>
    %759 = arith.addf %756, %758 : vector<8x16xf32>
    %760 = math.tanh %759 : vector<8x16xf32>
    %cst_232 = arith.constant 1.000000e+00 : f32
    %761 = vector.broadcast %cst_232 : f32 to vector<8x16xf32>
    %762 = arith.subf %761, %755 : vector<8x16xf32>
    %763 = arith.mulf %762, %760 : vector<8x16xf32>
    %764 = arith.mulf %755, %738 : vector<8x16xf32>
    %765 = arith.addf %763, %764 : vector<8x16xf32>
    %766 = math.exp %765 : vector<8x16xf32>
    %767 = tpu.iota {dimensions = array<i32: 1>} : vector<8x16xi32>
    %c8_i32_233 = arith.constant 8 : i32
    %768 = vector.broadcast %c8_i32_233 : i32 to vector<8x16xi32>
    %769 = arith.cmpi sge, %767, %768 : vector<8x16xi32>
    %770 = arith.select %769, %766, %765 : vector<8x16xi1>, vector<8x16xf32>
    %771 = vector.extract_strided_slice %765 {offsets = [0, 0], sizes = [8, 8], strides = [1, 1]} : vector<8x16xf32> to vector<8x8xf32>
    %772 = vector.extract_strided_slice %766 {offsets = [0, 8], sizes = [8, 8], strides = [1, 1]} : vector<8x16xf32> to vector<8x8xf32>
    %773 = arith.mulf %772, %720 : vector<8x8xf32>
    %774 = arith.addf %771, %773 : vector<8x8xf32>
    %cst_234 = arith.constant dense<0.000000e+00> : vector<8x32xf32>
    %775 = tpu.matmul %774, %2, %cst_234 {dimension_numbers = #tpu.dot_dimension_numbers<[1], [0], [0], [1], [0, 0, 1, 1], [], []>} : vector<8x8xf32>, vector<8x32xf32>, vector<8x32xf32> -> vector<8x32xf32>
    %776 = vector.broadcast %10 : vector<1x32xf32> to vector<8x32xf32>
    %777 = arith.addf %775, %776 : vector<8x32xf32>
    %cst_235 = arith.constant 0.000000e+00 : f32
    %778 = vector.broadcast %cst_235 : f32 to vector<8x32xf32>
    %779 = arith.maximumf %777, %778 : vector<8x32xf32>
    %cst_236 = arith.constant dense<0.000000e+00> : vector<8x32xf32>
    %780 = tpu.matmul %779, %3, %cst_236 {dimension_numbers = #tpu.dot_dimension_numbers<[1], [0], [0], [1], [0, 0, 1, 1], [], []>} : vector<8x32xf32>, vector<32x32xf32>, vector<8x32xf32> -> vector<8x32xf32>
    %781 = vector.broadcast %11 : vector<1x32xf32> to vector<8x32xf32>
    %782 = arith.addf %780, %781 : vector<8x32xf32>
    %cst_237 = arith.constant dense<0.000000e+00> : vector<8x132xf32>
    %783 = tpu.matmul %782, %4, %cst_237 {dimension_numbers = #tpu.dot_dimension_numbers<[1], [0], [0], [1], [0, 0, 1, 1], [], []>} : vector<8x32xf32>, vector<32x132xf32>, vector<8x132xf32> -> vector<8x132xf32>
    %784 = vector.broadcast %12 : vector<1x132xf32> to vector<8x132xf32>
    %785 = arith.addf %783, %784 : vector<8x132xf32>
    %786 = vector.extract_strided_slice %785 {offsets = [0, 0], sizes = [8, 128], strides = [1, 1]} : vector<8x132xf32> to vector<8x128xf32>
    %787 = vector.extract_strided_slice %785 {offsets = [0, 128], sizes = [8, 4], strides = [1, 1]} : vector<8x132xf32> to vector<8x4xf32>
    %cst_238 = arith.constant dense<0.000000e+00> : vector<8x128xf32>
    %788 = tpu.matmul %722, %5, %cst_238 {dimension_numbers = #tpu.dot_dimension_numbers<[1], [0], [0], [1], [0, 0, 1, 1], [], []>} : vector<8x32xf32>, vector<32x128xf32>, vector<8x128xf32> -> vector<8x128xf32>
    %cst_239 = arith.constant dense<0.000000e+00> : vector<8x128xf32>
    %789 = tpu.matmul %698, %6, %cst_239 {dimension_numbers = #tpu.dot_dimension_numbers<[1], [0], [0], [1], [0, 0, 1, 1], [], []>} : vector<8x32xf32>, vector<32x128xf32>, vector<8x128xf32> -> vector<8x128xf32>
    %790 = arith.addf %788, %789 : vector<8x128xf32>
    %791 = vector.broadcast %13 : vector<1x128xf32> to vector<8x128xf32>
    %792 = arith.addf %790, %791 : vector<8x128xf32>
    %793 = vector.extract_strided_slice %792 {offsets = [0, 0], sizes = [8, 32], strides = [1, 1]} : vector<8x128xf32> to vector<8x32xf32>
    %794 = arith.negf %793 : vector<8x32xf32>
    %795 = math.exp %794 : vector<8x32xf32>
    %cst_240 = arith.constant 1.000000e+00 : f32
    %796 = vector.broadcast %cst_240 : f32 to vector<8x32xf32>
    %797 = arith.addf %796, %795 : vector<8x32xf32>
    %798 = arith.divf %796, %797 : vector<8x32xf32>
    %799 = vector.extract_strided_slice %792 {offsets = [0, 32], sizes = [8, 32], strides = [1, 1]} : vector<8x128xf32> to vector<8x32xf32>
    %800 = arith.negf %799 : vector<8x32xf32>
    %801 = math.exp %800 : vector<8x32xf32>
    %cst_241 = arith.constant 1.000000e+00 : f32
    %802 = vector.broadcast %cst_241 : f32 to vector<8x32xf32>
    %803 = arith.addf %802, %801 : vector<8x32xf32>
    %804 = arith.divf %802, %803 : vector<8x32xf32>
    %805 = vector.extract_strided_slice %792 {offsets = [0, 64], sizes = [8, 32], strides = [1, 1]} : vector<8x128xf32> to vector<8x32xf32>
    %806 = vector.extract_strided_slice %792 {offsets = [0, 96], sizes = [8, 32], strides = [1, 1]} : vector<8x128xf32> to vector<8x32xf32>
    %807 = arith.mulf %798, %806 : vector<8x32xf32>
    %808 = arith.addf %805, %807 : vector<8x32xf32>
    %809 = math.tanh %808 : vector<8x32xf32>
    %cst_242 = arith.constant 1.000000e+00 : f32
    %810 = vector.broadcast %cst_242 : f32 to vector<8x32xf32>
    %811 = arith.subf %810, %804 : vector<8x32xf32>
    %812 = arith.mulf %811, %809 : vector<8x32xf32>
    %813 = arith.mulf %804, %698 : vector<8x32xf32>
    %814 = arith.addf %812, %813 : vector<8x32xf32>
    %cst_243 = arith.constant dense<0.000000e+00> : vector<8x128xf32>
    %815 = tpu.matmul %814, %7, %cst_243 {dimension_numbers = #tpu.dot_dimension_numbers<[1], [0], [0], [1], [0, 0, 1, 1], [], []>} : vector<8x32xf32>, vector<32x128xf32>, vector<8x128xf32> -> vector<8x128xf32>
    %816 = arith.mulf %786, %815 : vector<8x128xf32>
    %cst_244 = arith.constant dense<0.000000e+00> : vector<8x4xf32>
    %817 = tpu.matmul %816, %8, %cst_244 {dimension_numbers = #tpu.dot_dimension_numbers<[1], [0], [0], [1], [0, 0, 1, 1], [], []>} : vector<8x128xf32>, vector<128x4xf32>, vector<8x4xf32> -> vector<8x4xf32>
    %818 = arith.addf %817, %787 : vector<8x4xf32>
    %819 = arith.index_cast %c6_i32 : i32 to index
    %c0_245 = arith.constant 0 : index
    %c0_246 = arith.constant 0 : index
    %820 = vector.load %arg20[%819, %c0_245, %c0_246] : memref<8x8x4xf32, #tpu.memory_space<vmem>>, vector<1x8x4xf32>
    %821 = vector.shape_cast %820 : vector<1x8x4xf32> to vector<8x4xf32>
    %822 = vector.shape_cast %818 : vector<8x4xf32> to vector<1x8x4xf32>
    tpu.vector_store %arg20[%819, %c0_245, %c0_246], %822 {strides = array<i32>} : memref<8x8x4xf32, #tpu.memory_space<vmem>>, vector<1x8x4xf32>,
    %823 = arith.index_cast %c6_i32 : i32 to index
    %c0_247 = arith.constant 0 : index
    %c0_248 = arith.constant 0 : index
    %824 = vector.load %arg21[%823, %c0_247, %c0_248] : memref<8x8x32xf32, #tpu.memory_space<vmem>>, vector<1x8x32xf32>
    %825 = vector.shape_cast %824 : vector<1x8x32xf32> to vector<8x32xf32>
    %826 = vector.shape_cast %814 : vector<8x32xf32> to vector<1x8x32xf32>
    tpu.vector_store %arg21[%823, %c0_247, %c0_248], %826 {strides = array<i32>} : memref<8x8x32xf32, #tpu.memory_space<vmem>>, vector<1x8x32xf32>,
    %827 = arith.index_cast %c6_i32 : i32 to index
    %c0_249 = arith.constant 0 : index
    %c0_250 = arith.constant 0 : index
    %828 = vector.load %arg22[%827, %c0_249, %c0_250] : memref<8x8x16xf32, #tpu.memory_space<vmem>>, vector<1x8x16xf32>
    %829 = vector.shape_cast %828 : vector<1x8x16xf32> to vector<8x16xf32>
    %830 = vector.shape_cast %770 : vector<8x16xf32> to vector<1x8x16xf32>
    tpu.vector_store %arg22[%827, %c0_249, %c0_250], %830 {strides = array<i32>} : memref<8x8x16xf32, #tpu.memory_space<vmem>>, vector<1x8x16xf32>,
    %c7_i32 = arith.constant 7 : i32
    %831 = arith.index_cast %c7_i32 : i32 to index
    %c0_251 = arith.constant 0 : index
    %c0_252 = arith.constant 0 : index
    %832 = vector.load %arg0[%831, %c0_251, %c0_252] : memref<8x8x48xf32, #tpu.memory_space<vmem>>, vector<1x8x48xf32>
    %833 = vector.shape_cast %832 : vector<1x8x48xf32> to vector<8x48xf32>
    %834 = arith.index_cast %c7_i32 : i32 to index
    %c0_253 = arith.constant 0 : index
    %c0_254 = arith.constant 0 : index
    %835 = vector.load %arg1[%834, %c0_253, %c0_254] : memref<8x8x8xf32, #tpu.memory_space<vmem>>, vector<1x8x8xf32>
    %836 = vector.shape_cast %835 : vector<1x8x8xf32> to vector<8x8xf32>
    %837 = vector.extract_strided_slice %833 {offsets = [0, 0], sizes = [8, 16], strides = [1, 1]} : vector<8x48xf32> to vector<8x16xf32>
    %838 = vector.extract_strided_slice %833 {offsets = [0, 16], sizes = [8, 32], strides = [1, 1]} : vector<8x48xf32> to vector<8x32xf32>
    %c0_i32_255 = arith.constant 0 : i32
    %839 = arith.cmpi eq, %c7_i32, %c0_i32_255 : i32
    %840 = arith.select %839, %837, %770 : vector<8x16xf32>
    %cst_256 = arith.constant dense<0.000000e+00> : vector<1x16xf32>
    %841 = tpu.matmul %16, %840, %cst_256 {dimension_numbers = #tpu.dot_dimension_numbers<[1], [0], [0], [1], [0, 0, 1, 1], [], []>} : vector<1x8xf32>, vector<8x16xf32>, vector<1x16xf32> -> vector<1x16xf32>
    %842 = vector.broadcast %841 : vector<1x16xf32> to vector<8x16xf32>
    %843 = arith.subf %840, %842 : vector<8x16xf32>
    %844 = arith.mulf %843, %843 : vector<8x16xf32>
    %cst_257 = arith.constant dense<0.000000e+00> : vector<1x16xf32>
    %845 = tpu.matmul %16, %844, %cst_257 {dimension_numbers = #tpu.dot_dimension_numbers<[1], [0], [0], [1], [0, 0, 1, 1], [], []>} : vector<1x8xf32>, vector<8x16xf32>, vector<1x16xf32> -> vector<1x16xf32>
    %cst_258 = arith.constant 9.99999974E-6 : f32
    %846 = vector.broadcast %cst_258 : f32 to vector<1x16xf32>
    %847 = arith.addf %845, %846 : vector<1x16xf32>
    %848 = math.rsqrt %847 : vector<1x16xf32>
    %849 = vector.broadcast %848 : vector<1x16xf32> to vector<8x16xf32>
    %850 = arith.mulf %843, %849 : vector<8x16xf32>
    %851 = vector.broadcast %14 : vector<1x16xf32> to vector<8x16xf32>
    %852 = arith.mulf %850, %851 : vector<8x16xf32>
    %853 = vector.broadcast %15 : vector<1x16xf32> to vector<8x16xf32>
    %854 = arith.addf %852, %853 : vector<8x16xf32>
    %cst_259 = arith.constant dense<0.000000e+00> : vector<8x64xf32>
    %855 = tpu.matmul %837, %0, %cst_259 {dimension_numbers = #tpu.dot_dimension_numbers<[1], [0], [0], [1], [0, 0, 1, 1], [], []>} : vector<8x16xf32>, vector<16x64xf32>, vector<8x64xf32> -> vector<8x64xf32>
    %cst_260 = arith.constant dense<0.000000e+00> : vector<8x64xf32>
    %856 = tpu.matmul %854, %1, %cst_260 {dimension_numbers = #tpu.dot_dimension_numbers<[1], [0], [0], [1], [0, 0, 1, 1], [], []>} : vector<8x16xf32>, vector<16x64xf32>, vector<8x64xf32> -> vector<8x64xf32>
    %857 = arith.addf %855, %856 : vector<8x64xf32>
    %858 = vector.broadcast %9 : vector<1x64xf32> to vector<8x64xf32>
    %859 = arith.addf %857, %858 : vector<8x64xf32>
    %860 = vector.extract_strided_slice %859 {offsets = [0, 0], sizes = [8, 16], strides = [1, 1]} : vector<8x64xf32> to vector<8x16xf32>
    %861 = arith.negf %860 : vector<8x16xf32>
    %862 = math.exp %861 : vector<8x16xf32>
    %cst_261 = arith.constant 1.000000e+00 : f32
    %863 = vector.broadcast %cst_261 : f32 to vector<8x16xf32>
    %864 = arith.addf %863, %862 : vector<8x16xf32>
    %865 = arith.divf %863, %864 : vector<8x16xf32>
    %866 = vector.extract_strided_slice %859 {offsets = [0, 16], sizes = [8, 16], strides = [1, 1]} : vector<8x64xf32> to vector<8x16xf32>
    %867 = arith.negf %866 : vector<8x16xf32>
    %868 = math.exp %867 : vector<8x16xf32>
    %cst_262 = arith.constant 1.000000e+00 : f32
    %869 = vector.broadcast %cst_262 : f32 to vector<8x16xf32>
    %870 = arith.addf %869, %868 : vector<8x16xf32>
    %871 = arith.divf %869, %870 : vector<8x16xf32>
    %872 = vector.extract_strided_slice %859 {offsets = [0, 32], sizes = [8, 16], strides = [1, 1]} : vector<8x64xf32> to vector<8x16xf32>
    %873 = vector.extract_strided_slice %859 {offsets = [0, 48], sizes = [8, 16], strides = [1, 1]} : vector<8x64xf32> to vector<8x16xf32>
    %874 = arith.mulf %865, %873 : vector<8x16xf32>
    %875 = arith.addf %872, %874 : vector<8x16xf32>
    %876 = math.tanh %875 : vector<8x16xf32>
    %cst_263 = arith.constant 1.000000e+00 : f32
    %877 = vector.broadcast %cst_263 : f32 to vector<8x16xf32>
    %878 = arith.subf %877, %871 : vector<8x16xf32>
    %879 = arith.mulf %878, %876 : vector<8x16xf32>
    %880 = arith.mulf %871, %854 : vector<8x16xf32>
    %881 = arith.addf %879, %880 : vector<8x16xf32>
    %882 = math.exp %881 : vector<8x16xf32>
    %883 = tpu.iota {dimensions = array<i32: 1>} : vector<8x16xi32>
    %c8_i32_264 = arith.constant 8 : i32
    %884 = vector.broadcast %c8_i32_264 : i32 to vector<8x16xi32>
    %885 = arith.cmpi sge, %883, %884 : vector<8x16xi32>
    %886 = arith.select %885, %882, %881 : vector<8x16xi1>, vector<8x16xf32>
    %887 = vector.extract_strided_slice %881 {offsets = [0, 0], sizes = [8, 8], strides = [1, 1]} : vector<8x16xf32> to vector<8x8xf32>
    %888 = vector.extract_strided_slice %882 {offsets = [0, 8], sizes = [8, 8], strides = [1, 1]} : vector<8x16xf32> to vector<8x8xf32>
    %889 = arith.mulf %888, %836 : vector<8x8xf32>
    %890 = arith.addf %887, %889 : vector<8x8xf32>
    %cst_265 = arith.constant dense<0.000000e+00> : vector<8x32xf32>
    %891 = tpu.matmul %890, %2, %cst_265 {dimension_numbers = #tpu.dot_dimension_numbers<[1], [0], [0], [1], [0, 0, 1, 1], [], []>} : vector<8x8xf32>, vector<8x32xf32>, vector<8x32xf32> -> vector<8x32xf32>
    %892 = vector.broadcast %10 : vector<1x32xf32> to vector<8x32xf32>
    %893 = arith.addf %891, %892 : vector<8x32xf32>
    %cst_266 = arith.constant 0.000000e+00 : f32
    %894 = vector.broadcast %cst_266 : f32 to vector<8x32xf32>
    %895 = arith.maximumf %893, %894 : vector<8x32xf32>
    %cst_267 = arith.constant dense<0.000000e+00> : vector<8x32xf32>
    %896 = tpu.matmul %895, %3, %cst_267 {dimension_numbers = #tpu.dot_dimension_numbers<[1], [0], [0], [1], [0, 0, 1, 1], [], []>} : vector<8x32xf32>, vector<32x32xf32>, vector<8x32xf32> -> vector<8x32xf32>
    %897 = vector.broadcast %11 : vector<1x32xf32> to vector<8x32xf32>
    %898 = arith.addf %896, %897 : vector<8x32xf32>
    %cst_268 = arith.constant dense<0.000000e+00> : vector<8x132xf32>
    %899 = tpu.matmul %898, %4, %cst_268 {dimension_numbers = #tpu.dot_dimension_numbers<[1], [0], [0], [1], [0, 0, 1, 1], [], []>} : vector<8x32xf32>, vector<32x132xf32>, vector<8x132xf32> -> vector<8x132xf32>
    %900 = vector.broadcast %12 : vector<1x132xf32> to vector<8x132xf32>
    %901 = arith.addf %899, %900 : vector<8x132xf32>
    %902 = vector.extract_strided_slice %901 {offsets = [0, 0], sizes = [8, 128], strides = [1, 1]} : vector<8x132xf32> to vector<8x128xf32>
    %903 = vector.extract_strided_slice %901 {offsets = [0, 128], sizes = [8, 4], strides = [1, 1]} : vector<8x132xf32> to vector<8x4xf32>
    %cst_269 = arith.constant dense<0.000000e+00> : vector<8x128xf32>
    %904 = tpu.matmul %838, %5, %cst_269 {dimension_numbers = #tpu.dot_dimension_numbers<[1], [0], [0], [1], [0, 0, 1, 1], [], []>} : vector<8x32xf32>, vector<32x128xf32>, vector<8x128xf32> -> vector<8x128xf32>
    %cst_270 = arith.constant dense<0.000000e+00> : vector<8x128xf32>
    %905 = tpu.matmul %814, %6, %cst_270 {dimension_numbers = #tpu.dot_dimension_numbers<[1], [0], [0], [1], [0, 0, 1, 1], [], []>} : vector<8x32xf32>, vector<32x128xf32>, vector<8x128xf32> -> vector<8x128xf32>
    %906 = arith.addf %904, %905 : vector<8x128xf32>
    %907 = vector.broadcast %13 : vector<1x128xf32> to vector<8x128xf32>
    %908 = arith.addf %906, %907 : vector<8x128xf32>
    %909 = vector.extract_strided_slice %908 {offsets = [0, 0], sizes = [8, 32], strides = [1, 1]} : vector<8x128xf32> to vector<8x32xf32>
    %910 = arith.negf %909 : vector<8x32xf32>
    %911 = math.exp %910 : vector<8x32xf32>
    %cst_271 = arith.constant 1.000000e+00 : f32
    %912 = vector.broadcast %cst_271 : f32 to vector<8x32xf32>
    %913 = arith.addf %912, %911 : vector<8x32xf32>
    %914 = arith.divf %912, %913 : vector<8x32xf32>
    %915 = vector.extract_strided_slice %908 {offsets = [0, 32], sizes = [8, 32], strides = [1, 1]} : vector<8x128xf32> to vector<8x32xf32>
    %916 = arith.negf %915 : vector<8x32xf32>
    %917 = math.exp %916 : vector<8x32xf32>
    %cst_272 = arith.constant 1.000000e+00 : f32
    %918 = vector.broadcast %cst_272 : f32 to vector<8x32xf32>
    %919 = arith.addf %918, %917 : vector<8x32xf32>
    %920 = arith.divf %918, %919 : vector<8x32xf32>
    %921 = vector.extract_strided_slice %908 {offsets = [0, 64], sizes = [8, 32], strides = [1, 1]} : vector<8x128xf32> to vector<8x32xf32>
    %922 = vector.extract_strided_slice %908 {offsets = [0, 96], sizes = [8, 32], strides = [1, 1]} : vector<8x128xf32> to vector<8x32xf32>
    %923 = arith.mulf %914, %922 : vector<8x32xf32>
    %924 = arith.addf %921, %923 : vector<8x32xf32>
    %925 = math.tanh %924 : vector<8x32xf32>
    %cst_273 = arith.constant 1.000000e+00 : f32
    %926 = vector.broadcast %cst_273 : f32 to vector<8x32xf32>
    %927 = arith.subf %926, %920 : vector<8x32xf32>
    %928 = arith.mulf %927, %925 : vector<8x32xf32>
    %929 = arith.mulf %920, %814 : vector<8x32xf32>
    %930 = arith.addf %928, %929 : vector<8x32xf32>
    %cst_274 = arith.constant dense<0.000000e+00> : vector<8x128xf32>
    %931 = tpu.matmul %930, %7, %cst_274 {dimension_numbers = #tpu.dot_dimension_numbers<[1], [0], [0], [1], [0, 0, 1, 1], [], []>} : vector<8x32xf32>, vector<32x128xf32>, vector<8x128xf32> -> vector<8x128xf32>
    %932 = arith.mulf %902, %931 : vector<8x128xf32>
    %cst_275 = arith.constant dense<0.000000e+00> : vector<8x4xf32>
    %933 = tpu.matmul %932, %8, %cst_275 {dimension_numbers = #tpu.dot_dimension_numbers<[1], [0], [0], [1], [0, 0, 1, 1], [], []>} : vector<8x128xf32>, vector<128x4xf32>, vector<8x4xf32> -> vector<8x4xf32>
    %934 = arith.addf %933, %903 : vector<8x4xf32>
    %935 = arith.index_cast %c7_i32 : i32 to index
    %c0_276 = arith.constant 0 : index
    %c0_277 = arith.constant 0 : index
    %936 = vector.load %arg20[%935, %c0_276, %c0_277] : memref<8x8x4xf32, #tpu.memory_space<vmem>>, vector<1x8x4xf32>
    %937 = vector.shape_cast %936 : vector<1x8x4xf32> to vector<8x4xf32>
    %938 = vector.shape_cast %934 : vector<8x4xf32> to vector<1x8x4xf32>
    tpu.vector_store %arg20[%935, %c0_276, %c0_277], %938 {strides = array<i32>} : memref<8x8x4xf32, #tpu.memory_space<vmem>>, vector<1x8x4xf32>,
    %939 = arith.index_cast %c7_i32 : i32 to index
    %c0_278 = arith.constant 0 : index
    %c0_279 = arith.constant 0 : index
    %940 = vector.load %arg21[%939, %c0_278, %c0_279] : memref<8x8x32xf32, #tpu.memory_space<vmem>>, vector<1x8x32xf32>
    %941 = vector.shape_cast %940 : vector<1x8x32xf32> to vector<8x32xf32>
    %942 = vector.shape_cast %930 : vector<8x32xf32> to vector<1x8x32xf32>
    tpu.vector_store %arg21[%939, %c0_278, %c0_279], %942 {strides = array<i32>} : memref<8x8x32xf32, #tpu.memory_space<vmem>>, vector<1x8x32xf32>,
    %943 = arith.index_cast %c7_i32 : i32 to index
    %c0_280 = arith.constant 0 : index
    %c0_281 = arith.constant 0 : index
    %944 = vector.load %arg22[%943, %c0_280, %c0_281] : memref<8x8x16xf32, #tpu.memory_space<vmem>>, vector<1x8x16xf32>
    %945 = vector.shape_cast %944 : vector<1x8x16xf32> to vector<8x16xf32>
    %946 = vector.shape_cast %886 : vector<8x16xf32> to vector<1x8x16xf32>
    tpu.vector_store %arg22[%943, %c0_280, %c0_281], %946 {strides = array<i32>} : memref<8x8x16xf32, #tpu.memory_space<vmem>>, vector<1x8x16xf32>,
    %c8_i32_282 = arith.constant 8 : i32
    return
  }
}

</mosaic_0001>

<llo_original>
// kernel: tpu_custom_call.1
$region0: #{tpu_custom_call.1}
  #allocation0 [shape = 'u32[]', space=smem, size = 0x4, offset = 0x4, fixed_abs, tag = 'smem constant byte address 0x4 - core index']
  #allocation1 [shape = 'u32[144,128]{1,0:T(1,128)}', space=vmem, size = 0x12000, scoped, tag = 'internal scratch']
  %s0 = inlined_call_operand.vmem [shape: f32[8,8,48], index: 0, kind: input, shape index: {}]
  %s1 = inlined_call_operand.vmem [shape: f32[8,8,8], index: 1, kind: input, shape index: {}]
  %s2 = inlined_call_operand.hbm [shape: f32[8,32], index: 2, kind: input, shape index: {}]
  %s3 = inlined_call_operand.vmem [shape: f32[8,16], index: 3, kind: input, shape index: {}]
  %s4 = inlined_call_operand.hbm [shape: f32[16,64], index: 4, kind: input, shape index: {}]
  %s5 = inlined_call_operand.hbm [shape: f32[16,64], index: 5, kind: input, shape index: {}]
  %s6 = inlined_call_operand.hbm [shape: f32[8,32], index: 6, kind: input, shape index: {}]
  %s7 = inlined_call_operand.hbm [shape: f32[32,32], index: 7, kind: input, shape index: {}]
  %s8 = inlined_call_operand.hbm [shape: f32[32,132], index: 8, kind: input, shape index: {}]
  %s9 = inlined_call_operand.hbm [shape: f32[32,128], index: 9, kind: input, shape index: {}]
  %s10 = inlined_call_operand.hbm [shape: f32[32,128], index: 10, kind: input, shape index: {}]
  %s11 = inlined_call_operand.hbm [shape: f32[32,128], index: 11, kind: input, shape index: {}]
  %s12 = inlined_call_operand.vmem [shape: f32[128,4], index: 12, kind: input, shape index: {}]
  %s13 = inlined_call_operand.vmem [shape: f32[1,64], index: 13, kind: input, shape index: {}]
  %s14 = inlined_call_operand.vmem [shape: f32[1,32], index: 14, kind: input, shape index: {}]
  %s15 = inlined_call_operand.vmem [shape: f32[1,32], index: 15, kind: input, shape index: {}]
  %s16 = inlined_call_operand.vmem [shape: f32[1,132], index: 16, kind: input, shape index: {}]
  %s17 = inlined_call_operand.vmem [shape: f32[1,128], index: 17, kind: input, shape index: {}]
  %s18 = inlined_call_operand.vmem [shape: f32[1,16], index: 18, kind: input, shape index: {}]
  %s19 = inlined_call_operand.vmem [shape: f32[1,16], index: 19, kind: input, shape index: {}]
  %s20 = inlined_call_operand.vmem [shape: f32[8,8,4], index: 20, kind: output, shape index: {0}]
  %s21 = inlined_call_operand.hbm [shape: f32[8,8,32], index: 21, kind: output, shape index: {1}]
  %s22 = inlined_call_operand.hbm [shape: f32[8,8,16], index: 22, kind: output, shape index: {2}]
  %23 = xla_tuple %s20, %s21, %s22
  %s24 = sld [smem:[#allocation0]]
  $region142: #{tpu_custom_call.1} parent=0
    _
  %s26 = ssub.s32 1, %s24
  %s27 = scalar_select 0, %s26, %s24
  $region1: #{tpu_custom_call.1} parent=0
    #allocation2 [shape = 'u8[4096]{0}', space=vmem, size = 0x1000, scoped, tag = 'input window, operand 2, single buffered']
    #allocation3 [shape = 's32[1]{0}', space=sflag, size = 0x4, scoped, tag = 'scoped memory for tpu_custom_call.1']
    #allocation4 [shape = 's32[1]{0}', space=sflag, size = 0x4, scoped, tag = 'scoped memory for tpu_custom_call.1']
    #allocation5 [shape = 'u8[8192]{0}', space=vmem, size = 0x2000, scoped, tag = 'input window, operand 4, single buffered']
    #allocation6 [shape = 's32[1]{0}', space=sflag, size = 0x4, scoped, tag = 'scoped memory for tpu_custom_call.1']
    #allocation7 [shape = 'u8[8192]{0}', space=vmem, size = 0x2000, scoped, tag = 'input window, operand 5, single buffered']
    #allocation8 [shape = 'u8[4096]{0}', space=vmem, size = 0x1000, scoped, tag = 'input window, operand 6, single buffered']
    #allocation9 [shape = 's32[1]{0}', space=sflag, size = 0x4, scoped, tag = 'scoped memory for tpu_custom_call.1']
    #allocation10 [shape = 'u8[16384]{0}', space=vmem, size = 0x4000, scoped, tag = 'input window, operand 7, single buffered']
    #allocation11 [shape = 'u8[32768]{0}', space=vmem, size = 0x8000, scoped, tag = 'input window, operand 8, single buffered']
    #allocation12 [shape = 's32[1]{0}', space=sflag, size = 0x4, scoped, tag = 'scoped memory for tpu_custom_call.1']
    #allocation13 [shape = 'u8[16384]{0}', space=vmem, size = 0x4000, scoped, tag = 'input window, operand 9, single buffered']
    #allocation14 [shape = 'u8[16384]{0}', space=vmem, size = 0x4000, scoped, tag = 'input window, operand 10, single buffered']
    #allocation15 [shape = 's32[1]{0}', space=sflag, size = 0x4, scoped, tag = 'scoped memory for tpu_custom_call.1']
    #allocation16 [shape = 'u8[16384]{0}', space=vmem, size = 0x4000, scoped, tag = 'input window, operand 11, single buffered']
    #allocation17 [shape = 'u8[32768]{0}', space=vmem, size = 0x8000, scoped, tag = 'output window, operand 1, single buffered']
    #allocation18 [shape = 'u8[32768]{0}', space=vmem, size = 0x8000, scoped, tag = 'output window, operand 2, single buffered']
    #allocation19 [shape = 's32[1]{0}', space=sflag, size = 0x4, scoped, tag = 'scoped memory for tpu_custom_call.1']
    %28 = vsyncpa [#allocation3], 0
    %29 = vsyncpa [#allocation6], 0
    %30 = vsyncpa [#allocation9], 0
    %31 = vsyncpa [#allocation12], 0
    %32 = vsyncpa [#allocation15], 0
    %33 = vsyncpa [#allocation4], 0
    %34 = vsyncpa [#allocation19], 0
    // Predicated region
    $region2: #{tpu_custom_call.1} parent=1 // pred_check
      _
    $region3: #{tpu_custom_call.1} parent=1 // pred_check_branch
      %36 = sbr.rel (0) target = $region5
    $region4: #{tpu_custom_call.1} parent=1 // pred_region
      _
    $region5: #{tpu_custom_call.1} parent=1 // pred_fallthru
      _
    // Predicated region
    $region6: #{tpu_custom_call.1} parent=1 // pred_check
      _
    $region7: #{tpu_custom_call.1} parent=1 // pred_check_branch
      %38 = sbr.rel (0) target = $region9
    $region8: #{tpu_custom_call.1} parent=1 // pred_region
      _
    $region9: #{tpu_custom_call.1} parent=1 // pred_fallthru
      _
    // Predicated region
    $region10: #{tpu_custom_call.1} parent=1 // pred_check
      _
    $region11: #{tpu_custom_call.1} parent=1 // pred_check_branch
      %40 = sbr.rel (0) target = $region13
    $region12: #{tpu_custom_call.1} parent=1 // pred_region
      %s42 = ssub.s32 128, 128
      %43 = vsyncadd [#allocation3], %s42
      %s45 = sshll.u32 [#allocation2], 4
      %s46 = int_to_ptr.vmem [resolvable:$true] %s45
      %48 = dma.hbm_to_vmem [thread:$0]  %s2, 128, %s46, [#allocation3]
    $region13: #{tpu_custom_call.1} parent=1 // pred_fallthru
      _
    // Predicated region
    $region14: #{tpu_custom_call.1} parent=1 // pred_check
      _
    $region15: #{tpu_custom_call.1} parent=1 // pred_check_branch
      %50 = sbr.rel (0) target = $region17
    $region16: #{tpu_custom_call.1} parent=1 // pred_region
      _
    $region17: #{tpu_custom_call.1} parent=1 // pred_fallthru
      _
    // Predicated region
    $region18: #{tpu_custom_call.1} parent=1 // pred_check
      _
    $region19: #{tpu_custom_call.1} parent=1 // pred_check_branch
      %52 = sbr.rel (0) target = $region21
    $region20: #{tpu_custom_call.1} parent=1 // pred_region
      %s54 = ssub.s32 256, 256
      %55 = vsyncadd [#allocation6], %s54
      %s56 = sshll.u32 [#allocation5], 4
      %s57 = int_to_ptr.vmem [resolvable:$true] %s56
      %62 = dma.hbm_to_vmem [thread:$0]  %s4, 256, %s57, [#allocation6], 128, 128, 8
    $region21: #{tpu_custom_call.1} parent=1 // pred_fallthru
      _
    // Predicated region
    $region22: #{tpu_custom_call.1} parent=1 // pred_check
      _
    $region23: #{tpu_custom_call.1} parent=1 // pred_check_branch
      %64 = sbr.rel (0) target = $region25
    $region24: #{tpu_custom_call.1} parent=1 // pred_region
      %s66 = ssub.s32 256, 256
      %67 = vsyncadd [#allocation6], %s66
      %s68 = sshll.u32 [#allocation7], 4
      %s69 = int_to_ptr.vmem [resolvable:$true] %s68
      %74 = dma.hbm_to_vmem [thread:$0]  %s5, 256, %s69, [#allocation6], 128, 128, 8
    $region25: #{tpu_custom_call.1} parent=1 // pred_fallthru
      _
    // Predicated region
    $region26: #{tpu_custom_call.1} parent=1 // pred_check
      _
    $region27: #{tpu_custom_call.1} parent=1 // pred_check_branch
      %76 = sbr.rel (0) target = $region29
    $region28: #{tpu_custom_call.1} parent=1 // pred_region
      %s78 = ssub.s32 128, 128
      %79 = vsyncadd [#allocation9], %s78
      %s81 = sshll.u32 [#allocation8], 4
      %s82 = int_to_ptr.vmem [resolvable:$true] %s81
      %84 = dma.hbm_to_vmem [thread:$0]  %s6, 128, %s82, [#allocation9]
    $region29: #{tpu_custom_call.1} parent=1 // pred_fallthru
      _
    // Predicated region
    $region30: #{tpu_custom_call.1} parent=1 // pred_check
      _
    $region31: #{tpu_custom_call.1} parent=1 // pred_check_branch
      %86 = sbr.rel (0) target = $region33
    $region32: #{tpu_custom_call.1} parent=1 // pred_region
      %s88 = ssub.s32 512, 512
      %89 = vsyncadd [#allocation9], %s88
      %s90 = sshll.u32 [#allocation10], 4
      %s91 = int_to_ptr.vmem [resolvable:$true] %s90
      %96 = dma.hbm_to_vmem [thread:$0]  %s7, 512, %s91, [#allocation9], 128, 128, 8
    $region33: #{tpu_custom_call.1} parent=1 // pred_fallthru
      _
    // Predicated region
    $region34: #{tpu_custom_call.1} parent=1 // pred_check
      _
    $region35: #{tpu_custom_call.1} parent=1 // pred_check_branch
      %98 = sbr.rel (0) target = $region37
    $region36: #{tpu_custom_call.1} parent=1 // pred_region
      %s100 = ssub.s32 1024, 1024
      %101 = vsyncadd [#allocation12], %s100
      %s102 = sshll.u32 [#allocation11], 4
      %s103 = int_to_ptr.vmem [resolvable:$true] %s102
      %108 = dma.hbm_to_vmem [thread:$0]  %s8, 1024, %s103, [#allocation12], 256, 256, 16
    $region37: #{tpu_custom_call.1} parent=1 // pred_fallthru
      _
    // Predicated region
    $region38: #{tpu_custom_call.1} parent=1 // pred_check
      _
    $region39: #{tpu_custom_call.1} parent=1 // pred_check_branch
      %110 = sbr.rel (0) target = $region41
    $region40: #{tpu_custom_call.1} parent=1 // pred_region
      %s112 = ssub.s32 512, 512
      %113 = vsyncadd [#allocation12], %s112
      %s114 = sshll.u32 [#allocation13], 4
      %s115 = int_to_ptr.vmem [resolvable:$true] %s114
      %120 = dma.hbm_to_vmem [thread:$0]  %s9, 512, %s115, [#allocation12], 128, 128, 8
    $region41: #{tpu_custom_call.1} parent=1 // pred_fallthru
      _
    // Predicated region
    $region42: #{tpu_custom_call.1} parent=1 // pred_check
      _
    $region43: #{tpu_custom_call.1} parent=1 // pred_check_branch
      %122 = sbr.rel (0) target = $region45
    $region44: #{tpu_custom_call.1} parent=1 // pred_region
      %s124 = ssub.s32 512, 512
      %125 = vsyncadd [#allocation15], %s124
      %s126 = sshll.u32 [#allocation14], 4
      %s127 = int_to_ptr.vmem [resolvable:$true] %s126
      %132 = dma.hbm_to_vmem [thread:$0]  %s10, 512, %s127, [#allocation15], 128, 128, 8
    $region45: #{tpu_custom_call.1} parent=1 // pred_fallthru
      _
    // Predicated region
    $region46: #{tpu_custom_call.1} parent=1 // pred_check
      _
    $region47: #{tpu_custom_call.1} parent=1 // pred_check_branch
      %134 = sbr.rel (0) target = $region49
    $region48: #{tpu_custom_call.1} parent=1 // pred_region
      %s136 = ssub.s32 512, 512
      %137 = vsyncadd [#allocation15], %s136
      %s138 = sshll.u32 [#allocation16], 4
      %s139 = int_to_ptr.vmem [resolvable:$true] %s138
      %144 = dma.hbm_to_vmem [thread:$0]  %s11, 512, %s139, [#allocation15], 128, 128, 8
    $region49: #{tpu_custom_call.1} parent=1 // pred_fallthru
      _
    // Predicated region
    $region50: #{tpu_custom_call.1} parent=1 // pred_check
      _
    $region51: #{tpu_custom_call.1} parent=1 // pred_check_branch
      %146 = sbr.rel (0) target = $region53
    $region52: #{tpu_custom_call.1} parent=1 // pred_region
      _
    $region53: #{tpu_custom_call.1} parent=1 // pred_fallthru
      _
    // Predicated region
    $region54: #{tpu_custom_call.1} parent=1 // pred_check
      _
    $region55: #{tpu_custom_call.1} parent=1 // pred_check_branch
      %148 = sbr.rel (0) target = $region57
    $region56: #{tpu_custom_call.1} parent=1 // pred_region
      _
    $region57: #{tpu_custom_call.1} parent=1 // pred_fallthru
      _
    // Predicated region
    $region58: #{tpu_custom_call.1} parent=1 // pred_check
      _
    $region59: #{tpu_custom_call.1} parent=1 // pred_check_branch
      %150 = sbr.rel (0) target = $region61
    $region60: #{tpu_custom_call.1} parent=1 // pred_region
      _
    $region61: #{tpu_custom_call.1} parent=1 // pred_fallthru
      _
    // Predicated region
    $region62: #{tpu_custom_call.1} parent=1 // pred_check
      _
    $region63: #{tpu_custom_call.1} parent=1 // pred_check_branch
      %152 = sbr.rel (0) target = $region65
    $region64: #{tpu_custom_call.1} parent=1 // pred_region
      _
    $region65: #{tpu_custom_call.1} parent=1 // pred_fallthru
      _
    // Predicated region
    $region66: #{tpu_custom_call.1} parent=1 // pred_check
      _
    $region67: #{tpu_custom_call.1} parent=1 // pred_check_branch
      %154 = sbr.rel (0) target = $region69
    $region68: #{tpu_custom_call.1} parent=1 // pred_region
      _
    $region69: #{tpu_custom_call.1} parent=1 // pred_fallthru
      _
    // Predicated region
    $region70: #{tpu_custom_call.1} parent=1 // pred_check
      _
    $region71: #{tpu_custom_call.1} parent=1 // pred_check_branch
      %156 = sbr.rel (0) target = $region73
    $region72: #{tpu_custom_call.1} parent=1 // pred_region
      _
    $region73: #{tpu_custom_call.1} parent=1 // pred_fallthru
      _
    // Predicated region
    $region74: #{tpu_custom_call.1} parent=1 // pred_check
      _
    $region75: #{tpu_custom_call.1} parent=1 // pred_check_branch
      %158 = sbr.rel (0) target = $region77
    $region76: #{tpu_custom_call.1} parent=1 // pred_region
      _
    $region77: #{tpu_custom_call.1} parent=1 // pred_fallthru
      _
    // Predicated region
    $region78: #{tpu_custom_call.1} parent=1 // pred_check
      _
    $region79: #{tpu_custom_call.1} parent=1 // pred_check_branch
      %160 = sbr.rel (0) target = $region81
    $region80: #{tpu_custom_call.1} parent=1 // pred_region
      _
    $region81: #{tpu_custom_call.1} parent=1 // pred_fallthru
      _
    // Predicated region
    $region82: #{tpu_custom_call.1} parent=1 // pred_check
      _
    $region83: #{tpu_custom_call.1} parent=1 // pred_check_branch
      %162 = sbr.rel (0) target = $region85
    $region84: #{tpu_custom_call.1} parent=1 // pred_region
      %163 = dma.done [#allocation3], 128
    $region85: #{tpu_custom_call.1} parent=1 // pred_fallthru
      _
    // Predicated region
    $region86: #{tpu_custom_call.1} parent=1 // pred_check
      _
    $region87: #{tpu_custom_call.1} parent=1 // pred_check_branch
      %165 = sbr.rel (0) target = $region89
    $region88: #{tpu_custom_call.1} parent=1 // pred_region
      %166 = dma.done [#allocation6], 256
    $region89: #{tpu_custom_call.1} parent=1 // pred_fallthru
      _
    // Predicated region
    $region90: #{tpu_custom_call.1} parent=1 // pred_check
      _
    $region91: #{tpu_custom_call.1} parent=1 // pred_check_branch
      %168 = sbr.rel (0) target = $region93
    $region92: #{tpu_custom_call.1} parent=1 // pred_region
      %169 = dma.done [#allocation6], 256
    $region93: #{tpu_custom_call.1} parent=1 // pred_fallthru
      _
    // Predicated region
    $region94: #{tpu_custom_call.1} parent=1 // pred_check
      _
    $region95: #{tpu_custom_call.1} parent=1 // pred_check_branch
      %171 = sbr.rel (0) target = $region97
    $region96: #{tpu_custom_call.1} parent=1 // pred_region
      %172 = dma.done [#allocation9], 128
    $region97: #{tpu_custom_call.1} parent=1 // pred_fallthru
      _
    // Predicated region
    $region98: #{tpu_custom_call.1} parent=1 // pred_check
      _
    $region99: #{tpu_custom_call.1} parent=1 // pred_check_branch
      %174 = sbr.rel (0) target = $region101
    $region100: #{tpu_custom_call.1} parent=1 // pred_region
      %175 = dma.done [#allocation9], 512
    $region101: #{tpu_custom_call.1} parent=1 // pred_fallthru
      _
    // Predicated region
    $region102: #{tpu_custom_call.1} parent=1 // pred_check
      _
    $region103: #{tpu_custom_call.1} parent=1 // pred_check_branch
      %177 = sbr.rel (0) target = $region105
    $region104: #{tpu_custom_call.1} parent=1 // pred_region
      %178 = dma.done [#allocation12], 1024
    $region105: #{tpu_custom_call.1} parent=1 // pred_fallthru
      _
    // Predicated region
    $region106: #{tpu_custom_call.1} parent=1 // pred_check
      _
    $region107: #{tpu_custom_call.1} parent=1 // pred_check_branch
      %180 = sbr.rel (0) target = $region109
    $region108: #{tpu_custom_call.1} parent=1 // pred_region
      %181 = dma.done [#allocation12], 512
    $region109: #{tpu_custom_call.1} parent=1 // pred_fallthru
      _
    // Predicated region
    $region110: #{tpu_custom_call.1} parent=1 // pred_check
      _
    $region111: #{tpu_custom_call.1} parent=1 // pred_check_branch
      %183 = sbr.rel (0) target = $region113
    $region112: #{tpu_custom_call.1} parent=1 // pred_region
      %184 = dma.done [#allocation15], 512
    $region113: #{tpu_custom_call.1} parent=1 // pred_fallthru
      _
    // Predicated region
    $region114: #{tpu_custom_call.1} parent=1 // pred_check
      _
    $region115: #{tpu_custom_call.1} parent=1 // pred_check_branch
      %186 = sbr.rel (0) target = $region117
    $region116: #{tpu_custom_call.1} parent=1 // pred_region
      %187 = dma.done [#allocation15], 512
    $region117: #{tpu_custom_call.1} parent=1 // pred_fallthru
      _
    %v188 = vld [vmem:[#allocation5] sm:$0xff]
    %v189 = vld [vmem:[#allocation5 + $0x8] sm:$0xff]
    %v190 = vld [vmem:[#allocation7] sm:$0xff]
    %v191 = vld [vmem:[#allocation7 + $0x8] sm:$0xff]
    %v192 = vld [vmem:[#allocation8] sm:$0xff]
    %v193 = vld [vmem:[#allocation10] sm:$0xff]
    %v194 = vld [vmem:[#allocation10 + $0x8] sm:$0xff]
    %v195 = vld [vmem:[#allocation10 + $0x10] sm:$0xff]
    %v196 = vld [vmem:[#allocation10 + $0x18] sm:$0xff]
    %v197 = vld [vmem:[#allocation11] sm:$0xff]
    %v198 = vld [vmem:[#allocation11 + $0x8] sm:$0xff]
    %v199 = vld [vmem:[#allocation11 + $0x10] sm:$0xff]
    %v200 = vld [vmem:[#allocation11 + $0x18] sm:$0xff]
    %v201 = vld [vmem:[#allocation11 + $0x20] sm:$0xff]
    %v202 = vld [vmem:[#allocation11 + $0x28] sm:$0xff]
    %v203 = vld [vmem:[#allocation11 + $0x30] sm:$0xff]
    %v204 = vld [vmem:[#allocation11 + $0x38] sm:$0xff]
    %v205 = vld [vmem:[#allocation13] sm:$0xff]
    %v206 = vld [vmem:[#allocation13 + $0x8] sm:$0xff]
    %v207 = vld [vmem:[#allocation13 + $0x10] sm:$0xff]
    %v208 = vld [vmem:[#allocation13 + $0x18] sm:$0xff]
    %v209 = vld [vmem:[#allocation14] sm:$0xff]
    %v210 = vld [vmem:[#allocation14 + $0x8] sm:$0xff]
    %v211 = vld [vmem:[#allocation14 + $0x10] sm:$0xff]
    %v212 = vld [vmem:[#allocation14 + $0x18] sm:$0xff]
    %v213 = vld [vmem:[#allocation16] sm:$0xff]
    %v214 = vld [vmem:[#allocation16 + $0x8] sm:$0xff]
    %v215 = vld [vmem:[#allocation16 + $0x10] sm:$0xff]
    %v216 = vld [vmem:[#allocation16 + $0x18] sm:$0xff]
    %v217 = vld [vmem:[%s12] sm:$0xff]
    %v218 = vld [vmem:[%s12 + $0x8] sm:$0xff]
    %v219 = vld [vmem:[%s12 + $0x10] sm:$0xff]
    %v220 = vld [vmem:[%s12 + $0x18] sm:$0xff]
    %v221 = vld [vmem:[%s12 + $0x20] sm:$0xff]
    %v222 = vld [vmem:[%s12 + $0x28] sm:$0xff]
    %v223 = vld [vmem:[%s12 + $0x30] sm:$0xff]
    %v224 = vld [vmem:[%s12 + $0x38] sm:$0xff]
    %v225 = vld [vmem:[%s12 + $0x40] sm:$0xff]
    %v226 = vld [vmem:[%s12 + $0x48] sm:$0xff]
    %v227 = vld [vmem:[%s12 + $0x50] sm:$0xff]
    %v228 = vld [vmem:[%s12 + $0x58] sm:$0xff]
    %v229 = vld [vmem:[%s12 + $0x60] sm:$0xff]
    %v230 = vld [vmem:[%s12 + $0x68] sm:$0xff]
    %v231 = vld [vmem:[%s12 + $0x70] sm:$0xff]
    %v232 = vld [vmem:[%s12 + $0x78] sm:$0xff]
    %v233 = vld [vmem:[%s13] sm:$0x1]
    %v234 = vld [vmem:[%s14] sm:$0x1]
    %v235 = vld [vmem:[%s15] sm:$0x1]
    %v236 = vld [vmem:[%s16] sm:$0x3]
    %v237 = vld [vmem:[%s17] sm:$0x1]
    %v238 = vld [vmem:[%s18] sm:$0x1]
    %v239 = vld [vmem:[%s19] sm:$0x1]
    %v240 = vld [vmem:[#allocation2] sm:$0xff]
    %v241 = vld [vmem:[%s0] sm:$0xff]
    %v242 = vld [vmem:[%s1] sm:$0xff]
    %vm243 = vcmask 64512
    %v245 = vsel %vm243, 0.125, 0
    %247 = vmatprep.subr.mxu0 0.0
    %248 = vmatpush1.msra.mxu0 0.0
    %249 = vmatprep.subr.mxu0 0.0
    %250 = vmatpush1.msra.mxu0 0.0
    %251 = vmatprep.subr.mxu0 0.0
    %252 = vmatpush1.msra.mxu0 0.0
    %253 = vmatprep.subr.mxu0 0.0
    %254 = vmatpush1.msra.mxu0 0.0
    %255 = vmatprep.subr.mxu0 0.0
    %256 = vmatpush1.msra.mxu0 0.0
    %257 = vmatprep.subr.mxu0 0.0
    %258 = vmatpush1.msra.mxu0 0.0
    %259 = vmatprep.subr.mxu0 0.0
    %260 = vmatpush1.msra.mxu0 0.0
    %261 = vmatprep.subr.mxu0 0.0
    %262 = vmatpush1.msra.mxu0 0.0
    %263 = vmatprep.subr.mxu0 0.0
    %264 = vmatpush1.msra.mxu0 0.0
    %265 = vmatprep.subr.mxu0 0.0
    %266 = vmatpush1.msra.mxu0 0.0
    %267 = vmatprep.subr.mxu0 0.0
    %268 = vmatpush1.msra.mxu0 0.0
    %269 = vmatprep.subr.mxu0 0.0
    %270 = vmatpush1.msra.mxu0 0.0
    %271 = vmatprep.subr.mxu0 0.0
    %272 = vmatpush1.msra.mxu0 0.0
    %273 = vmatprep.subr.mxu0 0.0
    %274 = vmatpush1.msra.mxu0 0.0
    %275 = vmatprep.subr.mxu0 0.0
    %276 = vmatpush1.msra.mxu0 0.0
    %277 = vmatprep.subr.mxu0 0.0
    %278 = vmatpush1.msra.mxu0 %v241
    %279 = vmatprep.subr.mxu0 0.0
    %280 = vmatpush2.msra.mxu0 0.0
    %281 = vmatprep.subr.mxu0 0.0
    %282 = vmatpush2.msra.mxu0 0.0
    %283 = vmatprep.subr.mxu0 0.0
    %284 = vmatpush2.msra.mxu0 0.0
    %285 = vmatprep.subr.mxu0 0.0
    %286 = vmatpush2.msra.mxu0 0.0
    %287 = vmatprep.subr.mxu0 0.0
    %288 = vmatpush2.msra.mxu0 0.0
    %289 = vmatprep.subr.mxu0 0.0
    %290 = vmatpush2.msra.mxu0 0.0
    %291 = vmatprep.subr.mxu0 0.0
    %292 = vmatpush2.msra.mxu0 0.0
    %293 = vmatprep.subr.mxu0 0.0
    %294 = vmatpush2.msra.mxu0 0.0
    %295 = vmatprep.subr.mxu0 0.0
    %296 = vmatpush2.msra.mxu0 0.0
    %297 = vmatprep.subr.mxu0 0.0
    %298 = vmatpush2.msra.mxu0 0.0
    %299 = vmatprep.subr.mxu0 0.0
    %300 = vmatpush2.msra.mxu0 0.0
    %301 = vmatprep.subr.mxu0 0.0
    %302 = vmatpush2.msra.mxu0 0.0
    %303 = vmatprep.subr.mxu0 0.0
    %304 = vmatpush2.msra.mxu0 0.0
    %305 = vmatprep.subr.mxu0 0.0
    %306 = vmatpush2.msra.mxu0 0.0
    %307 = vmatprep.subr.mxu0 0.0
    %308 = vmatpush2.msra.mxu0 0.0
    %309 = vmatprep.subr.mxu0 0.0
    %310 = vmatpush2.msra.mxu0 0.0
    %311 = vmatprep.mubr.f32.mxu0 0.0
    %312 = vmatmul.mubr.f32.gmra.mxu0 %v245
    %v313 = vpop.f32.mrf.mxu0
    %v314 = vadd.f32 0.0, %v313
    %v315 = vpop.f32.mrf.mxu0
    %316 = vdwg.mxu0
    %v317 = vlaneseq
    %v318 = vshrl.u32 %v317, 7
    %v319 = vsub.s32 0, %v318
    %v320 = vrot.slane %v314, %v319
    %v321 = vsub.f32 %v241, %v320
    %v322 = vmul.f32 %v321, %v321
    %323 = vmatprep.subr.mxu0 0.0
    %324 = vmatpush1.msra.mxu0 0.0
    %325 = vmatprep.subr.mxu0 0.0
    %326 = vmatpush1.msra.mxu0 0.0
    %327 = vmatprep.subr.mxu0 0.0
    %328 = vmatpush1.msra.mxu0 0.0
    %329 = vmatprep.subr.mxu0 0.0
    %330 = vmatpush1.msra.mxu0 0.0
    %331 = vmatprep.subr.mxu0 0.0
    %332 = vmatpush1.msra.mxu0 0.0
    %333 = vmatprep.subr.mxu0 0.0
    %334 = vmatpush1.msra.mxu0 0.0
    %335 = vmatprep.subr.mxu0 0.0
    %336 = vmatpush1.msra.mxu0 0.0
    %337 = vmatprep.subr.mxu0 0.0
    %338 = vmatpush1.msra.mxu0 0.0
    %339 = vmatprep.subr.mxu0 0.0
    %340 = vmatpush1.msra.mxu0 0.0
    %341 = vmatprep.subr.mxu0 0.0
    %342 = vmatpush1.msra.mxu0 0.0
    %343 = vmatprep.subr.mxu0 0.0
    %344 = vmatpush1.msra.mxu0 0.0
    %345 = vmatprep.subr.mxu0 0.0
    %346 = vmatpush1.msra.mxu0 0.0
    %347 = vmatprep.subr.mxu0 0.0
    %348 = vmatpush1.msra.mxu0 0.0
    %349 = vmatprep.subr.mxu0 0.0
    %350 = vmatpush1.msra.mxu0 0.0
    %351 = vmatprep.subr.mxu0 0.0
    %352 = vmatpush1.msra.mxu0 0.0
    %353 = vmatprep.subr.mxu0 0.0
    %354 = vmatpush1.msra.mxu0 %v322
    %355 = vmatprep.subr.mxu0 0.0
    %356 = vmatpush2.msra.mxu0 0.0
    %357 = vmatprep.subr.mxu0 0.0
    %358 = vmatpush2.msra.mxu0 0.0
    %359 = vmatprep.subr.mxu0 0.0
    %360 = vmatpush2.msra.mxu0 0.0
    %361 = vmatprep.subr.mxu0 0.0
    %362 = vmatpush2.msra.mxu0 0.0
    %363 = vmatprep.subr.mxu0 0.0
    %364 = vmatpush2.msra.mxu0 0.0
    %365 = vmatprep.subr.mxu0 0.0
    %366 = vmatpush2.msra.mxu0 0.0
    %367 = vmatprep.subr.mxu0 0.0
    %368 = vmatpush2.msra.mxu0 0.0
    %369 = vmatprep.subr.mxu0 0.0
    %370 = vmatpush2.msra.mxu0 0.0
    %371 = vmatprep.subr.mxu0 0.0
    %372 = vmatpush2.msra.mxu0 0.0
    %373 = vmatprep.subr.mxu0 0.0
    %374 = vmatpush2.msra.mxu0 0.0
    %375 = vmatprep.subr.mxu0 0.0
    %376 = vmatpush2.msra.mxu0 0.0
    %377 = vmatprep.subr.mxu0 0.0
    %378 = vmatpush2.msra.mxu0 0.0
    %379 = vmatprep.subr.mxu0 0.0
    %380 = vmatpush2.msra.mxu0 0.0
    %381 = vmatprep.subr.mxu0 0.0
    %382 = vmatpush2.msra.mxu0 0.0
    %383 = vmatprep.subr.mxu0 0.0
    %384 = vmatpush2.msra.mxu0 0.0
    %385 = vmatprep.subr.mxu0 0.0
    %386 = vmatpush2.msra.mxu0 0.0
    %387 = vmatprep.mubr.f32.mxu0 0.0
    %388 = vmatmul.mubr.f32.gmra.mxu0 %v245
    %v389 = vpop.f32.mrf.mxu0
    %v390 = vadd.f32 1e-05, %v389
    %v391 = vpop.f32.mrf.mxu0
    %392 = vdwg.mxu0
    %v393 = vrsqrt.pop %v390
    %v394 = vlaneseq
    %v395 = vshrl.u32 %v394, 7
    %v396 = vsub.s32 0, %v395
    %v397 = vrot.slane %v393, %v396
    %v398 = vmul.f32 %v321, %v397
    %v400 = vlaneseq
    %v401 = vshrl.u32 %v400, 7
    %v402 = vsub.s32 0, %v401
    %v403 = vrot.slane %v238, %v402
    %v405 = vmul.f32 %v398, %v403
    %v407 = vlaneseq
    %v408 = vshrl.u32 %v407, 7
    %v409 = vsub.s32 0, %v408
    %v410 = vrot.slane %v239, %v409
    %v412 = vadd.f32 %v405, %v410
    %vm413 = vcmask 130048
    %v415 = vsel %vm413, %v412, 0
    %417 = vmatprep.subr.mxu0 0.0
    %418 = vmatpush1.msra.mxu0 0.0
    %419 = vmatprep.subr.mxu0 0.0
    %420 = vmatpush1.msra.mxu0 0.0
    %421 = vmatprep.subr.mxu0 0.0
    %422 = vmatpush1.msra.mxu0 0.0
    %423 = vmatprep.subr.mxu0 0.0
    %424 = vmatpush1.msra.mxu0 0.0
    %425 = vmatprep.subr.mxu0 0.0
    %426 = vmatpush1.msra.mxu0 0.0
    %427 = vmatprep.subr.mxu0 0.0
    %428 = vmatpush1.msra.mxu0 0.0
    %429 = vmatprep.subr.mxu0 0.0
    %430 = vmatpush1.msra.mxu0 0.0
    %431 = vmatprep.subr.mxu0 0.0
    %432 = vmatpush1.msra.mxu0 0.0
    %433 = vmatprep.subr.mxu0 0.0
    %434 = vmatpush1.msra.mxu0 0.0
    %435 = vmatprep.subr.mxu0 0.0
    %436 = vmatpush1.msra.mxu0 0.0
    %437 = vmatprep.subr.mxu0 0.0
    %438 = vmatpush1.msra.mxu0 0.0
    %439 = vmatprep.subr.mxu0 0.0
    %440 = vmatpush1.msra.mxu0 0.0
    %441 = vmatprep.subr.mxu0 0.0
    %442 = vmatpush1.msra.mxu0 0.0
    %443 = vmatprep.subr.mxu0 0.0
    %444 = vmatpush1.msra.mxu0 0.0
    %445 = vmatprep.subr.mxu0 0.0
    %446 = vmatpush1.msra.mxu0 %v191
    %447 = vmatprep.subr.mxu0 0.0
    %448 = vmatpush1.msra.mxu0 %v190
    %449 = vmatprep.subr.mxu0 0.0
    %450 = vmatpush2.msra.mxu0 0.0
    %451 = vmatprep.subr.mxu0 0.0
    %452 = vmatpush2.msra.mxu0 0.0
    %453 = vmatprep.subr.mxu0 0.0
    %454 = vmatpush2.msra.mxu0 0.0
    %455 = vmatprep.subr.mxu0 0.0
    %456 = vmatpush2.msra.mxu0 0.0
    %457 = vmatprep.subr.mxu0 0.0
    %458 = vmatpush2.msra.mxu0 0.0
    %459 = vmatprep.subr.mxu0 0.0
    %460 = vmatpush2.msra.mxu0 0.0
    %461 = vmatprep.subr.mxu0 0.0
    %462 = vmatpush2.msra.mxu0 0.0
    %463 = vmatprep.subr.mxu0 0.0
    %464 = vmatpush2.msra.mxu0 0.0
    %465 = vmatprep.subr.mxu0 0.0
    %466 = vmatpush2.msra.mxu0 0.0
    %467 = vmatprep.subr.mxu0 0.0
    %468 = vmatpush2.msra.mxu0 0.0
    %469 = vmatprep.subr.mxu0 0.0
    %470 = vmatpush2.msra.mxu0 0.0
    %471 = vmatprep.subr.mxu0 0.0
    %472 = vmatpush2.msra.mxu0 0.0
    %473 = vmatprep.subr.mxu0 0.0
    %474 = vmatpush2.msra.mxu0 0.0
    %475 = vmatprep.subr.mxu0 0.0
    %476 = vmatpush2.msra.mxu0 0.0
    %477 = vmatprep.subr.mxu0 0.0
    %478 = vmatpush2.msra.mxu0 0.0
    %479 = vmatprep.subr.mxu0 0.0
    %480 = vmatpush2.msra.mxu0 0.0
    %481 = vmatprep.mubr.f32.mxu0 0.0
    %482 = vmatmul.mubr.f32.gmra.mxu0 %v415
    %v483 = vpop.f32.mrf.mxu0
    %v484 = vadd.f32 0.0, %v483
    %v485 = vpop.f32.mrf.mxu0
    %486 = vdwg.mxu0
    %v488 = vsel %vm413, %v241, 0
    %490 = vmatprep.subr.mxu0 0.0
    %491 = vmatpush1.msra.mxu0 0.0
    %492 = vmatprep.subr.mxu0 0.0
    %493 = vmatpush1.msra.mxu0 0.0
    %494 = vmatprep.subr.mxu0 0.0
    %495 = vmatpush1.msra.mxu0 0.0
    %496 = vmatprep.subr.mxu0 0.0
    %497 = vmatpush1.msra.mxu0 0.0
    %498 = vmatprep.subr.mxu0 0.0
    %499 = vmatpush1.msra.mxu0 0.0
    %500 = vmatprep.subr.mxu0 0.0
    %501 = vmatpush1.msra.mxu0 0.0
    %502 = vmatprep.subr.mxu0 0.0
    %503 = vmatpush1.msra.mxu0 0.0
    %504 = vmatprep.subr.mxu0 0.0
    %505 = vmatpush1.msra.mxu0 0.0
    %506 = vmatprep.subr.mxu0 0.0
    %507 = vmatpush1.msra.mxu0 0.0
    %508 = vmatprep.subr.mxu0 0.0
    %509 = vmatpush1.msra.mxu0 0.0
    %510 = vmatprep.subr.mxu0 0.0
    %511 = vmatpush1.msra.mxu0 0.0
    %512 = vmatprep.subr.mxu0 0.0
    %513 = vmatpush1.msra.mxu0 0.0
    %514 = vmatprep.subr.mxu0 0.0
    %515 = vmatpush1.msra.mxu0 0.0
    %516 = vmatprep.subr.mxu0 0.0
    %517 = vmatpush1.msra.mxu0 0.0
    %518 = vmatprep.subr.mxu0 0.0
    %519 = vmatpush1.msra.mxu0 %v189
    %520 = vmatprep.subr.mxu0 0.0
    %521 = vmatpush1.msra.mxu0 %v188
    %522 = vmatprep.subr.mxu0 0.0
    %523 = vmatpush2.msra.mxu0 0.0
    %524 = vmatprep.subr.mxu0 0.0
    %525 = vmatpush2.msra.mxu0 0.0
    %526 = vmatprep.subr.mxu0 0.0
    %527 = vmatpush2.msra.mxu0 0.0
    %528 = vmatprep.subr.mxu0 0.0
    %529 = vmatpush2.msra.mxu0 0.0
    %530 = vmatprep.subr.mxu0 0.0
    %531 = vmatpush2.msra.mxu0 0.0
    %532 = vmatprep.subr.mxu0 0.0
    %533 = vmatpush2.msra.mxu0 0.0
    %534 = vmatprep.subr.mxu0 0.0
    %535 = vmatpush2.msra.mxu0 0.0
    %536 = vmatprep.subr.mxu0 0.0
    %537 = vmatpush2.msra.mxu0 0.0
    %538 = vmatprep.subr.mxu0 0.0
    %539 = vmatpush2.msra.mxu0 0.0
    %540 = vmatprep.subr.mxu0 0.0
    %541 = vmatpush2.msra.mxu0 0.0
    %542 = vmatprep.subr.mxu0 0.0
    %543 = vmatpush2.msra.mxu0 0.0
    %544 = vmatprep.subr.mxu0 0.0
    %545 = vmatpush2.msra.mxu0 0.0
    %546 = vmatprep.subr.mxu0 0.0
    %547 = vmatpush2.msra.mxu0 0.0
    %548 = vmatprep.subr.mxu0 0.0
    %549 = vmatpush2.msra.mxu0 0.0
    %550 = vmatprep.subr.mxu0 0.0
    %551 = vmatpush2.msra.mxu0 0.0
    %552 = vmatprep.subr.mxu0 0.0
    %553 = vmatpush2.msra.mxu0 0.0
    %554 = vmatprep.mubr.f32.mxu0 0.0
    %555 = vmatmul.mubr.f32.gmra.mxu0 %v488
    %v556 = vpop.f32.mrf.mxu0
    %v557 = vadd.f32 %v484, %v556
    %v558 = vpop.f32.mrf.mxu0
    %559 = vdwg.mxu0
    %v561 = vlaneseq
    %v562 = vshrl.u32 %v561, 7
    %v563 = vsub.s32 0, %v562
    %v564 = vrot.slane %v233, %v563
    %v566 = vadd.f32 %v557, %v564
    %v567 = vxor.u32 %v566, 2147483648
    %v568 = vmul.f32 %v567, 1.442695
    %v569 = vpow.pop %v568
    %v570 = vadd.f32 %v569, 1.0
    %v571 = vrcp.pop %v570
    %v572 = vmul.f32 1.0, %v571
    %574 = vrot.lane.b32.xlu0 %v566, 80
    %v575 = vpop.permute.xlu0 %574
    %v577 = vmul.f32 %v572, %v575
    %579 = vrot.lane.b32.xlu0 %v577, 32
    %v580 = vpop.permute.xlu0 %579
    %v582 = vadd.f32 %v566, %v580
    %v583 = vtanh.pop %v582
    %v584 = vsub.f32 1.0, %v572
    %586 = vrot.lane.b32.xlu0 %v583, 112
    %v587 = vpop.permute.xlu0 %586
    %v589 = vmul.f32 %v584, %v587
    %590 = vrot.lane.b32.xlu0 %v412, 16
    %v591 = vpop.permute.xlu0 %590
    %v593 = vmul.f32 %v572, %v591
    %v594 = vadd.f32 %v589, %v593
    %v595 = vmul.f32 %v594, 1.442695
    %v596 = vpow.pop %v595
    %v597 = vlaneseq
    %v598 = vand.u32 %v597, 127
    %vm599 = vcmp.ge.s32.totalorder %v598, 8
    %601 = vrot.lane.b32.xlu0 %v596, 112
    %v602 = vpop.permute.xlu0 %601
    %605 = vrot.lane.b32.xlu0 %v594, 112
    %v606 = vpop.permute.xlu0 %605
    %v608 = vsel %vm599, %v602, %v606
    %610 = vrot.lane.b32.xlu0 %v242, 24
    %v611 = vpop.permute.xlu0 %610
    %v613 = vmul.f32 %v596, %v611
    %615 = vrot.lane.b32.xlu0 %v613, 120
    %v616 = vpop.permute.xlu0 %615
    %v618 = vadd.f32 %v594, %v616
    %v620 = vlaneseq
    %v621 = vshrl.u32 %v620, 7
    %v622 = vsub.s32 0, %v621
    %v623 = vrot.slane %v234, %v622
    %626 = vrot.lane.b32.xlu0 %v618, 112
    %v627 = vpop.permute.xlu0 %626
    %v628 = vsel %vm243, %v627, 0
    %630 = vmatprep.subr.mxu0 0.0
    %631 = vmatpush1.msra.mxu0 0.0
    %632 = vmatprep.subr.mxu0 0.0
    %633 = vmatpush1.msra.mxu0 0.0
    %634 = vmatprep.subr.mxu0 0.0
    %635 = vmatpush1.msra.mxu0 0.0
    %636 = vmatprep.subr.mxu0 0.0
    %637 = vmatpush1.msra.mxu0 0.0
    %638 = vmatprep.subr.mxu0 0.0
    %639 = vmatpush1.msra.mxu0 0.0
    %640 = vmatprep.subr.mxu0 0.0
    %641 = vmatpush1.msra.mxu0 0.0
    %642 = vmatprep.subr.mxu0 0.0
    %643 = vmatpush1.msra.mxu0 0.0
    %644 = vmatprep.subr.mxu0 0.0
    %645 = vmatpush1.msra.mxu0 0.0
    %646 = vmatprep.subr.mxu0 0.0
    %647 = vmatpush1.msra.mxu0 0.0
    %648 = vmatprep.subr.mxu0 0.0
    %649 = vmatpush1.msra.mxu0 0.0
    %650 = vmatprep.subr.mxu0 0.0
    %651 = vmatpush1.msra.mxu0 0.0
    %652 = vmatprep.subr.mxu0 0.0
    %653 = vmatpush1.msra.mxu0 0.0
    %654 = vmatprep.subr.mxu0 0.0
    %655 = vmatpush1.msra.mxu0 0.0
    %656 = vmatprep.subr.mxu0 0.0
    %657 = vmatpush1.msra.mxu0 0.0
    %658 = vmatprep.subr.mxu0 0.0
    %659 = vmatpush1.msra.mxu0 0.0
    %660 = vmatprep.subr.mxu0 0.0
    %661 = vmatpush1.msra.mxu0 %v192
    %662 = vmatprep.subr.mxu0 0.0
    %663 = vmatpush2.msra.mxu0 0.0
    %664 = vmatprep.subr.mxu0 0.0
    %665 = vmatpush2.msra.mxu0 0.0
    %666 = vmatprep.subr.mxu0 0.0
    %667 = vmatpush2.msra.mxu0 0.0
    %668 = vmatprep.subr.mxu0 0.0
    %669 = vmatpush2.msra.mxu0 0.0
    %670 = vmatprep.subr.mxu0 0.0
    %671 = vmatpush2.msra.mxu0 0.0
    %672 = vmatprep.subr.mxu0 0.0
    %673 = vmatpush2.msra.mxu0 0.0
    %674 = vmatprep.subr.mxu0 0.0
    %675 = vmatpush2.msra.mxu0 0.0
    %676 = vmatprep.subr.mxu0 0.0
    %677 = vmatpush2.msra.mxu0 0.0
    %678 = vmatprep.subr.mxu0 0.0
    %679 = vmatpush2.msra.mxu0 0.0
    %680 = vmatprep.subr.mxu0 0.0
    %681 = vmatpush2.msra.mxu0 0.0
    %682 = vmatprep.subr.mxu0 0.0
    %683 = vmatpush2.msra.mxu0 0.0
    %684 = vmatprep.subr.mxu0 0.0
    %685 = vmatpush2.msra.mxu0 0.0
    %686 = vmatprep.subr.mxu0 0.0
    %687 = vmatpush2.msra.mxu0 0.0
    %688 = vmatprep.subr.mxu0 0.0
    %689 = vmatpush2.msra.mxu0 0.0
    %690 = vmatprep.subr.mxu0 0.0
    %691 = vmatpush2.msra.mxu0 0.0
    %692 = vmatprep.subr.mxu0 0.0
    %693 = vmatpush2.msra.mxu0 0.0
    %694 = vmatprep.mubr.f32.mxu0 0.0
    %695 = vmatmul.mubr.f32.gmra.mxu0 %v628
    %v696 = vpop.f32.mrf.mxu0
    %v697 = vadd.f32 %v623, %v696
    %v698 = vpop.f32.mrf.mxu0
    %699 = vdwg.mxu0
    %v700 = vmax.f32 %v697, 0.0
    %v702 = vlaneseq
    %v703 = vshrl.u32 %v702, 7
    %v704 = vsub.s32 0, %v703
    %v705 = vrot.slane %v235, %v704
    %vm707 = vcmask 261120
    %v709 = vsel %vm707, %v700, 0
    %711 = vmatprep.subr.mxu0 0.0
    %712 = vmatpush1.msra.mxu0 0.0
    %713 = vmatprep.subr.mxu0 0.0
    %714 = vmatpush1.msra.mxu0 0.0
    %715 = vmatprep.subr.mxu0 0.0
    %716 = vmatpush1.msra.mxu0 0.0
    %717 = vmatprep.subr.mxu0 0.0
    %718 = vmatpush1.msra.mxu0 0.0
    %719 = vmatprep.subr.mxu0 0.0
    %720 = vmatpush1.msra.mxu0 0.0
    %721 = vmatprep.subr.mxu0 0.0
    %722 = vmatpush1.msra.mxu0 0.0
    %723 = vmatprep.subr.mxu0 0.0
    %724 = vmatpush1.msra.mxu0 0.0
    %725 = vmatprep.subr.mxu0 0.0
    %726 = vmatpush1.msra.mxu0 0.0
    %727 = vmatprep.subr.mxu0 0.0
    %728 = vmatpush1.msra.mxu0 0.0
    %729 = vmatprep.subr.mxu0 0.0
    %730 = vmatpush1.msra.mxu0 0.0
    %731 = vmatprep.subr.mxu0 0.0
    %732 = vmatpush1.msra.mxu0 0.0
    %733 = vmatprep.subr.mxu0 0.0
    %734 = vmatpush1.msra.mxu0 0.0
    %735 = vmatprep.subr.mxu0 0.0
    %736 = vmatpush1.msra.mxu0 %v196
    %737 = vmatprep.subr.mxu0 0.0
    %738 = vmatpush1.msra.mxu0 %v195
    %739 = vmatprep.subr.mxu0 0.0
    %740 = vmatpush1.msra.mxu0 %v194
    %741 = vmatprep.subr.mxu0 0.0
    %742 = vmatpush1.msra.mxu0 %v193
    %743 = vmatprep.subr.mxu0 0.0
    %744 = vmatpush2.msra.mxu0 0.0
    %745 = vmatprep.subr.mxu0 0.0
    %746 = vmatpush2.msra.mxu0 0.0
    %747 = vmatprep.subr.mxu0 0.0
    %748 = vmatpush2.msra.mxu0 0.0
    %749 = vmatprep.subr.mxu0 0.0
    %750 = vmatpush2.msra.mxu0 0.0
    %751 = vmatprep.subr.mxu0 0.0
    %752 = vmatpush2.msra.mxu0 0.0
    %753 = vmatprep.subr.mxu0 0.0
    %754 = vmatpush2.msra.mxu0 0.0
    %755 = vmatprep.subr.mxu0 0.0
    %756 = vmatpush2.msra.mxu0 0.0
    %757 = vmatprep.subr.mxu0 0.0
    %758 = vmatpush2.msra.mxu0 0.0
    %759 = vmatprep.subr.mxu0 0.0
    %760 = vmatpush2.msra.mxu0 0.0
    %761 = vmatprep.subr.mxu0 0.0
    %762 = vmatpush2.msra.mxu0 0.0
    %763 = vmatprep.subr.mxu0 0.0
    %764 = vmatpush2.msra.mxu0 0.0
    %765 = vmatprep.subr.mxu0 0.0
    %766 = vmatpush2.msra.mxu0 0.0
    %767 = vmatprep.subr.mxu0 0.0
    %768 = vmatpush2.msra.mxu0 0.0
    %769 = vmatprep.subr.mxu0 0.0
    %770 = vmatpush2.msra.mxu0 0.0
    %771 = vmatprep.subr.mxu0 0.0
    %772 = vmatpush2.msra.mxu0 0.0
    %773 = vmatprep.subr.mxu0 0.0
    %774 = vmatpush2.msra.mxu0 0.0
    %775 = vmatprep.mubr.f32.mxu0 0.0
    %776 = vmatmul.mubr.f32.gmra.mxu0 %v709
    %v777 = vpop.f32.mrf.mxu0
    %v778 = vadd.f32 %v705, %v777
    %v779 = vpop.f32.mrf.mxu0
    %780 = vdwg.mxu0
    %v782 = vlaneseq
    %v783 = vshrl.u32 %v782, 7
    %v784 = vsub.s32 0, %v783
    %v785 = vrot.slane %v236, %v784
    %v786 = vlaneseq
    %v787 = vshrl.u32 %v786, 7
    %v788 = vsub.s32 1, %v787
    %v789 = vrot.slane %v236, %v788
    %v793 = vsel %vm707, %v778, 0
    %795 = vmatprep.subr.mxu0 0.0
    %796 = vmatpush1.msra.mxu0 0.0
    %797 = vmatprep.subr.mxu0 0.0
    %798 = vmatpush1.msra.mxu0 0.0
    %799 = vmatprep.subr.mxu0 0.0
    %800 = vmatpush1.msra.mxu0 0.0
    %801 = vmatprep.subr.mxu0 0.0
    %802 = vmatpush1.msra.mxu0 0.0
    %803 = vmatprep.subr.mxu0 0.0
    %804 = vmatpush1.msra.mxu0 0.0
    %805 = vmatprep.subr.mxu0 0.0
    %806 = vmatpush1.msra.mxu0 0.0
    %807 = vmatprep.subr.mxu0 0.0
    %808 = vmatpush1.msra.mxu0 0.0
    %809 = vmatprep.subr.mxu0 0.0
    %810 = vmatpush1.msra.mxu0 0.0
    %811 = vmatprep.subr.mxu0 0.0
    %812 = vmatpush1.msra.mxu0 0.0
    %813 = vmatprep.subr.mxu0 0.0
    %814 = vmatpush1.msra.mxu0 0.0
    %815 = vmatprep.subr.mxu0 0.0
    %816 = vmatpush1.msra.mxu0 0.0
    %817 = vmatprep.subr.mxu0 0.0
    %818 = vmatpush1.msra.mxu0 0.0
    %819 = vmatprep.subr.mxu0 %v204
    %820 = vmatpush1.msra.mxu0 %v203
    %821 = vmatprep.subr.mxu0 %v202
    %822 = vmatpush1.msra.mxu0 %v201
    %823 = vmatprep.subr.mxu0 %v200
    %824 = vmatpush1.msra.mxu0 %v199
    %825 = vmatprep.subr.mxu0 %v198
    %826 = vmatpush1.msra.mxu0 %v197
    %827 = vmatprep.subr.mxu0 0.0
    %828 = vmatpush2.msra.mxu0 0.0
    %829 = vmatprep.subr.mxu0 0.0
    %830 = vmatpush2.msra.mxu0 0.0
    %831 = vmatprep.subr.mxu0 0.0
    %832 = vmatpush2.msra.mxu0 0.0
    %833 = vmatprep.subr.mxu0 0.0
    %834 = vmatpush2.msra.mxu0 0.0
    %835 = vmatprep.subr.mxu0 0.0
    %836 = vmatpush2.msra.mxu0 0.0
    %837 = vmatprep.subr.mxu0 0.0
    %838 = vmatpush2.msra.mxu0 0.0
    %839 = vmatprep.subr.mxu0 0.0
    %840 = vmatpush2.msra.mxu0 0.0
    %841 = vmatprep.subr.mxu0 0.0
    %842 = vmatpush2.msra.mxu0 0.0
    %843 = vmatprep.subr.mxu0 0.0
    %844 = vmatpush2.msra.mxu0 0.0
    %845 = vmatprep.subr.mxu0 0.0
    %846 = vmatpush2.msra.mxu0 0.0
    %847 = vmatprep.subr.mxu0 0.0
    %848 = vmatpush2.msra.mxu0 0.0
    %849 = vmatprep.subr.mxu0 0.0
    %850 = vmatpush2.msra.mxu0 0.0
    %851 = vmatprep.subr.mxu0 0.0
    %852 = vmatpush2.msra.mxu0 0.0
    %853 = vmatprep.subr.mxu0 0.0
    %854 = vmatpush2.msra.mxu0 0.0
    %855 = vmatprep.subr.mxu0 0.0
    %856 = vmatpush2.msra.mxu0 0.0
    %857 = vmatprep.subr.mxu0 0.0
    %858 = vmatpush2.msra.mxu0 0.0
    %859 = vmatprep.mubr.f32.mxu0 0.0
    %860 = vmatmul.mubr.f32.gmra.mxu0 %v793
    %v861 = vpop.f32.mrf.mxu0
    %v862 = vadd.f32 %v785, %v861
    %v863 = vpop.f32.mrf.mxu0
    %v864 = vadd.f32 %v789, %v863
    %865 = vdwg.mxu0
    %v867 = vsel %vm707, %v240, 0
    %869 = vmatprep.subr.mxu0 0.0
    %870 = vmatpush1.msra.mxu0 0.0
    %871 = vmatprep.subr.mxu0 0.0
    %872 = vmatpush1.msra.mxu0 0.0
    %873 = vmatprep.subr.mxu0 0.0
    %874 = vmatpush1.msra.mxu0 0.0
    %875 = vmatprep.subr.mxu0 0.0
    %876 = vmatpush1.msra.mxu0 0.0
    %877 = vmatprep.subr.mxu0 0.0
    %878 = vmatpush1.msra.mxu0 0.0
    %879 = vmatprep.subr.mxu0 0.0
    %880 = vmatpush1.msra.mxu0 0.0
    %881 = vmatprep.subr.mxu0 0.0
    %882 = vmatpush1.msra.mxu0 0.0
    %883 = vmatprep.subr.mxu0 0.0
    %884 = vmatpush1.msra.mxu0 0.0
    %885 = vmatprep.subr.mxu0 0.0
    %886 = vmatpush1.msra.mxu0 0.0
    %887 = vmatprep.subr.mxu0 0.0
    %888 = vmatpush1.msra.mxu0 0.0
    %889 = vmatprep.subr.mxu0 0.0
    %890 = vmatpush1.msra.mxu0 0.0
    %891 = vmatprep.subr.mxu0 0.0
    %892 = vmatpush1.msra.mxu0 0.0
    %893 = vmatprep.subr.mxu0 0.0
    %894 = vmatpush1.msra.mxu0 %v212
    %895 = vmatprep.subr.mxu0 0.0
    %896 = vmatpush1.msra.mxu0 %v211
    %897 = vmatprep.subr.mxu0 0.0
    %898 = vmatpush1.msra.mxu0 %v210
    %899 = vmatprep.subr.mxu0 0.0
    %900 = vmatpush1.msra.mxu0 %v209
    %901 = vmatprep.subr.mxu0 0.0
    %902 = vmatpush2.msra.mxu0 0.0
    %903 = vmatprep.subr.mxu0 0.0
    %904 = vmatpush2.msra.mxu0 0.0
    %905 = vmatprep.subr.mxu0 0.0
    %906 = vmatpush2.msra.mxu0 0.0
    %907 = vmatprep.subr.mxu0 0.0
    %908 = vmatpush2.msra.mxu0 0.0
    %909 = vmatprep.subr.mxu0 0.0
    %910 = vmatpush2.msra.mxu0 0.0
    %911 = vmatprep.subr.mxu0 0.0
    %912 = vmatpush2.msra.mxu0 0.0
    %913 = vmatprep.subr.mxu0 0.0
    %914 = vmatpush2.msra.mxu0 0.0
    %915 = vmatprep.subr.mxu0 0.0
    %916 = vmatpush2.msra.mxu0 0.0
    %917 = vmatprep.subr.mxu0 0.0
    %918 = vmatpush2.msra.mxu0 0.0
    %919 = vmatprep.subr.mxu0 0.0
    %920 = vmatpush2.msra.mxu0 0.0
    %921 = vmatprep.subr.mxu0 0.0
    %922 = vmatpush2.msra.mxu0 0.0
    %923 = vmatprep.subr.mxu0 0.0
    %924 = vmatpush2.msra.mxu0 0.0
    %925 = vmatprep.subr.mxu0 0.0
    %926 = vmatpush2.msra.mxu0 0.0
    %927 = vmatprep.subr.mxu0 0.0
    %928 = vmatpush2.msra.mxu0 0.0
    %929 = vmatprep.subr.mxu0 0.0
    %930 = vmatpush2.msra.mxu0 0.0
    %931 = vmatprep.subr.mxu0 0.0
    %932 = vmatpush2.msra.mxu0 0.0
    %933 = vmatprep.mubr.f32.mxu0 0.0
    %934 = vmatmul.mubr.f32.gmra.mxu0 %v867
    %v935 = vpop.f32.mrf.mxu0
    %v936 = vadd.f32 0.0, %v935
    %v937 = vpop.f32.mrf.mxu0
    %938 = vdwg.mxu0
    %939 = vrot.lane.b32.xlu0 %v241, 112
    %v940 = vpop.permute.xlu0 %939
    %v941 = vsel %vm707, %v940, 0
    %943 = vmatprep.subr.mxu0 0.0
    %944 = vmatpush1.msra.mxu0 0.0
    %945 = vmatprep.subr.mxu0 0.0
    %946 = vmatpush1.msra.mxu0 0.0
    %947 = vmatprep.subr.mxu0 0.0
    %948 = vmatpush1.msra.mxu0 0.0
    %949 = vmatprep.subr.mxu0 0.0
    %950 = vmatpush1.msra.mxu0 0.0
    %951 = vmatprep.subr.mxu0 0.0
    %952 = vmatpush1.msra.mxu0 0.0
    %953 = vmatprep.subr.mxu0 0.0
    %954 = vmatpush1.msra.mxu0 0.0
    %955 = vmatprep.subr.mxu0 0.0
    %956 = vmatpush1.msra.mxu0 0.0
    %957 = vmatprep.subr.mxu0 0.0
    %958 = vmatpush1.msra.mxu0 0.0
    %959 = vmatprep.subr.mxu0 0.0
    %960 = vmatpush1.msra.mxu0 0.0
    %961 = vmatprep.subr.mxu0 0.0
    %962 = vmatpush1.msra.mxu0 0.0
    %963 = vmatprep.subr.mxu0 0.0
    %964 = vmatpush1.msra.mxu0 0.0
    %965 = vmatprep.subr.mxu0 0.0
    %966 = vmatpush1.msra.mxu0 0.0
    %967 = vmatprep.subr.mxu0 0.0
    %968 = vmatpush1.msra.mxu0 %v208
    %969 = vmatprep.subr.mxu0 0.0
    %970 = vmatpush1.msra.mxu0 %v207
    %971 = vmatprep.subr.mxu0 0.0
    %972 = vmatpush1.msra.mxu0 %v206
    %973 = vmatprep.subr.mxu0 0.0
    %974 = vmatpush1.msra.mxu0 %v205
    %975 = vmatprep.subr.mxu0 0.0
    %976 = vmatpush2.msra.mxu0 0.0
    %977 = vmatprep.subr.mxu0 0.0
    %978 = vmatpush2.msra.mxu0 0.0
    %979 = vmatprep.subr.mxu0 0.0
    %980 = vmatpush2.msra.mxu0 0.0
    %981 = vmatprep.subr.mxu0 0.0
    %982 = vmatpush2.msra.mxu0 0.0
    %983 = vmatprep.subr.mxu0 0.0
    %984 = vmatpush2.msra.mxu0 0.0
    %985 = vmatprep.subr.mxu0 0.0
    %986 = vmatpush2.msra.mxu0 0.0
    %987 = vmatprep.subr.mxu0 0.0
    %988 = vmatpush2.msra.mxu0 0.0
    %989 = vmatprep.subr.mxu0 0.0
    %990 = vmatpush2.msra.mxu0 0.0
    %991 = vmatprep.subr.mxu0 0.0
    %992 = vmatpush2.msra.mxu0 0.0
    %993 = vmatprep.subr.mxu0 0.0
    %994 = vmatpush2.msra.mxu0 0.0
    %995 = vmatprep.subr.mxu0 0.0
    %996 = vmatpush2.msra.mxu0 0.0
    %997 = vmatprep.subr.mxu0 0.0
    %998 = vmatpush2.msra.mxu0 0.0
    %999 = vmatprep.subr.mxu0 0.0
    %1000 = vmatpush2.msra.mxu0 0.0
    %1001 = vmatprep.subr.mxu0 0.0
    %1002 = vmatpush2.msra.mxu0 0.0
    %1003 = vmatprep.subr.mxu0 0.0
    %1004 = vmatpush2.msra.mxu0 0.0
    %1005 = vmatprep.subr.mxu0 0.0
    %1006 = vmatpush2.msra.mxu0 0.0
    %1007 = vmatprep.mubr.f32.mxu0 0.0
    %1008 = vmatmul.mubr.f32.gmra.mxu0 %v941
    %v1009 = vpop.f32.mrf.mxu0
    %v1010 = vadd.f32 %v936, %v1009
    %v1011 = vpop.f32.mrf.mxu0
    %1012 = vdwg.mxu0
    %v1014 = vlaneseq
    %v1015 = vshrl.u32 %v1014, 7
    %v1016 = vsub.s32 0, %v1015
    %v1017 = vrot.slane %v237, %v1016
    %v1019 = vadd.f32 %v1010, %v1017
    %v1020 = vxor.u32 %v1019, 2147483648
    %v1021 = vmul.f32 %v1020, 1.442695
    %v1022 = vpow.pop %v1021
    %v1023 = vadd.f32 %v1022, 1.0
    %v1024 = vrcp.pop %v1023
    %v1025 = vmul.f32 1.0, %v1024
    %1027 = vrot.lane.b32.xlu0 %v1019, 32
    %v1028 = vpop.permute.xlu0 %1027
    %v1030 = vmul.f32 %v1025, %v1028
    %1032 = vrot.lane.b32.xlu0 %v1030, 64
    %v1033 = vpop.permute.xlu0 %1032
    %v1035 = vadd.f32 %v1019, %v1033
    %v1036 = vtanh.pop %v1035
    %v1037 = vsub.f32 1.0, %v1025
    %1039 = vrot.lane.b32.xlu0 %v1036, 96
    %v1040 = vpop.permute.xlu0 %1039
    %v1042 = vmul.f32 %v1037, %v1040
    %1043 = vrot.lane.b32.xlu0 %v240, 32
    %v1044 = vpop.permute.xlu0 %1043
    %v1046 = vmul.f32 %v1025, %v1044
    %v1047 = vadd.f32 %v1042, %v1046
    %1049 = vrot.lane.b32.xlu0 %v1047, 96
    %v1050 = vpop.permute.xlu0 %1049
    %v1051 = vsel %vm707, %v1050, 0
    %1053 = vmatprep.subr.mxu0 0.0
    %1054 = vmatpush1.msra.mxu0 0.0
    %1055 = vmatprep.subr.mxu0 0.0
    %1056 = vmatpush1.msra.mxu0 0.0
    %1057 = vmatprep.subr.mxu0 0.0
    %1058 = vmatpush1.msra.mxu0 0.0
    %1059 = vmatprep.subr.mxu0 0.0
    %1060 = vmatpush1.msra.mxu0 0.0
    %1061 = vmatprep.subr.mxu0 0.0
    %1062 = vmatpush1.msra.mxu0 0.0
    %1063 = vmatprep.subr.mxu0 0.0
    %1064 = vmatpush1.msra.mxu0 0.0
    %1065 = vmatprep.subr.mxu0 0.0
    %1066 = vmatpush1.msra.mxu0 0.0
    %1067 = vmatprep.subr.mxu0 0.0
    %1068 = vmatpush1.msra.mxu0 0.0
    %1069 = vmatprep.subr.mxu0 0.0
    %1070 = vmatpush1.msra.mxu0 0.0
    %1071 = vmatprep.subr.mxu0 0.0
    %1072 = vmatpush1.msra.mxu0 0.0
    %1073 = vmatprep.subr.mxu0 0.0
    %1074 = vmatpush1.msra.mxu0 0.0
    %1075 = vmatprep.subr.mxu0 0.0
    %1076 = vmatpush1.msra.mxu0 0.0
    %1077 = vmatprep.subr.mxu0 0.0
    %1078 = vmatpush1.msra.mxu0 %v216
    %1079 = vmatprep.subr.mxu0 0.0
    %1080 = vmatpush1.msra.mxu0 %v215
    %1081 = vmatprep.subr.mxu0 0.0
    %1082 = vmatpush1.msra.mxu0 %v214
    %1083 = vmatprep.subr.mxu0 0.0
    %1084 = vmatpush1.msra.mxu0 %v213
    %1085 = vmatprep.subr.mxu0 0.0
    %1086 = vmatpush2.msra.mxu0 0.0
    %1087 = vmatprep.subr.mxu0 0.0
    %1088 = vmatpush2.msra.mxu0 0.0
    %1089 = vmatprep.subr.mxu0 0.0
    %1090 = vmatpush2.msra.mxu0 0.0
    %1091 = vmatprep.subr.mxu0 0.0
    %1092 = vmatpush2.msra.mxu0 0.0
    %1093 = vmatprep.subr.mxu0 0.0
    %1094 = vmatpush2.msra.mxu0 0.0
    %1095 = vmatprep.subr.mxu0 0.0
    %1096 = vmatpush2.msra.mxu0 0.0
    %1097 = vmatprep.subr.mxu0 0.0
    %1098 = vmatpush2.msra.mxu0 0.0
    %1099 = vmatprep.subr.mxu0 0.0
    %1100 = vmatpush2.msra.mxu0 0.0
    %1101 = vmatprep.subr.mxu0 0.0
    %1102 = vmatpush2.msra.mxu0 0.0
    %1103 = vmatprep.subr.mxu0 0.0
    %1104 = vmatpush2.msra.mxu0 0.0
    %1105 = vmatprep.subr.mxu0 0.0
    %1106 = vmatpush2.msra.mxu0 0.0
    %1107 = vmatprep.subr.mxu0 0.0
    %1108 = vmatpush2.msra.mxu0 0.0
    %1109 = vmatprep.subr.mxu0 0.0
    %1110 = vmatpush2.msra.mxu0 0.0
    %1111 = vmatprep.subr.mxu0 0.0
    %1112 = vmatpush2.msra.mxu0 0.0
    %1113 = vmatprep.subr.mxu0 0.0
    %1114 = vmatpush2.msra.mxu0 0.0
    %1115 = vmatprep.subr.mxu0 0.0
    %1116 = vmatpush2.msra.mxu0 0.0
    %1117 = vmatprep.mubr.f32.mxu0 0.0
    %1118 = vmatmul.mubr.f32.gmra.mxu0 %v1051
    %v1119 = vpop.f32.mrf.mxu0
    %v1120 = vadd.f32 0.0, %v1119
    %v1121 = vpop.f32.mrf.mxu0
    %1122 = vdwg.mxu0
    %v1123 = vmul.f32 %v862, %v1120
    %1124 = vmatprep.subr.mxu0 0.0
    %1125 = vmatpush1.msra.mxu0 %v232
    %1126 = vmatprep.subr.mxu0 0.0
    %1127 = vmatpush1.msra.mxu0 %v231
    %1128 = vmatprep.subr.mxu0 0.0
    %1129 = vmatpush1.msra.mxu0 %v230
    %1130 = vmatprep.subr.mxu0 0.0
    %1131 = vmatpush1.msra.mxu0 %v229
    %1132 = vmatprep.subr.mxu0 0.0
    %1133 = vmatpush1.msra.mxu0 %v228
    %1134 = vmatprep.subr.mxu0 0.0
    %1135 = vmatpush1.msra.mxu0 %v227
    %1136 = vmatprep.subr.mxu0 0.0
    %1137 = vmatpush1.msra.mxu0 %v226
    %1138 = vmatprep.subr.mxu0 0.0
    %1139 = vmatpush1.msra.mxu0 %v225
    %1140 = vmatprep.subr.mxu0 0.0
    %1141 = vmatpush1.msra.mxu0 %v224
    %1142 = vmatprep.subr.mxu0 0.0
    %1143 = vmatpush1.msra.mxu0 %v223
    %1144 = vmatprep.subr.mxu0 0.0
    %1145 = vmatpush1.msra.mxu0 %v222
    %1146 = vmatprep.subr.mxu0 0.0
    %1147 = vmatpush1.msra.mxu0 %v221
    %1148 = vmatprep.subr.mxu0 0.0
    %1149 = vmatpush1.msra.mxu0 %v220
    %1150 = vmatprep.subr.mxu0 0.0
    %1151 = vmatpush1.msra.mxu0 %v219
    %1152 = vmatprep.subr.mxu0 0.0
    %1153 = vmatpush1.msra.mxu0 %v218
    %1154 = vmatprep.subr.mxu0 0.0
    %1155 = vmatpush1.msra.mxu0 %v217
    %1156 = vmatprep.subr.mxu0 0.0
    %1157 = vmatpush2.msra.mxu0 0.0
    %1158 = vmatprep.subr.mxu0 0.0
    %1159 = vmatpush2.msra.mxu0 0.0
    %1160 = vmatprep.subr.mxu0 0.0
    %1161 = vmatpush2.msra.mxu0 0.0
    %1162 = vmatprep.subr.mxu0 0.0
    %1163 = vmatpush2.msra.mxu0 0.0
    %1164 = vmatprep.subr.mxu0 0.0
    %1165 = vmatpush2.msra.mxu0 0.0
    %1166 = vmatprep.subr.mxu0 0.0
    %1167 = vmatpush2.msra.mxu0 0.0
    %1168 = vmatprep.subr.mxu0 0.0
    %1169 = vmatpush2.msra.mxu0 0.0
    %1170 = vmatprep.subr.mxu0 0.0
    %1171 = vmatpush2.msra.mxu0 0.0
    %1172 = vmatprep.subr.mxu0 0.0
    %1173 = vmatpush2.msra.mxu0 0.0
    %1174 = vmatprep.subr.mxu0 0.0
    %1175 = vmatpush2.msra.mxu0 0.0
    %1176 = vmatprep.subr.mxu0 0.0
    %1177 = vmatpush2.msra.mxu0 0.0
    %1178 = vmatprep.subr.mxu0 0.0
    %1179 = vmatpush2.msra.mxu0 0.0
    %1180 = vmatprep.subr.mxu0 0.0
    %1181 = vmatpush2.msra.mxu0 0.0
    %1182 = vmatprep.subr.mxu0 0.0
    %1183 = vmatpush2.msra.mxu0 0.0
    %1184 = vmatprep.subr.mxu0 0.0
    %1185 = vmatpush2.msra.mxu0 0.0
    %1186 = vmatprep.subr.mxu0 0.0
    %1187 = vmatpush2.msra.mxu0 0.0
    %1188 = vmatprep.mubr.f32.mxu0 0.0
    %1189 = vmatmul.mubr.f32.gmra.mxu0 %v1123
    %v1190 = vpop.f32.mrf.mxu0
    %v1191 = vadd.f32 %v864, %v1190
    %v1192 = vpop.f32.mrf.mxu0
    %1193 = vdwg.mxu0
    %vm1194 = vcmask 31744
    %1195 = vst.msk [vmem:[%s20] sm:$0xff] %vm1194, %v1191
    %1197 = vst.msk [vmem:[#allocation17] sm:$0xff] %vm707, %v1050
    %1198 = vst.msk [vmem:[#allocation18] sm:$0xff] %vm413, %v608
    %s1199 = scalar_lea.vmem %s0, 8
    %v1200 = vld [vmem:[%s1199] sm:$0xff]
    %s1201 = scalar_lea.vmem %s1, 8
    %v1202 = vld [vmem:[%s1201] sm:$0xff]
    %1203 = vmatprep.subr.mxu0 0.0
    %1204 = vmatpush1.msra.mxu0 0.0
    %1205 = vmatprep.subr.mxu0 0.0
    %1206 = vmatpush1.msra.mxu0 0.0
    %1207 = vmatprep.subr.mxu0 0.0
    %1208 = vmatpush1.msra.mxu0 0.0
    %1209 = vmatprep.subr.mxu0 0.0
    %1210 = vmatpush1.msra.mxu0 0.0
    %1211 = vmatprep.subr.mxu0 0.0
    %1212 = vmatpush1.msra.mxu0 0.0
    %1213 = vmatprep.subr.mxu0 0.0
    %1214 = vmatpush1.msra.mxu0 0.0
    %1215 = vmatprep.subr.mxu0 0.0
    %1216 = vmatpush1.msra.mxu0 0.0
    %1217 = vmatprep.subr.mxu0 0.0
    %1218 = vmatpush1.msra.mxu0 0.0
    %1219 = vmatprep.subr.mxu0 0.0
    %1220 = vmatpush1.msra.mxu0 0.0
    %1221 = vmatprep.subr.mxu0 0.0
    %1222 = vmatpush1.msra.mxu0 0.0
    %1223 = vmatprep.subr.mxu0 0.0
    %1224 = vmatpush1.msra.mxu0 0.0
    %1225 = vmatprep.subr.mxu0 0.0
    %1226 = vmatpush1.msra.mxu0 0.0
    %1227 = vmatprep.subr.mxu0 0.0
    %1228 = vmatpush1.msra.mxu0 0.0
    %1229 = vmatprep.subr.mxu0 0.0
    %1230 = vmatpush1.msra.mxu0 0.0
    %1231 = vmatprep.subr.mxu0 0.0
    %1232 = vmatpush1.msra.mxu0 0.0
    %1233 = vmatprep.subr.mxu0 0.0
    %1234 = vmatpush1.msra.mxu0 %v608
    %1235 = vmatprep.subr.mxu0 0.0
    %1236 = vmatpush2.msra.mxu0 0.0
    %1237 = vmatprep.subr.mxu0 0.0
    %1238 = vmatpush2.msra.mxu0 0.0
    %1239 = vmatprep.subr.mxu0 0.0
    %1240 = vmatpush2.msra.mxu0 0.0
    %1241 = vmatprep.subr.mxu0 0.0
    %1242 = vmatpush2.msra.mxu0 0.0
    %1243 = vmatprep.subr.mxu0 0.0
    %1244 = vmatpush2.msra.mxu0 0.0
    %1245 = vmatprep.subr.mxu0 0.0
    %1246 = vmatpush2.msra.mxu0 0.0
    %1247 = vmatprep.subr.mxu0 0.0
    %1248 = vmatpush2.msra.mxu0 0.0
    %1249 = vmatprep.subr.mxu0 0.0
    %1250 = vmatpush2.msra.mxu0 0.0
    %1251 = vmatprep.subr.mxu0 0.0
    %1252 = vmatpush2.msra.mxu0 0.0
    %1253 = vmatprep.subr.mxu0 0.0
    %1254 = vmatpush2.msra.mxu0 0.0
    %1255 = vmatprep.subr.mxu0 0.0
    %1256 = vmatpush2.msra.mxu0 0.0
    %1257 = vmatprep.subr.mxu0 0.0
    %1258 = vmatpush2.msra.mxu0 0.0
    %1259 = vmatprep.subr.mxu0 0.0
    %1260 = vmatpush2.msra.mxu0 0.0
    %1261 = vmatprep.subr.mxu0 0.0
    %1262 = vmatpush2.msra.mxu0 0.0
    %1263 = vmatprep.subr.mxu0 0.0
    %1264 = vmatpush2.msra.mxu0 0.0
    %1265 = vmatprep.subr.mxu0 0.0
    %1266 = vmatpush2.msra.mxu0 0.0
    %1267 = vmatprep.mubr.f32.mxu0 0.0
    %1268 = vmatmul.mubr.f32.gmra.mxu0 %v245
    %v1269 = vpop.f32.mrf.mxu0
    %v1270 = vadd.f32 0.0, %v1269
    %v1271 = vpop.f32.mrf.mxu0
    %1272 = vdwg.mxu0
    %v1273 = vlaneseq
    %v1274 = vshrl.u32 %v1273, 7
    %v1275 = vsub.s32 0, %v1274
    %v1276 = vrot.slane %v1270, %v1275
    %v1277 = vsub.f32 %v608, %v1276
    %v1278 = vmul.f32 %v1277, %v1277
    %1279 = vmatprep.subr.mxu0 0.0
    %1280 = vmatpush1.msra.mxu0 0.0
    %1281 = vmatprep.subr.mxu0 0.0
    %1282 = vmatpush1.msra.mxu0 0.0
    %1283 = vmatprep.subr.mxu0 0.0
    %1284 = vmatpush1.msra.mxu0 0.0
    %1285 = vmatprep.subr.mxu0 0.0
    %1286 = vmatpush1.msra.mxu0 0.0
    %1287 = vmatprep.subr.mxu0 0.0
    %1288 = vmatpush1.msra.mxu0 0.0
    %1289 = vmatprep.subr.mxu0 0.0
    %1290 = vmatpush1.msra.mxu0 0.0
    %1291 = vmatprep.subr.mxu0 0.0
    %1292 = vmatpush1.msra.mxu0 0.0
    %1293 = vmatprep.subr.mxu0 0.0
    %1294 = vmatpush1.msra.mxu0 0.0
    %1295 = vmatprep.subr.mxu0 0.0
    %1296 = vmatpush1.msra.mxu0 0.0
    %1297 = vmatprep.subr.mxu0 0.0
    %1298 = vmatpush1.msra.mxu0 0.0
    %1299 = vmatprep.subr.mxu0 0.0
    %1300 = vmatpush1.msra.mxu0 0.0
    %1301 = vmatprep.subr.mxu0 0.0
    %1302 = vmatpush1.msra.mxu0 0.0
    %1303 = vmatprep.subr.mxu0 0.0
    %1304 = vmatpush1.msra.mxu0 0.0
    %1305 = vmatprep.subr.mxu0 0.0
    %1306 = vmatpush1.msra.mxu0 0.0
    %1307 = vmatprep.subr.mxu0 0.0
    %1308 = vmatpush1.msra.mxu0 0.0
    %1309 = vmatprep.subr.mxu0 0.0
    %1310 = vmatpush1.msra.mxu0 %v1278
    %1311 = vmatprep.subr.mxu0 0.0
    %1312 = vmatpush2.msra.mxu0 0.0
    %1313 = vmatprep.subr.mxu0 0.0
    %1314 = vmatpush2.msra.mxu0 0.0
    %1315 = vmatprep.subr.mxu0 0.0
    %1316 = vmatpush2.msra.mxu0 0.0
    %1317 = vmatprep.subr.mxu0 0.0
    %1318 = vmatpush2.msra.mxu0 0.0
    %1319 = vmatprep.subr.mxu0 0.0
    %1320 = vmatpush2.msra.mxu0 0.0
    %1321 = vmatprep.subr.mxu0 0.0
    %1322 = vmatpush2.msra.mxu0 0.0
    %1323 = vmatprep.subr.mxu0 0.0
    %1324 = vmatpush2.msra.mxu0 0.0
    %1325 = vmatprep.subr.mxu0 0.0
    %1326 = vmatpush2.msra.mxu0 0.0
    %1327 = vmatprep.subr.mxu0 0.0
    %1328 = vmatpush2.msra.mxu0 0.0
    %1329 = vmatprep.subr.mxu0 0.0
    %1330 = vmatpush2.msra.mxu0 0.0
    %1331 = vmatprep.subr.mxu0 0.0
    %1332 = vmatpush2.msra.mxu0 0.0
    %1333 = vmatprep.subr.mxu0 0.0
    %1334 = vmatpush2.msra.mxu0 0.0
    %1335 = vmatprep.subr.mxu0 0.0
    %1336 = vmatpush2.msra.mxu0 0.0
    %1337 = vmatprep.subr.mxu0 0.0
    %1338 = vmatpush2.msra.mxu0 0.0
    %1339 = vmatprep.subr.mxu0 0.0
    %1340 = vmatpush2.msra.mxu0 0.0
    %1341 = vmatprep.subr.mxu0 0.0
    %1342 = vmatpush2.msra.mxu0 0.0
    %1343 = vmatprep.mubr.f32.mxu0 0.0
    %1344 = vmatmul.mubr.f32.gmra.mxu0 %v245
    %v1345 = vpop.f32.mrf.mxu0
    %v1346 = vadd.f32 1e-05, %v1345
    %v1347 = vpop.f32.mrf.mxu0
    %1348 = vdwg.mxu0
    %v1349 = vrsqrt.pop %v1346
    %v1350 = vlaneseq
    %v1351 = vshrl.u32 %v1350, 7
    %v1352 = vsub.s32 0, %v1351
    %v1353 = vrot.slane %v1349, %v1352
    %v1354 = vmul.f32 %v1277, %v1353
    %v1355 = vmul.f32 %v1354, %v403
    %v1356 = vadd.f32 %v1355, %v410
    %v1358 = vsel %vm413, %v1356, 0
    %1360 = vmatprep.subr.mxu0 0.0
    %1361 = vmatpush1.msra.mxu0 0.0
    %1362 = vmatprep.subr.mxu0 0.0
    %1363 = vmatpush1.msra.mxu0 0.0
    %1364 = vmatprep.subr.mxu0 0.0
    %1365 = vmatpush1.msra.mxu0 0.0
    %1366 = vmatprep.subr.mxu0 0.0
    %1367 = vmatpush1.msra.mxu0 0.0
    %1368 = vmatprep.subr.mxu0 0.0
    %1369 = vmatpush1.msra.mxu0 0.0
    %1370 = vmatprep.subr.mxu0 0.0
    %1371 = vmatpush1.msra.mxu0 0.0
    %1372 = vmatprep.subr.mxu0 0.0
    %1373 = vmatpush1.msra.mxu0 0.0
    %1374 = vmatprep.subr.mxu0 0.0
    %1375 = vmatpush1.msra.mxu0 0.0
    %1376 = vmatprep.subr.mxu0 0.0
    %1377 = vmatpush1.msra.mxu0 0.0
    %1378 = vmatprep.subr.mxu0 0.0
    %1379 = vmatpush1.msra.mxu0 0.0
    %1380 = vmatprep.subr.mxu0 0.0
    %1381 = vmatpush1.msra.mxu0 0.0
    %1382 = vmatprep.subr.mxu0 0.0
    %1383 = vmatpush1.msra.mxu0 0.0
    %1384 = vmatprep.subr.mxu0 0.0
    %1385 = vmatpush1.msra.mxu0 0.0
    %1386 = vmatprep.subr.mxu0 0.0
    %1387 = vmatpush1.msra.mxu0 0.0
    %1388 = vmatprep.subr.mxu0 0.0
    %1389 = vmatpush1.msra.mxu0 %v191
    %1390 = vmatprep.subr.mxu0 0.0
    %1391 = vmatpush1.msra.mxu0 %v190
    %1392 = vmatprep.subr.mxu0 0.0
    %1393 = vmatpush2.msra.mxu0 0.0
    %1394 = vmatprep.subr.mxu0 0.0
    %1395 = vmatpush2.msra.mxu0 0.0
    %1396 = vmatprep.subr.mxu0 0.0
    %1397 = vmatpush2.msra.mxu0 0.0
    %1398 = vmatprep.subr.mxu0 0.0
    %1399 = vmatpush2.msra.mxu0 0.0
    %1400 = vmatprep.subr.mxu0 0.0
    %1401 = vmatpush2.msra.mxu0 0.0
    %1402 = vmatprep.subr.mxu0 0.0
    %1403 = vmatpush2.msra.mxu0 0.0
    %1404 = vmatprep.subr.mxu0 0.0
    %1405 = vmatpush2.msra.mxu0 0.0
    %1406 = vmatprep.subr.mxu0 0.0
    %1407 = vmatpush2.msra.mxu0 0.0
    %1408 = vmatprep.subr.mxu0 0.0
    %1409 = vmatpush2.msra.mxu0 0.0
    %1410 = vmatprep.subr.mxu0 0.0
    %1411 = vmatpush2.msra.mxu0 0.0
    %1412 = vmatprep.subr.mxu0 0.0
    %1413 = vmatpush2.msra.mxu0 0.0
    %1414 = vmatprep.subr.mxu0 0.0
    %1415 = vmatpush2.msra.mxu0 0.0
    %1416 = vmatprep.subr.mxu0 0.0
    %1417 = vmatpush2.msra.mxu0 0.0
    %1418 = vmatprep.subr.mxu0 0.0
    %1419 = vmatpush2.msra.mxu0 0.0
    %1420 = vmatprep.subr.mxu0 0.0
    %1421 = vmatpush2.msra.mxu0 0.0
    %1422 = vmatprep.subr.mxu0 0.0
    %1423 = vmatpush2.msra.mxu0 0.0
    %1424 = vmatprep.mubr.f32.mxu0 0.0
    %1425 = vmatmul.mubr.f32.gmra.mxu0 %v1358
    %v1426 = vpop.f32.mrf.mxu0
    %v1427 = vadd.f32 0.0, %v1426
    %v1428 = vpop.f32.mrf.mxu0
    %1429 = vdwg.mxu0
    %v1431 = vsel %vm413, %v1200, 0
    %1433 = vmatprep.subr.mxu0 0.0
    %1434 = vmatpush1.msra.mxu0 0.0
    %1435 = vmatprep.subr.mxu0 0.0
    %1436 = vmatpush1.msra.mxu0 0.0
    %1437 = vmatprep.subr.mxu0 0.0
    %1438 = vmatpush1.msra.mxu0 0.0
    %1439 = vmatprep.subr.mxu0 0.0
    %1440 = vmatpush1.msra.mxu0 0.0
    %1441 = vmatprep.subr.mxu0 0.0
    %1442 = vmatpush1.msra.mxu0 0.0
    %1443 = vmatprep.subr.mxu0 0.0
    %1444 = vmatpush1.msra.mxu0 0.0
    %1445 = vmatprep.subr.mxu0 0.0
    %1446 = vmatpush1.msra.mxu0 0.0
    %1447 = vmatprep.subr.mxu0 0.0
    %1448 = vmatpush1.msra.mxu0 0.0
    %1449 = vmatprep.subr.mxu0 0.0
    %1450 = vmatpush1.msra.mxu0 0.0
    %1451 = vmatprep.subr.mxu0 0.0
    %1452 = vmatpush1.msra.mxu0 0.0
    %1453 = vmatprep.subr.mxu0 0.0
    %1454 = vmatpush1.msra.mxu0 0.0
    %1455 = vmatprep.subr.mxu0 0.0
    %1456 = vmatpush1.msra.mxu0 0.0
    %1457 = vmatprep.subr.mxu0 0.0
    %1458 = vmatpush1.msra.mxu0 0.0
    %1459 = vmatprep.subr.mxu0 0.0
    %1460 = vmatpush1.msra.mxu0 0.0
    %1461 = vmatprep.subr.mxu0 0.0
    %1462 = vmatpush1.msra.mxu0 %v189
    %1463 = vmatprep.subr.mxu0 0.0
    %1464 = vmatpush1.msra.mxu0 %v188
    %1465 = vmatprep.subr.mxu0 0.0
    %1466 = vmatpush2.msra.mxu0 0.0
    %1467 = vmatprep.subr.mxu0 0.0
    %1468 = vmatpush2.msra.mxu0 0.0
    %1469 = vmatprep.subr.mxu0 0.0
    %1470 = vmatpush2.msra.mxu0 0.0
    %1471 = vmatprep.subr.mxu0 0.0
    %1472 = vmatpush2.msra.mxu0 0.0
    %1473 = vmatprep.subr.mxu0 0.0
    %1474 = vmatpush2.msra.mxu0 0.0
    %1475 = vmatprep.subr.mxu0 0.0
    %1476 = vmatpush2.msra.mxu0 0.0
    %1477 = vmatprep.subr.mxu0 0.0
    %1478 = vmatpush2.msra.mxu0 0.0
    %1479 = vmatprep.subr.mxu0 0.0
    %1480 = vmatpush2.msra.mxu0 0.0
    %1481 = vmatprep.subr.mxu0 0.0
    %1482 = vmatpush2.msra.mxu0 0.0
    %1483 = vmatprep.subr.mxu0 0.0
    %1484 = vmatpush2.msra.mxu0 0.0
    %1485 = vmatprep.subr.mxu0 0.0
    %1486 = vmatpush2.msra.mxu0 0.0
    %1487 = vmatprep.subr.mxu0 0.0
    %1488 = vmatpush2.msra.mxu0 0.0
    %1489 = vmatprep.subr.mxu0 0.0
    %1490 = vmatpush2.msra.mxu0 0.0
    %1491 = vmatprep.subr.mxu0 0.0
    %1492 = vmatpush2.msra.mxu0 0.0
    %1493 = vmatprep.subr.mxu0 0.0
    %1494 = vmatpush2.msra.mxu0 0.0
    %1495 = vmatprep.subr.mxu0 0.0
    %1496 = vmatpush2.msra.mxu0 0.0
    %1497 = vmatprep.mubr.f32.mxu0 0.0
    %1498 = vmatmul.mubr.f32.gmra.mxu0 %v1431
    %v1499 = vpop.f32.mrf.mxu0
    %v1500 = vadd.f32 %v1427, %v1499
    %v1501 = vpop.f32.mrf.mxu0
    %1502 = vdwg.mxu0
    %v1503 = vadd.f32 %v1500, %v564
    %v1504 = vxor.u32 %v1503, 2147483648
    %v1505 = vmul.f32 %v1504, 1.442695
    %v1506 = vpow.pop %v1505
    %v1507 = vadd.f32 %v1506, 1.0
    %v1508 = vrcp.pop %v1507
    %v1509 = vmul.f32 1.0, %v1508
    %1511 = vrot.lane.b32.xlu0 %v1503, 80
    %v1512 = vpop.permute.xlu0 %1511
    %v1514 = vmul.f32 %v1509, %v1512
    %1516 = vrot.lane.b32.xlu0 %v1514, 32
    %v1517 = vpop.permute.xlu0 %1516
    %v1519 = vadd.f32 %v1503, %v1517
    %v1520 = vtanh.pop %v1519
    %v1521 = vsub.f32 1.0, %v1509
    %1523 = vrot.lane.b32.xlu0 %v1520, 112
    %v1524 = vpop.permute.xlu0 %1523
    %v1526 = vmul.f32 %v1521, %v1524
    %1527 = vrot.lane.b32.xlu0 %v1356, 16
    %v1528 = vpop.permute.xlu0 %1527
    %v1530 = vmul.f32 %v1509, %v1528
    %v1531 = vadd.f32 %v1526, %v1530
    %v1532 = vmul.f32 %v1531, 1.442695
    %v1533 = vpow.pop %v1532
    %1535 = vrot.lane.b32.xlu0 %v1533, 112
    %v1536 = vpop.permute.xlu0 %1535
    %1539 = vrot.lane.b32.xlu0 %v1531, 112
    %v1540 = vpop.permute.xlu0 %1539
    %v1542 = vsel %vm599, %v1536, %v1540
    %1544 = vrot.lane.b32.xlu0 %v1202, 24
    %v1545 = vpop.permute.xlu0 %1544
    %v1547 = vmul.f32 %v1533, %v1545
    %1549 = vrot.lane.b32.xlu0 %v1547, 120
    %v1550 = vpop.permute.xlu0 %1549
    %v1552 = vadd.f32 %v1531, %v1550
    %1554 = vrot.lane.b32.xlu0 %v1552, 112
    %v1555 = vpop.permute.xlu0 %1554
    %v1556 = vsel %vm243, %v1555, 0
    %1558 = vmatprep.subr.mxu0 0.0
    %1559 = vmatpush1.msra.mxu0 0.0
    %1560 = vmatprep.subr.mxu0 0.0
    %1561 = vmatpush1.msra.mxu0 0.0
    %1562 = vmatprep.subr.mxu0 0.0
    %1563 = vmatpush1.msra.mxu0 0.0
    %1564 = vmatprep.subr.mxu0 0.0
    %1565 = vmatpush1.msra.mxu0 0.0
    %1566 = vmatprep.subr.mxu0 0.0
    %1567 = vmatpush1.msra.mxu0 0.0
    %1568 = vmatprep.subr.mxu0 0.0
    %1569 = vmatpush1.msra.mxu0 0.0
    %1570 = vmatprep.subr.mxu0 0.0
    %1571 = vmatpush1.msra.mxu0 0.0
    %1572 = vmatprep.subr.mxu0 0.0
    %1573 = vmatpush1.msra.mxu0 0.0
    %1574 = vmatprep.subr.mxu0 0.0
    %1575 = vmatpush1.msra.mxu0 0.0
    %1576 = vmatprep.subr.mxu0 0.0
    %1577 = vmatpush1.msra.mxu0 0.0
    %1578 = vmatprep.subr.mxu0 0.0
    %1579 = vmatpush1.msra.mxu0 0.0
    %1580 = vmatprep.subr.mxu0 0.0
    %1581 = vmatpush1.msra.mxu0 0.0
    %1582 = vmatprep.subr.mxu0 0.0
    %1583 = vmatpush1.msra.mxu0 0.0
    %1584 = vmatprep.subr.mxu0 0.0
    %1585 = vmatpush1.msra.mxu0 0.0
    %1586 = vmatprep.subr.mxu0 0.0
    %1587 = vmatpush1.msra.mxu0 0.0
    %1588 = vmatprep.subr.mxu0 0.0
    %1589 = vmatpush1.msra.mxu0 %v192
    %1590 = vmatprep.subr.mxu0 0.0
    %1591 = vmatpush2.msra.mxu0 0.0
    %1592 = vmatprep.subr.mxu0 0.0
    %1593 = vmatpush2.msra.mxu0 0.0
    %1594 = vmatprep.subr.mxu0 0.0
    %1595 = vmatpush2.msra.mxu0 0.0
    %1596 = vmatprep.subr.mxu0 0.0
    %1597 = vmatpush2.msra.mxu0 0.0
    %1598 = vmatprep.subr.mxu0 0.0
    %1599 = vmatpush2.msra.mxu0 0.0
    %1600 = vmatprep.subr.mxu0 0.0
    %1601 = vmatpush2.msra.mxu0 0.0
    %1602 = vmatprep.subr.mxu0 0.0
    %1603 = vmatpush2.msra.mxu0 0.0
    %1604 = vmatprep.subr.mxu0 0.0
    %1605 = vmatpush2.msra.mxu0 0.0
    %1606 = vmatprep.subr.mxu0 0.0
    %1607 = vmatpush2.msra.mxu0 0.0
    %1608 = vmatprep.subr.mxu0 0.0
    %1609 = vmatpush2.msra.mxu0 0.0
    %1610 = vmatprep.subr.mxu0 0.0
    %1611 = vmatpush2.msra.mxu0 0.0
    %1612 = vmatprep.subr.mxu0 0.0
    %1613 = vmatpush2.msra.mxu0 0.0
    %1614 = vmatprep.subr.mxu0 0.0
    %1615 = vmatpush2.msra.mxu0 0.0
    %1616 = vmatprep.subr.mxu0 0.0
    %1617 = vmatpush2.msra.mxu0 0.0
    %1618 = vmatprep.subr.mxu0 0.0
    %1619 = vmatpush2.msra.mxu0 0.0
    %1620 = vmatprep.subr.mxu0 0.0
    %1621 = vmatpush2.msra.mxu0 0.0
    %1622 = vmatprep.mubr.f32.mxu0 0.0
    %1623 = vmatmul.mubr.f32.gmra.mxu0 %v1556
    %v1624 = vpop.f32.mrf.mxu0
    %v1625 = vadd.f32 %v623, %v1624
    %v1626 = vpop.f32.mrf.mxu0
    %1627 = vdwg.mxu0
    %v1628 = vmax.f32 %v1625, 0.0
    %v1630 = vsel %vm707, %v1628, 0
    %1632 = vmatprep.subr.mxu0 0.0
    %1633 = vmatpush1.msra.mxu0 0.0
    %1634 = vmatprep.subr.mxu0 0.0
    %1635 = vmatpush1.msra.mxu0 0.0
    %1636 = vmatprep.subr.mxu0 0.0
    %1637 = vmatpush1.msra.mxu0 0.0
    %1638 = vmatprep.subr.mxu0 0.0
    %1639 = vmatpush1.msra.mxu0 0.0
    %1640 = vmatprep.subr.mxu0 0.0
    %1641 = vmatpush1.msra.mxu0 0.0
    %1642 = vmatprep.subr.mxu0 0.0
    %1643 = vmatpush1.msra.mxu0 0.0
    %1644 = vmatprep.subr.mxu0 0.0
    %1645 = vmatpush1.msra.mxu0 0.0
    %1646 = vmatprep.subr.mxu0 0.0
    %1647 = vmatpush1.msra.mxu0 0.0
    %1648 = vmatprep.subr.mxu0 0.0
    %1649 = vmatpush1.msra.mxu0 0.0
    %1650 = vmatprep.subr.mxu0 0.0
    %1651 = vmatpush1.msra.mxu0 0.0
    %1652 = vmatprep.subr.mxu0 0.0
    %1653 = vmatpush1.msra.mxu0 0.0
    %1654 = vmatprep.subr.mxu0 0.0
    %1655 = vmatpush1.msra.mxu0 0.0
    %1656 = vmatprep.subr.mxu0 0.0
    %1657 = vmatpush1.msra.mxu0 %v196
    %1658 = vmatprep.subr.mxu0 0.0
    %1659 = vmatpush1.msra.mxu0 %v195
    %1660 = vmatprep.subr.mxu0 0.0
    %1661 = vmatpush1.msra.mxu0 %v194
    %1662 = vmatprep.subr.mxu0 0.0
    %1663 = vmatpush1.msra.mxu0 %v193
    %1664 = vmatprep.subr.mxu0 0.0
    %1665 = vmatpush2.msra.mxu0 0.0
    %1666 = vmatprep.subr.mxu0 0.0
    %1667 = vmatpush2.msra.mxu0 0.0
    %1668 = vmatprep.subr.mxu0 0.0
    %1669 = vmatpush2.msra.mxu0 0.0
    %1670 = vmatprep.subr.mxu0 0.0
    %1671 = vmatpush2.msra.mxu0 0.0
    %1672 = vmatprep.subr.mxu0 0.0
    %1673 = vmatpush2.msra.mxu0 0.0
    %1674 = vmatprep.subr.mxu0 0.0
    %1675 = vmatpush2.msra.mxu0 0.0
    %1676 = vmatprep.subr.mxu0 0.0
    %1677 = vmatpush2.msra.mxu0 0.0
    %1678 = vmatprep.subr.mxu0 0.0
    %1679 = vmatpush2.msra.mxu0 0.0
    %1680 = vmatprep.subr.mxu0 0.0
    %1681 = vmatpush2.msra.mxu0 0.0
    %1682 = vmatprep.subr.mxu0 0.0
    %1683 = vmatpush2.msra.mxu0 0.0
    %1684 = vmatprep.subr.mxu0 0.0
    %1685 = vmatpush2.msra.mxu0 0.0
    %1686 = vmatprep.subr.mxu0 0.0
    %1687 = vmatpush2.msra.mxu0 0.0
    %1688 = vmatprep.subr.mxu0 0.0
    %1689 = vmatpush2.msra.mxu0 0.0
    %1690 = vmatprep.subr.mxu0 0.0
    %1691 = vmatpush2.msra.mxu0 0.0
    %1692 = vmatprep.subr.mxu0 0.0
    %1693 = vmatpush2.msra.mxu0 0.0
    %1694 = vmatprep.subr.mxu0 0.0
    %1695 = vmatpush2.msra.mxu0 0.0
    %1696 = vmatprep.mubr.f32.mxu0 0.0
    %1697 = vmatmul.mubr.f32.gmra.mxu0 %v1630
    %v1698 = vpop.f32.mrf.mxu0
    %v1699 = vadd.f32 %v705, %v1698
    %v1700 = vpop.f32.mrf.mxu0
    %1701 = vdwg.mxu0
    %v1703 = vsel %vm707, %v1699, 0
    %1705 = vmatprep.subr.mxu0 0.0
    %1706 = vmatpush1.msra.mxu0 0.0
    %1707 = vmatprep.subr.mxu0 0.0
    %1708 = vmatpush1.msra.mxu0 0.0
    %1709 = vmatprep.subr.mxu0 0.0
    %1710 = vmatpush1.msra.mxu0 0.0
    %1711 = vmatprep.subr.mxu0 0.0
    %1712 = vmatpush1.msra.mxu0 0.0
    %1713 = vmatprep.subr.mxu0 0.0
    %1714 = vmatpush1.msra.mxu0 0.0
    %1715 = vmatprep.subr.mxu0 0.0
    %1716 = vmatpush1.msra.mxu0 0.0
    %1717 = vmatprep.subr.mxu0 0.0
    %1718 = vmatpush1.msra.mxu0 0.0
    %1719 = vmatprep.subr.mxu0 0.0
    %1720 = vmatpush1.msra.mxu0 0.0
    %1721 = vmatprep.subr.mxu0 0.0
    %1722 = vmatpush1.msra.mxu0 0.0
    %1723 = vmatprep.subr.mxu0 0.0
    %1724 = vmatpush1.msra.mxu0 0.0
    %1725 = vmatprep.subr.mxu0 0.0
    %1726 = vmatpush1.msra.mxu0 0.0
    %1727 = vmatprep.subr.mxu0 0.0
    %1728 = vmatpush1.msra.mxu0 0.0
    %1729 = vmatprep.subr.mxu0 %v204
    %1730 = vmatpush1.msra.mxu0 %v203
    %1731 = vmatprep.subr.mxu0 %v202
    %1732 = vmatpush1.msra.mxu0 %v201
    %1733 = vmatprep.subr.mxu0 %v200
    %1734 = vmatpush1.msra.mxu0 %v199
    %1735 = vmatprep.subr.mxu0 %v198
    %1736 = vmatpush1.msra.mxu0 %v197
    %1737 = vmatprep.subr.mxu0 0.0
    %1738 = vmatpush2.msra.mxu0 0.0
    %1739 = vmatprep.subr.mxu0 0.0
    %1740 = vmatpush2.msra.mxu0 0.0
    %1741 = vmatprep.subr.mxu0 0.0
    %1742 = vmatpush2.msra.mxu0 0.0
    %1743 = vmatprep.subr.mxu0 0.0
    %1744 = vmatpush2.msra.mxu0 0.0
    %1745 = vmatprep.subr.mxu0 0.0
    %1746 = vmatpush2.msra.mxu0 0.0
    %1747 = vmatprep.subr.mxu0 0.0
    %1748 = vmatpush2.msra.mxu0 0.0
    %1749 = vmatprep.subr.mxu0 0.0
    %1750 = vmatpush2.msra.mxu0 0.0
    %1751 = vmatprep.subr.mxu0 0.0
    %1752 = vmatpush2.msra.mxu0 0.0
    %1753 = vmatprep.subr.mxu0 0.0
    %1754 = vmatpush2.msra.mxu0 0.0
    %1755 = vmatprep.subr.mxu0 0.0
    %1756 = vmatpush2.msra.mxu0 0.0
    %1757 = vmatprep.subr.mxu0 0.0
    %1758 = vmatpush2.msra.mxu0 0.0
    %1759 = vmatprep.subr.mxu0 0.0
    %1760 = vmatpush2.msra.mxu0 0.0
    %1761 = vmatprep.subr.mxu0 0.0
    %1762 = vmatpush2.msra.mxu0 0.0
    %1763 = vmatprep.subr.mxu0 0.0
    %1764 = vmatpush2.msra.mxu0 0.0
    %1765 = vmatprep.subr.mxu0 0.0
    %1766 = vmatpush2.msra.mxu0 0.0
    %1767 = vmatprep.subr.mxu0 0.0
    %1768 = vmatpush2.msra.mxu0 0.0
    %1769 = vmatprep.mubr.f32.mxu0 0.0
    %1770 = vmatmul.mubr.f32.gmra.mxu0 %v1703
    %v1771 = vpop.f32.mrf.mxu0
    %v1772 = vadd.f32 %v785, %v1771
    %v1773 = vpop.f32.mrf.mxu0
    %v1774 = vadd.f32 %v789, %v1773
    %1775 = vdwg.mxu0
    %1776 = vmatprep.subr.mxu0 0.0
    %1777 = vmatpush1.msra.mxu0 0.0
    %1778 = vmatprep.subr.mxu0 0.0
    %1779 = vmatpush1.msra.mxu0 0.0
    %1780 = vmatprep.subr.mxu0 0.0
    %1781 = vmatpush1.msra.mxu0 0.0
    %1782 = vmatprep.subr.mxu0 0.0
    %1783 = vmatpush1.msra.mxu0 0.0
    %1784 = vmatprep.subr.mxu0 0.0
    %1785 = vmatpush1.msra.mxu0 0.0
    %1786 = vmatprep.subr.mxu0 0.0
    %1787 = vmatpush1.msra.mxu0 0.0
    %1788 = vmatprep.subr.mxu0 0.0
    %1789 = vmatpush1.msra.mxu0 0.0
    %1790 = vmatprep.subr.mxu0 0.0
    %1791 = vmatpush1.msra.mxu0 0.0
    %1792 = vmatprep.subr.mxu0 0.0
    %1793 = vmatpush1.msra.mxu0 0.0
    %1794 = vmatprep.subr.mxu0 0.0
    %1795 = vmatpush1.msra.mxu0 0.0
    %1796 = vmatprep.subr.mxu0 0.0
    %1797 = vmatpush1.msra.mxu0 0.0
    %1798 = vmatprep.subr.mxu0 0.0
    %1799 = vmatpush1.msra.mxu0 0.0
    %1800 = vmatprep.subr.mxu0 0.0
    %1801 = vmatpush1.msra.mxu0 %v212
    %1802 = vmatprep.subr.mxu0 0.0
    %1803 = vmatpush1.msra.mxu0 %v211
    %1804 = vmatprep.subr.mxu0 0.0
    %1805 = vmatpush1.msra.mxu0 %v210
    %1806 = vmatprep.subr.mxu0 0.0
    %1807 = vmatpush1.msra.mxu0 %v209
    %1808 = vmatprep.subr.mxu0 0.0
    %1809 = vmatpush2.msra.mxu0 0.0
    %1810 = vmatprep.subr.mxu0 0.0
    %1811 = vmatpush2.msra.mxu0 0.0
    %1812 = vmatprep.subr.mxu0 0.0
    %1813 = vmatpush2.msra.mxu0 0.0
    %1814 = vmatprep.subr.mxu0 0.0
    %1815 = vmatpush2.msra.mxu0 0.0
    %1816 = vmatprep.subr.mxu0 0.0
    %1817 = vmatpush2.msra.mxu0 0.0
    %1818 = vmatprep.subr.mxu0 0.0
    %1819 = vmatpush2.msra.mxu0 0.0
    %1820 = vmatprep.subr.mxu0 0.0
    %1821 = vmatpush2.msra.mxu0 0.0
    %1822 = vmatprep.subr.mxu0 0.0
    %1823 = vmatpush2.msra.mxu0 0.0
    %1824 = vmatprep.subr.mxu0 0.0
    %1825 = vmatpush2.msra.mxu0 0.0
    %1826 = vmatprep.subr.mxu0 0.0
    %1827 = vmatpush2.msra.mxu0 0.0
    %1828 = vmatprep.subr.mxu0 0.0
    %1829 = vmatpush2.msra.mxu0 0.0
    %1830 = vmatprep.subr.mxu0 0.0
    %1831 = vmatpush2.msra.mxu0 0.0
    %1832 = vmatprep.subr.mxu0 0.0
    %1833 = vmatpush2.msra.mxu0 0.0
    %1834 = vmatprep.subr.mxu0 0.0
    %1835 = vmatpush2.msra.mxu0 0.0
    %1836 = vmatprep.subr.mxu0 0.0
    %1837 = vmatpush2.msra.mxu0 0.0
    %1838 = vmatprep.subr.mxu0 0.0
    %1839 = vmatpush2.msra.mxu0 0.0
    %1840 = vmatprep.mubr.f32.mxu0 0.0
    %1841 = vmatmul.mubr.f32.gmra.mxu0 %v1051
    %v1842 = vpop.f32.mrf.mxu0
    %v1843 = vadd.f32 0.0, %v1842
    %v1844 = vpop.f32.mrf.mxu0
    %1845 = vdwg.mxu0
    %1846 = vrot.lane.b32.xlu0 %v1200, 112
    %v1847 = vpop.permute.xlu0 %1846
    %v1848 = vsel %vm707, %v1847, 0
    %1850 = vmatprep.subr.mxu0 0.0
    %1851 = vmatpush1.msra.mxu0 0.0
    %1852 = vmatprep.subr.mxu0 0.0
    %1853 = vmatpush1.msra.mxu0 0.0
    %1854 = vmatprep.subr.mxu0 0.0
    %1855 = vmatpush1.msra.mxu0 0.0
    %1856 = vmatprep.subr.mxu0 0.0
    %1857 = vmatpush1.msra.mxu0 0.0
    %1858 = vmatprep.subr.mxu0 0.0
    %1859 = vmatpush1.msra.mxu0 0.0
    %1860 = vmatprep.subr.mxu0 0.0
    %1861 = vmatpush1.msra.mxu0 0.0
    %1862 = vmatprep.subr.mxu0 0.0
    %1863 = vmatpush1.msra.mxu0 0.0
    %1864 = vmatprep.subr.mxu0 0.0
    %1865 = vmatpush1.msra.mxu0 0.0
    %1866 = vmatprep.subr.mxu0 0.0
    %1867 = vmatpush1.msra.mxu0 0.0
    %1868 = vmatprep.subr.mxu0 0.0
    %1869 = vmatpush1.msra.mxu0 0.0
    %1870 = vmatprep.subr.mxu0 0.0
    %1871 = vmatpush1.msra.mxu0 0.0
    %1872 = vmatprep.subr.mxu0 0.0
    %1873 = vmatpush1.msra.mxu0 0.0
    %1874 = vmatprep.subr.mxu0 0.0
    %1875 = vmatpush1.msra.mxu0 %v208
    %1876 = vmatprep.subr.mxu0 0.0
    %1877 = vmatpush1.msra.mxu0 %v207
    %1878 = vmatprep.subr.mxu0 0.0
    %1879 = vmatpush1.msra.mxu0 %v206
    %1880 = vmatprep.subr.mxu0 0.0
    %1881 = vmatpush1.msra.mxu0 %v205
    %1882 = vmatprep.subr.mxu0 0.0
    %1883 = vmatpush2.msra.mxu0 0.0
    %1884 = vmatprep.subr.mxu0 0.0
    %1885 = vmatpush2.msra.mxu0 0.0
    %1886 = vmatprep.subr.mxu0 0.0
    %1887 = vmatpush2.msra.mxu0 0.0
    %1888 = vmatprep.subr.mxu0 0.0
    %1889 = vmatpush2.msra.mxu0 0.0
    %1890 = vmatprep.subr.mxu0 0.0
    %1891 = vmatpush2.msra.mxu0 0.0
    %1892 = vmatprep.subr.mxu0 0.0
    %1893 = vmatpush2.msra.mxu0 0.0
    %1894 = vmatprep.subr.mxu0 0.0
    %1895 = vmatpush2.msra.mxu0 0.0
    %1896 = vmatprep.subr.mxu0 0.0
    %1897 = vmatpush2.msra.mxu0 0.0
    %1898 = vmatprep.subr.mxu0 0.0
    %1899 = vmatpush2.msra.mxu0 0.0
    %1900 = vmatprep.subr.mxu0 0.0
    %1901 = vmatpush2.msra.mxu0 0.0
    %1902 = vmatprep.subr.mxu0 0.0
    %1903 = vmatpush2.msra.mxu0 0.0
    %1904 = vmatprep.subr.mxu0 0.0
    %1905 = vmatpush2.msra.mxu0 0.0
    %1906 = vmatprep.subr.mxu0 0.0
    %1907 = vmatpush2.msra.mxu0 0.0
    %1908 = vmatprep.subr.mxu0 0.0
    %1909 = vmatpush2.msra.mxu0 0.0
    %1910 = vmatprep.subr.mxu0 0.0
    %1911 = vmatpush2.msra.mxu0 0.0
    %1912 = vmatprep.subr.mxu0 0.0
    %1913 = vmatpush2.msra.mxu0 0.0
    %1914 = vmatprep.mubr.f32.mxu0 0.0
    %1915 = vmatmul.mubr.f32.gmra.mxu0 %v1848
    %v1916 = vpop.f32.mrf.mxu0
    %v1917 = vadd.f32 %v1843, %v1916
    %v1918 = vpop.f32.mrf.mxu0
    %1919 = vdwg.mxu0
    %v1920 = vadd.f32 %v1917, %v1017
    %v1921 = vxor.u32 %v1920, 2147483648
    %v1922 = vmul.f32 %v1921, 1.442695
    %v1923 = vpow.pop %v1922
    %v1924 = vadd.f32 %v1923, 1.0
    %v1925 = vrcp.pop %v1924
    %v1926 = vmul.f32 1.0, %v1925
    %1928 = vrot.lane.b32.xlu0 %v1920, 32
    %v1929 = vpop.permute.xlu0 %1928
    %v1931 = vmul.f32 %v1926, %v1929
    %1933 = vrot.lane.b32.xlu0 %v1931, 64
    %v1934 = vpop.permute.xlu0 %1933
    %v1936 = vadd.f32 %v1920, %v1934
    %v1937 = vtanh.pop %v1936
    %v1938 = vsub.f32 1.0, %v1926
    %1940 = vrot.lane.b32.xlu0 %v1937, 96
    %v1941 = vpop.permute.xlu0 %1940
    %v1943 = vmul.f32 %v1938, %v1941
    %v1944 = vmul.f32 %v1926, %v1047
    %v1945 = vadd.f32 %v1943, %v1944
    %1947 = vrot.lane.b32.xlu0 %v1945, 96
    %v1948 = vpop.permute.xlu0 %1947
    %v1949 = vsel %vm707, %v1948, 0
    %1951 = vmatprep.subr.mxu0 0.0
    %1952 = vmatpush1.msra.mxu0 0.0
    %1953 = vmatprep.subr.mxu0 0.0
    %1954 = vmatpush1.msra.mxu0 0.0
    %1955 = vmatprep.subr.mxu0 0.0
    %1956 = vmatpush1.msra.mxu0 0.0
    %1957 = vmatprep.subr.mxu0 0.0
    %1958 = vmatpush1.msra.mxu0 0.0
    %1959 = vmatprep.subr.mxu0 0.0
    %1960 = vmatpush1.msra.mxu0 0.0
    %1961 = vmatprep.subr.mxu0 0.0
    %1962 = vmatpush1.msra.mxu0 0.0
    %1963 = vmatprep.subr.mxu0 0.0
    %1964 = vmatpush1.msra.mxu0 0.0
    %1965 = vmatprep.subr.mxu0 0.0
    %1966 = vmatpush1.msra.mxu0 0.0
    %1967 = vmatprep.subr.mxu0 0.0
    %1968 = vmatpush1.msra.mxu0 0.0
    %1969 = vmatprep.subr.mxu0 0.0
    %1970 = vmatpush1.msra.mxu0 0.0
    %1971 = vmatprep.subr.mxu0 0.0
    %1972 = vmatpush1.msra.mxu0 0.0
    %1973 = vmatprep.subr.mxu0 0.0
    %1974 = vmatpush1.msra.mxu0 0.0
    %1975 = vmatprep.subr.mxu0 0.0
    %1976 = vmatpush1.msra.mxu0 %v216
    %1977 = vmatprep.subr.mxu0 0.0
    %1978 = vmatpush1.msra.mxu0 %v215
    %1979 = vmatprep.subr.mxu0 0.0
    %1980 = vmatpush1.msra.mxu0 %v214
    %1981 = vmatprep.subr.mxu0 0.0
    %1982 = vmatpush1.msra.mxu0 %v213
    %1983 = vmatprep.subr.mxu0 0.0
    %1984 = vmatpush2.msra.mxu0 0.0
    %1985 = vmatprep.subr.mxu0 0.0
    %1986 = vmatpush2.msra.mxu0 0.0
    %1987 = vmatprep.subr.mxu0 0.0
    %1988 = vmatpush2.msra.mxu0 0.0
    %1989 = vmatprep.subr.mxu0 0.0
    %1990 = vmatpush2.msra.mxu0 0.0
    %1991 = vmatprep.subr.mxu0 0.0
    %1992 = vmatpush2.msra.mxu0 0.0
    %1993 = vmatprep.subr.mxu0 0.0
    %1994 = vmatpush2.msra.mxu0 0.0
    %1995 = vmatprep.subr.mxu0 0.0
    %1996 = vmatpush2.msra.mxu0 0.0
    %1997 = vmatprep.subr.mxu0 0.0
    %1998 = vmatpush2.msra.mxu0 0.0
    %1999 = vmatprep.subr.mxu0 0.0
    %2000 = vmatpush2.msra.mxu0 0.0
    %2001 = vmatprep.subr.mxu0 0.0
    %2002 = vmatpush2.msra.mxu0 0.0
    %2003 = vmatprep.subr.mxu0 0.0
    %2004 = vmatpush2.msra.mxu0 0.0
    %2005 = vmatprep.subr.mxu0 0.0
    %2006 = vmatpush2.msra.mxu0 0.0
    %2007 = vmatprep.subr.mxu0 0.0
    %2008 = vmatpush2.msra.mxu0 0.0
    %2009 = vmatprep.subr.mxu0 0.0
    %2010 = vmatpush2.msra.mxu0 0.0
    %2011 = vmatprep.subr.mxu0 0.0
    %2012 = vmatpush2.msra.mxu0 0.0
    %2013 = vmatprep.subr.mxu0 0.0
    %2014 = vmatpush2.msra.mxu0 0.0
    %2015 = vmatprep.mubr.f32.mxu0 0.0
    %2016 = vmatmul.mubr.f32.gmra.mxu0 %v1949
    %v2017 = vpop.f32.mrf.mxu0
    %v2018 = vadd.f32 0.0, %v2017
    %v2019 = vpop.f32.mrf.mxu0
    %2020 = vdwg.mxu0
    %v2021 = vmul.f32 %v1772, %v2018
    %2022 = vmatprep.subr.mxu0 0.0
    %2023 = vmatpush1.msra.mxu0 %v232
    %2024 = vmatprep.subr.mxu0 0.0
    %2025 = vmatpush1.msra.mxu0 %v231
    %2026 = vmatprep.subr.mxu0 0.0
    %2027 = vmatpush1.msra.mxu0 %v230
    %2028 = vmatprep.subr.mxu0 0.0
    %2029 = vmatpush1.msra.mxu0 %v229
    %2030 = vmatprep.subr.mxu0 0.0
    %2031 = vmatpush1.msra.mxu0 %v228
    %2032 = vmatprep.subr.mxu0 0.0
    %2033 = vmatpush1.msra.mxu0 %v227
    %2034 = vmatprep.subr.mxu0 0.0
    %2035 = vmatpush1.msra.mxu0 %v226
    %2036 = vmatprep.subr.mxu0 0.0
    %2037 = vmatpush1.msra.mxu0 %v225
    %2038 = vmatprep.subr.mxu0 0.0
    %2039 = vmatpush1.msra.mxu0 %v224
    %2040 = vmatprep.subr.mxu0 0.0
    %2041 = vmatpush1.msra.mxu0 %v223
    %2042 = vmatprep.subr.mxu0 0.0
    %2043 = vmatpush1.msra.mxu0 %v222
    %2044 = vmatprep.subr.mxu0 0.0
    %2045 = vmatpush1.msra.mxu0 %v221
    %2046 = vmatprep.subr.mxu0 0.0
    %2047 = vmatpush1.msra.mxu0 %v220
    %2048 = vmatprep.subr.mxu0 0.0
    %2049 = vmatpush1.msra.mxu0 %v219
    %2050 = vmatprep.subr.mxu0 0.0
    %2051 = vmatpush1.msra.mxu0 %v218
    %2052 = vmatprep.subr.mxu0 0.0
    %2053 = vmatpush1.msra.mxu0 %v217
    %2054 = vmatprep.subr.mxu0 0.0
    %2055 = vmatpush2.msra.mxu0 0.0
    %2056 = vmatprep.subr.mxu0 0.0
    %2057 = vmatpush2.msra.mxu0 0.0
    %2058 = vmatprep.subr.mxu0 0.0
    %2059 = vmatpush2.msra.mxu0 0.0
    %2060 = vmatprep.subr.mxu0 0.0
    %2061 = vmatpush2.msra.mxu0 0.0
    %2062 = vmatprep.subr.mxu0 0.0
    %2063 = vmatpush2.msra.mxu0 0.0
    %2064 = vmatprep.subr.mxu0 0.0
    %2065 = vmatpush2.msra.mxu0 0.0
    %2066 = vmatprep.subr.mxu0 0.0
    %2067 = vmatpush2.msra.mxu0 0.0
    %2068 = vmatprep.subr.mxu0 0.0
    %2069 = vmatpush2.msra.mxu0 0.0
    %2070 = vmatprep.subr.mxu0 0.0
    %2071 = vmatpush2.msra.mxu0 0.0
    %2072 = vmatprep.subr.mxu0 0.0
    %2073 = vmatpush2.msra.mxu0 0.0
    %2074 = vmatprep.subr.mxu0 0.0
    %2075 = vmatpush2.msra.mxu0 0.0
    %2076 = vmatprep.subr.mxu0 0.0
    %2077 = vmatpush2.msra.mxu0 0.0
    %2078 = vmatprep.subr.mxu0 0.0
    %2079 = vmatpush2.msra.mxu0 0.0
    %2080 = vmatprep.subr.mxu0 0.0
    %2081 = vmatpush2.msra.mxu0 0.0
    %2082 = vmatprep.subr.mxu0 0.0
    %2083 = vmatpush2.msra.mxu0 0.0
    %2084 = vmatprep.subr.mxu0 0.0
    %2085 = vmatpush2.msra.mxu0 0.0
    %2086 = vmatprep.mubr.f32.mxu0 0.0
    %2087 = vmatmul.mubr.f32.gmra.mxu0 %v2021
    %v2088 = vpop.f32.mrf.mxu0
    %v2089 = vadd.f32 %v1774, %v2088
    %v2090 = vpop.f32.mrf.mxu0
    %2091 = vdwg.mxu0
    %s2092 = scalar_lea.vmem %s20, 8
    %2093 = vst.msk [vmem:[%s2092] sm:$0xff] %vm1194, %v2089
    %s2095 = scalar_lea.vmem [#allocation17], 8
    %2096 = vst.msk [vmem:[%s2095] sm:$0xff] %vm707, %v1948
    %s2097 = scalar_lea.vmem [#allocation18], 8
    %2098 = vst.msk [vmem:[%s2097] sm:$0xff] %vm413, %v1542
    %s2099 = scalar_lea.vmem %s0, 16
    %v2100 = vld [vmem:[%s2099] sm:$0xff]
    %s2101 = scalar_lea.vmem %s1, 16
    %v2102 = vld [vmem:[%s2101] sm:$0xff]
    %2103 = vmatprep.subr.mxu0 0.0
    %2104 = vmatpush1.msra.mxu0 0.0
    %2105 = vmatprep.subr.mxu0 0.0
    %2106 = vmatpush1.msra.mxu0 0.0
    %2107 = vmatprep.subr.mxu0 0.0
    %2108 = vmatpush1.msra.mxu0 0.0
    %2109 = vmatprep.subr.mxu0 0.0
    %2110 = vmatpush1.msra.mxu0 0.0
    %2111 = vmatprep.subr.mxu0 0.0
    %2112 = vmatpush1.msra.mxu0 0.0
    %2113 = vmatprep.subr.mxu0 0.0
    %2114 = vmatpush1.msra.mxu0 0.0
    %2115 = vmatprep.subr.mxu0 0.0
    %2116 = vmatpush1.msra.mxu0 0.0
    %2117 = vmatprep.subr.mxu0 0.0
    %2118 = vmatpush1.msra.mxu0 0.0
    %2119 = vmatprep.subr.mxu0 0.0
    %2120 = vmatpush1.msra.mxu0 0.0
    %2121 = vmatprep.subr.mxu0 0.0
    %2122 = vmatpush1.msra.mxu0 0.0
    %2123 = vmatprep.subr.mxu0 0.0
    %2124 = vmatpush1.msra.mxu0 0.0
    %2125 = vmatprep.subr.mxu0 0.0
    %2126 = vmatpush1.msra.mxu0 0.0
    %2127 = vmatprep.subr.mxu0 0.0
    %2128 = vmatpush1.msra.mxu0 0.0
    %2129 = vmatprep.subr.mxu0 0.0
    %2130 = vmatpush1.msra.mxu0 0.0
    %2131 = vmatprep.subr.mxu0 0.0
    %2132 = vmatpush1.msra.mxu0 0.0
    %2133 = vmatprep.subr.mxu0 0.0
    %2134 = vmatpush1.msra.mxu0 %v1542
    %2135 = vmatprep.subr.mxu0 0.0
    %2136 = vmatpush2.msra.mxu0 0.0
    %2137 = vmatprep.subr.mxu0 0.0
    %2138 = vmatpush2.msra.mxu0 0.0
    %2139 = vmatprep.subr.mxu0 0.0
    %2140 = vmatpush2.msra.mxu0 0.0
    %2141 = vmatprep.subr.mxu0 0.0
    %2142 = vmatpush2.msra.mxu0 0.0
    %2143 = vmatprep.subr.mxu0 0.0
    %2144 = vmatpush2.msra.mxu0 0.0
    %2145 = vmatprep.subr.mxu0 0.0
    %2146 = vmatpush2.msra.mxu0 0.0
    %2147 = vmatprep.subr.mxu0 0.0
    %2148 = vmatpush2.msra.mxu0 0.0
    %2149 = vmatprep.subr.mxu0 0.0
    %2150 = vmatpush2.msra.mxu0 0.0
    %2151 = vmatprep.subr.mxu0 0.0
    %2152 = vmatpush2.msra.mxu0 0.0
    %2153 = vmatprep.subr.mxu0 0.0
    %2154 = vmatpush2.msra.mxu0 0.0
    %2155 = vmatprep.subr.mxu0 0.0
    %2156 = vmatpush2.msra.mxu0 0.0
    %2157 = vmatprep.subr.mxu0 0.0
    %2158 = vmatpush2.msra.mxu0 0.0
    %2159 = vmatprep.subr.mxu0 0.0
    %2160 = vmatpush2.msra.mxu0 0.0
    %2161 = vmatprep.subr.mxu0 0.0
    %2162 = vmatpush2.msra.mxu0 0.0
    %2163 = vmatprep.subr.mxu0 0.0
    %2164 = vmatpush2.msra.mxu0 0.0
    %2165 = vmatprep.subr.mxu0 0.0
    %2166 = vmatpush2.msra.mxu0 0.0
    %2167 = vmatprep.mubr.f32.mxu0 0.0
    %2168 = vmatmul.mubr.f32.gmra.mxu0 %v245
    %v2169 = vpop.f32.mrf.mxu0
    %v2170 = vadd.f32 0.0, %v2169
    %v2171 = vpop.f32.mrf.mxu0
    %2172 = vdwg.mxu0
    %v2173 = vlaneseq
    %v2174 = vshrl.u32 %v2173, 7
    %v2175 = vsub.s32 0, %v2174
    %v2176 = vrot.slane %v2170, %v2175
    %v2177 = vsub.f32 %v1542, %v2176
    %v2178 = vmul.f32 %v2177, %v2177
    %2179 = vmatprep.subr.mxu0 0.0
    %2180 = vmatpush1.msra.mxu0 0.0
    %2181 = vmatprep.subr.mxu0 0.0
    %2182 = vmatpush1.msra.mxu0 0.0
    %2183 = vmatprep.subr.mxu0 0.0
    %2184 = vmatpush1.msra.mxu0 0.0
    %2185 = vmatprep.subr.mxu0 0.0
    %2186 = vmatpush1.msra.mxu0 0.0
    %2187 = vmatprep.subr.mxu0 0.0
    %2188 = vmatpush1.msra.mxu0 0.0
    %2189 = vmatprep.subr.mxu0 0.0
    %2190 = vmatpush1.msra.mxu0 0.0
    %2191 = vmatprep.subr.mxu0 0.0
    %2192 = vmatpush1.msra.mxu0 0.0
    %2193 = vmatprep.subr.mxu0 0.0
    %2194 = vmatpush1.msra.mxu0 0.0
    %2195 = vmatprep.subr.mxu0 0.0
    %2196 = vmatpush1.msra.mxu0 0.0
    %2197 = vmatprep.subr.mxu0 0.0
    %2198 = vmatpush1.msra.mxu0 0.0
    %2199 = vmatprep.subr.mxu0 0.0
    %2200 = vmatpush1.msra.mxu0 0.0
    %2201 = vmatprep.subr.mxu0 0.0
    %2202 = vmatpush1.msra.mxu0 0.0
    %2203 = vmatprep.subr.mxu0 0.0
    %2204 = vmatpush1.msra.mxu0 0.0
    %2205 = vmatprep.subr.mxu0 0.0
    %2206 = vmatpush1.msra.mxu0 0.0
    %2207 = vmatprep.subr.mxu0 0.0
    %2208 = vmatpush1.msra.mxu0 0.0
    %2209 = vmatprep.subr.mxu0 0.0
    %2210 = vmatpush1.msra.mxu0 %v2178
    %2211 = vmatprep.subr.mxu0 0.0
    %2212 = vmatpush2.msra.mxu0 0.0
    %2213 = vmatprep.subr.mxu0 0.0
    %2214 = vmatpush2.msra.mxu0 0.0
    %2215 = vmatprep.subr.mxu0 0.0
    %2216 = vmatpush2.msra.mxu0 0.0
    %2217 = vmatprep.subr.mxu0 0.0
    %2218 = vmatpush2.msra.mxu0 0.0
    %2219 = vmatprep.subr.mxu0 0.0
    %2220 = vmatpush2.msra.mxu0 0.0
    %2221 = vmatprep.subr.mxu0 0.0
    %2222 = vmatpush2.msra.mxu0 0.0
    %2223 = vmatprep.subr.mxu0 0.0
    %2224 = vmatpush2.msra.mxu0 0.0
    %2225 = vmatprep.subr.mxu0 0.0
    %2226 = vmatpush2.msra.mxu0 0.0
    %2227 = vmatprep.subr.mxu0 0.0
    %2228 = vmatpush2.msra.mxu0 0.0
    %2229 = vmatprep.subr.mxu0 0.0
    %2230 = vmatpush2.msra.mxu0 0.0
    %2231 = vmatprep.subr.mxu0 0.0
    %2232 = vmatpush2.msra.mxu0 0.0
    %2233 = vmatprep.subr.mxu0 0.0
    %2234 = vmatpush2.msra.mxu0 0.0
    %2235 = vmatprep.subr.mxu0 0.0
    %2236 = vmatpush2.msra.mxu0 0.0
    %2237 = vmatprep.subr.mxu0 0.0
    %2238 = vmatpush2.msra.mxu0 0.0
    %2239 = vmatprep.subr.mxu0 0.0
    %2240 = vmatpush2.msra.mxu0 0.0
    %2241 = vmatprep.subr.mxu0 0.0
    %2242 = vmatpush2.msra.mxu0 0.0
    %2243 = vmatprep.mubr.f32.mxu0 0.0
    %2244 = vmatmul.mubr.f32.gmra.mxu0 %v245
    %v2245 = vpop.f32.mrf.mxu0
    %v2246 = vadd.f32 1e-05, %v2245
    %v2247 = vpop.f32.mrf.mxu0
    %2248 = vdwg.mxu0
    %v2249 = vrsqrt.pop %v2246
    %v2250 = vlaneseq
    %v2251 = vshrl.u32 %v2250, 7
    %v2252 = vsub.s32 0, %v2251
    %v2253 = vrot.slane %v2249, %v2252
    %v2254 = vmul.f32 %v2177, %v2253
    %v2255 = vmul.f32 %v2254, %v403
    %v2256 = vadd.f32 %v2255, %v410
    %v2258 = vsel %vm413, %v2256, 0
    %2260 = vmatprep.subr.mxu0 0.0
    %2261 = vmatpush1.msra.mxu0 0.0
    %2262 = vmatprep.subr.mxu0 0.0
    %2263 = vmatpush1.msra.mxu0 0.0
    %2264 = vmatprep.subr.mxu0 0.0
    %2265 = vmatpush1.msra.mxu0 0.0
    %2266 = vmatprep.subr.mxu0 0.0
    %2267 = vmatpush1.msra.mxu0 0.0
    %2268 = vmatprep.subr.mxu0 0.0
    %2269 = vmatpush1.msra.mxu0 0.0
    %2270 = vmatprep.subr.mxu0 0.0
    %2271 = vmatpush1.msra.mxu0 0.0
    %2272 = vmatprep.subr.mxu0 0.0
    %2273 = vmatpush1.msra.mxu0 0.0
    %2274 = vmatprep.subr.mxu0 0.0
    %2275 = vmatpush1.msra.mxu0 0.0
    %2276 = vmatprep.subr.mxu0 0.0
    %2277 = vmatpush1.msra.mxu0 0.0
    %2278 = vmatprep.subr.mxu0 0.0
    %2279 = vmatpush1.msra.mxu0 0.0
    %2280 = vmatprep.subr.mxu0 0.0
    %2281 = vmatpush1.msra.mxu0 0.0
    %2282 = vmatprep.subr.mxu0 0.0
    %2283 = vmatpush1.msra.mxu0 0.0
    %2284 = vmatprep.subr.mxu0 0.0
    %2285 = vmatpush1.msra.mxu0 0.0
    %2286 = vmatprep.subr.mxu0 0.0
    %2287 = vmatpush1.msra.mxu0 0.0
    %2288 = vmatprep.subr.mxu0 0.0
    %2289 = vmatpush1.msra.mxu0 %v191
    %2290 = vmatprep.subr.mxu0 0.0
    %2291 = vmatpush1.msra.mxu0 %v190
    %2292 = vmatprep.subr.mxu0 0.0
    %2293 = vmatpush2.msra.mxu0 0.0
    %2294 = vmatprep.subr.mxu0 0.0
    %2295 = vmatpush2.msra.mxu0 0.0
    %2296 = vmatprep.subr.mxu0 0.0
    %2297 = vmatpush2.msra.mxu0 0.0
    %2298 = vmatprep.subr.mxu0 0.0
    %2299 = vmatpush2.msra.mxu0 0.0
    %2300 = vmatprep.subr.mxu0 0.0
    %2301 = vmatpush2.msra.mxu0 0.0
    %2302 = vmatprep.subr.mxu0 0.0
    %2303 = vmatpush2.msra.mxu0 0.0
    %2304 = vmatprep.subr.mxu0 0.0
    %2305 = vmatpush2.msra.mxu0 0.0
    %2306 = vmatprep.subr.mxu0 0.0
    %2307 = vmatpush2.msra.mxu0 0.0
    %2308 = vmatprep.subr.mxu0 0.0
    %2309 = vmatpush2.msra.mxu0 0.0
    %2310 = vmatprep.subr.mxu0 0.0
    %2311 = vmatpush2.msra.mxu0 0.0
    %2312 = vmatprep.subr.mxu0 0.0
    %2313 = vmatpush2.msra.mxu0 0.0
    %2314 = vmatprep.subr.mxu0 0.0
    %2315 = vmatpush2.msra.mxu0 0.0
    %2316 = vmatprep.subr.mxu0 0.0
    %2317 = vmatpush2.msra.mxu0 0.0
    %2318 = vmatprep.subr.mxu0 0.0
    %2319 = vmatpush2.msra.mxu0 0.0
    %2320 = vmatprep.subr.mxu0 0.0
    %2321 = vmatpush2.msra.mxu0 0.0
    %2322 = vmatprep.subr.mxu0 0.0
    %2323 = vmatpush2.msra.mxu0 0.0
    %2324 = vmatprep.mubr.f32.mxu0 0.0
    %2325 = vmatmul.mubr.f32.gmra.mxu0 %v2258
    %v2326 = vpop.f32.mrf.mxu0
    %v2327 = vadd.f32 0.0, %v2326
    %v2328 = vpop.f32.mrf.mxu0
    %2329 = vdwg.mxu0
    %v2331 = vsel %vm413, %v2100, 0
    %2333 = vmatprep.subr.mxu0 0.0
    %2334 = vmatpush1.msra.mxu0 0.0
    %2335 = vmatprep.subr.mxu0 0.0
    %2336 = vmatpush1.msra.mxu0 0.0
    %2337 = vmatprep.subr.mxu0 0.0
    %2338 = vmatpush1.msra.mxu0 0.0
    %2339 = vmatprep.subr.mxu0 0.0
    %2340 = vmatpush1.msra.mxu0 0.0
    %2341 = vmatprep.subr.mxu0 0.0
    %2342 = vmatpush1.msra.mxu0 0.0
    %2343 = vmatprep.subr.mxu0 0.0
    %2344 = vmatpush1.msra.mxu0 0.0
    %2345 = vmatprep.subr.mxu0 0.0
    %2346 = vmatpush1.msra.mxu0 0.0
    %2347 = vmatprep.subr.mxu0 0.0
    %2348 = vmatpush1.msra.mxu0 0.0
    %2349 = vmatprep.subr.mxu0 0.0
    %2350 = vmatpush1.msra.mxu0 0.0
    %2351 = vmatprep.subr.mxu0 0.0
    %2352 = vmatpush1.msra.mxu0 0.0
    %2353 = vmatprep.subr.mxu0 0.0
    %2354 = vmatpush1.msra.mxu0 0.0
    %2355 = vmatprep.subr.mxu0 0.0
    %2356 = vmatpush1.msra.mxu0 0.0
    %2357 = vmatprep.subr.mxu0 0.0
    %2358 = vmatpush1.msra.mxu0 0.0
    %2359 = vmatprep.subr.mxu0 0.0
    %2360 = vmatpush1.msra.mxu0 0.0
    %2361 = vmatprep.subr.mxu0 0.0
    %2362 = vmatpush1.msra.mxu0 %v189
    %2363 = vmatprep.subr.mxu0 0.0
    %2364 = vmatpush1.msra.mxu0 %v188
    %2365 = vmatprep.subr.mxu0 0.0
    %2366 = vmatpush2.msra.mxu0 0.0
    %2367 = vmatprep.subr.mxu0 0.0
    %2368 = vmatpush2.msra.mxu0 0.0
    %2369 = vmatprep.subr.mxu0 0.0
    %2370 = vmatpush2.msra.mxu0 0.0
    %2371 = vmatprep.subr.mxu0 0.0
    %2372 = vmatpush2.msra.mxu0 0.0
    %2373 = vmatprep.subr.mxu0 0.0
    %2374 = vmatpush2.msra.mxu0 0.0
    %2375 = vmatprep.subr.mxu0 0.0
    %2376 = vmatpush2.msra.mxu0 0.0
    %2377 = vmatprep.subr.mxu0 0.0
    %2378 = vmatpush2.msra.mxu0 0.0
    %2379 = vmatprep.subr.mxu0 0.0
    %2380 = vmatpush2.msra.mxu0 0.0
    %2381 = vmatprep.subr.mxu0 0.0
    %2382 = vmatpush2.msra.mxu0 0.0
    %2383 = vmatprep.subr.mxu0 0.0
    %2384 = vmatpush2.msra.mxu0 0.0
    %2385 = vmatprep.subr.mxu0 0.0
    %2386 = vmatpush2.msra.mxu0 0.0
    %2387 = vmatprep.subr.mxu0 0.0
    %2388 = vmatpush2.msra.mxu0 0.0
    %2389 = vmatprep.subr.mxu0 0.0
    %2390 = vmatpush2.msra.mxu0 0.0
    %2391 = vmatprep.subr.mxu0 0.0
    %2392 = vmatpush2.msra.mxu0 0.0
    %2393 = vmatprep.subr.mxu0 0.0
    %2394 = vmatpush2.msra.mxu0 0.0
    %2395 = vmatprep.subr.mxu0 0.0
    %2396 = vmatpush2.msra.mxu0 0.0
    %2397 = vmatprep.mubr.f32.mxu0 0.0
    %2398 = vmatmul.mubr.f32.gmra.mxu0 %v2331
    %v2399 = vpop.f32.mrf.mxu0
    %v2400 = vadd.f32 %v2327, %v2399
    %v2401 = vpop.f32.mrf.mxu0
    %2402 = vdwg.mxu0
    %v2403 = vadd.f32 %v2400, %v564
    %v2404 = vxor.u32 %v2403, 2147483648
    %v2405 = vmul.f32 %v2404, 1.442695
    %v2406 = vpow.pop %v2405
    %v2407 = vadd.f32 %v2406, 1.0
    %v2408 = vrcp.pop %v2407
    %v2409 = vmul.f32 1.0, %v2408
    %2411 = vrot.lane.b32.xlu0 %v2403, 80
    %v2412 = vpop.permute.xlu0 %2411
    %v2414 = vmul.f32 %v2409, %v2412
    %2416 = vrot.lane.b32.xlu0 %v2414, 32
    %v2417 = vpop.permute.xlu0 %2416
    %v2419 = vadd.f32 %v2403, %v2417
    %v2420 = vtanh.pop %v2419
    %v2421 = vsub.f32 1.0, %v2409
    %2423 = vrot.lane.b32.xlu0 %v2420, 112
    %v2424 = vpop.permute.xlu0 %2423
    %v2426 = vmul.f32 %v2421, %v2424
    %2427 = vrot.lane.b32.xlu0 %v2256, 16
    %v2428 = vpop.permute.xlu0 %2427
    %v2430 = vmul.f32 %v2409, %v2428
    %v2431 = vadd.f32 %v2426, %v2430
    %v2432 = vmul.f32 %v2431, 1.442695
    %v2433 = vpow.pop %v2432
    %2435 = vrot.lane.b32.xlu0 %v2433, 112
    %v2436 = vpop.permute.xlu0 %2435
    %2439 = vrot.lane.b32.xlu0 %v2431, 112
    %v2440 = vpop.permute.xlu0 %2439
    %v2442 = vsel %vm599, %v2436, %v2440
    %2444 = vrot.lane.b32.xlu0 %v2102, 24
    %v2445 = vpop.permute.xlu0 %2444
    %v2447 = vmul.f32 %v2433, %v2445
    %2449 = vrot.lane.b32.xlu0 %v2447, 120
    %v2450 = vpop.permute.xlu0 %2449
    %v2452 = vadd.f32 %v2431, %v2450
    %2454 = vrot.lane.b32.xlu0 %v2452, 112
    %v2455 = vpop.permute.xlu0 %2454
    %v2456 = vsel %vm243, %v2455, 0
    %2458 = vmatprep.subr.mxu0 0.0
    %2459 = vmatpush1.msra.mxu0 0.0
    %2460 = vmatprep.subr.mxu0 0.0
    %2461 = vmatpush1.msra.mxu0 0.0
    %2462 = vmatprep.subr.mxu0 0.0
    %2463 = vmatpush1.msra.mxu0 0.0
    %2464 = vmatprep.subr.mxu0 0.0
    %2465 = vmatpush1.msra.mxu0 0.0
    %2466 = vmatprep.subr.mxu0 0.0
    %2467 = vmatpush1.msra.mxu0 0.0
    %2468 = vmatprep.subr.mxu0 0.0
    %2469 = vmatpush1.msra.mxu0 0.0
    %2470 = vmatprep.subr.mxu0 0.0
    %2471 = vmatpush1.msra.mxu0 0.0
    %2472 = vmatprep.subr.mxu0 0.0
    %2473 = vmatpush1.msra.mxu0 0.0
    %2474 = vmatprep.subr.mxu0 0.0
    %2475 = vmatpush1.msra.mxu0 0.0
    %2476 = vmatprep.subr.mxu0 0.0
    %2477 = vmatpush1.msra.mxu0 0.0
    %2478 = vmatprep.subr.mxu0 0.0
    %2479 = vmatpush1.msra.mxu0 0.0
    %2480 = vmatprep.subr.mxu0 0.0
    %2481 = vmatpush1.msra.mxu0 0.0
    %2482 = vmatprep.subr.mxu0 0.0
    %2483 = vmatpush1.msra.mxu0 0.0
    %2484 = vmatprep.subr.mxu0 0.0
    %2485 = vmatpush1.msra.mxu0 0.0
    %2486 = vmatprep.subr.mxu0 0.0
    %2487 = vmatpush1.msra.mxu0 0.0
    %2488 = vmatprep.subr.mxu0 0.0
    %2489 = vmatpush1.msra.mxu0 %v192
    %2490 = vmatprep.subr.mxu0 0.0
    %2491 = vmatpush2.msra.mxu0 0.0
    %2492 = vmatprep.subr.mxu0 0.0
    %2493 = vmatpush2.msra.mxu0 0.0
    %2494 = vmatprep.subr.mxu0 0.0
    %2495 = vmatpush2.msra.mxu0 0.0
    %2496 = vmatprep.subr.mxu0 0.0
    %2497 = vmatpush2.msra.mxu0 0.0
    %2498 = vmatprep.subr.mxu0 0.0
    %2499 = vmatpush2.msra.mxu0 0.0
    %2500 = vmatprep.subr.mxu0 0.0
    %2501 = vmatpush2.msra.mxu0 0.0
    %2502 = vmatprep.subr.mxu0 0.0
    %2503 = vmatpush2.msra.mxu0 0.0
    %2504 = vmatprep.subr.mxu0 0.0
    %2505 = vmatpush2.msra.mxu0 0.0
    %2506 = vmatprep.subr.mxu0 0.0
    %2507 = vmatpush2.msra.mxu0 0.0
    %2508 = vmatprep.subr.mxu0 0.0
    %2509 = vmatpush2.msra.mxu0 0.0
    %2510 = vmatprep.subr.mxu0 0.0
    %2511 = vmatpush2.msra.mxu0 0.0
    %2512 = vmatprep.subr.mxu0 0.0
    %2513 = vmatpush2.msra.mxu0 0.0
    %2514 = vmatprep.subr.mxu0 0.0
    %2515 = vmatpush2.msra.mxu0 0.0
    %2516 = vmatprep.subr.mxu0 0.0
    %2517 = vmatpush2.msra.mxu0 0.0
    %2518 = vmatprep.subr.mxu0 0.0
    %2519 = vmatpush2.msra.mxu0 0.0
    %2520 = vmatprep.subr.mxu0 0.0
    %2521 = vmatpush2.msra.mxu0 0.0
    %2522 = vmatprep.mubr.f32.mxu0 0.0
    %2523 = vmatmul.mubr.f32.gmra.mxu0 %v2456
    %v2524 = vpop.f32.mrf.mxu0
    %v2525 = vadd.f32 %v623, %v2524
    %v2526 = vpop.f32.mrf.mxu0
    %2527 = vdwg.mxu0
    %v2528 = vmax.f32 %v2525, 0.0
    %v2530 = vsel %vm707, %v2528, 0
    %2532 = vmatprep.subr.mxu0 0.0
    %2533 = vmatpush1.msra.mxu0 0.0
    %2534 = vmatprep.subr.mxu0 0.0
    %2535 = vmatpush1.msra.mxu0 0.0
    %2536 = vmatprep.subr.mxu0 0.0
    %2537 = vmatpush1.msra.mxu0 0.0
    %2538 = vmatprep.subr.mxu0 0.0
    %2539 = vmatpush1.msra.mxu0 0.0
    %2540 = vmatprep.subr.mxu0 0.0
    %2541 = vmatpush1.msra.mxu0 0.0
    %2542 = vmatprep.subr.mxu0 0.0
    %2543 = vmatpush1.msra.mxu0 0.0
    %2544 = vmatprep.subr.mxu0 0.0
    %2545 = vmatpush1.msra.mxu0 0.0
    %2546 = vmatprep.subr.mxu0 0.0
    %2547 = vmatpush1.msra.mxu0 0.0
    %2548 = vmatprep.subr.mxu0 0.0
    %2549 = vmatpush1.msra.mxu0 0.0
    %2550 = vmatprep.subr.mxu0 0.0
    %2551 = vmatpush1.msra.mxu0 0.0
    %2552 = vmatprep.subr.mxu0 0.0
    %2553 = vmatpush1.msra.mxu0 0.0
    %2554 = vmatprep.subr.mxu0 0.0
    %2555 = vmatpush1.msra.mxu0 0.0
    %2556 = vmatprep.subr.mxu0 0.0
    %2557 = vmatpush1.msra.mxu0 %v196
    %2558 = vmatprep.subr.mxu0 0.0
    %2559 = vmatpush1.msra.mxu0 %v195
    %2560 = vmatprep.subr.mxu0 0.0
    %2561 = vmatpush1.msra.mxu0 %v194
    %2562 = vmatprep.subr.mxu0 0.0
    %2563 = vmatpush1.msra.mxu0 %v193
    %2564 = vmatprep.subr.mxu0 0.0
    %2565 = vmatpush2.msra.mxu0 0.0
    %2566 = vmatprep.subr.mxu0 0.0
    %2567 = vmatpush2.msra.mxu0 0.0
    %2568 = vmatprep.subr.mxu0 0.0
    %2569 = vmatpush2.msra.mxu0 0.0
    %2570 = vmatprep.subr.mxu0 0.0
    %2571 = vmatpush2.msra.mxu0 0.0
    %2572 = vmatprep.subr.mxu0 0.0
    %2573 = vmatpush2.msra.mxu0 0.0
    %2574 = vmatprep.subr.mxu0 0.0
    %2575 = vmatpush2.msra.mxu0 0.0
    %2576 = vmatprep.subr.mxu0 0.0
    %2577 = vmatpush2.msra.mxu0 0.0
    %2578 = vmatprep.subr.mxu0 0.0
    %2579 = vmatpush2.msra.mxu0 0.0
    %2580 = vmatprep.subr.mxu0 0.0
    %2581 = vmatpush2.msra.mxu0 0.0
    %2582 = vmatprep.subr.mxu0 0.0
    %2583 = vmatpush2.msra.mxu0 0.0
    %2584 = vmatprep.subr.mxu0 0.0
    %2585 = vmatpush2.msra.mxu0 0.0
    %2586 = vmatprep.subr.mxu0 0.0
    %2587 = vmatpush2.msra.mxu0 0.0
    %2588 = vmatprep.subr.mxu0 0.0
    %2589 = vmatpush2.msra.mxu0 0.0
    %2590 = vmatprep.subr.mxu0 0.0
    %2591 = vmatpush2.msra.mxu0 0.0
    %2592 = vmatprep.subr.mxu0 0.0
    %2593 = vmatpush2.msra.mxu0 0.0
    %2594 = vmatprep.subr.mxu0 0.0
    %2595 = vmatpush2.msra.mxu0 0.0
    %2596 = vmatprep.mubr.f32.mxu0 0.0
    %2597 = vmatmul.mubr.f32.gmra.mxu0 %v2530
    %v2598 = vpop.f32.mrf.mxu0
    %v2599 = vadd.f32 %v705, %v2598
    %v2600 = vpop.f32.mrf.mxu0
    %2601 = vdwg.mxu0
    %v2603 = vsel %vm707, %v2599, 0
    %2605 = vmatprep.subr.mxu0 0.0
    %2606 = vmatpush1.msra.mxu0 0.0
    %2607 = vmatprep.subr.mxu0 0.0
    %2608 = vmatpush1.msra.mxu0 0.0
    %2609 = vmatprep.subr.mxu0 0.0
    %2610 = vmatpush1.msra.mxu0 0.0
    %2611 = vmatprep.subr.mxu0 0.0
    %2612 = vmatpush1.msra.mxu0 0.0
    %2613 = vmatprep.subr.mxu0 0.0
    %2614 = vmatpush1.msra.mxu0 0.0
    %2615 = vmatprep.subr.mxu0 0.0
    %2616 = vmatpush1.msra.mxu0 0.0
    %2617 = vmatprep.subr.mxu0 0.0
    %2618 = vmatpush1.msra.mxu0 0.0
    %2619 = vmatprep.subr.mxu0 0.0
    %2620 = vmatpush1.msra.mxu0 0.0
    %2621 = vmatprep.subr.mxu0 0.0
    %2622 = vmatpush1.msra.mxu0 0.0
    %2623 = vmatprep.subr.mxu0 0.0
    %2624 = vmatpush1.msra.mxu0 0.0
    %2625 = vmatprep.subr.mxu0 0.0
    %2626 = vmatpush1.msra.mxu0 0.0
    %2627 = vmatprep.subr.mxu0 0.0
    %2628 = vmatpush1.msra.mxu0 0.0
    %2629 = vmatprep.subr.mxu0 %v204
    %2630 = vmatpush1.msra.mxu0 %v203
    %2631 = vmatprep.subr.mxu0 %v202
    %2632 = vmatpush1.msra.mxu0 %v201
    %2633 = vmatprep.subr.mxu0 %v200
    %2634 = vmatpush1.msra.mxu0 %v199
    %2635 = vmatprep.subr.mxu0 %v198
    %2636 = vmatpush1.msra.mxu0 %v197
    %2637 = vmatprep.subr.mxu0 0.0
    %2638 = vmatpush2.msra.mxu0 0.0
    %2639 = vmatprep.subr.mxu0 0.0
    %2640 = vmatpush2.msra.mxu0 0.0
    %2641 = vmatprep.subr.mxu0 0.0
    %2642 = vmatpush2.msra.mxu0 0.0
    %2643 = vmatprep.subr.mxu0 0.0
    %2644 = vmatpush2.msra.mxu0 0.0
    %2645 = vmatprep.subr.mxu0 0.0
    %2646 = vmatpush2.msra.mxu0 0.0
    %2647 = vmatprep.subr.mxu0 0.0
    %2648 = vmatpush2.msra.mxu0 0.0
    %2649 = vmatprep.subr.mxu0 0.0
    %2650 = vmatpush2.msra.mxu0 0.0
    %2651 = vmatprep.subr.mxu0 0.0
    %2652 = vmatpush2.msra.mxu0 0.0
    %2653 = vmatprep.subr.mxu0 0.0
    %2654 = vmatpush2.msra.mxu0 0.0
    %2655 = vmatprep.subr.mxu0 0.0
    %2656 = vmatpush2.msra.mxu0 0.0
    %2657 = vmatprep.subr.mxu0 0.0
    %2658 = vmatpush2.msra.mxu0 0.0
    %2659 = vmatprep.subr.mxu0 0.0
    %2660 = vmatpush2.msra.mxu0 0.0
    %2661 = vmatprep.subr.mxu0 0.0
    %2662 = vmatpush2.msra.mxu0 0.0
    %2663 = vmatprep.subr.mxu0 0.0
    %2664 = vmatpush2.msra.mxu0 0.0
    %2665 = vmatprep.subr.mxu0 0.0
    %2666 = vmatpush2.msra.mxu0 0.0
    %2667 = vmatprep.subr.mxu0 0.0
    %2668 = vmatpush2.msra.mxu0 0.0
    %2669 = vmatprep.mubr.f32.mxu0 0.0
    %2670 = vmatmul.mubr.f32.gmra.mxu0 %v2603
    %v2671 = vpop.f32.mrf.mxu0
    %v2672 = vadd.f32 %v785, %v2671
    %v2673 = vpop.f32.mrf.mxu0
    %v2674 = vadd.f32 %v789, %v2673
    %2675 = vdwg.mxu0
    %2676 = vmatprep.subr.mxu0 0.0
    %2677 = vmatpush1.msra.mxu0 0.0
    %2678 = vmatprep.subr.mxu0 0.0
    %2679 = vmatpush1.msra.mxu0 0.0
    %2680 = vmatprep.subr.mxu0 0.0
    %2681 = vmatpush1.msra.mxu0 0.0
    %2682 = vmatprep.subr.mxu0 0.0
    %2683 = vmatpush1.msra.mxu0 0.0
    %2684 = vmatprep.subr.mxu0 0.0
    %2685 = vmatpush1.msra.mxu0 0.0
    %2686 = vmatprep.subr.mxu0 0.0
    %2687 = vmatpush1.msra.mxu0 0.0
    %2688 = vmatprep.subr.mxu0 0.0
    %2689 = vmatpush1.msra.mxu0 0.0
    %2690 = vmatprep.subr.mxu0 0.0
    %2691 = vmatpush1.msra.mxu0 0.0
    %2692 = vmatprep.subr.mxu0 0.0
    %2693 = vmatpush1.msra.mxu0 0.0
    %2694 = vmatprep.subr.mxu0 0.0
    %2695 = vmatpush1.msra.mxu0 0.0
    %2696 = vmatprep.subr.mxu0 0.0
    %2697 = vmatpush1.msra.mxu0 0.0
    %2698 = vmatprep.subr.mxu0 0.0
    %2699 = vmatpush1.msra.mxu0 0.0
    %2700 = vmatprep.subr.mxu0 0.0
    %2701 = vmatpush1.msra.mxu0 %v212
    %2702 = vmatprep.subr.mxu0 0.0
    %2703 = vmatpush1.msra.mxu0 %v211
    %2704 = vmatprep.subr.mxu0 0.0
    %2705 = vmatpush1.msra.mxu0 %v210
    %2706 = vmatprep.subr.mxu0 0.0
    %2707 = vmatpush1.msra.mxu0 %v209
    %2708 = vmatprep.subr.mxu0 0.0
    %2709 = vmatpush2.msra.mxu0 0.0
    %2710 = vmatprep.subr.mxu0 0.0
    %2711 = vmatpush2.msra.mxu0 0.0
    %2712 = vmatprep.subr.mxu0 0.0
    %2713 = vmatpush2.msra.mxu0 0.0
    %2714 = vmatprep.subr.mxu0 0.0
    %2715 = vmatpush2.msra.mxu0 0.0
    %2716 = vmatprep.subr.mxu0 0.0
    %2717 = vmatpush2.msra.mxu0 0.0
    %2718 = vmatprep.subr.mxu0 0.0
    %2719 = vmatpush2.msra.mxu0 0.0
    %2720 = vmatprep.subr.mxu0 0.0
    %2721 = vmatpush2.msra.mxu0 0.0
    %2722 = vmatprep.subr.mxu0 0.0
    %2723 = vmatpush2.msra.mxu0 0.0
    %2724 = vmatprep.subr.mxu0 0.0
    %2725 = vmatpush2.msra.mxu0 0.0
    %2726 = vmatprep.subr.mxu0 0.0
    %2727 = vmatpush2.msra.mxu0 0.0
    %2728 = vmatprep.subr.mxu0 0.0
    %2729 = vmatpush2.msra.mxu0 0.0
    %2730 = vmatprep.subr.mxu0 0.0
    %2731 = vmatpush2.msra.mxu0 0.0
    %2732 = vmatprep.subr.mxu0 0.0
    %2733 = vmatpush2.msra.mxu0 0.0
    %2734 = vmatprep.subr.mxu0 0.0
    %2735 = vmatpush2.msra.mxu0 0.0
    %2736 = vmatprep.subr.mxu0 0.0
    %2737 = vmatpush2.msra.mxu0 0.0
    %2738 = vmatprep.subr.mxu0 0.0
    %2739 = vmatpush2.msra.mxu0 0.0
    %2740 = vmatprep.mubr.f32.mxu0 0.0
    %2741 = vmatmul.mubr.f32.gmra.mxu0 %v1949
    %v2742 = vpop.f32.mrf.mxu0
    %v2743 = vadd.f32 0.0, %v2742
    %v2744 = vpop.f32.mrf.mxu0
    %2745 = vdwg.mxu0
    %2746 = vrot.lane.b32.xlu0 %v2100, 112
    %v2747 = vpop.permute.xlu0 %2746
    %v2748 = vsel %vm707, %v2747, 0
    %2750 = vmatprep.subr.mxu0 0.0
    %2751 = vmatpush1.msra.mxu0 0.0
    %2752 = vmatprep.subr.mxu0 0.0
    %2753 = vmatpush1.msra.mxu0 0.0
    %2754 = vmatprep.subr.mxu0 0.0
    %2755 = vmatpush1.msra.mxu0 0.0
    %2756 = vmatprep.subr.mxu0 0.0
    %2757 = vmatpush1.msra.mxu0 0.0
    %2758 = vmatprep.subr.mxu0 0.0
    %2759 = vmatpush1.msra.mxu0 0.0
    %2760 = vmatprep.subr.mxu0 0.0
    %2761 = vmatpush1.msra.mxu0 0.0
    %2762 = vmatprep.subr.mxu0 0.0
    %2763 = vmatpush1.msra.mxu0 0.0
    %2764 = vmatprep.subr.mxu0 0.0
    %2765 = vmatpush1.msra.mxu0 0.0
    %2766 = vmatprep.subr.mxu0 0.0
    %2767 = vmatpush1.msra.mxu0 0.0
    %2768 = vmatprep.subr.mxu0 0.0
    %2769 = vmatpush1.msra.mxu0 0.0
    %2770 = vmatprep.subr.mxu0 0.0
    %2771 = vmatpush1.msra.mxu0 0.0
    %2772 = vmatprep.subr.mxu0 0.0
    %2773 = vmatpush1.msra.mxu0 0.0
    %2774 = vmatprep.subr.mxu0 0.0
    %2775 = vmatpush1.msra.mxu0 %v208
    %2776 = vmatprep.subr.mxu0 0.0
    %2777 = vmatpush1.msra.mxu0 %v207
    %2778 = vmatprep.subr.mxu0 0.0
    %2779 = vmatpush1.msra.mxu0 %v206
    %2780 = vmatprep.subr.mxu0 0.0
    %2781 = vmatpush1.msra.mxu0 %v205
    %2782 = vmatprep.subr.mxu0 0.0
    %2783 = vmatpush2.msra.mxu0 0.0
    %2784 = vmatprep.subr.mxu0 0.0
    %2785 = vmatpush2.msra.mxu0 0.0
    %2786 = vmatprep.subr.mxu0 0.0
    %2787 = vmatpush2.msra.mxu0 0.0
    %2788 = vmatprep.subr.mxu0 0.0
    %2789 = vmatpush2.msra.mxu0 0.0
    %2790 = vmatprep.subr.mxu0 0.0
    %2791 = vmatpush2.msra.mxu0 0.0
    %2792 = vmatprep.subr.mxu0 0.0
    %2793 = vmatpush2.msra.mxu0 0.0
    %2794 = vmatprep.subr.mxu0 0.0
    %2795 = vmatpush2.msra.mxu0 0.0
    %2796 = vmatprep.subr.mxu0 0.0
    %2797 = vmatpush2.msra.mxu0 0.0
    %2798 = vmatprep.subr.mxu0 0.0
    %2799 = vmatpush2.msra.mxu0 0.0
    %2800 = vmatprep.subr.mxu0 0.0
    %2801 = vmatpush2.msra.mxu0 0.0
    %2802 = vmatprep.subr.mxu0 0.0
    %2803 = vmatpush2.msra.mxu0 0.0
    %2804 = vmatprep.subr.mxu0 0.0
    %2805 = vmatpush2.msra.mxu0 0.0
    %2806 = vmatprep.subr.mxu0 0.0
    %2807 = vmatpush2.msra.mxu0 0.0
    %2808 = vmatprep.subr.mxu0 0.0
    %2809 = vmatpush2.msra.mxu0 0.0
    %2810 = vmatprep.subr.mxu0 0.0
    %2811 = vmatpush2.msra.mxu0 0.0
    %2812 = vmatprep.subr.mxu0 0.0
    %2813 = vmatpush2.msra.mxu0 0.0
    %2814 = vmatprep.mubr.f32.mxu0 0.0
    %2815 = vmatmul.mubr.f32.gmra.mxu0 %v2748
    %v2816 = vpop.f32.mrf.mxu0
    %v2817 = vadd.f32 %v2743, %v2816
    %v2818 = vpop.f32.mrf.mxu0
    %2819 = vdwg.mxu0
    %v2820 = vadd.f32 %v2817, %v1017
    %v2821 = vxor.u32 %v2820, 2147483648
    %v2822 = vmul.f32 %v2821, 1.442695
    %v2823 = vpow.pop %v2822
    %v2824 = vadd.f32 %v2823, 1.0
    %v2825 = vrcp.pop %v2824
    %v2826 = vmul.f32 1.0, %v2825
    %2828 = vrot.lane.b32.xlu0 %v2820, 32
    %v2829 = vpop.permute.xlu0 %2828
    %v2831 = vmul.f32 %v2826, %v2829
    %2833 = vrot.lane.b32.xlu0 %v2831, 64
    %v2834 = vpop.permute.xlu0 %2833
    %v2836 = vadd.f32 %v2820, %v2834
    %v2837 = vtanh.pop %v2836
    %v2838 = vsub.f32 1.0, %v2826
    %2840 = vrot.lane.b32.xlu0 %v2837, 96
    %v2841 = vpop.permute.xlu0 %2840
    %v2843 = vmul.f32 %v2838, %v2841
    %v2844 = vmul.f32 %v2826, %v1945
    %v2845 = vadd.f32 %v2843, %v2844
    %2847 = vrot.lane.b32.xlu0 %v2845, 96
    %v2848 = vpop.permute.xlu0 %2847
    %v2849 = vsel %vm707, %v2848, 0
    %2851 = vmatprep.subr.mxu0 0.0
    %2852 = vmatpush1.msra.mxu0 0.0
    %2853 = vmatprep.subr.mxu0 0.0
    %2854 = vmatpush1.msra.mxu0 0.0
    %2855 = vmatprep.subr.mxu0 0.0
    %2856 = vmatpush1.msra.mxu0 0.0
    %2857 = vmatprep.subr.mxu0 0.0
    %2858 = vmatpush1.msra.mxu0 0.0
    %2859 = vmatprep.subr.mxu0 0.0
    %2860 = vmatpush1.msra.mxu0 0.0
    %2861 = vmatprep.subr.mxu0 0.0
    %2862 = vmatpush1.msra.mxu0 0.0
    %2863 = vmatprep.subr.mxu0 0.0
    %2864 = vmatpush1.msra.mxu0 0.0
    %2865 = vmatprep.subr.mxu0 0.0
    %2866 = vmatpush1.msra.mxu0 0.0
    %2867 = vmatprep.subr.mxu0 0.0
    %2868 = vmatpush1.msra.mxu0 0.0
    %2869 = vmatprep.subr.mxu0 0.0
    %2870 = vmatpush1.msra.mxu0 0.0
    %2871 = vmatprep.subr.mxu0 0.0
    %2872 = vmatpush1.msra.mxu0 0.0
    %2873 = vmatprep.subr.mxu0 0.0
    %2874 = vmatpush1.msra.mxu0 0.0
    %2875 = vmatprep.subr.mxu0 0.0
    %2876 = vmatpush1.msra.mxu0 %v216
    %2877 = vmatprep.subr.mxu0 0.0
    %2878 = vmatpush1.msra.mxu0 %v215
    %2879 = vmatprep.subr.mxu0 0.0
    %2880 = vmatpush1.msra.mxu0 %v214
    %2881 = vmatprep.subr.mxu0 0.0
    %2882 = vmatpush1.msra.mxu0 %v213
    %2883 = vmatprep.subr.mxu0 0.0
    %2884 = vmatpush2.msra.mxu0 0.0
    %2885 = vmatprep.subr.mxu0 0.0
    %2886 = vmatpush2.msra.mxu0 0.0
    %2887 = vmatprep.subr.mxu0 0.0
    %2888 = vmatpush2.msra.mxu0 0.0
    %2889 = vmatprep.subr.mxu0 0.0
    %2890 = vmatpush2.msra.mxu0 0.0
    %2891 = vmatprep.subr.mxu0 0.0
    %2892 = vmatpush2.msra.mxu0 0.0
    %2893 = vmatprep.subr.mxu0 0.0
    %2894 = vmatpush2.msra.mxu0 0.0
    %2895 = vmatprep.subr.mxu0 0.0
    %2896 = vmatpush2.msra.mxu0 0.0
    %2897 = vmatprep.subr.mxu0 0.0
    %2898 = vmatpush2.msra.mxu0 0.0
    %2899 = vmatprep.subr.mxu0 0.0
    %2900 = vmatpush2.msra.mxu0 0.0
    %2901 = vmatprep.subr.mxu0 0.0
    %2902 = vmatpush2.msra.mxu0 0.0
    %2903 = vmatprep.subr.mxu0 0.0
    %2904 = vmatpush2.msra.mxu0 0.0
    %2905 = vmatprep.subr.mxu0 0.0
    %2906 = vmatpush2.msra.mxu0 0.0
    %2907 = vmatprep.subr.mxu0 0.0
    %2908 = vmatpush2.msra.mxu0 0.0
    %2909 = vmatprep.subr.mxu0 0.0
    %2910 = vmatpush2.msra.mxu0 0.0
    %2911 = vmatprep.subr.mxu0 0.0
    %2912 = vmatpush2.msra.mxu0 0.0
    %2913 = vmatprep.subr.mxu0 0.0
    %2914 = vmatpush2.msra.mxu0 0.0
    %2915 = vmatprep.mubr.f32.mxu0 0.0
    %2916 = vmatmul.mubr.f32.gmra.mxu0 %v2849
    %v2917 = vpop.f32.mrf.mxu0
    %v2918 = vadd.f32 0.0, %v2917
    %v2919 = vpop.f32.mrf.mxu0
    %2920 = vdwg.mxu0
    %v2921 = vmul.f32 %v2672, %v2918
    %2922 = vmatprep.subr.mxu0 0.0
    %2923 = vmatpush1.msra.mxu0 %v232
    %2924 = vmatprep.subr.mxu0 0.0
    %2925 = vmatpush1.msra.mxu0 %v231
    %2926 = vmatprep.subr.mxu0 0.0
    %2927 = vmatpush1.msra.mxu0 %v230
    %2928 = vmatprep.subr.mxu0 0.0
    %2929 = vmatpush1.msra.mxu0 %v229
    %2930 = vmatprep.subr.mxu0 0.0
    %2931 = vmatpush1.msra.mxu0 %v228
    %2932 = vmatprep.subr.mxu0 0.0
    %2933 = vmatpush1.msra.mxu0 %v227
    %2934 = vmatprep.subr.mxu0 0.0
    %2935 = vmatpush1.msra.mxu0 %v226
    %2936 = vmatprep.subr.mxu0 0.0
    %2937 = vmatpush1.msra.mxu0 %v225
    %2938 = vmatprep.subr.mxu0 0.0
    %2939 = vmatpush1.msra.mxu0 %v224
    %2940 = vmatprep.subr.mxu0 0.0
    %2941 = vmatpush1.msra.mxu0 %v223
    %2942 = vmatprep.subr.mxu0 0.0
    %2943 = vmatpush1.msra.mxu0 %v222
    %2944 = vmatprep.subr.mxu0 0.0
    %2945 = vmatpush1.msra.mxu0 %v221
    %2946 = vmatprep.subr.mxu0 0.0
    %2947 = vmatpush1.msra.mxu0 %v220
    %2948 = vmatprep.subr.mxu0 0.0
    %2949 = vmatpush1.msra.mxu0 %v219
    %2950 = vmatprep.subr.mxu0 0.0
    %2951 = vmatpush1.msra.mxu0 %v218
    %2952 = vmatprep.subr.mxu0 0.0
    %2953 = vmatpush1.msra.mxu0 %v217
    %2954 = vmatprep.subr.mxu0 0.0
    %2955 = vmatpush2.msra.mxu0 0.0
    %2956 = vmatprep.subr.mxu0 0.0
    %2957 = vmatpush2.msra.mxu0 0.0
    %2958 = vmatprep.subr.mxu0 0.0
    %2959 = vmatpush2.msra.mxu0 0.0
    %2960 = vmatprep.subr.mxu0 0.0
    %2961 = vmatpush2.msra.mxu0 0.0
    %2962 = vmatprep.subr.mxu0 0.0
    %2963 = vmatpush2.msra.mxu0 0.0
    %2964 = vmatprep.subr.mxu0 0.0
    %2965 = vmatpush2.msra.mxu0 0.0
    %2966 = vmatprep.subr.mxu0 0.0
    %2967 = vmatpush2.msra.mxu0 0.0
    %2968 = vmatprep.subr.mxu0 0.0
    %2969 = vmatpush2.msra.mxu0 0.0
    %2970 = vmatprep.subr.mxu0 0.0
    %2971 = vmatpush2.msra.mxu0 0.0
    %2972 = vmatprep.subr.mxu0 0.0
    %2973 = vmatpush2.msra.mxu0 0.0
    %2974 = vmatprep.subr.mxu0 0.0
    %2975 = vmatpush2.msra.mxu0 0.0
    %2976 = vmatprep.subr.mxu0 0.0
    %2977 = vmatpush2.msra.mxu0 0.0
    %2978 = vmatprep.subr.mxu0 0.0
    %2979 = vmatpush2.msra.mxu0 0.0
    %2980 = vmatprep.subr.mxu0 0.0
    %2981 = vmatpush2.msra.mxu0 0.0
    %2982 = vmatprep.subr.mxu0 0.0
    %2983 = vmatpush2.msra.mxu0 0.0
    %2984 = vmatprep.subr.mxu0 0.0
    %2985 = vmatpush2.msra.mxu0 0.0
    %2986 = vmatprep.mubr.f32.mxu0 0.0
    %2987 = vmatmul.mubr.f32.gmra.mxu0 %v2921
    %v2988 = vpop.f32.mrf.mxu0
    %v2989 = vadd.f32 %v2674, %v2988
    %v2990 = vpop.f32.mrf.mxu0
    %2991 = vdwg.mxu0
    %s2992 = scalar_lea.vmem %s20, 16
    %2993 = vst.msk [vmem:[%s2992] sm:$0xff] %vm1194, %v2989
    %s2995 = scalar_lea.vmem [#allocation17], 16
    %2996 = vst.msk [vmem:[%s2995] sm:$0xff] %vm707, %v2848
    %s2997 = scalar_lea.vmem [#allocation18], 16
    %2998 = vst.msk [vmem:[%s2997] sm:$0xff] %vm413, %v2442
    %s2999 = scalar_lea.vmem %s0, 24
    %v3000 = vld [vmem:[%s2999] sm:$0xff]
    %s3001 = scalar_lea.vmem %s1, 24
    %v3002 = vld [vmem:[%s3001] sm:$0xff]
    %3003 = vmatprep.subr.mxu0 0.0
    %3004 = vmatpush1.msra.mxu0 0.0
    %3005 = vmatprep.subr.mxu0 0.0
    %3006 = vmatpush1.msra.mxu0 0.0
    %3007 = vmatprep.subr.mxu0 0.0
    %3008 = vmatpush1.msra.mxu0 0.0
    %3009 = vmatprep.subr.mxu0 0.0
    %3010 = vmatpush1.msra.mxu0 0.0
    %3011 = vmatprep.subr.mxu0 0.0
    %3012 = vmatpush1.msra.mxu0 0.0
    %3013 = vmatprep.subr.mxu0 0.0
    %3014 = vmatpush1.msra.mxu0 0.0
    %3015 = vmatprep.subr.mxu0 0.0
    %3016 = vmatpush1.msra.mxu0 0.0
    %3017 = vmatprep.subr.mxu0 0.0
    %3018 = vmatpush1.msra.mxu0 0.0
    %3019 = vmatprep.subr.mxu0 0.0
    %3020 = vmatpush1.msra.mxu0 0.0
    %3021 = vmatprep.subr.mxu0 0.0
    %3022 = vmatpush1.msra.mxu0 0.0
    %3023 = vmatprep.subr.mxu0 0.0
    %3024 = vmatpush1.msra.mxu0 0.0
    %3025 = vmatprep.subr.mxu0 0.0
    %3026 = vmatpush1.msra.mxu0 0.0
    %3027 = vmatprep.subr.mxu0 0.0
    %3028 = vmatpush1.msra.mxu0 0.0
    %3029 = vmatprep.subr.mxu0 0.0
    %3030 = vmatpush1.msra.mxu0 0.0
    %3031 = vmatprep.subr.mxu0 0.0
    %3032 = vmatpush1.msra.mxu0 0.0
    %3033 = vmatprep.subr.mxu0 0.0
    %3034 = vmatpush1.msra.mxu0 %v2442
    %3035 = vmatprep.subr.mxu0 0.0
    %3036 = vmatpush2.msra.mxu0 0.0
    %3037 = vmatprep.subr.mxu0 0.0
    %3038 = vmatpush2.msra.mxu0 0.0
    %3039 = vmatprep.subr.mxu0 0.0
    %3040 = vmatpush2.msra.mxu0 0.0
    %3041 = vmatprep.subr.mxu0 0.0
    %3042 = vmatpush2.msra.mxu0 0.0
    %3043 = vmatprep.subr.mxu0 0.0
    %3044 = vmatpush2.msra.mxu0 0.0
    %3045 = vmatprep.subr.mxu0 0.0
    %3046 = vmatpush2.msra.mxu0 0.0
    %3047 = vmatprep.subr.mxu0 0.0
    %3048 = vmatpush2.msra.mxu0 0.0
    %3049 = vmatprep.subr.mxu0 0.0
    %3050 = vmatpush2.msra.mxu0 0.0
    %3051 = vmatprep.subr.mxu0 0.0
    %3052 = vmatpush2.msra.mxu0 0.0
    %3053 = vmatprep.subr.mxu0 0.0
    %3054 = vmatpush2.msra.mxu0 0.0
    %3055 = vmatprep.subr.mxu0 0.0
    %3056 = vmatpush2.msra.mxu0 0.0
    %3057 = vmatprep.subr.mxu0 0.0
    %3058 = vmatpush2.msra.mxu0 0.0
    %3059 = vmatprep.subr.mxu0 0.0
    %3060 = vmatpush2.msra.mxu0 0.0
    %3061 = vmatprep.subr.mxu0 0.0
    %3062 = vmatpush2.msra.mxu0 0.0
    %3063 = vmatprep.subr.mxu0 0.0
    %3064 = vmatpush2.msra.mxu0 0.0
    %3065 = vmatprep.subr.mxu0 0.0
    %3066 = vmatpush2.msra.mxu0 0.0
    %3067 = vmatprep.mubr.f32.mxu0 0.0
    %3068 = vmatmul.mubr.f32.gmra.mxu0 %v245
    %v3069 = vpop.f32.mrf.mxu0
    %v3070 = vadd.f32 0.0, %v3069
    %v3071 = vpop.f32.mrf.mxu0
    %3072 = vdwg.mxu0
    %v3073 = vlaneseq
    %v3074 = vshrl.u32 %v3073, 7
    %v3075 = vsub.s32 0, %v3074
    %v3076 = vrot.slane %v3070, %v3075
    %v3077 = vsub.f32 %v2442, %v3076
    %v3078 = vmul.f32 %v3077, %v3077
    %3079 = vmatprep.subr.mxu0 0.0
    %3080 = vmatpush1.msra.mxu0 0.0
    %3081 = vmatprep.subr.mxu0 0.0
    %3082 = vmatpush1.msra.mxu0 0.0
    %3083 = vmatprep.subr.mxu0 0.0
    %3084 = vmatpush1.msra.mxu0 0.0
    %3085 = vmatprep.subr.mxu0 0.0
    %3086 = vmatpush1.msra.mxu0 0.0
    %3087 = vmatprep.subr.mxu0 0.0
    %3088 = vmatpush1.msra.mxu0 0.0
    %3089 = vmatprep.subr.mxu0 0.0
    %3090 = vmatpush1.msra.mxu0 0.0
    %3091 = vmatprep.subr.mxu0 0.0
    %3092 = vmatpush1.msra.mxu0 0.0
    %3093 = vmatprep.subr.mxu0 0.0
    %3094 = vmatpush1.msra.mxu0 0.0
    %3095 = vmatprep.subr.mxu0 0.0
    %3096 = vmatpush1.msra.mxu0 0.0
    %3097 = vmatprep.subr.mxu0 0.0
    %3098 = vmatpush1.msra.mxu0 0.0
    %3099 = vmatprep.subr.mxu0 0.0
    %3100 = vmatpush1.msra.mxu0 0.0
    %3101 = vmatprep.subr.mxu0 0.0
    %3102 = vmatpush1.msra.mxu0 0.0
    %3103 = vmatprep.subr.mxu0 0.0
    %3104 = vmatpush1.msra.mxu0 0.0
    %3105 = vmatprep.subr.mxu0 0.0
    %3106 = vmatpush1.msra.mxu0 0.0
    %3107 = vmatprep.subr.mxu0 0.0
    %3108 = vmatpush1.msra.mxu0 0.0
    %3109 = vmatprep.subr.mxu0 0.0
    %3110 = vmatpush1.msra.mxu0 %v3078
    %3111 = vmatprep.subr.mxu0 0.0
    %3112 = vmatpush2.msra.mxu0 0.0
    %3113 = vmatprep.subr.mxu0 0.0
    %3114 = vmatpush2.msra.mxu0 0.0
    %3115 = vmatprep.subr.mxu0 0.0
    %3116 = vmatpush2.msra.mxu0 0.0
    %3117 = vmatprep.subr.mxu0 0.0
    %3118 = vmatpush2.msra.mxu0 0.0
    %3119 = vmatprep.subr.mxu0 0.0
    %3120 = vmatpush2.msra.mxu0 0.0
    %3121 = vmatprep.subr.mxu0 0.0
    %3122 = vmatpush2.msra.mxu0 0.0
    %3123 = vmatprep.subr.mxu0 0.0
    %3124 = vmatpush2.msra.mxu0 0.0
    %3125 = vmatprep.subr.mxu0 0.0
    %3126 = vmatpush2.msra.mxu0 0.0
    %3127 = vmatprep.subr.mxu0 0.0
    %3128 = vmatpush2.msra.mxu0 0.0
    %3129 = vmatprep.subr.mxu0 0.0
    %3130 = vmatpush2.msra.mxu0 0.0
    %3131 = vmatprep.subr.mxu0 0.0
    %3132 = vmatpush2.msra.mxu0 0.0
    %3133 = vmatprep.subr.mxu0 0.0
    %3134 = vmatpush2.msra.mxu0 0.0
    %3135 = vmatprep.subr.mxu0 0.0
    %3136 = vmatpush2.msra.mxu0 0.0
    %3137 = vmatprep.subr.mxu0 0.0
    %3138 = vmatpush2.msra.mxu0 0.0
    %3139 = vmatprep.subr.mxu0 0.0
    %3140 = vmatpush2.msra.mxu0 0.0
    %3141 = vmatprep.subr.mxu0 0.0
    %3142 = vmatpush2.msra.mxu0 0.0
    %3143 = vmatprep.mubr.f32.mxu0 0.0
    %3144 = vmatmul.mubr.f32.gmra.mxu0 %v245
    %v3145 = vpop.f32.mrf.mxu0
    %v3146 = vadd.f32 1e-05, %v3145
    %v3147 = vpop.f32.mrf.mxu0
    %3148 = vdwg.mxu0
    %v3149 = vrsqrt.pop %v3146
    %v3150 = vlaneseq
    %v3151 = vshrl.u32 %v3150, 7
    %v3152 = vsub.s32 0, %v3151
    %v3153 = vrot.slane %v3149, %v3152
    %v3154 = vmul.f32 %v3077, %v3153
    %v3155 = vmul.f32 %v3154, %v403
    %v3156 = vadd.f32 %v3155, %v410
    %v3158 = vsel %vm413, %v3156, 0
    %3160 = vmatprep.subr.mxu0 0.0
    %3161 = vmatpush1.msra.mxu0 0.0
    %3162 = vmatprep.subr.mxu0 0.0
    %3163 = vmatpush1.msra.mxu0 0.0
    %3164 = vmatprep.subr.mxu0 0.0
    %3165 = vmatpush1.msra.mxu0 0.0
    %3166 = vmatprep.subr.mxu0 0.0
    %3167 = vmatpush1.msra.mxu0 0.0
    %3168 = vmatprep.subr.mxu0 0.0
    %3169 = vmatpush1.msra.mxu0 0.0
    %3170 = vmatprep.subr.mxu0 0.0
    %3171 = vmatpush1.msra.mxu0 0.0
    %3172 = vmatprep.subr.mxu0 0.0
    %3173 = vmatpush1.msra.mxu0 0.0
    %3174 = vmatprep.subr.mxu0 0.0
    %3175 = vmatpush1.msra.mxu0 0.0
    %3176 = vmatprep.subr.mxu0 0.0
    %3177 = vmatpush1.msra.mxu0 0.0
    %3178 = vmatprep.subr.mxu0 0.0
    %3179 = vmatpush1.msra.mxu0 0.0
    %3180 = vmatprep.subr.mxu0 0.0
    %3181 = vmatpush1.msra.mxu0 0.0
    %3182 = vmatprep.subr.mxu0 0.0
    %3183 = vmatpush1.msra.mxu0 0.0
    %3184 = vmatprep.subr.mxu0 0.0
    %3185 = vmatpush1.msra.mxu0 0.0
    %3186 = vmatprep.subr.mxu0 0.0
    %3187 = vmatpush1.msra.mxu0 0.0
    %3188 = vmatprep.subr.mxu0 0.0
    %3189 = vmatpush1.msra.mxu0 %v191
    %3190 = vmatprep.subr.mxu0 0.0
    %3191 = vmatpush1.msra.mxu0 %v190
    %3192 = vmatprep.subr.mxu0 0.0
    %3193 = vmatpush2.msra.mxu0 0.0
    %3194 = vmatprep.subr.mxu0 0.0
    %3195 = vmatpush2.msra.mxu0 0.0
    %3196 = vmatprep.subr.mxu0 0.0
    %3197 = vmatpush2.msra.mxu0 0.0
    %3198 = vmatprep.subr.mxu0 0.0
    %3199 = vmatpush2.msra.mxu0 0.0
    %3200 = vmatprep.subr.mxu0 0.0
    %3201 = vmatpush2.msra.mxu0 0.0
    %3202 = vmatprep.subr.mxu0 0.0
    %3203 = vmatpush2.msra.mxu0 0.0
    %3204 = vmatprep.subr.mxu0 0.0
    %3205 = vmatpush2.msra.mxu0 0.0
    %3206 = vmatprep.subr.mxu0 0.0
    %3207 = vmatpush2.msra.mxu0 0.0
    %3208 = vmatprep.subr.mxu0 0.0
    %3209 = vmatpush2.msra.mxu0 0.0
    %3210 = vmatprep.subr.mxu0 0.0
    %3211 = vmatpush2.msra.mxu0 0.0
    %3212 = vmatprep.subr.mxu0 0.0
    %3213 = vmatpush2.msra.mxu0 0.0
    %3214 = vmatprep.subr.mxu0 0.0
    %3215 = vmatpush2.msra.mxu0 0.0
    %3216 = vmatprep.subr.mxu0 0.0
    %3217 = vmatpush2.msra.mxu0 0.0
    %3218 = vmatprep.subr.mxu0 0.0
    %3219 = vmatpush2.msra.mxu0 0.0
    %3220 = vmatprep.subr.mxu0 0.0
    %3221 = vmatpush2.msra.mxu0 0.0
    %3222 = vmatprep.subr.mxu0 0.0
    %3223 = vmatpush2.msra.mxu0 0.0
    %3224 = vmatprep.mubr.f32.mxu0 0.0
    %3225 = vmatmul.mubr.f32.gmra.mxu0 %v3158
    %v3226 = vpop.f32.mrf.mxu0
    %v3227 = vadd.f32 0.0, %v3226
    %v3228 = vpop.f32.mrf.mxu0
    %3229 = vdwg.mxu0
    %v3231 = vsel %vm413, %v3000, 0
    %3233 = vmatprep.subr.mxu0 0.0
    %3234 = vmatpush1.msra.mxu0 0.0
    %3235 = vmatprep.subr.mxu0 0.0
    %3236 = vmatpush1.msra.mxu0 0.0
    %3237 = vmatprep.subr.mxu0 0.0
    %3238 = vmatpush1.msra.mxu0 0.0
    %3239 = vmatprep.subr.mxu0 0.0
    %3240 = vmatpush1.msra.mxu0 0.0
    %3241 = vmatprep.subr.mxu0 0.0
    %3242 = vmatpush1.msra.mxu0 0.0
    %3243 = vmatprep.subr.mxu0 0.0
    %3244 = vmatpush1.msra.mxu0 0.0
    %3245 = vmatprep.subr.mxu0 0.0
    %3246 = vmatpush1.msra.mxu0 0.0
    %3247 = vmatprep.subr.mxu0 0.0
    %3248 = vmatpush1.msra.mxu0 0.0
    %3249 = vmatprep.subr.mxu0 0.0
    %3250 = vmatpush1.msra.mxu0 0.0
    %3251 = vmatprep.subr.mxu0 0.0
    %3252 = vmatpush1.msra.mxu0 0.0
    %3253 = vmatprep.subr.mxu0 0.0
    %3254 = vmatpush1.msra.mxu0 0.0
    %3255 = vmatprep.subr.mxu0 0.0
    %3256 = vmatpush1.msra.mxu0 0.0
    %3257 = vmatprep.subr.mxu0 0.0
    %3258 = vmatpush1.msra.mxu0 0.0
    %3259 = vmatprep.subr.mxu0 0.0
    %3260 = vmatpush1.msra.mxu0 0.0
    %3261 = vmatprep.subr.mxu0 0.0
    %3262 = vmatpush1.msra.mxu0 %v189
    %3263 = vmatprep.subr.mxu0 0.0
    %3264 = vmatpush1.msra.mxu0 %v188
    %3265 = vmatprep.subr.mxu0 0.0
    %3266 = vmatpush2.msra.mxu0 0.0
    %3267 = vmatprep.subr.mxu0 0.0
    %3268 = vmatpush2.msra.mxu0 0.0
    %3269 = vmatprep.subr.mxu0 0.0
    %3270 = vmatpush2.msra.mxu0 0.0
    %3271 = vmatprep.subr.mxu0 0.0
    %3272 = vmatpush2.msra.mxu0 0.0
    %3273 = vmatprep.subr.mxu0 0.0
    %3274 = vmatpush2.msra.mxu0 0.0
    %3275 = vmatprep.subr.mxu0 0.0
    %3276 = vmatpush2.msra.mxu0 0.0
    %3277 = vmatprep.subr.mxu0 0.0
    %3278 = vmatpush2.msra.mxu0 0.0
    %3279 = vmatprep.subr.mxu0 0.0
    %3280 = vmatpush2.msra.mxu0 0.0
    %3281 = vmatprep.subr.mxu0 0.0
    %3282 = vmatpush2.msra.mxu0 0.0
    %3283 = vmatprep.subr.mxu0 0.0
    %3284 = vmatpush2.msra.mxu0 0.0
    %3285 = vmatprep.subr.mxu0 0.0
    %3286 = vmatpush2.msra.mxu0 0.0
    %3287 = vmatprep.subr.mxu0 0.0
    %3288 = vmatpush2.msra.mxu0 0.0
    %3289 = vmatprep.subr.mxu0 0.0
    %3290 = vmatpush2.msra.mxu0 0.0
    %3291 = vmatprep.subr.mxu0 0.0
    %3292 = vmatpush2.msra.mxu0 0.0
    %3293 = vmatprep.subr.mxu0 0.0
    %3294 = vmatpush2.msra.mxu0 0.0
    %3295 = vmatprep.subr.mxu0 0.0
    %3296 = vmatpush2.msra.mxu0 0.0
    %3297 = vmatprep.mubr.f32.mxu0 0.0
    %3298 = vmatmul.mubr.f32.gmra.mxu0 %v3231
    %v3299 = vpop.f32.mrf.mxu0
    %v3300 = vadd.f32 %v3227, %v3299
    %v3301 = vpop.f32.mrf.mxu0
    %3302 = vdwg.mxu0
    %v3303 = vadd.f32 %v3300, %v564
    %v3304 = vxor.u32 %v3303, 2147483648
    %v3305 = vmul.f32 %v3304, 1.442695
    %v3306 = vpow.pop %v3305
    %v3307 = vadd.f32 %v3306, 1.0
    %v3308 = vrcp.pop %v3307
    %v3309 = vmul.f32 1.0, %v3308
    %3311 = vrot.lane.b32.xlu0 %v3303, 80
    %v3312 = vpop.permute.xlu0 %3311
    %v3314 = vmul.f32 %v3309, %v3312
    %3316 = vrot.lane.b32.xlu0 %v3314, 32
    %v3317 = vpop.permute.xlu0 %3316
    %v3319 = vadd.f32 %v3303, %v3317
    %v3320 = vtanh.pop %v3319
    %v3321 = vsub.f32 1.0, %v3309
    %3323 = vrot.lane.b32.xlu0 %v3320, 112
    %v3324 = vpop.permute.xlu0 %3323
    %v3326 = vmul.f32 %v3321, %v3324
    %3327 = vrot.lane.b32.xlu0 %v3156, 16
    %v3328 = vpop.permute.xlu0 %3327
    %v3330 = vmul.f32 %v3309, %v3328
    %v3331 = vadd.f32 %v3326, %v3330
    %v3332 = vmul.f32 %v3331, 1.442695
    %v3333 = vpow.pop %v3332
    %3335 = vrot.lane.b32.xlu0 %v3333, 112
    %v3336 = vpop.permute.xlu0 %3335
    %3339 = vrot.lane.b32.xlu0 %v3331, 112
    %v3340 = vpop.permute.xlu0 %3339
    %v3342 = vsel %vm599, %v3336, %v3340
    %3344 = vrot.lane.b32.xlu0 %v3002, 24
    %v3345 = vpop.permute.xlu0 %3344
    %v3347 = vmul.f32 %v3333, %v3345
    %3349 = vrot.lane.b32.xlu0 %v3347, 120
    %v3350 = vpop.permute.xlu0 %3349
    %v3352 = vadd.f32 %v3331, %v3350
    %3354 = vrot.lane.b32.xlu0 %v3352, 112
    %v3355 = vpop.permute.xlu0 %3354
    %v3356 = vsel %vm243, %v3355, 0
    %3358 = vmatprep.subr.mxu0 0.0
    %3359 = vmatpush1.msra.mxu0 0.0
    %3360 = vmatprep.subr.mxu0 0.0
    %3361 = vmatpush1.msra.mxu0 0.0
    %3362 = vmatprep.subr.mxu0 0.0
    %3363 = vmatpush1.msra.mxu0 0.0
    %3364 = vmatprep.subr.mxu0 0.0
    %3365 = vmatpush1.msra.mxu0 0.0
    %3366 = vmatprep.subr.mxu0 0.0
    %3367 = vmatpush1.msra.mxu0 0.0
    %3368 = vmatprep.subr.mxu0 0.0
    %3369 = vmatpush1.msra.mxu0 0.0
    %3370 = vmatprep.subr.mxu0 0.0
    %3371 = vmatpush1.msra.mxu0 0.0
    %3372 = vmatprep.subr.mxu0 0.0
    %3373 = vmatpush1.msra.mxu0 0.0
    %3374 = vmatprep.subr.mxu0 0.0
    %3375 = vmatpush1.msra.mxu0 0.0
    %3376 = vmatprep.subr.mxu0 0.0
    %3377 = vmatpush1.msra.mxu0 0.0
    %3378 = vmatprep.subr.mxu0 0.0
    %3379 = vmatpush1.msra.mxu0 0.0
    %3380 = vmatprep.subr.mxu0 0.0
    %3381 = vmatpush1.msra.mxu0 0.0
    %3382 = vmatprep.subr.mxu0 0.0
    %3383 = vmatpush1.msra.mxu0 0.0
    %3384 = vmatprep.subr.mxu0 0.0
    %3385 = vmatpush1.msra.mxu0 0.0
    %3386 = vmatprep.subr.mxu0 0.0
    %3387 = vmatpush1.msra.mxu0 0.0
    %3388 = vmatprep.subr.mxu0 0.0
    %3389 = vmatpush1.msra.mxu0 %v192
    %3390 = vmatprep.subr.mxu0 0.0
    %3391 = vmatpush2.msra.mxu0 0.0
    %3392 = vmatprep.subr.mxu0 0.0
    %3393 = vmatpush2.msra.mxu0 0.0
    %3394 = vmatprep.subr.mxu0 0.0
    %3395 = vmatpush2.msra.mxu0 0.0
    %3396 = vmatprep.subr.mxu0 0.0
    %3397 = vmatpush2.msra.mxu0 0.0
    %3398 = vmatprep.subr.mxu0 0.0
    %3399 = vmatpush2.msra.mxu0 0.0
    %3400 = vmatprep.subr.mxu0 0.0
    %3401 = vmatpush2.msra.mxu0 0.0
    %3402 = vmatprep.subr.mxu0 0.0
    %3403 = vmatpush2.msra.mxu0 0.0
    %3404 = vmatprep.subr.mxu0 0.0
    %3405 = vmatpush2.msra.mxu0 0.0
    %3406 = vmatprep.subr.mxu0 0.0
    %3407 = vmatpush2.msra.mxu0 0.0
    %3408 = vmatprep.subr.mxu0 0.0
    %3409 = vmatpush2.msra.mxu0 0.0
    %3410 = vmatprep.subr.mxu0 0.0
    %3411 = vmatpush2.msra.mxu0 0.0
    %3412 = vmatprep.subr.mxu0 0.0
    %3413 = vmatpush2.msra.mxu0 0.0
    %3414 = vmatprep.subr.mxu0 0.0
    %3415 = vmatpush2.msra.mxu0 0.0
    %3416 = vmatprep.subr.mxu0 0.0
    %3417 = vmatpush2.msra.mxu0 0.0
    %3418 = vmatprep.subr.mxu0 0.0
    %3419 = vmatpush2.msra.mxu0 0.0
    %3420 = vmatprep.subr.mxu0 0.0
    %3421 = vmatpush2.msra.mxu0 0.0
    %3422 = vmatprep.mubr.f32.mxu0 0.0
    %3423 = vmatmul.mubr.f32.gmra.mxu0 %v3356
    %v3424 = vpop.f32.mrf.mxu0
    %v3425 = vadd.f32 %v623, %v3424
    %v3426 = vpop.f32.mrf.mxu0
    %3427 = vdwg.mxu0
    %v3428 = vmax.f32 %v3425, 0.0
    %v3430 = vsel %vm707, %v3428, 0
    %3432 = vmatprep.subr.mxu0 0.0
    %3433 = vmatpush1.msra.mxu0 0.0
    %3434 = vmatprep.subr.mxu0 0.0
    %3435 = vmatpush1.msra.mxu0 0.0
    %3436 = vmatprep.subr.mxu0 0.0
    %3437 = vmatpush1.msra.mxu0 0.0
    %3438 = vmatprep.subr.mxu0 0.0
    %3439 = vmatpush1.msra.mxu0 0.0
    %3440 = vmatprep.subr.mxu0 0.0
    %3441 = vmatpush1.msra.mxu0 0.0
    %3442 = vmatprep.subr.mxu0 0.0
    %3443 = vmatpush1.msra.mxu0 0.0
    %3444 = vmatprep.subr.mxu0 0.0
    %3445 = vmatpush1.msra.mxu0 0.0
    %3446 = vmatprep.subr.mxu0 0.0
    %3447 = vmatpush1.msra.mxu0 0.0
    %3448 = vmatprep.subr.mxu0 0.0
    %3449 = vmatpush1.msra.mxu0 0.0
    %3450 = vmatprep.subr.mxu0 0.0
    %3451 = vmatpush1.msra.mxu0 0.0
    %3452 = vmatprep.subr.mxu0 0.0
    %3453 = vmatpush1.msra.mxu0 0.0
    %3454 = vmatprep.subr.mxu0 0.0
    %3455 = vmatpush1.msra.mxu0 0.0
    %3456 = vmatprep.subr.mxu0 0.0
    %3457 = vmatpush1.msra.mxu0 %v196
    %3458 = vmatprep.subr.mxu0 0.0
    %3459 = vmatpush1.msra.mxu0 %v195
    %3460 = vmatprep.subr.mxu0 0.0
    %3461 = vmatpush1.msra.mxu0 %v194
    %3462 = vmatprep.subr.mxu0 0.0
    %3463 = vmatpush1.msra.mxu0 %v193
    %3464 = vmatprep.subr.mxu0 0.0
    %3465 = vmatpush2.msra.mxu0 0.0
    %3466 = vmatprep.subr.mxu0 0.0
    %3467 = vmatpush2.msra.mxu0 0.0
    %3468 = vmatprep.subr.mxu0 0.0
    %3469 = vmatpush2.msra.mxu0 0.0
    %3470 = vmatprep.subr.mxu0 0.0
    %3471 = vmatpush2.msra.mxu0 0.0
    %3472 = vmatprep.subr.mxu0 0.0
    %3473 = vmatpush2.msra.mxu0 0.0
    %3474 = vmatprep.subr.mxu0 0.0
    %3475 = vmatpush2.msra.mxu0 0.0
    %3476 = vmatprep.subr.mxu0 0.0
    %3477 = vmatpush2.msra.mxu0 0.0
    %3478 = vmatprep.subr.mxu0 0.0
    %3479 = vmatpush2.msra.mxu0 0.0
    %3480 = vmatprep.subr.mxu0 0.0
    %3481 = vmatpush2.msra.mxu0 0.0
    %3482 = vmatprep.subr.mxu0 0.0
    %3483 = vmatpush2.msra.mxu0 0.0
    %3484 = vmatprep.subr.mxu0 0.0
    %3485 = vmatpush2.msra.mxu0 0.0
    %3486 = vmatprep.subr.mxu0 0.0
    %3487 = vmatpush2.msra.mxu0 0.0
    %3488 = vmatprep.subr.mxu0 0.0
    %3489 = vmatpush2.msra.mxu0 0.0
    %3490 = vmatprep.subr.mxu0 0.0
    %3491 = vmatpush2.msra.mxu0 0.0
    %3492 = vmatprep.subr.mxu0 0.0
    %3493 = vmatpush2.msra.mxu0 0.0
    %3494 = vmatprep.subr.mxu0 0.0
    %3495 = vmatpush2.msra.mxu0 0.0
    %3496 = vmatprep.mubr.f32.mxu0 0.0
    %3497 = vmatmul.mubr.f32.gmra.mxu0 %v3430
    %v3498 = vpop.f32.mrf.mxu0
    %v3499 = vadd.f32 %v705, %v3498
    %v3500 = vpop.f32.mrf.mxu0
    %3501 = vdwg.mxu0
    %v3503 = vsel %vm707, %v3499, 0
    %3505 = vmatprep.subr.mxu0 0.0
    %3506 = vmatpush1.msra.mxu0 0.0
    %3507 = vmatprep.subr.mxu0 0.0
    %3508 = vmatpush1.msra.mxu0 0.0
    %3509 = vmatprep.subr.mxu0 0.0
    %3510 = vmatpush1.msra.mxu0 0.0
    %3511 = vmatprep.subr.mxu0 0.0
    %3512 = vmatpush1.msra.mxu0 0.0
    %3513 = vmatprep.subr.mxu0 0.0
    %3514 = vmatpush1.msra.mxu0 0.0
    %3515 = vmatprep.subr.mxu0 0.0
    %3516 = vmatpush1.msra.mxu0 0.0
    %3517 = vmatprep.subr.mxu0 0.0
    %3518 = vmatpush1.msra.mxu0 0.0
    %3519 = vmatprep.subr.mxu0 0.0
    %3520 = vmatpush1.msra.mxu0 0.0
    %3521 = vmatprep.subr.mxu0 0.0
    %3522 = vmatpush1.msra.mxu0 0.0
    %3523 = vmatprep.subr.mxu0 0.0
    %3524 = vmatpush1.msra.mxu0 0.0
    %3525 = vmatprep.subr.mxu0 0.0
    %3526 = vmatpush1.msra.mxu0 0.0
    %3527 = vmatprep.subr.mxu0 0.0
    %3528 = vmatpush1.msra.mxu0 0.0
    %3529 = vmatprep.subr.mxu0 %v204
    %3530 = vmatpush1.msra.mxu0 %v203
    %3531 = vmatprep.subr.mxu0 %v202
    %3532 = vmatpush1.msra.mxu0 %v201
    %3533 = vmatprep.subr.mxu0 %v200
    %3534 = vmatpush1.msra.mxu0 %v199
    %3535 = vmatprep.subr.mxu0 %v198
    %3536 = vmatpush1.msra.mxu0 %v197
    %3537 = vmatprep.subr.mxu0 0.0
    %3538 = vmatpush2.msra.mxu0 0.0
    %3539 = vmatprep.subr.mxu0 0.0
    %3540 = vmatpush2.msra.mxu0 0.0
    %3541 = vmatprep.subr.mxu0 0.0
    %3542 = vmatpush2.msra.mxu0 0.0
    %3543 = vmatprep.subr.mxu0 0.0
    %3544 = vmatpush2.msra.mxu0 0.0
    %3545 = vmatprep.subr.mxu0 0.0
    %3546 = vmatpush2.msra.mxu0 0.0
    %3547 = vmatprep.subr.mxu0 0.0
    %3548 = vmatpush2.msra.mxu0 0.0
    %3549 = vmatprep.subr.mxu0 0.0
    %3550 = vmatpush2.msra.mxu0 0.0
    %3551 = vmatprep.subr.mxu0 0.0
    %3552 = vmatpush2.msra.mxu0 0.0
    %3553 = vmatprep.subr.mxu0 0.0
    %3554 = vmatpush2.msra.mxu0 0.0
    %3555 = vmatprep.subr.mxu0 0.0
    %3556 = vmatpush2.msra.mxu0 0.0
    %3557 = vmatprep.subr.mxu0 0.0
    %3558 = vmatpush2.msra.mxu0 0.0
    %3559 = vmatprep.subr.mxu0 0.0
    %3560 = vmatpush2.msra.mxu0 0.0
    %3561 = vmatprep.subr.mxu0 0.0
    %3562 = vmatpush2.msra.mxu0 0.0
    %3563 = vmatprep.subr.mxu0 0.0
    %3564 = vmatpush2.msra.mxu0 0.0
    %3565 = vmatprep.subr.mxu0 0.0
    %3566 = vmatpush2.msra.mxu0 0.0
    %3567 = vmatprep.subr.mxu0 0.0
    %3568 = vmatpush2.msra.mxu0 0.0
    %3569 = vmatprep.mubr.f32.mxu0 0.0
    %3570 = vmatmul.mubr.f32.gmra.mxu0 %v3503
    %v3571 = vpop.f32.mrf.mxu0
    %v3572 = vadd.f32 %v785, %v3571
    %v3573 = vpop.f32.mrf.mxu0
    %v3574 = vadd.f32 %v789, %v3573
    %3575 = vdwg.mxu0
    %3576 = vmatprep.subr.mxu0 0.0
    %3577 = vmatpush1.msra.mxu0 0.0
    %3578 = vmatprep.subr.mxu0 0.0
    %3579 = vmatpush1.msra.mxu0 0.0
    %3580 = vmatprep.subr.mxu0 0.0
    %3581 = vmatpush1.msra.mxu0 0.0
    %3582 = vmatprep.subr.mxu0 0.0
    %3583 = vmatpush1.msra.mxu0 0.0
    %3584 = vmatprep.subr.mxu0 0.0
    %3585 = vmatpush1.msra.mxu0 0.0
    %3586 = vmatprep.subr.mxu0 0.0
    %3587 = vmatpush1.msra.mxu0 0.0
    %3588 = vmatprep.subr.mxu0 0.0
    %3589 = vmatpush1.msra.mxu0 0.0
    %3590 = vmatprep.subr.mxu0 0.0
    %3591 = vmatpush1.msra.mxu0 0.0
    %3592 = vmatprep.subr.mxu0 0.0
    %3593 = vmatpush1.msra.mxu0 0.0
    %3594 = vmatprep.subr.mxu0 0.0
    %3595 = vmatpush1.msra.mxu0 0.0
    %3596 = vmatprep.subr.mxu0 0.0
    %3597 = vmatpush1.msra.mxu0 0.0
    %3598 = vmatprep.subr.mxu0 0.0
    %3599 = vmatpush1.msra.mxu0 0.0
    %3600 = vmatprep.subr.mxu0 0.0
    %3601 = vmatpush1.msra.mxu0 %v212
    %3602 = vmatprep.subr.mxu0 0.0
    %3603 = vmatpush1.msra.mxu0 %v211
    %3604 = vmatprep.subr.mxu0 0.0
    %3605 = vmatpush1.msra.mxu0 %v210
    %3606 = vmatprep.subr.mxu0 0.0
    %3607 = vmatpush1.msra.mxu0 %v209
    %3608 = vmatprep.subr.mxu0 0.0
    %3609 = vmatpush2.msra.mxu0 0.0
    %3610 = vmatprep.subr.mxu0 0.0
    %3611 = vmatpush2.msra.mxu0 0.0
    %3612 = vmatprep.subr.mxu0 0.0
    %3613 = vmatpush2.msra.mxu0 0.0
    %3614 = vmatprep.subr.mxu0 0.0
    %3615 = vmatpush2.msra.mxu0 0.0
    %3616 = vmatprep.subr.mxu0 0.0
    %3617 = vmatpush2.msra.mxu0 0.0
    %3618 = vmatprep.subr.mxu0 0.0
    %3619 = vmatpush2.msra.mxu0 0.0
    %3620 = vmatprep.subr.mxu0 0.0
    %3621 = vmatpush2.msra.mxu0 0.0
    %3622 = vmatprep.subr.mxu0 0.0
    %3623 = vmatpush2.msra.mxu0 0.0
    %3624 = vmatprep.subr.mxu0 0.0
    %3625 = vmatpush2.msra.mxu0 0.0
    %3626 = vmatprep.subr.mxu0 0.0
    %3627 = vmatpush2.msra.mxu0 0.0
    %3628 = vmatprep.subr.mxu0 0.0
    %3629 = vmatpush2.msra.mxu0 0.0
    %3630 = vmatprep.subr.mxu0 0.0
    %3631 = vmatpush2.msra.mxu0 0.0
    %3632 = vmatprep.subr.mxu0 0.0
    %3633 = vmatpush2.msra.mxu0 0.0
    %3634 = vmatprep.subr.mxu0 0.0
    %3635 = vmatpush2.msra.mxu0 0.0
    %3636 = vmatprep.subr.mxu0 0.0
    %3637 = vmatpush2.msra.mxu0 0.0
    %3638 = vmatprep.subr.mxu0 0.0
    %3639 = vmatpush2.msra.mxu0 0.0
    %3640 = vmatprep.mubr.f32.mxu0 0.0
    %3641 = vmatmul.mubr.f32.gmra.mxu0 %v2849
    %v3642 = vpop.f32.mrf.mxu0
    %v3643 = vadd.f32 0.0, %v3642
    %v3644 = vpop.f32.mrf.mxu0
    %3645 = vdwg.mxu0
    %3646 = vrot.lane.b32.xlu0 %v3000, 112
    %v3647 = vpop.permute.xlu0 %3646
    %v3648 = vsel %vm707, %v3647, 0
    %3650 = vmatprep.subr.mxu0 0.0
    %3651 = vmatpush1.msra.mxu0 0.0
    %3652 = vmatprep.subr.mxu0 0.0
    %3653 = vmatpush1.msra.mxu0 0.0
    %3654 = vmatprep.subr.mxu0 0.0
    %3655 = vmatpush1.msra.mxu0 0.0
    %3656 = vmatprep.subr.mxu0 0.0
    %3657 = vmatpush1.msra.mxu0 0.0
    %3658 = vmatprep.subr.mxu0 0.0
    %3659 = vmatpush1.msra.mxu0 0.0
    %3660 = vmatprep.subr.mxu0 0.0
    %3661 = vmatpush1.msra.mxu0 0.0
    %3662 = vmatprep.subr.mxu0 0.0
    %3663 = vmatpush1.msra.mxu0 0.0
    %3664 = vmatprep.subr.mxu0 0.0
    %3665 = vmatpush1.msra.mxu0 0.0
    %3666 = vmatprep.subr.mxu0 0.0
    %3667 = vmatpush1.msra.mxu0 0.0
    %3668 = vmatprep.subr.mxu0 0.0
    %3669 = vmatpush1.msra.mxu0 0.0
    %3670 = vmatprep.subr.mxu0 0.0
    %3671 = vmatpush1.msra.mxu0 0.0
    %3672 = vmatprep.subr.mxu0 0.0
    %3673 = vmatpush1.msra.mxu0 0.0
    %3674 = vmatprep.subr.mxu0 0.0
    %3675 = vmatpush1.msra.mxu0 %v208
    %3676 = vmatprep.subr.mxu0 0.0
    %3677 = vmatpush1.msra.mxu0 %v207
    %3678 = vmatprep.subr.mxu0 0.0
    %3679 = vmatpush1.msra.mxu0 %v206
    %3680 = vmatprep.subr.mxu0 0.0
    %3681 = vmatpush1.msra.mxu0 %v205
    %3682 = vmatprep.subr.mxu0 0.0
    %3683 = vmatpush2.msra.mxu0 0.0
    %3684 = vmatprep.subr.mxu0 0.0
    %3685 = vmatpush2.msra.mxu0 0.0
    %3686 = vmatprep.subr.mxu0 0.0
    %3687 = vmatpush2.msra.mxu0 0.0
    %3688 = vmatprep.subr.mxu0 0.0
    %3689 = vmatpush2.msra.mxu0 0.0
    %3690 = vmatprep.subr.mxu0 0.0
    %3691 = vmatpush2.msra.mxu0 0.0
    %3692 = vmatprep.subr.mxu0 0.0
    %3693 = vmatpush2.msra.mxu0 0.0
    %3694 = vmatprep.subr.mxu0 0.0
    %3695 = vmatpush2.msra.mxu0 0.0
    %3696 = vmatprep.subr.mxu0 0.0
    %3697 = vmatpush2.msra.mxu0 0.0
    %3698 = vmatprep.subr.mxu0 0.0
    %3699 = vmatpush2.msra.mxu0 0.0
    %3700 = vmatprep.subr.mxu0 0.0
    %3701 = vmatpush2.msra.mxu0 0.0
    %3702 = vmatprep.subr.mxu0 0.0
    %3703 = vmatpush2.msra.mxu0 0.0
    %3704 = vmatprep.subr.mxu0 0.0
    %3705 = vmatpush2.msra.mxu0 0.0
    %3706 = vmatprep.subr.mxu0 0.0
    %3707 = vmatpush2.msra.mxu0 0.0
    %3708 = vmatprep.subr.mxu0 0.0
    %3709 = vmatpush2.msra.mxu0 0.0
    %3710 = vmatprep.subr.mxu0 0.0
    %3711 = vmatpush2.msra.mxu0 0.0
    %3712 = vmatprep.subr.mxu0 0.0
    %3713 = vmatpush2.msra.mxu0 0.0
    %3714 = vmatprep.mubr.f32.mxu0 0.0
    %3715 = vmatmul.mubr.f32.gmra.mxu0 %v3648
    %v3716 = vpop.f32.mrf.mxu0
    %v3717 = vadd.f32 %v3643, %v3716
    %v3718 = vpop.f32.mrf.mxu0
    %3719 = vdwg.mxu0
    %v3720 = vadd.f32 %v3717, %v1017
    %v3721 = vxor.u32 %v3720, 2147483648
    %v3722 = vmul.f32 %v3721, 1.442695
    %v3723 = vpow.pop %v3722
    %v3724 = vadd.f32 %v3723, 1.0
    %v3725 = vrcp.pop %v3724
    %v3726 = vmul.f32 1.0, %v3725
    %3728 = vrot.lane.b32.xlu0 %v3720, 32
    %v3729 = vpop.permute.xlu0 %3728
    %v3731 = vmul.f32 %v3726, %v3729
    %3733 = vrot.lane.b32.xlu0 %v3731, 64
    %v3734 = vpop.permute.xlu0 %3733
    %v3736 = vadd.f32 %v3720, %v3734
    %v3737 = vtanh.pop %v3736
    %v3738 = vsub.f32 1.0, %v3726
    %3740 = vrot.lane.b32.xlu0 %v3737, 96
    %v3741 = vpop.permute.xlu0 %3740
    %v3743 = vmul.f32 %v3738, %v3741
    %v3744 = vmul.f32 %v3726, %v2845
    %v3745 = vadd.f32 %v3743, %v3744
    %3747 = vrot.lane.b32.xlu0 %v3745, 96
    %v3748 = vpop.permute.xlu0 %3747
    %v3749 = vsel %vm707, %v3748, 0
    %3751 = vmatprep.subr.mxu0 0.0
    %3752 = vmatpush1.msra.mxu0 0.0
    %3753 = vmatprep.subr.mxu0 0.0
    %3754 = vmatpush1.msra.mxu0 0.0
    %3755 = vmatprep.subr.mxu0 0.0
    %3756 = vmatpush1.msra.mxu0 0.0
    %3757 = vmatprep.subr.mxu0 0.0
    %3758 = vmatpush1.msra.mxu0 0.0
    %3759 = vmatprep.subr.mxu0 0.0
    %3760 = vmatpush1.msra.mxu0 0.0
    %3761 = vmatprep.subr.mxu0 0.0
    %3762 = vmatpush1.msra.mxu0 0.0
    %3763 = vmatprep.subr.mxu0 0.0
    %3764 = vmatpush1.msra.mxu0 0.0
    %3765 = vmatprep.subr.mxu0 0.0
    %3766 = vmatpush1.msra.mxu0 0.0
    %3767 = vmatprep.subr.mxu0 0.0
    %3768 = vmatpush1.msra.mxu0 0.0
    %3769 = vmatprep.subr.mxu0 0.0
    %3770 = vmatpush1.msra.mxu0 0.0
    %3771 = vmatprep.subr.mxu0 0.0
    %3772 = vmatpush1.msra.mxu0 0.0
    %3773 = vmatprep.subr.mxu0 0.0
    %3774 = vmatpush1.msra.mxu0 0.0
    %3775 = vmatprep.subr.mxu0 0.0
    %3776 = vmatpush1.msra.mxu0 %v216
    %3777 = vmatprep.subr.mxu0 0.0
    %3778 = vmatpush1.msra.mxu0 %v215
    %3779 = vmatprep.subr.mxu0 0.0
    %3780 = vmatpush1.msra.mxu0 %v214
    %3781 = vmatprep.subr.mxu0 0.0
    %3782 = vmatpush1.msra.mxu0 %v213
    %3783 = vmatprep.subr.mxu0 0.0
    %3784 = vmatpush2.msra.mxu0 0.0
    %3785 = vmatprep.subr.mxu0 0.0
    %3786 = vmatpush2.msra.mxu0 0.0
    %3787 = vmatprep.subr.mxu0 0.0
    %3788 = vmatpush2.msra.mxu0 0.0
    %3789 = vmatprep.subr.mxu0 0.0
    %3790 = vmatpush2.msra.mxu0 0.0
    %3791 = vmatprep.subr.mxu0 0.0
    %3792 = vmatpush2.msra.mxu0 0.0
    %3793 = vmatprep.subr.mxu0 0.0
    %3794 = vmatpush2.msra.mxu0 0.0
    %3795 = vmatprep.subr.mxu0 0.0
    %3796 = vmatpush2.msra.mxu0 0.0
    %3797 = vmatprep.subr.mxu0 0.0
    %3798 = vmatpush2.msra.mxu0 0.0
    %3799 = vmatprep.subr.mxu0 0.0
    %3800 = vmatpush2.msra.mxu0 0.0
    %3801 = vmatprep.subr.mxu0 0.0
    %3802 = vmatpush2.msra.mxu0 0.0
    %3803 = vmatprep.subr.mxu0 0.0
    %3804 = vmatpush2.msra.mxu0 0.0
    %3805 = vmatprep.subr.mxu0 0.0
    %3806 = vmatpush2.msra.mxu0 0.0
    %3807 = vmatprep.subr.mxu0 0.0
    %3808 = vmatpush2.msra.mxu0 0.0
    %3809 = vmatprep.subr.mxu0 0.0
    %3810 = vmatpush2.msra.mxu0 0.0
    %3811 = vmatprep.subr.mxu0 0.0
    %3812 = vmatpush2.msra.mxu0 0.0
    %3813 = vmatprep.subr.mxu0 0.0
    %3814 = vmatpush2.msra.mxu0 0.0
    %3815 = vmatprep.mubr.f32.mxu0 0.0
    %3816 = vmatmul.mubr.f32.gmra.mxu0 %v3749
    %v3817 = vpop.f32.mrf.mxu0
    %v3818 = vadd.f32 0.0, %v3817
    %v3819 = vpop.f32.mrf.mxu0
    %3820 = vdwg.mxu0
    %v3821 = vmul.f32 %v3572, %v3818
    %3822 = vmatprep.subr.mxu0 0.0
    %3823 = vmatpush1.msra.mxu0 %v232
    %3824 = vmatprep.subr.mxu0 0.0
    %3825 = vmatpush1.msra.mxu0 %v231
    %3826 = vmatprep.subr.mxu0 0.0
    %3827 = vmatpush1.msra.mxu0 %v230
    %3828 = vmatprep.subr.mxu0 0.0
    %3829 = vmatpush1.msra.mxu0 %v229
    %3830 = vmatprep.subr.mxu0 0.0
    %3831 = vmatpush1.msra.mxu0 %v228
    %3832 = vmatprep.subr.mxu0 0.0
    %3833 = vmatpush1.msra.mxu0 %v227
    %3834 = vmatprep.subr.mxu0 0.0
    %3835 = vmatpush1.msra.mxu0 %v226
    %3836 = vmatprep.subr.mxu0 0.0
    %3837 = vmatpush1.msra.mxu0 %v225
    %3838 = vmatprep.subr.mxu0 0.0
    %3839 = vmatpush1.msra.mxu0 %v224
    %3840 = vmatprep.subr.mxu0 0.0
    %3841 = vmatpush1.msra.mxu0 %v223
    %3842 = vmatprep.subr.mxu0 0.0
    %3843 = vmatpush1.msra.mxu0 %v222
    %3844 = vmatprep.subr.mxu0 0.0
    %3845 = vmatpush1.msra.mxu0 %v221
    %3846 = vmatprep.subr.mxu0 0.0
    %3847 = vmatpush1.msra.mxu0 %v220
    %3848 = vmatprep.subr.mxu0 0.0
    %3849 = vmatpush1.msra.mxu0 %v219
    %3850 = vmatprep.subr.mxu0 0.0
    %3851 = vmatpush1.msra.mxu0 %v218
    %3852 = vmatprep.subr.mxu0 0.0
    %3853 = vmatpush1.msra.mxu0 %v217
    %3854 = vmatprep.subr.mxu0 0.0
    %3855 = vmatpush2.msra.mxu0 0.0
    %3856 = vmatprep.subr.mxu0 0.0
    %3857 = vmatpush2.msra.mxu0 0.0
    %3858 = vmatprep.subr.mxu0 0.0
    %3859 = vmatpush2.msra.mxu0 0.0
    %3860 = vmatprep.subr.mxu0 0.0
    %3861 = vmatpush2.msra.mxu0 0.0
    %3862 = vmatprep.subr.mxu0 0.0
    %3863 = vmatpush2.msra.mxu0 0.0
    %3864 = vmatprep.subr.mxu0 0.0
    %3865 = vmatpush2.msra.mxu0 0.0
    %3866 = vmatprep.subr.mxu0 0.0
    %3867 = vmatpush2.msra.mxu0 0.0
    %3868 = vmatprep.subr.mxu0 0.0
    %3869 = vmatpush2.msra.mxu0 0.0
    %3870 = vmatprep.subr.mxu0 0.0
    %3871 = vmatpush2.msra.mxu0 0.0
    %3872 = vmatprep.subr.mxu0 0.0
    %3873 = vmatpush2.msra.mxu0 0.0
    %3874 = vmatprep.subr.mxu0 0.0
    %3875 = vmatpush2.msra.mxu0 0.0
    %3876 = vmatprep.subr.mxu0 0.0
    %3877 = vmatpush2.msra.mxu0 0.0
    %3878 = vmatprep.subr.mxu0 0.0
    %3879 = vmatpush2.msra.mxu0 0.0
    %3880 = vmatprep.subr.mxu0 0.0
    %3881 = vmatpush2.msra.mxu0 0.0
    %3882 = vmatprep.subr.mxu0 0.0
    %3883 = vmatpush2.msra.mxu0 0.0
    %3884 = vmatprep.subr.mxu0 0.0
    %3885 = vmatpush2.msra.mxu0 0.0
    %3886 = vmatprep.mubr.f32.mxu0 0.0
    %3887 = vmatmul.mubr.f32.gmra.mxu0 %v3821
    %v3888 = vpop.f32.mrf.mxu0
    %v3889 = vadd.f32 %v3574, %v3888
    %v3890 = vpop.f32.mrf.mxu0
    %3891 = vdwg.mxu0
    %s3892 = scalar_lea.vmem %s20, 24
    %3893 = vst.msk [vmem:[%s3892] sm:$0xff] %vm1194, %v3889
    %s3895 = scalar_lea.vmem [#allocation17], 24
    %3896 = vst.msk [vmem:[%s3895] sm:$0xff] %vm707, %v3748
    %s3897 = scalar_lea.vmem [#allocation18], 24
    %3898 = vst.msk [vmem:[%s3897] sm:$0xff] %vm413, %v3342
    %s3899 = scalar_lea.vmem %s0, 32
    %v3900 = vld [vmem:[%s3899] sm:$0xff]
    %s3901 = scalar_lea.vmem %s1, 32
    %v3902 = vld [vmem:[%s3901] sm:$0xff]
    %3903 = vmatprep.subr.mxu0 0.0
    %3904 = vmatpush1.msra.mxu0 0.0
    %3905 = vmatprep.subr.mxu0 0.0
    %3906 = vmatpush1.msra.mxu0 0.0
    %3907 = vmatprep.subr.mxu0 0.0
    %3908 = vmatpush1.msra.mxu0 0.0
    %3909 = vmatprep.subr.mxu0 0.0
    %3910 = vmatpush1.msra.mxu0 0.0
    %3911 = vmatprep.subr.mxu0 0.0
    %3912 = vmatpush1.msra.mxu0 0.0
    %3913 = vmatprep.subr.mxu0 0.0
    %3914 = vmatpush1.msra.mxu0 0.0
    %3915 = vmatprep.subr.mxu0 0.0
    %3916 = vmatpush1.msra.mxu0 0.0
    %3917 = vmatprep.subr.mxu0 0.0
    %3918 = vmatpush1.msra.mxu0 0.0
    %3919 = vmatprep.subr.mxu0 0.0
    %3920 = vmatpush1.msra.mxu0 0.0
    %3921 = vmatprep.subr.mxu0 0.0
    %3922 = vmatpush1.msra.mxu0 0.0
    %3923 = vmatprep.subr.mxu0 0.0
    %3924 = vmatpush1.msra.mxu0 0.0
    %3925 = vmatprep.subr.mxu0 0.0
    %3926 = vmatpush1.msra.mxu0 0.0
    %3927 = vmatprep.subr.mxu0 0.0
    %3928 = vmatpush1.msra.mxu0 0.0
    %3929 = vmatprep.subr.mxu0 0.0
    %3930 = vmatpush1.msra.mxu0 0.0
    %3931 = vmatprep.subr.mxu0 0.0
    %3932 = vmatpush1.msra.mxu0 0.0
    %3933 = vmatprep.subr.mxu0 0.0
    %3934 = vmatpush1.msra.mxu0 %v3342
    %3935 = vmatprep.subr.mxu0 0.0
    %3936 = vmatpush2.msra.mxu0 0.0
    %3937 = vmatprep.subr.mxu0 0.0
    %3938 = vmatpush2.msra.mxu0 0.0
    %3939 = vmatprep.subr.mxu0 0.0
    %3940 = vmatpush2.msra.mxu0 0.0
    %3941 = vmatprep.subr.mxu0 0.0
    %3942 = vmatpush2.msra.mxu0 0.0
    %3943 = vmatprep.subr.mxu0 0.0
    %3944 = vmatpush2.msra.mxu0 0.0
    %3945 = vmatprep.subr.mxu0 0.0
    %3946 = vmatpush2.msra.mxu0 0.0
    %3947 = vmatprep.subr.mxu0 0.0
    %3948 = vmatpush2.msra.mxu0 0.0
    %3949 = vmatprep.subr.mxu0 0.0
    %3950 = vmatpush2.msra.mxu0 0.0
    %3951 = vmatprep.subr.mxu0 0.0
    %3952 = vmatpush2.msra.mxu0 0.0
    %3953 = vmatprep.subr.mxu0 0.0
    %3954 = vmatpush2.msra.mxu0 0.0
    %3955 = vmatprep.subr.mxu0 0.0
    %3956 = vmatpush2.msra.mxu0 0.0
    %3957 = vmatprep.subr.mxu0 0.0
    %3958 = vmatpush2.msra.mxu0 0.0
    %3959 = vmatprep.subr.mxu0 0.0
    %3960 = vmatpush2.msra.mxu0 0.0
    %3961 = vmatprep.subr.mxu0 0.0
    %3962 = vmatpush2.msra.mxu0 0.0
    %3963 = vmatprep.subr.mxu0 0.0
    %3964 = vmatpush2.msra.mxu0 0.0
    %3965 = vmatprep.subr.mxu0 0.0
    %3966 = vmatpush2.msra.mxu0 0.0
    %3967 = vmatprep.mubr.f32.mxu0 0.0
    %3968 = vmatmul.mubr.f32.gmra.mxu0 %v245
    %v3969 = vpop.f32.mrf.mxu0
    %v3970 = vadd.f32 0.0, %v3969
    %v3971 = vpop.f32.mrf.mxu0
    %3972 = vdwg.mxu0
    %v3973 = vlaneseq
    %v3974 = vshrl.u32 %v3973, 7
    %v3975 = vsub.s32 0, %v3974
    %v3976 = vrot.slane %v3970, %v3975
    %v3977 = vsub.f32 %v3342, %v3976
    %v3978 = vmul.f32 %v3977, %v3977
    %3979 = vmatprep.subr.mxu0 0.0
    %3980 = vmatpush1.msra.mxu0 0.0
    %3981 = vmatprep.subr.mxu0 0.0
    %3982 = vmatpush1.msra.mxu0 0.0
    %3983 = vmatprep.subr.mxu0 0.0
    %3984 = vmatpush1.msra.mxu0 0.0
    %3985 = vmatprep.subr.mxu0 0.0
    %3986 = vmatpush1.msra.mxu0 0.0
    %3987 = vmatprep.subr.mxu0 0.0
    %3988 = vmatpush1.msra.mxu0 0.0
    %3989 = vmatprep.subr.mxu0 0.0
    %3990 = vmatpush1.msra.mxu0 0.0
    %3991 = vmatprep.subr.mxu0 0.0
    %3992 = vmatpush1.msra.mxu0 0.0
    %3993 = vmatprep.subr.mxu0 0.0
    %3994 = vmatpush1.msra.mxu0 0.0
    %3995 = vmatprep.subr.mxu0 0.0
    %3996 = vmatpush1.msra.mxu0 0.0
    %3997 = vmatprep.subr.mxu0 0.0
    %3998 = vmatpush1.msra.mxu0 0.0
    %3999 = vmatprep.subr.mxu0 0.0
    %4000 = vmatpush1.msra.mxu0 0.0
    %4001 = vmatprep.subr.mxu0 0.0
    %4002 = vmatpush1.msra.mxu0 0.0
    %4003 = vmatprep.subr.mxu0 0.0
    %4004 = vmatpush1.msra.mxu0 0.0
    %4005 = vmatprep.subr.mxu0 0.0
    %4006 = vmatpush1.msra.mxu0 0.0
    %4007 = vmatprep.subr.mxu0 0.0
    %4008 = vmatpush1.msra.mxu0 0.0
    %4009 = vmatprep.subr.mxu0 0.0
    %4010 = vmatpush1.msra.mxu0 %v3978
    %4011 = vmatprep.subr.mxu0 0.0
    %4012 = vmatpush2.msra.mxu0 0.0
    %4013 = vmatprep.subr.mxu0 0.0
    %4014 = vmatpush2.msra.mxu0 0.0
    %4015 = vmatprep.subr.mxu0 0.0
    %4016 = vmatpush2.msra.mxu0 0.0
    %4017 = vmatprep.subr.mxu0 0.0
    %4018 = vmatpush2.msra.mxu0 0.0
    %4019 = vmatprep.subr.mxu0 0.0
    %4020 = vmatpush2.msra.mxu0 0.0
    %4021 = vmatprep.subr.mxu0 0.0
    %4022 = vmatpush2.msra.mxu0 0.0
    %4023 = vmatprep.subr.mxu0 0.0
    %4024 = vmatpush2.msra.mxu0 0.0
    %4025 = vmatprep.subr.mxu0 0.0
    %4026 = vmatpush2.msra.mxu0 0.0
    %4027 = vmatprep.subr.mxu0 0.0
    %4028 = vmatpush2.msra.mxu0 0.0
    %4029 = vmatprep.subr.mxu0 0.0
    %4030 = vmatpush2.msra.mxu0 0.0
    %4031 = vmatprep.subr.mxu0 0.0
    %4032 = vmatpush2.msra.mxu0 0.0
    %4033 = vmatprep.subr.mxu0 0.0
    %4034 = vmatpush2.msra.mxu0 0.0
    %4035 = vmatprep.subr.mxu0 0.0
    %4036 = vmatpush2.msra.mxu0 0.0
    %4037 = vmatprep.subr.mxu0 0.0
    %4038 = vmatpush2.msra.mxu0 0.0
    %4039 = vmatprep.subr.mxu0 0.0
    %4040 = vmatpush2.msra.mxu0 0.0
    %4041 = vmatprep.subr.mxu0 0.0
    %4042 = vmatpush2.msra.mxu0 0.0
    %4043 = vmatprep.mubr.f32.mxu0 0.0
    %4044 = vmatmul.mubr.f32.gmra.mxu0 %v245
    %v4045 = vpop.f32.mrf.mxu0
    %v4046 = vadd.f32 1e-05, %v4045
    %v4047 = vpop.f32.mrf.mxu0
    %4048 = vdwg.mxu0
    %v4049 = vrsqrt.pop %v4046
    %v4050 = vlaneseq
    %v4051 = vshrl.u32 %v4050, 7
    %v4052 = vsub.s32 0, %v4051
    %v4053 = vrot.slane %v4049, %v4052
    %v4054 = vmul.f32 %v3977, %v4053
    %v4055 = vmul.f32 %v4054, %v403
    %v4056 = vadd.f32 %v4055, %v410
    %v4058 = vsel %vm413, %v4056, 0
    %4060 = vmatprep.subr.mxu0 0.0
    %4061 = vmatpush1.msra.mxu0 0.0
    %4062 = vmatprep.subr.mxu0 0.0
    %4063 = vmatpush1.msra.mxu0 0.0
    %4064 = vmatprep.subr.mxu0 0.0
    %4065 = vmatpush1.msra.mxu0 0.0
    %4066 = vmatprep.subr.mxu0 0.0
    %4067 = vmatpush1.msra.mxu0 0.0
    %4068 = vmatprep.subr.mxu0 0.0
    %4069 = vmatpush1.msra.mxu0 0.0
    %4070 = vmatprep.subr.mxu0 0.0
    %4071 = vmatpush1.msra.mxu0 0.0
    %4072 = vmatprep.subr.mxu0 0.0
    %4073 = vmatpush1.msra.mxu0 0.0
    %4074 = vmatprep.subr.mxu0 0.0
    %4075 = vmatpush1.msra.mxu0 0.0
    %4076 = vmatprep.subr.mxu0 0.0
    %4077 = vmatpush1.msra.mxu0 0.0
    %4078 = vmatprep.subr.mxu0 0.0
    %4079 = vmatpush1.msra.mxu0 0.0
    %4080 = vmatprep.subr.mxu0 0.0
    %4081 = vmatpush1.msra.mxu0 0.0
    %4082 = vmatprep.subr.mxu0 0.0
    %4083 = vmatpush1.msra.mxu0 0.0
    %4084 = vmatprep.subr.mxu0 0.0
    %4085 = vmatpush1.msra.mxu0 0.0
    %4086 = vmatprep.subr.mxu0 0.0
    %4087 = vmatpush1.msra.mxu0 0.0
    %4088 = vmatprep.subr.mxu0 0.0
    %4089 = vmatpush1.msra.mxu0 %v191
    %4090 = vmatprep.subr.mxu0 0.0
    %4091 = vmatpush1.msra.mxu0 %v190
    %4092 = vmatprep.subr.mxu0 0.0
    %4093 = vmatpush2.msra.mxu0 0.0
    %4094 = vmatprep.subr.mxu0 0.0
    %4095 = vmatpush2.msra.mxu0 0.0
    %4096 = vmatprep.subr.mxu0 0.0
    %4097 = vmatpush2.msra.mxu0 0.0
    %4098 = vmatprep.subr.mxu0 0.0
    %4099 = vmatpush2.msra.mxu0 0.0
    %4100 = vmatprep.subr.mxu0 0.0
    %4101 = vmatpush2.msra.mxu0 0.0
    %4102 = vmatprep.subr.mxu0 0.0
    %4103 = vmatpush2.msra.mxu0 0.0
    %4104 = vmatprep.subr.mxu0 0.0
    %4105 = vmatpush2.msra.mxu0 0.0
    %4106 = vmatprep.subr.mxu0 0.0
    %4107 = vmatpush2.msra.mxu0 0.0
    %4108 = vmatprep.subr.mxu0 0.0
    %4109 = vmatpush2.msra.mxu0 0.0
    %4110 = vmatprep.subr.mxu0 0.0
    %4111 = vmatpush2.msra.mxu0 0.0
    %4112 = vmatprep.subr.mxu0 0.0
    %4113 = vmatpush2.msra.mxu0 0.0
    %4114 = vmatprep.subr.mxu0 0.0
    %4115 = vmatpush2.msra.mxu0 0.0
    %4116 = vmatprep.subr.mxu0 0.0
    %4117 = vmatpush2.msra.mxu0 0.0
    %4118 = vmatprep.subr.mxu0 0.0
    %4119 = vmatpush2.msra.mxu0 0.0
    %4120 = vmatprep.subr.mxu0 0.0
    %4121 = vmatpush2.msra.mxu0 0.0
    %4122 = vmatprep.subr.mxu0 0.0
    %4123 = vmatpush2.msra.mxu0 0.0
    %4124 = vmatprep.mubr.f32.mxu0 0.0
    %4125 = vmatmul.mubr.f32.gmra.mxu0 %v4058
    %v4126 = vpop.f32.mrf.mxu0
    %v4127 = vadd.f32 0.0, %v4126
    %v4128 = vpop.f32.mrf.mxu0
    %4129 = vdwg.mxu0
    %v4131 = vsel %vm413, %v3900, 0
    %4133 = vmatprep.subr.mxu0 0.0
    %4134 = vmatpush1.msra.mxu0 0.0
    %4135 = vmatprep.subr.mxu0 0.0
    %4136 = vmatpush1.msra.mxu0 0.0
    %4137 = vmatprep.subr.mxu0 0.0
    %4138 = vmatpush1.msra.mxu0 0.0
    %4139 = vmatprep.subr.mxu0 0.0
    %4140 = vmatpush1.msra.mxu0 0.0
    %4141 = vmatprep.subr.mxu0 0.0
    %4142 = vmatpush1.msra.mxu0 0.0
    %4143 = vmatprep.subr.mxu0 0.0
    %4144 = vmatpush1.msra.mxu0 0.0
    %4145 = vmatprep.subr.mxu0 0.0
    %4146 = vmatpush1.msra.mxu0 0.0
    %4147 = vmatprep.subr.mxu0 0.0
    %4148 = vmatpush1.msra.mxu0 0.0
    %4149 = vmatprep.subr.mxu0 0.0
    %4150 = vmatpush1.msra.mxu0 0.0
    %4151 = vmatprep.subr.mxu0 0.0
    %4152 = vmatpush1.msra.mxu0 0.0
    %4153 = vmatprep.subr.mxu0 0.0
    %4154 = vmatpush1.msra.mxu0 0.0
    %4155 = vmatprep.subr.mxu0 0.0
    %4156 = vmatpush1.msra.mxu0 0.0
    %4157 = vmatprep.subr.mxu0 0.0
    %4158 = vmatpush1.msra.mxu0 0.0
    %4159 = vmatprep.subr.mxu0 0.0
    %4160 = vmatpush1.msra.mxu0 0.0
    %4161 = vmatprep.subr.mxu0 0.0
    %4162 = vmatpush1.msra.mxu0 %v189
    %4163 = vmatprep.subr.mxu0 0.0
    %4164 = vmatpush1.msra.mxu0 %v188
    %4165 = vmatprep.subr.mxu0 0.0
    %4166 = vmatpush2.msra.mxu0 0.0
    %4167 = vmatprep.subr.mxu0 0.0
    %4168 = vmatpush2.msra.mxu0 0.0
    %4169 = vmatprep.subr.mxu0 0.0
    %4170 = vmatpush2.msra.mxu0 0.0
    %4171 = vmatprep.subr.mxu0 0.0
    %4172 = vmatpush2.msra.mxu0 0.0
    %4173 = vmatprep.subr.mxu0 0.0
    %4174 = vmatpush2.msra.mxu0 0.0
    %4175 = vmatprep.subr.mxu0 0.0
    %4176 = vmatpush2.msra.mxu0 0.0
    %4177 = vmatprep.subr.mxu0 0.0
    %4178 = vmatpush2.msra.mxu0 0.0
    %4179 = vmatprep.subr.mxu0 0.0
    %4180 = vmatpush2.msra.mxu0 0.0
    %4181 = vmatprep.subr.mxu0 0.0
    %4182 = vmatpush2.msra.mxu0 0.0
    %4183 = vmatprep.subr.mxu0 0.0
    %4184 = vmatpush2.msra.mxu0 0.0
    %4185 = vmatprep.subr.mxu0 0.0
    %4186 = vmatpush2.msra.mxu0 0.0
    %4187 = vmatprep.subr.mxu0 0.0
    %4188 = vmatpush2.msra.mxu0 0.0
    %4189 = vmatprep.subr.mxu0 0.0
    %4190 = vmatpush2.msra.mxu0 0.0
    %4191 = vmatprep.subr.mxu0 0.0
    %4192 = vmatpush2.msra.mxu0 0.0
    %4193 = vmatprep.subr.mxu0 0.0
    %4194 = vmatpush2.msra.mxu0 0.0
    %4195 = vmatprep.subr.mxu0 0.0
    %4196 = vmatpush2.msra.mxu0 0.0
    %4197 = vmatprep.mubr.f32.mxu0 0.0
    %4198 = vmatmul.mubr.f32.gmra.mxu0 %v4131
    %v4199 = vpop.f32.mrf.mxu0
    %v4200 = vadd.f32 %v4127, %v4199
    %v4201 = vpop.f32.mrf.mxu0
    %4202 = vdwg.mxu0
    %v4203 = vadd.f32 %v4200, %v564
    %v4204 = vxor.u32 %v4203, 2147483648
    %v4205 = vmul.f32 %v4204, 1.442695
    %v4206 = vpow.pop %v4205
    %v4207 = vadd.f32 %v4206, 1.0
    %v4208 = vrcp.pop %v4207
    %v4209 = vmul.f32 1.0, %v4208
    %4211 = vrot.lane.b32.xlu0 %v4203, 80
    %v4212 = vpop.permute.xlu0 %4211
    %v4214 = vmul.f32 %v4209, %v4212
    %4216 = vrot.lane.b32.xlu0 %v4214, 32
    %v4217 = vpop.permute.xlu0 %4216
    %v4219 = vadd.f32 %v4203, %v4217
    %v4220 = vtanh.pop %v4219
    %v4221 = vsub.f32 1.0, %v4209
    %4223 = vrot.lane.b32.xlu0 %v4220, 112
    %v4224 = vpop.permute.xlu0 %4223
    %v4226 = vmul.f32 %v4221, %v4224
    %4227 = vrot.lane.b32.xlu0 %v4056, 16
    %v4228 = vpop.permute.xlu0 %4227
    %v4230 = vmul.f32 %v4209, %v4228
    %v4231 = vadd.f32 %v4226, %v4230
    %v4232 = vmul.f32 %v4231, 1.442695
    %v4233 = vpow.pop %v4232
    %4235 = vrot.lane.b32.xlu0 %v4233, 112
    %v4236 = vpop.permute.xlu0 %4235
    %4239 = vrot.lane.b32.xlu0 %v4231, 112
    %v4240 = vpop.permute.xlu0 %4239
    %v4242 = vsel %vm599, %v4236, %v4240
    %4244 = vrot.lane.b32.xlu0 %v3902, 24
    %v4245 = vpop.permute.xlu0 %4244
    %v4247 = vmul.f32 %v4233, %v4245
    %4249 = vrot.lane.b32.xlu0 %v4247, 120
    %v4250 = vpop.permute.xlu0 %4249
    %v4252 = vadd.f32 %v4231, %v4250
    %4254 = vrot.lane.b32.xlu0 %v4252, 112
    %v4255 = vpop.permute.xlu0 %4254
    %v4256 = vsel %vm243, %v4255, 0
    %4258 = vmatprep.subr.mxu0 0.0
    %4259 = vmatpush1.msra.mxu0 0.0
    %4260 = vmatprep.subr.mxu0 0.0
    %4261 = vmatpush1.msra.mxu0 0.0
    %4262 = vmatprep.subr.mxu0 0.0
    %4263 = vmatpush1.msra.mxu0 0.0
    %4264 = vmatprep.subr.mxu0 0.0
    %4265 = vmatpush1.msra.mxu0 0.0
    %4266 = vmatprep.subr.mxu0 0.0
    %4267 = vmatpush1.msra.mxu0 0.0
    %4268 = vmatprep.subr.mxu0 0.0
    %4269 = vmatpush1.msra.mxu0 0.0
    %4270 = vmatprep.subr.mxu0 0.0
    %4271 = vmatpush1.msra.mxu0 0.0
    %4272 = vmatprep.subr.mxu0 0.0
    %4273 = vmatpush1.msra.mxu0 0.0
    %4274 = vmatprep.subr.mxu0 0.0
    %4275 = vmatpush1.msra.mxu0 0.0
    %4276 = vmatprep.subr.mxu0 0.0
    %4277 = vmatpush1.msra.mxu0 0.0
    %4278 = vmatprep.subr.mxu0 0.0
    %4279 = vmatpush1.msra.mxu0 0.0
    %4280 = vmatprep.subr.mxu0 0.0
    %4281 = vmatpush1.msra.mxu0 0.0
    %4282 = vmatprep.subr.mxu0 0.0
    %4283 = vmatpush1.msra.mxu0 0.0
    %4284 = vmatprep.subr.mxu0 0.0
    %4285 = vmatpush1.msra.mxu0 0.0
    %4286 = vmatprep.subr.mxu0 0.0
    %4287 = vmatpush1.msra.mxu0 0.0
    %4288 = vmatprep.subr.mxu0 0.0
    %4289 = vmatpush1.msra.mxu0 %v192
    %4290 = vmatprep.subr.mxu0 0.0
    %4291 = vmatpush2.msra.mxu0 0.0
    %4292 = vmatprep.subr.mxu0 0.0
    %4293 = vmatpush2.msra.mxu0 0.0
    %4294 = vmatprep.subr.mxu0 0.0
    %4295 = vmatpush2.msra.mxu0 0.0
    %4296 = vmatprep.subr.mxu0 0.0
    %4297 = vmatpush2.msra.mxu0 0.0
    %4298 = vmatprep.subr.mxu0 0.0
    %4299 = vmatpush2.msra.mxu0 0.0
    %4300 = vmatprep.subr.mxu0 0.0
    %4301 = vmatpush2.msra.mxu0 0.0
    %4302 = vmatprep.subr.mxu0 0.0
    %4303 = vmatpush2.msra.mxu0 0.0
    %4304 = vmatprep.subr.mxu0 0.0
    %4305 = vmatpush2.msra.mxu0 0.0
    %4306 = vmatprep.subr.mxu0 0.0
    %4307 = vmatpush2.msra.mxu0 0.0
    %4308 = vmatprep.subr.mxu0 0.0
    %4309 = vmatpush2.msra.mxu0 0.0
    %4310 = vmatprep.subr.mxu0 0.0
    %4311 = vmatpush2.msra.mxu0 0.0
    %4312 = vmatprep.subr.mxu0 0.0
    %4313 = vmatpush2.msra.mxu0 0.0
    %4314 = vmatprep.subr.mxu0 0.0
    %4315 = vmatpush2.msra.mxu0 0.0
    %4316 = vmatprep.subr.mxu0 0.0
    %4317 = vmatpush2.msra.mxu0 0.0
    %4318 = vmatprep.subr.mxu0 0.0
    %4319 = vmatpush2.msra.mxu0 0.0
    %4320 = vmatprep.subr.mxu0 0.0
    %4321 = vmatpush2.msra.mxu0 0.0
    %4322 = vmatprep.mubr.f32.mxu0 0.0
    %4323 = vmatmul.mubr.f32.gmra.mxu0 %v4256
    %v4324 = vpop.f32.mrf.mxu0
    %v4325 = vadd.f32 %v623, %v4324
    %v4326 = vpop.f32.mrf.mxu0
    %4327 = vdwg.mxu0
    %v4328 = vmax.f32 %v4325, 0.0
    %v4330 = vsel %vm707, %v4328, 0
    %4332 = vmatprep.subr.mxu0 0.0
    %4333 = vmatpush1.msra.mxu0 0.0
    %4334 = vmatprep.subr.mxu0 0.0
    %4335 = vmatpush1.msra.mxu0 0.0
    %4336 = vmatprep.subr.mxu0 0.0
    %4337 = vmatpush1.msra.mxu0 0.0
    %4338 = vmatprep.subr.mxu0 0.0
    %4339 = vmatpush1.msra.mxu0 0.0
    %4340 = vmatprep.subr.mxu0 0.0
    %4341 = vmatpush1.msra.mxu0 0.0
    %4342 = vmatprep.subr.mxu0 0.0
    %4343 = vmatpush1.msra.mxu0 0.0
    %4344 = vmatprep.subr.mxu0 0.0
    %4345 = vmatpush1.msra.mxu0 0.0
    %4346 = vmatprep.subr.mxu0 0.0
    %4347 = vmatpush1.msra.mxu0 0.0
    %4348 = vmatprep.subr.mxu0 0.0
    %4349 = vmatpush1.msra.mxu0 0.0
    %4350 = vmatprep.subr.mxu0 0.0
    %4351 = vmatpush1.msra.mxu0 0.0
    %4352 = vmatprep.subr.mxu0 0.0
    %4353 = vmatpush1.msra.mxu0 0.0
    %4354 = vmatprep.subr.mxu0 0.0
    %4355 = vmatpush1.msra.mxu0 0.0
    %4356 = vmatprep.subr.mxu0 0.0
    %4357 = vmatpush1.msra.mxu0 %v196
    %4358 = vmatprep.subr.mxu0 0.0
    %4359 = vmatpush1.msra.mxu0 %v195
    %4360 = vmatprep.subr.mxu0 0.0
    %4361 = vmatpush1.msra.mxu0 %v194
    %4362 = vmatprep.subr.mxu0 0.0
    %4363 = vmatpush1.msra.mxu0 %v193
    %4364 = vmatprep.subr.mxu0 0.0
    %4365 = vmatpush2.msra.mxu0 0.0
    %4366 = vmatprep.subr.mxu0 0.0
    %4367 = vmatpush2.msra.mxu0 0.0
    %4368 = vmatprep.subr.mxu0 0.0
    %4369 = vmatpush2.msra.mxu0 0.0
    %4370 = vmatprep.subr.mxu0 0.0
    %4371 = vmatpush2.msra.mxu0 0.0
    %4372 = vmatprep.subr.mxu0 0.0
    %4373 = vmatpush2.msra.mxu0 0.0
    %4374 = vmatprep.subr.mxu0 0.0
    %4375 = vmatpush2.msra.mxu0 0.0
    %4376 = vmatprep.subr.mxu0 0.0
    %4377 = vmatpush2.msra.mxu0 0.0
    %4378 = vmatprep.subr.mxu0 0.0
    %4379 = vmatpush2.msra.mxu0 0.0
    %4380 = vmatprep.subr.mxu0 0.0
    %4381 = vmatpush2.msra.mxu0 0.0
    %4382 = vmatprep.subr.mxu0 0.0
    %4383 = vmatpush2.msra.mxu0 0.0
    %4384 = vmatprep.subr.mxu0 0.0
    %4385 = vmatpush2.msra.mxu0 0.0
    %4386 = vmatprep.subr.mxu0 0.0
    %4387 = vmatpush2.msra.mxu0 0.0
    %4388 = vmatprep.subr.mxu0 0.0
    %4389 = vmatpush2.msra.mxu0 0.0
    %4390 = vmatprep.subr.mxu0 0.0
    %4391 = vmatpush2.msra.mxu0 0.0
    %4392 = vmatprep.subr.mxu0 0.0
    %4393 = vmatpush2.msra.mxu0 0.0
    %4394 = vmatprep.subr.mxu0 0.0
    %4395 = vmatpush2.msra.mxu0 0.0
    %4396 = vmatprep.mubr.f32.mxu0 0.0
    %4397 = vmatmul.mubr.f32.gmra.mxu0 %v4330
    %v4398 = vpop.f32.mrf.mxu0
    %v4399 = vadd.f32 %v705, %v4398
    %v4400 = vpop.f32.mrf.mxu0
    %4401 = vdwg.mxu0
    %v4403 = vsel %vm707, %v4399, 0
    %4405 = vmatprep.subr.mxu0 0.0
    %4406 = vmatpush1.msra.mxu0 0.0
    %4407 = vmatprep.subr.mxu0 0.0
    %4408 = vmatpush1.msra.mxu0 0.0
    %4409 = vmatprep.subr.mxu0 0.0
    %4410 = vmatpush1.msra.mxu0 0.0
    %4411 = vmatprep.subr.mxu0 0.0
    %4412 = vmatpush1.msra.mxu0 0.0
    %4413 = vmatprep.subr.mxu0 0.0
    %4414 = vmatpush1.msra.mxu0 0.0
    %4415 = vmatprep.subr.mxu0 0.0
    %4416 = vmatpush1.msra.mxu0 0.0
    %4417 = vmatprep.subr.mxu0 0.0
    %4418 = vmatpush1.msra.mxu0 0.0
    %4419 = vmatprep.subr.mxu0 0.0
    %4420 = vmatpush1.msra.mxu0 0.0
    %4421 = vmatprep.subr.mxu0 0.0
    %4422 = vmatpush1.msra.mxu0 0.0
    %4423 = vmatprep.subr.mxu0 0.0
    %4424 = vmatpush1.msra.mxu0 0.0
    %4425 = vmatprep.subr.mxu0 0.0
    %4426 = vmatpush1.msra.mxu0 0.0
    %4427 = vmatprep.subr.mxu0 0.0
    %4428 = vmatpush1.msra.mxu0 0.0
    %4429 = vmatprep.subr.mxu0 %v204
    %4430 = vmatpush1.msra.mxu0 %v203
    %4431 = vmatprep.subr.mxu0 %v202
    %4432 = vmatpush1.msra.mxu0 %v201
    %4433 = vmatprep.subr.mxu0 %v200
    %4434 = vmatpush1.msra.mxu0 %v199
    %4435 = vmatprep.subr.mxu0 %v198
    %4436 = vmatpush1.msra.mxu0 %v197
    %4437 = vmatprep.subr.mxu0 0.0
    %4438 = vmatpush2.msra.mxu0 0.0
    %4439 = vmatprep.subr.mxu0 0.0
    %4440 = vmatpush2.msra.mxu0 0.0
    %4441 = vmatprep.subr.mxu0 0.0
    %4442 = vmatpush2.msra.mxu0 0.0
    %4443 = vmatprep.subr.mxu0 0.0
    %4444 = vmatpush2.msra.mxu0 0.0
    %4445 = vmatprep.subr.mxu0 0.0
    %4446 = vmatpush2.msra.mxu0 0.0
    %4447 = vmatprep.subr.mxu0 0.0
    %4448 = vmatpush2.msra.mxu0 0.0
    %4449 = vmatprep.subr.mxu0 0.0
    %4450 = vmatpush2.msra.mxu0 0.0
    %4451 = vmatprep.subr.mxu0 0.0
    %4452 = vmatpush2.msra.mxu0 0.0
    %4453 = vmatprep.subr.mxu0 0.0
    %4454 = vmatpush2.msra.mxu0 0.0
    %4455 = vmatprep.subr.mxu0 0.0
    %4456 = vmatpush2.msra.mxu0 0.0
    %4457 = vmatprep.subr.mxu0 0.0
    %4458 = vmatpush2.msra.mxu0 0.0
    %4459 = vmatprep.subr.mxu0 0.0
    %4460 = vmatpush2.msra.mxu0 0.0
    %4461 = vmatprep.subr.mxu0 0.0
    %4462 = vmatpush2.msra.mxu0 0.0
    %4463 = vmatprep.subr.mxu0 0.0
    %4464 = vmatpush2.msra.mxu0 0.0
    %4465 = vmatprep.subr.mxu0 0.0
    %4466 = vmatpush2.msra.mxu0 0.0
    %4467 = vmatprep.subr.mxu0 0.0
    %4468 = vmatpush2.msra.mxu0 0.0
    %4469 = vmatprep.mubr.f32.mxu0 0.0
    %4470 = vmatmul.mubr.f32.gmra.mxu0 %v4403
    %v4471 = vpop.f32.mrf.mxu0
    %v4472 = vadd.f32 %v785, %v4471
    %v4473 = vpop.f32.mrf.mxu0
    %v4474 = vadd.f32 %v789, %v4473
    %4475 = vdwg.mxu0
    %4476 = vmatprep.subr.mxu0 0.0
    %4477 = vmatpush1.msra.mxu0 0.0
    %4478 = vmatprep.subr.mxu0 0.0
    %4479 = vmatpush1.msra.mxu0 0.0
    %4480 = vmatprep.subr.mxu0 0.0
    %4481 = vmatpush1.msra.mxu0 0.0
    %4482 = vmatprep.subr.mxu0 0.0
    %4483 = vmatpush1.msra.mxu0 0.0
    %4484 = vmatprep.subr.mxu0 0.0
    %4485 = vmatpush1.msra.mxu0 0.0
    %4486 = vmatprep.subr.mxu0 0.0
    %4487 = vmatpush1.msra.mxu0 0.0
    %4488 = vmatprep.subr.mxu0 0.0
    %4489 = vmatpush1.msra.mxu0 0.0
    %4490 = vmatprep.subr.mxu0 0.0
    %4491 = vmatpush1.msra.mxu0 0.0
    %4492 = vmatprep.subr.mxu0 0.0
    %4493 = vmatpush1.msra.mxu0 0.0
    %4494 = vmatprep.subr.mxu0 0.0
    %4495 = vmatpush1.msra.mxu0 0.0
    %4496 = vmatprep.subr.mxu0 0.0
    %4497 = vmatpush1.msra.mxu0 0.0
    %4498 = vmatprep.subr.mxu0 0.0
    %4499 = vmatpush1.msra.mxu0 0.0
    %4500 = vmatprep.subr.mxu0 0.0
    %4501 = vmatpush1.msra.mxu0 %v212
    %4502 = vmatprep.subr.mxu0 0.0
    %4503 = vmatpush1.msra.mxu0 %v211
    %4504 = vmatprep.subr.mxu0 0.0
    %4505 = vmatpush1.msra.mxu0 %v210
    %4506 = vmatprep.subr.mxu0 0.0
    %4507 = vmatpush1.msra.mxu0 %v209
    %4508 = vmatprep.subr.mxu0 0.0
    %4509 = vmatpush2.msra.mxu0 0.0
    %4510 = vmatprep.subr.mxu0 0.0
    %4511 = vmatpush2.msra.mxu0 0.0
    %4512 = vmatprep.subr.mxu0 0.0
    %4513 = vmatpush2.msra.mxu0 0.0
    %4514 = vmatprep.subr.mxu0 0.0
    %4515 = vmatpush2.msra.mxu0 0.0
    %4516 = vmatprep.subr.mxu0 0.0
    %4517 = vmatpush2.msra.mxu0 0.0
    %4518 = vmatprep.subr.mxu0 0.0
    %4519 = vmatpush2.msra.mxu0 0.0
    %4520 = vmatprep.subr.mxu0 0.0
    %4521 = vmatpush2.msra.mxu0 0.0
    %4522 = vmatprep.subr.mxu0 0.0
    %4523 = vmatpush2.msra.mxu0 0.0
    %4524 = vmatprep.subr.mxu0 0.0
    %4525 = vmatpush2.msra.mxu0 0.0
    %4526 = vmatprep.subr.mxu0 0.0
    %4527 = vmatpush2.msra.mxu0 0.0
    %4528 = vmatprep.subr.mxu0 0.0
    %4529 = vmatpush2.msra.mxu0 0.0
    %4530 = vmatprep.subr.mxu0 0.0
    %4531 = vmatpush2.msra.mxu0 0.0
    %4532 = vmatprep.subr.mxu0 0.0
    %4533 = vmatpush2.msra.mxu0 0.0
    %4534 = vmatprep.subr.mxu0 0.0
    %4535 = vmatpush2.msra.mxu0 0.0
    %4536 = vmatprep.subr.mxu0 0.0
    %4537 = vmatpush2.msra.mxu0 0.0
    %4538 = vmatprep.subr.mxu0 0.0
    %4539 = vmatpush2.msra.mxu0 0.0
    %4540 = vmatprep.mubr.f32.mxu0 0.0
    %4541 = vmatmul.mubr.f32.gmra.mxu0 %v3749
    %v4542 = vpop.f32.mrf.mxu0
    %v4543 = vadd.f32 0.0, %v4542
    %v4544 = vpop.f32.mrf.mxu0
    %4545 = vdwg.mxu0
    %4546 = vrot.lane.b32.xlu0 %v3900, 112
    %v4547 = vpop.permute.xlu0 %4546
    %v4548 = vsel %vm707, %v4547, 0
    %4550 = vmatprep.subr.mxu0 0.0
    %4551 = vmatpush1.msra.mxu0 0.0
    %4552 = vmatprep.subr.mxu0 0.0
    %4553 = vmatpush1.msra.mxu0 0.0
    %4554 = vmatprep.subr.mxu0 0.0
    %4555 = vmatpush1.msra.mxu0 0.0
    %4556 = vmatprep.subr.mxu0 0.0
    %4557 = vmatpush1.msra.mxu0 0.0
    %4558 = vmatprep.subr.mxu0 0.0
    %4559 = vmatpush1.msra.mxu0 0.0
    %4560 = vmatprep.subr.mxu0 0.0
    %4561 = vmatpush1.msra.mxu0 0.0
    %4562 = vmatprep.subr.mxu0 0.0
    %4563 = vmatpush1.msra.mxu0 0.0
    %4564 = vmatprep.subr.mxu0 0.0
    %4565 = vmatpush1.msra.mxu0 0.0
    %4566 = vmatprep.subr.mxu0 0.0
    %4567 = vmatpush1.msra.mxu0 0.0
    %4568 = vmatprep.subr.mxu0 0.0
    %4569 = vmatpush1.msra.mxu0 0.0
    %4570 = vmatprep.subr.mxu0 0.0
    %4571 = vmatpush1.msra.mxu0 0.0
    %4572 = vmatprep.subr.mxu0 0.0
    %4573 = vmatpush1.msra.mxu0 0.0
    %4574 = vmatprep.subr.mxu0 0.0
    %4575 = vmatpush1.msra.mxu0 %v208
    %4576 = vmatprep.subr.mxu0 0.0
    %4577 = vmatpush1.msra.mxu0 %v207
    %4578 = vmatprep.subr.mxu0 0.0
    %4579 = vmatpush1.msra.mxu0 %v206
    %4580 = vmatprep.subr.mxu0 0.0
    %4581 = vmatpush1.msra.mxu0 %v205
    %4582 = vmatprep.subr.mxu0 0.0
    %4583 = vmatpush2.msra.mxu0 0.0
    %4584 = vmatprep.subr.mxu0 0.0
    %4585 = vmatpush2.msra.mxu0 0.0
    %4586 = vmatprep.subr.mxu0 0.0
    %4587 = vmatpush2.msra.mxu0 0.0
    %4588 = vmatprep.subr.mxu0 0.0
    %4589 = vmatpush2.msra.mxu0 0.0
    %4590 = vmatprep.subr.mxu0 0.0
    %4591 = vmatpush2.msra.mxu0 0.0
    %4592 = vmatprep.subr.mxu0 0.0
    %4593 = vmatpush2.msra.mxu0 0.0
    %4594 = vmatprep.subr.mxu0 0.0
    %4595 = vmatpush2.msra.mxu0 0.0
    %4596 = vmatprep.subr.mxu0 0.0
    %4597 = vmatpush2.msra.mxu0 0.0
    %4598 = vmatprep.subr.mxu0 0.0
    %4599 = vmatpush2.msra.mxu0 0.0
    %4600 = vmatprep.subr.mxu0 0.0
    %4601 = vmatpush2.msra.mxu0 0.0
    %4602 = vmatprep.subr.mxu0 0.0
    %4603 = vmatpush2.msra.mxu0 0.0
    %4604 = vmatprep.subr.mxu0 0.0
    %4605 = vmatpush2.msra.mxu0 0.0
    %4606 = vmatprep.subr.mxu0 0.0
    %4607 = vmatpush2.msra.mxu0 0.0
    %4608 = vmatprep.subr.mxu0 0.0
    %4609 = vmatpush2.msra.mxu0 0.0
    %4610 = vmatprep.subr.mxu0 0.0
    %4611 = vmatpush2.msra.mxu0 0.0
    %4612 = vmatprep.subr.mxu0 0.0
    %4613 = vmatpush2.msra.mxu0 0.0
    %4614 = vmatprep.mubr.f32.mxu0 0.0
    %4615 = vmatmul.mubr.f32.gmra.mxu0 %v4548
    %v4616 = vpop.f32.mrf.mxu0
    %v4617 = vadd.f32 %v4543, %v4616
    %v4618 = vpop.f32.mrf.mxu0
    %4619 = vdwg.mxu0
    %v4620 = vadd.f32 %v4617, %v1017
    %v4621 = vxor.u32 %v4620, 2147483648
    %v4622 = vmul.f32 %v4621, 1.442695
    %v4623 = vpow.pop %v4622
    %v4624 = vadd.f32 %v4623, 1.0
    %v4625 = vrcp.pop %v4624
    %v4626 = vmul.f32 1.0, %v4625
    %4628 = vrot.lane.b32.xlu0 %v4620, 32
    %v4629 = vpop.permute.xlu0 %4628
    %v4631 = vmul.f32 %v4626, %v4629
    %4633 = vrot.lane.b32.xlu0 %v4631, 64
    %v4634 = vpop.permute.xlu0 %4633
    %v4636 = vadd.f32 %v4620, %v4634
    %v4637 = vtanh.pop %v4636
    %v4638 = vsub.f32 1.0, %v4626
    %4640 = vrot.lane.b32.xlu0 %v4637, 96
    %v4641 = vpop.permute.xlu0 %4640
    %v4643 = vmul.f32 %v4638, %v4641
    %v4644 = vmul.f32 %v4626, %v3745
    %v4645 = vadd.f32 %v4643, %v4644
    %4647 = vrot.lane.b32.xlu0 %v4645, 96
    %v4648 = vpop.permute.xlu0 %4647
    %v4649 = vsel %vm707, %v4648, 0
    %4651 = vmatprep.subr.mxu0 0.0
    %4652 = vmatpush1.msra.mxu0 0.0
    %4653 = vmatprep.subr.mxu0 0.0
    %4654 = vmatpush1.msra.mxu0 0.0
    %4655 = vmatprep.subr.mxu0 0.0
    %4656 = vmatpush1.msra.mxu0 0.0
    %4657 = vmatprep.subr.mxu0 0.0
    %4658 = vmatpush1.msra.mxu0 0.0
    %4659 = vmatprep.subr.mxu0 0.0
    %4660 = vmatpush1.msra.mxu0 0.0
    %4661 = vmatprep.subr.mxu0 0.0
    %4662 = vmatpush1.msra.mxu0 0.0
    %4663 = vmatprep.subr.mxu0 0.0
    %4664 = vmatpush1.msra.mxu0 0.0
    %4665 = vmatprep.subr.mxu0 0.0
    %4666 = vmatpush1.msra.mxu0 0.0
    %4667 = vmatprep.subr.mxu0 0.0
    %4668 = vmatpush1.msra.mxu0 0.0
    %4669 = vmatprep.subr.mxu0 0.0
    %4670 = vmatpush1.msra.mxu0 0.0
    %4671 = vmatprep.subr.mxu0 0.0
    %4672 = vmatpush1.msra.mxu0 0.0
    %4673 = vmatprep.subr.mxu0 0.0
    %4674 = vmatpush1.msra.mxu0 0.0
    %4675 = vmatprep.subr.mxu0 0.0
    %4676 = vmatpush1.msra.mxu0 %v216
    %4677 = vmatprep.subr.mxu0 0.0
    %4678 = vmatpush1.msra.mxu0 %v215
    %4679 = vmatprep.subr.mxu0 0.0
    %4680 = vmatpush1.msra.mxu0 %v214
    %4681 = vmatprep.subr.mxu0 0.0
    %4682 = vmatpush1.msra.mxu0 %v213
    %4683 = vmatprep.subr.mxu0 0.0
    %4684 = vmatpush2.msra.mxu0 0.0
    %4685 = vmatprep.subr.mxu0 0.0
    %4686 = vmatpush2.msra.mxu0 0.0
    %4687 = vmatprep.subr.mxu0 0.0
    %4688 = vmatpush2.msra.mxu0 0.0
    %4689 = vmatprep.subr.mxu0 0.0
    %4690 = vmatpush2.msra.mxu0 0.0
    %4691 = vmatprep.subr.mxu0 0.0
    %4692 = vmatpush2.msra.mxu0 0.0
    %4693 = vmatprep.subr.mxu0 0.0
    %4694 = vmatpush2.msra.mxu0 0.0
    %4695 = vmatprep.subr.mxu0 0.0
    %4696 = vmatpush2.msra.mxu0 0.0
    %4697 = vmatprep.subr.mxu0 0.0
    %4698 = vmatpush2.msra.mxu0 0.0
    %4699 = vmatprep.subr.mxu0 0.0
    %4700 = vmatpush2.msra.mxu0 0.0
    %4701 = vmatprep.subr.mxu0 0.0
    %4702 = vmatpush2.msra.mxu0 0.0
    %4703 = vmatprep.subr.mxu0 0.0
    %4704 = vmatpush2.msra.mxu0 0.0
    %4705 = vmatprep.subr.mxu0 0.0
    %4706 = vmatpush2.msra.mxu0 0.0
    %4707 = vmatprep.subr.mxu0 0.0
    %4708 = vmatpush2.msra.mxu0 0.0
    %4709 = vmatprep.subr.mxu0 0.0
    %4710 = vmatpush2.msra.mxu0 0.0
    %4711 = vmatprep.subr.mxu0 0.0
    %4712 = vmatpush2.msra.mxu0 0.0
    %4713 = vmatprep.subr.mxu0 0.0
    %4714 = vmatpush2.msra.mxu0 0.0
    %4715 = vmatprep.mubr.f32.mxu0 0.0
    %4716 = vmatmul.mubr.f32.gmra.mxu0 %v4649
    %v4717 = vpop.f32.mrf.mxu0
    %v4718 = vadd.f32 0.0, %v4717
    %v4719 = vpop.f32.mrf.mxu0
    %4720 = vdwg.mxu0
    %v4721 = vmul.f32 %v4472, %v4718
    %4722 = vmatprep.subr.mxu0 0.0
    %4723 = vmatpush1.msra.mxu0 %v232
    %4724 = vmatprep.subr.mxu0 0.0
    %4725 = vmatpush1.msra.mxu0 %v231
    %4726 = vmatprep.subr.mxu0 0.0
    %4727 = vmatpush1.msra.mxu0 %v230
    %4728 = vmatprep.subr.mxu0 0.0
    %4729 = vmatpush1.msra.mxu0 %v229
    %4730 = vmatprep.subr.mxu0 0.0
    %4731 = vmatpush1.msra.mxu0 %v228
    %4732 = vmatprep.subr.mxu0 0.0
    %4733 = vmatpush1.msra.mxu0 %v227
    %4734 = vmatprep.subr.mxu0 0.0
    %4735 = vmatpush1.msra.mxu0 %v226
    %4736 = vmatprep.subr.mxu0 0.0
    %4737 = vmatpush1.msra.mxu0 %v225
    %4738 = vmatprep.subr.mxu0 0.0
    %4739 = vmatpush1.msra.mxu0 %v224
    %4740 = vmatprep.subr.mxu0 0.0
    %4741 = vmatpush1.msra.mxu0 %v223
    %4742 = vmatprep.subr.mxu0 0.0
    %4743 = vmatpush1.msra.mxu0 %v222
    %4744 = vmatprep.subr.mxu0 0.0
    %4745 = vmatpush1.msra.mxu0 %v221
    %4746 = vmatprep.subr.mxu0 0.0
    %4747 = vmatpush1.msra.mxu0 %v220
    %4748 = vmatprep.subr.mxu0 0.0
    %4749 = vmatpush1.msra.mxu0 %v219
    %4750 = vmatprep.subr.mxu0 0.0
    %4751 = vmatpush1.msra.mxu0 %v218
    %4752 = vmatprep.subr.mxu0 0.0
    %4753 = vmatpush1.msra.mxu0 %v217
    %4754 = vmatprep.subr.mxu0 0.0
    %4755 = vmatpush2.msra.mxu0 0.0
    %4756 = vmatprep.subr.mxu0 0.0
    %4757 = vmatpush2.msra.mxu0 0.0
    %4758 = vmatprep.subr.mxu0 0.0
    %4759 = vmatpush2.msra.mxu0 0.0
    %4760 = vmatprep.subr.mxu0 0.0
    %4761 = vmatpush2.msra.mxu0 0.0
    %4762 = vmatprep.subr.mxu0 0.0
    %4763 = vmatpush2.msra.mxu0 0.0
    %4764 = vmatprep.subr.mxu0 0.0
    %4765 = vmatpush2.msra.mxu0 0.0
    %4766 = vmatprep.subr.mxu0 0.0
    %4767 = vmatpush2.msra.mxu0 0.0
    %4768 = vmatprep.subr.mxu0 0.0
    %4769 = vmatpush2.msra.mxu0 0.0
    %4770 = vmatprep.subr.mxu0 0.0
    %4771 = vmatpush2.msra.mxu0 0.0
    %4772 = vmatprep.subr.mxu0 0.0
    %4773 = vmatpush2.msra.mxu0 0.0
    %4774 = vmatprep.subr.mxu0 0.0
    %4775 = vmatpush2.msra.mxu0 0.0
    %4776 = vmatprep.subr.mxu0 0.0
    %4777 = vmatpush2.msra.mxu0 0.0
    %4778 = vmatprep.subr.mxu0 0.0
    %4779 = vmatpush2.msra.mxu0 0.0
    %4780 = vmatprep.subr.mxu0 0.0
    %4781 = vmatpush2.msra.mxu0 0.0
    %4782 = vmatprep.subr.mxu0 0.0
    %4783 = vmatpush2.msra.mxu0 0.0
    %4784 = vmatprep.subr.mxu0 0.0
    %4785 = vmatpush2.msra.mxu0 0.0
    %4786 = vmatprep.mubr.f32.mxu0 0.0
    %4787 = vmatmul.mubr.f32.gmra.mxu0 %v4721
    %v4788 = vpop.f32.mrf.mxu0
    %v4789 = vadd.f32 %v4474, %v4788
    %v4790 = vpop.f32.mrf.mxu0
    %4791 = vdwg.mxu0
    %s4792 = scalar_lea.vmem %s20, 32
    %4793 = vst.msk [vmem:[%s4792] sm:$0xff] %vm1194, %v4789
    %s4795 = scalar_lea.vmem [#allocation17], 32
    %4796 = vst.msk [vmem:[%s4795] sm:$0xff] %vm707, %v4648
    %s4797 = scalar_lea.vmem [#allocation18], 32
    %4798 = vst.msk [vmem:[%s4797] sm:$0xff] %vm413, %v4242
    %s4799 = scalar_lea.vmem %s0, 40
    %v4800 = vld [vmem:[%s4799] sm:$0xff]
    %s4801 = scalar_lea.vmem %s1, 40
    %v4802 = vld [vmem:[%s4801] sm:$0xff]
    %4803 = vmatprep.subr.mxu0 0.0
    %4804 = vmatpush1.msra.mxu0 0.0
    %4805 = vmatprep.subr.mxu0 0.0
    %4806 = vmatpush1.msra.mxu0 0.0
    %4807 = vmatprep.subr.mxu0 0.0
    %4808 = vmatpush1.msra.mxu0 0.0
    %4809 = vmatprep.subr.mxu0 0.0
    %4810 = vmatpush1.msra.mxu0 0.0
    %4811 = vmatprep.subr.mxu0 0.0
    %4812 = vmatpush1.msra.mxu0 0.0
    %4813 = vmatprep.subr.mxu0 0.0
    %4814 = vmatpush1.msra.mxu0 0.0
    %4815 = vmatprep.subr.mxu0 0.0
    %4816 = vmatpush1.msra.mxu0 0.0
    %4817 = vmatprep.subr.mxu0 0.0
    %4818 = vmatpush1.msra.mxu0 0.0
    %4819 = vmatprep.subr.mxu0 0.0
    %4820 = vmatpush1.msra.mxu0 0.0
    %4821 = vmatprep.subr.mxu0 0.0
    %4822 = vmatpush1.msra.mxu0 0.0
    %4823 = vmatprep.subr.mxu0 0.0
    %4824 = vmatpush1.msra.mxu0 0.0
    %4825 = vmatprep.subr.mxu0 0.0
    %4826 = vmatpush1.msra.mxu0 0.0
    %4827 = vmatprep.subr.mxu0 0.0
    %4828 = vmatpush1.msra.mxu0 0.0
    %4829 = vmatprep.subr.mxu0 0.0
    %4830 = vmatpush1.msra.mxu0 0.0
    %4831 = vmatprep.subr.mxu0 0.0
    %4832 = vmatpush1.msra.mxu0 0.0
    %4833 = vmatprep.subr.mxu0 0.0
    %4834 = vmatpush1.msra.mxu0 %v4242
    %4835 = vmatprep.subr.mxu0 0.0
    %4836 = vmatpush2.msra.mxu0 0.0
    %4837 = vmatprep.subr.mxu0 0.0
    %4838 = vmatpush2.msra.mxu0 0.0
    %4839 = vmatprep.subr.mxu0 0.0
    %4840 = vmatpush2.msra.mxu0 0.0
    %4841 = vmatprep.subr.mxu0 0.0
    %4842 = vmatpush2.msra.mxu0 0.0
    %4843 = vmatprep.subr.mxu0 0.0
    %4844 = vmatpush2.msra.mxu0 0.0
    %4845 = vmatprep.subr.mxu0 0.0
    %4846 = vmatpush2.msra.mxu0 0.0
    %4847 = vmatprep.subr.mxu0 0.0
    %4848 = vmatpush2.msra.mxu0 0.0
    %4849 = vmatprep.subr.mxu0 0.0
    %4850 = vmatpush2.msra.mxu0 0.0
    %4851 = vmatprep.subr.mxu0 0.0
    %4852 = vmatpush2.msra.mxu0 0.0
    %4853 = vmatprep.subr.mxu0 0.0
    %4854 = vmatpush2.msra.mxu0 0.0
    %4855 = vmatprep.subr.mxu0 0.0
    %4856 = vmatpush2.msra.mxu0 0.0
    %4857 = vmatprep.subr.mxu0 0.0
    %4858 = vmatpush2.msra.mxu0 0.0
    %4859 = vmatprep.subr.mxu0 0.0
    %4860 = vmatpush2.msra.mxu0 0.0
    %4861 = vmatprep.subr.mxu0 0.0
    %4862 = vmatpush2.msra.mxu0 0.0
    %4863 = vmatprep.subr.mxu0 0.0
    %4864 = vmatpush2.msra.mxu0 0.0
    %4865 = vmatprep.subr.mxu0 0.0
    %4866 = vmatpush2.msra.mxu0 0.0
    %4867 = vmatprep.mubr.f32.mxu0 0.0
    %4868 = vmatmul.mubr.f32.gmra.mxu0 %v245
    %v4869 = vpop.f32.mrf.mxu0
    %v4870 = vadd.f32 0.0, %v4869
    %v4871 = vpop.f32.mrf.mxu0
    %4872 = vdwg.mxu0
    %v4873 = vlaneseq
    %v4874 = vshrl.u32 %v4873, 7
    %v4875 = vsub.s32 0, %v4874
    %v4876 = vrot.slane %v4870, %v4875
    %v4877 = vsub.f32 %v4242, %v4876
    %v4878 = vmul.f32 %v4877, %v4877
    %4879 = vmatprep.subr.mxu0 0.0
    %4880 = vmatpush1.msra.mxu0 0.0
    %4881 = vmatprep.subr.mxu0 0.0
    %4882 = vmatpush1.msra.mxu0 0.0
    %4883 = vmatprep.subr.mxu0 0.0
    %4884 = vmatpush1.msra.mxu0 0.0
    %4885 = vmatprep.subr.mxu0 0.0
    %4886 = vmatpush1.msra.mxu0 0.0
    %4887 = vmatprep.subr.mxu0 0.0
    %4888 = vmatpush1.msra.mxu0 0.0
    %4889 = vmatprep.subr.mxu0 0.0
    %4890 = vmatpush1.msra.mxu0 0.0
    %4891 = vmatprep.subr.mxu0 0.0
    %4892 = vmatpush1.msra.mxu0 0.0
    %4893 = vmatprep.subr.mxu0 0.0
    %4894 = vmatpush1.msra.mxu0 0.0
    %4895 = vmatprep.subr.mxu0 0.0
    %4896 = vmatpush1.msra.mxu0 0.0
    %4897 = vmatprep.subr.mxu0 0.0
    %4898 = vmatpush1.msra.mxu0 0.0
    %4899 = vmatprep.subr.mxu0 0.0
    %4900 = vmatpush1.msra.mxu0 0.0
    %4901 = vmatprep.subr.mxu0 0.0
    %4902 = vmatpush1.msra.mxu0 0.0
    %4903 = vmatprep.subr.mxu0 0.0
    %4904 = vmatpush1.msra.mxu0 0.0
    %4905 = vmatprep.subr.mxu0 0.0
    %4906 = vmatpush1.msra.mxu0 0.0
    %4907 = vmatprep.subr.mxu0 0.0
    %4908 = vmatpush1.msra.mxu0 0.0
    %4909 = vmatprep.subr.mxu0 0.0
    %4910 = vmatpush1.msra.mxu0 %v4878
    %4911 = vmatprep.subr.mxu0 0.0
    %4912 = vmatpush2.msra.mxu0 0.0
    %4913 = vmatprep.subr.mxu0 0.0
    %4914 = vmatpush2.msra.mxu0 0.0
    %4915 = vmatprep.subr.mxu0 0.0
    %4916 = vmatpush2.msra.mxu0 0.0
    %4917 = vmatprep.subr.mxu0 0.0
    %4918 = vmatpush2.msra.mxu0 0.0
    %4919 = vmatprep.subr.mxu0 0.0
    %4920 = vmatpush2.msra.mxu0 0.0
    %4921 = vmatprep.subr.mxu0 0.0
    %4922 = vmatpush2.msra.mxu0 0.0
    %4923 = vmatprep.subr.mxu0 0.0
    %4924 = vmatpush2.msra.mxu0 0.0
    %4925 = vmatprep.subr.mxu0 0.0
    %4926 = vmatpush2.msra.mxu0 0.0
    %4927 = vmatprep.subr.mxu0 0.0
    %4928 = vmatpush2.msra.mxu0 0.0
    %4929 = vmatprep.subr.mxu0 0.0
    %4930 = vmatpush2.msra.mxu0 0.0
    %4931 = vmatprep.subr.mxu0 0.0
    %4932 = vmatpush2.msra.mxu0 0.0
    %4933 = vmatprep.subr.mxu0 0.0
    %4934 = vmatpush2.msra.mxu0 0.0
    %4935 = vmatprep.subr.mxu0 0.0
    %4936 = vmatpush2.msra.mxu0 0.0
    %4937 = vmatprep.subr.mxu0 0.0
    %4938 = vmatpush2.msra.mxu0 0.0
    %4939 = vmatprep.subr.mxu0 0.0
    %4940 = vmatpush2.msra.mxu0 0.0
    %4941 = vmatprep.subr.mxu0 0.0
    %4942 = vmatpush2.msra.mxu0 0.0
    %4943 = vmatprep.mubr.f32.mxu0 0.0
    %4944 = vmatmul.mubr.f32.gmra.mxu0 %v245
    %v4945 = vpop.f32.mrf.mxu0
    %v4946 = vadd.f32 1e-05, %v4945
    %v4947 = vpop.f32.mrf.mxu0
    %4948 = vdwg.mxu0
    %v4949 = vrsqrt.pop %v4946
    %v4950 = vlaneseq
    %v4951 = vshrl.u32 %v4950, 7
    %v4952 = vsub.s32 0, %v4951
    %v4953 = vrot.slane %v4949, %v4952
    %v4954 = vmul.f32 %v4877, %v4953
    %v4955 = vmul.f32 %v4954, %v403
    %v4956 = vadd.f32 %v4955, %v410
    %v4958 = vsel %vm413, %v4956, 0
    %4960 = vmatprep.subr.mxu0 0.0
    %4961 = vmatpush1.msra.mxu0 0.0
    %4962 = vmatprep.subr.mxu0 0.0
    %4963 = vmatpush1.msra.mxu0 0.0
    %4964 = vmatprep.subr.mxu0 0.0
    %4965 = vmatpush1.msra.mxu0 0.0
    %4966 = vmatprep.subr.mxu0 0.0
    %4967 = vmatpush1.msra.mxu0 0.0
    %4968 = vmatprep.subr.mxu0 0.0
    %4969 = vmatpush1.msra.mxu0 0.0
    %4970 = vmatprep.subr.mxu0 0.0
    %4971 = vmatpush1.msra.mxu0 0.0
    %4972 = vmatprep.subr.mxu0 0.0
    %4973 = vmatpush1.msra.mxu0 0.0
    %4974 = vmatprep.subr.mxu0 0.0
    %4975 = vmatpush1.msra.mxu0 0.0
    %4976 = vmatprep.subr.mxu0 0.0
    %4977 = vmatpush1.msra.mxu0 0.0
    %4978 = vmatprep.subr.mxu0 0.0
    %4979 = vmatpush1.msra.mxu0 0.0
    %4980 = vmatprep.subr.mxu0 0.0
    %4981 = vmatpush1.msra.mxu0 0.0
    %4982 = vmatprep.subr.mxu0 0.0
    %4983 = vmatpush1.msra.mxu0 0.0
    %4984 = vmatprep.subr.mxu0 0.0
    %4985 = vmatpush1.msra.mxu0 0.0
    %4986 = vmatprep.subr.mxu0 0.0
    %4987 = vmatpush1.msra.mxu0 0.0
    %4988 = vmatprep.subr.mxu0 0.0
    %4989 = vmatpush1.msra.mxu0 %v191
    %4990 = vmatprep.subr.mxu0 0.0
    %4991 = vmatpush1.msra.mxu0 %v190
    %4992 = vmatprep.subr.mxu0 0.0
    %4993 = vmatpush2.msra.mxu0 0.0
    %4994 = vmatprep.subr.mxu0 0.0
    %4995 = vmatpush2.msra.mxu0 0.0
    %4996 = vmatprep.subr.mxu0 0.0
    %4997 = vmatpush2.msra.mxu0 0.0
    %4998 = vmatprep.subr.mxu0 0.0
    %4999 = vmatpush2.msra.mxu0 0.0
    %5000 = vmatprep.subr.mxu0 0.0
    %5001 = vmatpush2.msra.mxu0 0.0
    %5002 = vmatprep.subr.mxu0 0.0
    %5003 = vmatpush2.msra.mxu0 0.0
    %5004 = vmatprep.subr.mxu0 0.0
    %5005 = vmatpush2.msra.mxu0 0.0
    %5006 = vmatprep.subr.mxu0 0.0
    %5007 = vmatpush2.msra.mxu0 0.0
    %5008 = vmatprep.subr.mxu0 0.0
    %5009 = vmatpush2.msra.mxu0 0.0
    %5010 = vmatprep.subr.mxu0 0.0
    %5011 = vmatpush2.msra.mxu0 0.0
    %5012 = vmatprep.subr.mxu0 0.0
    %5013 = vmatpush2.msra.mxu0 0.0
    %5014 = vmatprep.subr.mxu0 0.0
    %5015 = vmatpush2.msra.mxu0 0.0
    %5016 = vmatprep.subr.mxu0 0.0
    %5017 = vmatpush2.msra.mxu0 0.0
    %5018 = vmatprep.subr.mxu0 0.0
    %5019 = vmatpush2.msra.mxu0 0.0
    %5020 = vmatprep.subr.mxu0 0.0
    %5021 = vmatpush2.msra.mxu0 0.0
    %5022 = vmatprep.subr.mxu0 0.0
    %5023 = vmatpush2.msra.mxu0 0.0
    %5024 = vmatprep.mubr.f32.mxu0 0.0
    %5025 = vmatmul.mubr.f32.gmra.mxu0 %v4958
    %v5026 = vpop.f32.mrf.mxu0
    %v5027 = vadd.f32 0.0, %v5026
    %v5028 = vpop.f32.mrf.mxu0
    %5029 = vdwg.mxu0
    %v5031 = vsel %vm413, %v4800, 0
    %5033 = vmatprep.subr.mxu0 0.0
    %5034 = vmatpush1.msra.mxu0 0.0
    %5035 = vmatprep.subr.mxu0 0.0
    %5036 = vmatpush1.msra.mxu0 0.0
    %5037 = vmatprep.subr.mxu0 0.0
    %5038 = vmatpush1.msra.mxu0 0.0
    %5039 = vmatprep.subr.mxu0 0.0
    %5040 = vmatpush1.msra.mxu0 0.0
    %5041 = vmatprep.subr.mxu0 0.0
    %5042 = vmatpush1.msra.mxu0 0.0
    %5043 = vmatprep.subr.mxu0 0.0
    %5044 = vmatpush1.msra.mxu0 0.0
    %5045 = vmatprep.subr.mxu0 0.0
    %5046 = vmatpush1.msra.mxu0 0.0
    %5047 = vmatprep.subr.mxu0 0.0
    %5048 = vmatpush1.msra.mxu0 0.0
    %5049 = vmatprep.subr.mxu0 0.0
    %5050 = vmatpush1.msra.mxu0 0.0
    %5051 = vmatprep.subr.mxu0 0.0
    %5052 = vmatpush1.msra.mxu0 0.0
    %5053 = vmatprep.subr.mxu0 0.0
    %5054 = vmatpush1.msra.mxu0 0.0
    %5055 = vmatprep.subr.mxu0 0.0
    %5056 = vmatpush1.msra.mxu0 0.0
    %5057 = vmatprep.subr.mxu0 0.0
    %5058 = vmatpush1.msra.mxu0 0.0
    %5059 = vmatprep.subr.mxu0 0.0
    %5060 = vmatpush1.msra.mxu0 0.0
    %5061 = vmatprep.subr.mxu0 0.0
    %5062 = vmatpush1.msra.mxu0 %v189
    %5063 = vmatprep.subr.mxu0 0.0
    %5064 = vmatpush1.msra.mxu0 %v188
    %5065 = vmatprep.subr.mxu0 0.0
    %5066 = vmatpush2.msra.mxu0 0.0
    %5067 = vmatprep.subr.mxu0 0.0
    %5068 = vmatpush2.msra.mxu0 0.0
    %5069 = vmatprep.subr.mxu0 0.0
    %5070 = vmatpush2.msra.mxu0 0.0
    %5071 = vmatprep.subr.mxu0 0.0
    %5072 = vmatpush2.msra.mxu0 0.0
    %5073 = vmatprep.subr.mxu0 0.0
    %5074 = vmatpush2.msra.mxu0 0.0
    %5075 = vmatprep.subr.mxu0 0.0
    %5076 = vmatpush2.msra.mxu0 0.0
    %5077 = vmatprep.subr.mxu0 0.0
    %5078 = vmatpush2.msra.mxu0 0.0
    %5079 = vmatprep.subr.mxu0 0.0
    %5080 = vmatpush2.msra.mxu0 0.0
    %5081 = vmatprep.subr.mxu0 0.0
    %5082 = vmatpush2.msra.mxu0 0.0
    %5083 = vmatprep.subr.mxu0 0.0
    %5084 = vmatpush2.msra.mxu0 0.0
    %5085 = vmatprep.subr.mxu0 0.0
    %5086 = vmatpush2.msra.mxu0 0.0
    %5087 = vmatprep.subr.mxu0 0.0
    %5088 = vmatpush2.msra.mxu0 0.0
    %5089 = vmatprep.subr.mxu0 0.0
    %5090 = vmatpush2.msra.mxu0 0.0
    %5091 = vmatprep.subr.mxu0 0.0
    %5092 = vmatpush2.msra.mxu0 0.0
    %5093 = vmatprep.subr.mxu0 0.0
    %5094 = vmatpush2.msra.mxu0 0.0
    %5095 = vmatprep.subr.mxu0 0.0
    %5096 = vmatpush2.msra.mxu0 0.0
    %5097 = vmatprep.mubr.f32.mxu0 0.0
    %5098 = vmatmul.mubr.f32.gmra.mxu0 %v5031
    %v5099 = vpop.f32.mrf.mxu0
    %v5100 = vadd.f32 %v5027, %v5099
    %v5101 = vpop.f32.mrf.mxu0
    %5102 = vdwg.mxu0
    %v5103 = vadd.f32 %v5100, %v564
    %v5104 = vxor.u32 %v5103, 2147483648
    %v5105 = vmul.f32 %v5104, 1.442695
    %v5106 = vpow.pop %v5105
    %v5107 = vadd.f32 %v5106, 1.0
    %v5108 = vrcp.pop %v5107
    %v5109 = vmul.f32 1.0, %v5108
    %5111 = vrot.lane.b32.xlu0 %v5103, 80
    %v5112 = vpop.permute.xlu0 %5111
    %v5114 = vmul.f32 %v5109, %v5112
    %5116 = vrot.lane.b32.xlu0 %v5114, 32
    %v5117 = vpop.permute.xlu0 %5116
    %v5119 = vadd.f32 %v5103, %v5117
    %v5120 = vtanh.pop %v5119
    %v5121 = vsub.f32 1.0, %v5109
    %5123 = vrot.lane.b32.xlu0 %v5120, 112
    %v5124 = vpop.permute.xlu0 %5123
    %v5126 = vmul.f32 %v5121, %v5124
    %5127 = vrot.lane.b32.xlu0 %v4956, 16
    %v5128 = vpop.permute.xlu0 %5127
    %v5130 = vmul.f32 %v5109, %v5128
    %v5131 = vadd.f32 %v5126, %v5130
    %v5132 = vmul.f32 %v5131, 1.442695
    %v5133 = vpow.pop %v5132
    %5135 = vrot.lane.b32.xlu0 %v5133, 112
    %v5136 = vpop.permute.xlu0 %5135
    %5139 = vrot.lane.b32.xlu0 %v5131, 112
    %v5140 = vpop.permute.xlu0 %5139
    %v5142 = vsel %vm599, %v5136, %v5140
    %5144 = vrot.lane.b32.xlu0 %v4802, 24
    %v5145 = vpop.permute.xlu0 %5144
    %v5147 = vmul.f32 %v5133, %v5145
    %5149 = vrot.lane.b32.xlu0 %v5147, 120
    %v5150 = vpop.permute.xlu0 %5149
    %v5152 = vadd.f32 %v5131, %v5150
    %5154 = vrot.lane.b32.xlu0 %v5152, 112
    %v5155 = vpop.permute.xlu0 %5154
    %v5156 = vsel %vm243, %v5155, 0
    %5158 = vmatprep.subr.mxu0 0.0
    %5159 = vmatpush1.msra.mxu0 0.0
    %5160 = vmatprep.subr.mxu0 0.0
    %5161 = vmatpush1.msra.mxu0 0.0
    %5162 = vmatprep.subr.mxu0 0.0
    %5163 = vmatpush1.msra.mxu0 0.0
    %5164 = vmatprep.subr.mxu0 0.0
    %5165 = vmatpush1.msra.mxu0 0.0
    %5166 = vmatprep.subr.mxu0 0.0
    %5167 = vmatpush1.msra.mxu0 0.0
    %5168 = vmatprep.subr.mxu0 0.0
    %5169 = vmatpush1.msra.mxu0 0.0
    %5170 = vmatprep.subr.mxu0 0.0
    %5171 = vmatpush1.msra.mxu0 0.0
    %5172 = vmatprep.subr.mxu0 0.0
    %5173 = vmatpush1.msra.mxu0 0.0
    %5174 = vmatprep.subr.mxu0 0.0
    %5175 = vmatpush1.msra.mxu0 0.0
    %5176 = vmatprep.subr.mxu0 0.0
    %5177 = vmatpush1.msra.mxu0 0.0
    %5178 = vmatprep.subr.mxu0 0.0
    %5179 = vmatpush1.msra.mxu0 0.0
    %5180 = vmatprep.subr.mxu0 0.0
    %5181 = vmatpush1.msra.mxu0 0.0
    %5182 = vmatprep.subr.mxu0 0.0
    %5183 = vmatpush1.msra.mxu0 0.0
    %5184 = vmatprep.subr.mxu0 0.0
    %5185 = vmatpush1.msra.mxu0 0.0
    %5186 = vmatprep.subr.mxu0 0.0
    %5187 = vmatpush1.msra.mxu0 0.0
    %5188 = vmatprep.subr.mxu0 0.0
    %5189 = vmatpush1.msra.mxu0 %v192
    %5190 = vmatprep.subr.mxu0 0.0
    %5191 = vmatpush2.msra.mxu0 0.0
    %5192 = vmatprep.subr.mxu0 0.0
    %5193 = vmatpush2.msra.mxu0 0.0
    %5194 = vmatprep.subr.mxu0 0.0
    %5195 = vmatpush2.msra.mxu0 0.0
    %5196 = vmatprep.subr.mxu0 0.0
    %5197 = vmatpush2.msra.mxu0 0.0
    %5198 = vmatprep.subr.mxu0 0.0
    %5199 = vmatpush2.msra.mxu0 0.0
    %5200 = vmatprep.subr.mxu0 0.0
    %5201 = vmatpush2.msra.mxu0 0.0
    %5202 = vmatprep.subr.mxu0 0.0
    %5203 = vmatpush2.msra.mxu0 0.0
    %5204 = vmatprep.subr.mxu0 0.0
    %5205 = vmatpush2.msra.mxu0 0.0
    %5206 = vmatprep.subr.mxu0 0.0
    %5207 = vmatpush2.msra.mxu0 0.0
    %5208 = vmatprep.subr.mxu0 0.0
    %5209 = vmatpush2.msra.mxu0 0.0
    %5210 = vmatprep.subr.mxu0 0.0
    %5211 = vmatpush2.msra.mxu0 0.0
    %5212 = vmatprep.subr.mxu0 0.0
    %5213 = vmatpush2.msra.mxu0 0.0
    %5214 = vmatprep.subr.mxu0 0.0
    %5215 = vmatpush2.msra.mxu0 0.0
    %5216 = vmatprep.subr.mxu0 0.0
    %5217 = vmatpush2.msra.mxu0 0.0
    %5218 = vmatprep.subr.mxu0 0.0
    %5219 = vmatpush2.msra.mxu0 0.0
    %5220 = vmatprep.subr.mxu0 0.0
    %5221 = vmatpush2.msra.mxu0 0.0
    %5222 = vmatprep.mubr.f32.mxu0 0.0
    %5223 = vmatmul.mubr.f32.gmra.mxu0 %v5156
    %v5224 = vpop.f32.mrf.mxu0
    %v5225 = vadd.f32 %v623, %v5224
    %v5226 = vpop.f32.mrf.mxu0
    %5227 = vdwg.mxu0
    %v5228 = vmax.f32 %v5225, 0.0
    %v5230 = vsel %vm707, %v5228, 0
    %5232 = vmatprep.subr.mxu0 0.0
    %5233 = vmatpush1.msra.mxu0 0.0
    %5234 = vmatprep.subr.mxu0 0.0
    %5235 = vmatpush1.msra.mxu0 0.0
    %5236 = vmatprep.subr.mxu0 0.0
    %5237 = vmatpush1.msra.mxu0 0.0
    %5238 = vmatprep.subr.mxu0 0.0
    %5239 = vmatpush1.msra.mxu0 0.0
    %5240 = vmatprep.subr.mxu0 0.0
    %5241 = vmatpush1.msra.mxu0 0.0
    %5242 = vmatprep.subr.mxu0 0.0
    %5243 = vmatpush1.msra.mxu0 0.0
    %5244 = vmatprep.subr.mxu0 0.0
    %5245 = vmatpush1.msra.mxu0 0.0
    %5246 = vmatprep.subr.mxu0 0.0
    %5247 = vmatpush1.msra.mxu0 0.0
    %5248 = vmatprep.subr.mxu0 0.0
    %5249 = vmatpush1.msra.mxu0 0.0
    %5250 = vmatprep.subr.mxu0 0.0
    %5251 = vmatpush1.msra.mxu0 0.0
    %5252 = vmatprep.subr.mxu0 0.0
    %5253 = vmatpush1.msra.mxu0 0.0
    %5254 = vmatprep.subr.mxu0 0.0
    %5255 = vmatpush1.msra.mxu0 0.0
    %5256 = vmatprep.subr.mxu0 0.0
    %5257 = vmatpush1.msra.mxu0 %v196
    %5258 = vmatprep.subr.mxu0 0.0
    %5259 = vmatpush1.msra.mxu0 %v195
    %5260 = vmatprep.subr.mxu0 0.0
    %5261 = vmatpush1.msra.mxu0 %v194
    %5262 = vmatprep.subr.mxu0 0.0
    %5263 = vmatpush1.msra.mxu0 %v193
    %5264 = vmatprep.subr.mxu0 0.0
    %5265 = vmatpush2.msra.mxu0 0.0
    %5266 = vmatprep.subr.mxu0 0.0
    %5267 = vmatpush2.msra.mxu0 0.0
    %5268 = vmatprep.subr.mxu0 0.0
    %5269 = vmatpush2.msra.mxu0 0.0
    %5270 = vmatprep.subr.mxu0 0.0
    %5271 = vmatpush2.msra.mxu0 0.0
    %5272 = vmatprep.subr.mxu0 0.0
    %5273 = vmatpush2.msra.mxu0 0.0
    %5274 = vmatprep.subr.mxu0 0.0
    %5275 = vmatpush2.msra.mxu0 0.0
    %5276 = vmatprep.subr.mxu0 0.0
    %5277 = vmatpush2.msra.mxu0 0.0
    %5278 = vmatprep.subr.mxu0 0.0
    %5279 = vmatpush2.msra.mxu0 0.0
    %5280 = vmatprep.subr.mxu0 0.0
    %5281 = vmatpush2.msra.mxu0 0.0
    %5282 = vmatprep.subr.mxu0 0.0
    %5283 = vmatpush2.msra.mxu0 0.0
    %5284 = vmatprep.subr.mxu0 0.0
    %5285 = vmatpush2.msra.mxu0 0.0
    %5286 = vmatprep.subr.mxu0 0.0
    %5287 = vmatpush2.msra.mxu0 0.0
    %5288 = vmatprep.subr.mxu0 0.0
    %5289 = vmatpush2.msra.mxu0 0.0
    %5290 = vmatprep.subr.mxu0 0.0
    %5291 = vmatpush2.msra.mxu0 0.0
    %5292 = vmatprep.subr.mxu0 0.0
    %5293 = vmatpush2.msra.mxu0 0.0
    %5294 = vmatprep.subr.mxu0 0.0
    %5295 = vmatpush2.msra.mxu0 0.0
    %5296 = vmatprep.mubr.f32.mxu0 0.0
    %5297 = vmatmul.mubr.f32.gmra.mxu0 %v5230
    %v5298 = vpop.f32.mrf.mxu0
    %v5299 = vadd.f32 %v705, %v5298
    %v5300 = vpop.f32.mrf.mxu0
    %5301 = vdwg.mxu0
    %v5303 = vsel %vm707, %v5299, 0
    %5305 = vmatprep.subr.mxu0 0.0
    %5306 = vmatpush1.msra.mxu0 0.0
    %5307 = vmatprep.subr.mxu0 0.0
    %5308 = vmatpush1.msra.mxu0 0.0
    %5309 = vmatprep.subr.mxu0 0.0
    %5310 = vmatpush1.msra.mxu0 0.0
    %5311 = vmatprep.subr.mxu0 0.0
    %5312 = vmatpush1.msra.mxu0 0.0
    %5313 = vmatprep.subr.mxu0 0.0
    %5314 = vmatpush1.msra.mxu0 0.0
    %5315 = vmatprep.subr.mxu0 0.0
    %5316 = vmatpush1.msra.mxu0 0.0
    %5317 = vmatprep.subr.mxu0 0.0
    %5318 = vmatpush1.msra.mxu0 0.0
    %5319 = vmatprep.subr.mxu0 0.0
    %5320 = vmatpush1.msra.mxu0 0.0
    %5321 = vmatprep.subr.mxu0 0.0
    %5322 = vmatpush1.msra.mxu0 0.0
    %5323 = vmatprep.subr.mxu0 0.0
    %5324 = vmatpush1.msra.mxu0 0.0
    %5325 = vmatprep.subr.mxu0 0.0
    %5326 = vmatpush1.msra.mxu0 0.0
    %5327 = vmatprep.subr.mxu0 0.0
    %5328 = vmatpush1.msra.mxu0 0.0
    %5329 = vmatprep.subr.mxu0 %v204
    %5330 = vmatpush1.msra.mxu0 %v203
    %5331 = vmatprep.subr.mxu0 %v202
    %5332 = vmatpush1.msra.mxu0 %v201
    %5333 = vmatprep.subr.mxu0 %v200
    %5334 = vmatpush1.msra.mxu0 %v199
    %5335 = vmatprep.subr.mxu0 %v198
    %5336 = vmatpush1.msra.mxu0 %v197
    %5337 = vmatprep.subr.mxu0 0.0
    %5338 = vmatpush2.msra.mxu0 0.0
    %5339 = vmatprep.subr.mxu0 0.0
    %5340 = vmatpush2.msra.mxu0 0.0
    %5341 = vmatprep.subr.mxu0 0.0
    %5342 = vmatpush2.msra.mxu0 0.0
    %5343 = vmatprep.subr.mxu0 0.0
    %5344 = vmatpush2.msra.mxu0 0.0
    %5345 = vmatprep.subr.mxu0 0.0
    %5346 = vmatpush2.msra.mxu0 0.0
    %5347 = vmatprep.subr.mxu0 0.0
    %5348 = vmatpush2.msra.mxu0 0.0
    %5349 = vmatprep.subr.mxu0 0.0
    %5350 = vmatpush2.msra.mxu0 0.0
    %5351 = vmatprep.subr.mxu0 0.0
    %5352 = vmatpush2.msra.mxu0 0.0
    %5353 = vmatprep.subr.mxu0 0.0
    %5354 = vmatpush2.msra.mxu0 0.0
    %5355 = vmatprep.subr.mxu0 0.0
    %5356 = vmatpush2.msra.mxu0 0.0
    %5357 = vmatprep.subr.mxu0 0.0
    %5358 = vmatpush2.msra.mxu0 0.0
    %5359 = vmatprep.subr.mxu0 0.0
    %5360 = vmatpush2.msra.mxu0 0.0
    %5361 = vmatprep.subr.mxu0 0.0
    %5362 = vmatpush2.msra.mxu0 0.0
    %5363 = vmatprep.subr.mxu0 0.0
    %5364 = vmatpush2.msra.mxu0 0.0
    %5365 = vmatprep.subr.mxu0 0.0
    %5366 = vmatpush2.msra.mxu0 0.0
    %5367 = vmatprep.subr.mxu0 0.0
    %5368 = vmatpush2.msra.mxu0 0.0
    %5369 = vmatprep.mubr.f32.mxu0 0.0
    %5370 = vmatmul.mubr.f32.gmra.mxu0 %v5303
    %v5371 = vpop.f32.mrf.mxu0
    %v5372 = vadd.f32 %v785, %v5371
    %v5373 = vpop.f32.mrf.mxu0
    %v5374 = vadd.f32 %v789, %v5373
    %5375 = vdwg.mxu0
    %5376 = vmatprep.subr.mxu0 0.0
    %5377 = vmatpush1.msra.mxu0 0.0
    %5378 = vmatprep.subr.mxu0 0.0
    %5379 = vmatpush1.msra.mxu0 0.0
    %5380 = vmatprep.subr.mxu0 0.0
    %5381 = vmatpush1.msra.mxu0 0.0
    %5382 = vmatprep.subr.mxu0 0.0
    %5383 = vmatpush1.msra.mxu0 0.0
    %5384 = vmatprep.subr.mxu0 0.0
    %5385 = vmatpush1.msra.mxu0 0.0
    %5386 = vmatprep.subr.mxu0 0.0
    %5387 = vmatpush1.msra.mxu0 0.0
    %5388 = vmatprep.subr.mxu0 0.0
    %5389 = vmatpush1.msra.mxu0 0.0
    %5390 = vmatprep.subr.mxu0 0.0
    %5391 = vmatpush1.msra.mxu0 0.0
    %5392 = vmatprep.subr.mxu0 0.0
    %5393 = vmatpush1.msra.mxu0 0.0
    %5394 = vmatprep.subr.mxu0 0.0
    %5395 = vmatpush1.msra.mxu0 0.0
    %5396 = vmatprep.subr.mxu0 0.0
    %5397 = vmatpush1.msra.mxu0 0.0
    %5398 = vmatprep.subr.mxu0 0.0
    %5399 = vmatpush1.msra.mxu0 0.0
    %5400 = vmatprep.subr.mxu0 0.0
    %5401 = vmatpush1.msra.mxu0 %v212
    %5402 = vmatprep.subr.mxu0 0.0
    %5403 = vmatpush1.msra.mxu0 %v211
    %5404 = vmatprep.subr.mxu0 0.0
    %5405 = vmatpush1.msra.mxu0 %v210
    %5406 = vmatprep.subr.mxu0 0.0
    %5407 = vmatpush1.msra.mxu0 %v209
    %5408 = vmatprep.subr.mxu0 0.0
    %5409 = vmatpush2.msra.mxu0 0.0
    %5410 = vmatprep.subr.mxu0 0.0
    %5411 = vmatpush2.msra.mxu0 0.0
    %5412 = vmatprep.subr.mxu0 0.0
    %5413 = vmatpush2.msra.mxu0 0.0
    %5414 = vmatprep.subr.mxu0 0.0
    %5415 = vmatpush2.msra.mxu0 0.0
    %5416 = vmatprep.subr.mxu0 0.0
    %5417 = vmatpush2.msra.mxu0 0.0
    %5418 = vmatprep.subr.mxu0 0.0
    %5419 = vmatpush2.msra.mxu0 0.0
    %5420 = vmatprep.subr.mxu0 0.0
    %5421 = vmatpush2.msra.mxu0 0.0
    %5422 = vmatprep.subr.mxu0 0.0
    %5423 = vmatpush2.msra.mxu0 0.0
    %5424 = vmatprep.subr.mxu0 0.0
    %5425 = vmatpush2.msra.mxu0 0.0
    %5426 = vmatprep.subr.mxu0 0.0
    %5427 = vmatpush2.msra.mxu0 0.0
    %5428 = vmatprep.subr.mxu0 0.0
    %5429 = vmatpush2.msra.mxu0 0.0
    %5430 = vmatprep.subr.mxu0 0.0
    %5431 = vmatpush2.msra.mxu0 0.0
    %5432 = vmatprep.subr.mxu0 0.0
    %5433 = vmatpush2.msra.mxu0 0.0
    %5434 = vmatprep.subr.mxu0 0.0
    %5435 = vmatpush2.msra.mxu0 0.0
    %5436 = vmatprep.subr.mxu0 0.0
    %5437 = vmatpush2.msra.mxu0 0.0
    %5438 = vmatprep.subr.mxu0 0.0
    %5439 = vmatpush2.msra.mxu0 0.0
    %5440 = vmatprep.mubr.f32.mxu0 0.0
    %5441 = vmatmul.mubr.f32.gmra.mxu0 %v4649
    %v5442 = vpop.f32.mrf.mxu0
    %v5443 = vadd.f32 0.0, %v5442
    %v5444 = vpop.f32.mrf.mxu0
    %5445 = vdwg.mxu0
    %5446 = vrot.lane.b32.xlu0 %v4800, 112
    %v5447 = vpop.permute.xlu0 %5446
    %v5448 = vsel %vm707, %v5447, 0
    %5450 = vmatprep.subr.mxu0 0.0
    %5451 = vmatpush1.msra.mxu0 0.0
    %5452 = vmatprep.subr.mxu0 0.0
    %5453 = vmatpush1.msra.mxu0 0.0
    %5454 = vmatprep.subr.mxu0 0.0
    %5455 = vmatpush1.msra.mxu0 0.0
    %5456 = vmatprep.subr.mxu0 0.0
    %5457 = vmatpush1.msra.mxu0 0.0
    %5458 = vmatprep.subr.mxu0 0.0
    %5459 = vmatpush1.msra.mxu0 0.0
    %5460 = vmatprep.subr.mxu0 0.0
    %5461 = vmatpush1.msra.mxu0 0.0
    %5462 = vmatprep.subr.mxu0 0.0
    %5463 = vmatpush1.msra.mxu0 0.0
    %5464 = vmatprep.subr.mxu0 0.0
    %5465 = vmatpush1.msra.mxu0 0.0
    %5466 = vmatprep.subr.mxu0 0.0
    %5467 = vmatpush1.msra.mxu0 0.0
    %5468 = vmatprep.subr.mxu0 0.0
    %5469 = vmatpush1.msra.mxu0 0.0
    %5470 = vmatprep.subr.mxu0 0.0
    %5471 = vmatpush1.msra.mxu0 0.0
    %5472 = vmatprep.subr.mxu0 0.0
    %5473 = vmatpush1.msra.mxu0 0.0
    %5474 = vmatprep.subr.mxu0 0.0
    %5475 = vmatpush1.msra.mxu0 %v208
    %5476 = vmatprep.subr.mxu0 0.0
    %5477 = vmatpush1.msra.mxu0 %v207
    %5478 = vmatprep.subr.mxu0 0.0
    %5479 = vmatpush1.msra.mxu0 %v206
    %5480 = vmatprep.subr.mxu0 0.0
    %5481 = vmatpush1.msra.mxu0 %v205
    %5482 = vmatprep.subr.mxu0 0.0
    %5483 = vmatpush2.msra.mxu0 0.0
    %5484 = vmatprep.subr.mxu0 0.0
    %5485 = vmatpush2.msra.mxu0 0.0
    %5486 = vmatprep.subr.mxu0 0.0
    %5487 = vmatpush2.msra.mxu0 0.0
    %5488 = vmatprep.subr.mxu0 0.0
    %5489 = vmatpush2.msra.mxu0 0.0
    %5490 = vmatprep.subr.mxu0 0.0
    %5491 = vmatpush2.msra.mxu0 0.0
    %5492 = vmatprep.subr.mxu0 0.0
    %5493 = vmatpush2.msra.mxu0 0.0
    %5494 = vmatprep.subr.mxu0 0.0
    %5495 = vmatpush2.msra.mxu0 0.0
    %5496 = vmatprep.subr.mxu0 0.0
    %5497 = vmatpush2.msra.mxu0 0.0
    %5498 = vmatprep.subr.mxu0 0.0
    %5499 = vmatpush2.msra.mxu0 0.0
    %5500 = vmatprep.subr.mxu0 0.0
    %5501 = vmatpush2.msra.mxu0 0.0
    %5502 = vmatprep.subr.mxu0 0.0
    %5503 = vmatpush2.msra.mxu0 0.0
    %5504 = vmatprep.subr.mxu0 0.0
    %5505 = vmatpush2.msra.mxu0 0.0
    %5506 = vmatprep.subr.mxu0 0.0
    %5507 = vmatpush2.msra.mxu0 0.0
    %5508 = vmatprep.subr.mxu0 0.0
    %5509 = vmatpush2.msra.mxu0 0.0
    %5510 = vmatprep.subr.mxu0 0.0
    %5511 = vmatpush2.msra.mxu0 0.0
    %5512 = vmatprep.subr.mxu0 0.0
    %5513 = vmatpush2.msra.mxu0 0.0
    %5514 = vmatprep.mubr.f32.mxu0 0.0
    %5515 = vmatmul.mubr.f32.gmra.mxu0 %v5448
    %v5516 = vpop.f32.mrf.mxu0
    %v5517 = vadd.f32 %v5443, %v5516
    %v5518 = vpop.f32.mrf.mxu0
    %5519 = vdwg.mxu0
    %v5520 = vadd.f32 %v5517, %v1017
    %v5521 = vxor.u32 %v5520, 2147483648
    %v5522 = vmul.f32 %v5521, 1.442695
    %v5523 = vpow.pop %v5522
    %v5524 = vadd.f32 %v5523, 1.0
    %v5525 = vrcp.pop %v5524
    %v5526 = vmul.f32 1.0, %v5525
    %5528 = vrot.lane.b32.xlu0 %v5520, 32
    %v5529 = vpop.permute.xlu0 %5528
    %v5531 = vmul.f32 %v5526, %v5529
    %5533 = vrot.lane.b32.xlu0 %v5531, 64
    %v5534 = vpop.permute.xlu0 %5533
    %v5536 = vadd.f32 %v5520, %v5534
    %v5537 = vtanh.pop %v5536
    %v5538 = vsub.f32 1.0, %v5526
    %5540 = vrot.lane.b32.xlu0 %v5537, 96
    %v5541 = vpop.permute.xlu0 %5540
    %v5543 = vmul.f32 %v5538, %v5541
    %v5544 = vmul.f32 %v5526, %v4645
    %v5545 = vadd.f32 %v5543, %v5544
    %5547 = vrot.lane.b32.xlu0 %v5545, 96
    %v5548 = vpop.permute.xlu0 %5547
    %v5549 = vsel %vm707, %v5548, 0
    %5551 = vmatprep.subr.mxu0 0.0
    %5552 = vmatpush1.msra.mxu0 0.0
    %5553 = vmatprep.subr.mxu0 0.0
    %5554 = vmatpush1.msra.mxu0 0.0
    %5555 = vmatprep.subr.mxu0 0.0
    %5556 = vmatpush1.msra.mxu0 0.0
    %5557 = vmatprep.subr.mxu0 0.0
    %5558 = vmatpush1.msra.mxu0 0.0
    %5559 = vmatprep.subr.mxu0 0.0
    %5560 = vmatpush1.msra.mxu0 0.0
    %5561 = vmatprep.subr.mxu0 0.0
    %5562 = vmatpush1.msra.mxu0 0.0
    %5563 = vmatprep.subr.mxu0 0.0
    %5564 = vmatpush1.msra.mxu0 0.0
    %5565 = vmatprep.subr.mxu0 0.0
    %5566 = vmatpush1.msra.mxu0 0.0
    %5567 = vmatprep.subr.mxu0 0.0
    %5568 = vmatpush1.msra.mxu0 0.0
    %5569 = vmatprep.subr.mxu0 0.0
    %5570 = vmatpush1.msra.mxu0 0.0
    %5571 = vmatprep.subr.mxu0 0.0
    %5572 = vmatpush1.msra.mxu0 0.0
    %5573 = vmatprep.subr.mxu0 0.0
    %5574 = vmatpush1.msra.mxu0 0.0
    %5575 = vmatprep.subr.mxu0 0.0
    %5576 = vmatpush1.msra.mxu0 %v216
    %5577 = vmatprep.subr.mxu0 0.0
    %5578 = vmatpush1.msra.mxu0 %v215
    %5579 = vmatprep.subr.mxu0 0.0
    %5580 = vmatpush1.msra.mxu0 %v214
    %5581 = vmatprep.subr.mxu0 0.0
    %5582 = vmatpush1.msra.mxu0 %v213
    %5583 = vmatprep.subr.mxu0 0.0
    %5584 = vmatpush2.msra.mxu0 0.0
    %5585 = vmatprep.subr.mxu0 0.0
    %5586 = vmatpush2.msra.mxu0 0.0
    %5587 = vmatprep.subr.mxu0 0.0
    %5588 = vmatpush2.msra.mxu0 0.0
    %5589 = vmatprep.subr.mxu0 0.0
    %5590 = vmatpush2.msra.mxu0 0.0
    %5591 = vmatprep.subr.mxu0 0.0
    %5592 = vmatpush2.msra.mxu0 0.0
    %5593 = vmatprep.subr.mxu0 0.0
    %5594 = vmatpush2.msra.mxu0 0.0
    %5595 = vmatprep.subr.mxu0 0.0
    %5596 = vmatpush2.msra.mxu0 0.0
    %5597 = vmatprep.subr.mxu0 0.0
    %5598 = vmatpush2.msra.mxu0 0.0
    %5599 = vmatprep.subr.mxu0 0.0
    %5600 = vmatpush2.msra.mxu0 0.0
    %5601 = vmatprep.subr.mxu0 0.0
    %5602 = vmatpush2.msra.mxu0 0.0
    %5603 = vmatprep.subr.mxu0 0.0
    %5604 = vmatpush2.msra.mxu0 0.0
    %5605 = vmatprep.subr.mxu0 0.0
    %5606 = vmatpush2.msra.mxu0 0.0
    %5607 = vmatprep.subr.mxu0 0.0
    %5608 = vmatpush2.msra.mxu0 0.0
    %5609 = vmatprep.subr.mxu0 0.0
    %5610 = vmatpush2.msra.mxu0 0.0
    %5611 = vmatprep.subr.mxu0 0.0
    %5612 = vmatpush2.msra.mxu0 0.0
    %5613 = vmatprep.subr.mxu0 0.0
    %5614 = vmatpush2.msra.mxu0 0.0
    %5615 = vmatprep.mubr.f32.mxu0 0.0
    %5616 = vmatmul.mubr.f32.gmra.mxu0 %v5549
    %v5617 = vpop.f32.mrf.mxu0
    %v5618 = vadd.f32 0.0, %v5617
    %v5619 = vpop.f32.mrf.mxu0
    %5620 = vdwg.mxu0
    %v5621 = vmul.f32 %v5372, %v5618
    %5622 = vmatprep.subr.mxu0 0.0
    %5623 = vmatpush1.msra.mxu0 %v232
    %5624 = vmatprep.subr.mxu0 0.0
    %5625 = vmatpush1.msra.mxu0 %v231
    %5626 = vmatprep.subr.mxu0 0.0
    %5627 = vmatpush1.msra.mxu0 %v230
    %5628 = vmatprep.subr.mxu0 0.0
    %5629 = vmatpush1.msra.mxu0 %v229
    %5630 = vmatprep.subr.mxu0 0.0
    %5631 = vmatpush1.msra.mxu0 %v228
    %5632 = vmatprep.subr.mxu0 0.0
    %5633 = vmatpush1.msra.mxu0 %v227
    %5634 = vmatprep.subr.mxu0 0.0
    %5635 = vmatpush1.msra.mxu0 %v226
    %5636 = vmatprep.subr.mxu0 0.0
    %5637 = vmatpush1.msra.mxu0 %v225
    %5638 = vmatprep.subr.mxu0 0.0
    %5639 = vmatpush1.msra.mxu0 %v224
    %5640 = vmatprep.subr.mxu0 0.0
    %5641 = vmatpush1.msra.mxu0 %v223
    %5642 = vmatprep.subr.mxu0 0.0
    %5643 = vmatpush1.msra.mxu0 %v222
    %5644 = vmatprep.subr.mxu0 0.0
    %5645 = vmatpush1.msra.mxu0 %v221
    %5646 = vmatprep.subr.mxu0 0.0
    %5647 = vmatpush1.msra.mxu0 %v220
    %5648 = vmatprep.subr.mxu0 0.0
    %5649 = vmatpush1.msra.mxu0 %v219
    %5650 = vmatprep.subr.mxu0 0.0
    %5651 = vmatpush1.msra.mxu0 %v218
    %5652 = vmatprep.subr.mxu0 0.0
    %5653 = vmatpush1.msra.mxu0 %v217
    %5654 = vmatprep.subr.mxu0 0.0
    %5655 = vmatpush2.msra.mxu0 0.0
    %5656 = vmatprep.subr.mxu0 0.0
    %5657 = vmatpush2.msra.mxu0 0.0
    %5658 = vmatprep.subr.mxu0 0.0
    %5659 = vmatpush2.msra.mxu0 0.0
    %5660 = vmatprep.subr.mxu0 0.0
    %5661 = vmatpush2.msra.mxu0 0.0
    %5662 = vmatprep.subr.mxu0 0.0
    %5663 = vmatpush2.msra.mxu0 0.0
    %5664 = vmatprep.subr.mxu0 0.0
    %5665 = vmatpush2.msra.mxu0 0.0
    %5666 = vmatprep.subr.mxu0 0.0
    %5667 = vmatpush2.msra.mxu0 0.0
    %5668 = vmatprep.subr.mxu0 0.0
    %5669 = vmatpush2.msra.mxu0 0.0
    %5670 = vmatprep.subr.mxu0 0.0
    %5671 = vmatpush2.msra.mxu0 0.0
    %5672 = vmatprep.subr.mxu0 0.0
    %5673 = vmatpush2.msra.mxu0 0.0
    %5674 = vmatprep.subr.mxu0 0.0
    %5675 = vmatpush2.msra.mxu0 0.0
    %5676 = vmatprep.subr.mxu0 0.0
    %5677 = vmatpush2.msra.mxu0 0.0
    %5678 = vmatprep.subr.mxu0 0.0
    %5679 = vmatpush2.msra.mxu0 0.0
    %5680 = vmatprep.subr.mxu0 0.0
    %5681 = vmatpush2.msra.mxu0 0.0
    %5682 = vmatprep.subr.mxu0 0.0
    %5683 = vmatpush2.msra.mxu0 0.0
    %5684 = vmatprep.subr.mxu0 0.0
    %5685 = vmatpush2.msra.mxu0 0.0
    %5686 = vmatprep.mubr.f32.mxu0 0.0
    %5687 = vmatmul.mubr.f32.gmra.mxu0 %v5621
    %v5688 = vpop.f32.mrf.mxu0
    %v5689 = vadd.f32 %v5374, %v5688
    %v5690 = vpop.f32.mrf.mxu0
    %5691 = vdwg.mxu0
    %s5692 = scalar_lea.vmem %s20, 40
    %5693 = vst.msk [vmem:[%s5692] sm:$0xff] %vm1194, %v5689
    %s5695 = scalar_lea.vmem [#allocation17], 40
    %5696 = vst.msk [vmem:[%s5695] sm:$0xff] %vm707, %v5548
    %s5697 = scalar_lea.vmem [#allocation18], 40
    %5698 = vst.msk [vmem:[%s5697] sm:$0xff] %vm413, %v5142
    %s5699 = scalar_lea.vmem %s0, 48
    %v5700 = vld [vmem:[%s5699] sm:$0xff]
    %s5701 = scalar_lea.vmem %s1, 48
    %v5702 = vld [vmem:[%s5701] sm:$0xff]
    %5703 = vmatprep.subr.mxu0 0.0
    %5704 = vmatpush1.msra.mxu0 0.0
    %5705 = vmatprep.subr.mxu0 0.0
    %5706 = vmatpush1.msra.mxu0 0.0
    %5707 = vmatprep.subr.mxu0 0.0
    %5708 = vmatpush1.msra.mxu0 0.0
    %5709 = vmatprep.subr.mxu0 0.0
    %5710 = vmatpush1.msra.mxu0 0.0
    %5711 = vmatprep.subr.mxu0 0.0
    %5712 = vmatpush1.msra.mxu0 0.0
    %5713 = vmatprep.subr.mxu0 0.0
    %5714 = vmatpush1.msra.mxu0 0.0
    %5715 = vmatprep.subr.mxu0 0.0
    %5716 = vmatpush1.msra.mxu0 0.0
    %5717 = vmatprep.subr.mxu0 0.0
    %5718 = vmatpush1.msra.mxu0 0.0
    %5719 = vmatprep.subr.mxu0 0.0
    %5720 = vmatpush1.msra.mxu0 0.0
    %5721 = vmatprep.subr.mxu0 0.0
    %5722 = vmatpush1.msra.mxu0 0.0
    %5723 = vmatprep.subr.mxu0 0.0
    %5724 = vmatpush1.msra.mxu0 0.0
    %5725 = vmatprep.subr.mxu0 0.0
    %5726 = vmatpush1.msra.mxu0 0.0
    %5727 = vmatprep.subr.mxu0 0.0
    %5728 = vmatpush1.msra.mxu0 0.0
    %5729 = vmatprep.subr.mxu0 0.0
    %5730 = vmatpush1.msra.mxu0 0.0
    %5731 = vmatprep.subr.mxu0 0.0
    %5732 = vmatpush1.msra.mxu0 0.0
    %5733 = vmatprep.subr.mxu0 0.0
    %5734 = vmatpush1.msra.mxu0 %v5142
    %5735 = vmatprep.subr.mxu0 0.0
    %5736 = vmatpush2.msra.mxu0 0.0
    %5737 = vmatprep.subr.mxu0 0.0
    %5738 = vmatpush2.msra.mxu0 0.0
    %5739 = vmatprep.subr.mxu0 0.0
    %5740 = vmatpush2.msra.mxu0 0.0
    %5741 = vmatprep.subr.mxu0 0.0
    %5742 = vmatpush2.msra.mxu0 0.0
    %5743 = vmatprep.subr.mxu0 0.0
    %5744 = vmatpush2.msra.mxu0 0.0
    %5745 = vmatprep.subr.mxu0 0.0
    %5746 = vmatpush2.msra.mxu0 0.0
    %5747 = vmatprep.subr.mxu0 0.0
    %5748 = vmatpush2.msra.mxu0 0.0
    %5749 = vmatprep.subr.mxu0 0.0
    %5750 = vmatpush2.msra.mxu0 0.0
    %5751 = vmatprep.subr.mxu0 0.0
    %5752 = vmatpush2.msra.mxu0 0.0
    %5753 = vmatprep.subr.mxu0 0.0
    %5754 = vmatpush2.msra.mxu0 0.0
    %5755 = vmatprep.subr.mxu0 0.0
    %5756 = vmatpush2.msra.mxu0 0.0
    %5757 = vmatprep.subr.mxu0 0.0
    %5758 = vmatpush2.msra.mxu0 0.0
    %5759 = vmatprep.subr.mxu0 0.0
    %5760 = vmatpush2.msra.mxu0 0.0
    %5761 = vmatprep.subr.mxu0 0.0
    %5762 = vmatpush2.msra.mxu0 0.0
    %5763 = vmatprep.subr.mxu0 0.0
    %5764 = vmatpush2.msra.mxu0 0.0
    %5765 = vmatprep.subr.mxu0 0.0
    %5766 = vmatpush2.msra.mxu0 0.0
    %5767 = vmatprep.mubr.f32.mxu0 0.0
    %5768 = vmatmul.mubr.f32.gmra.mxu0 %v245
    %v5769 = vpop.f32.mrf.mxu0
    %v5770 = vadd.f32 0.0, %v5769
    %v5771 = vpop.f32.mrf.mxu0
    %5772 = vdwg.mxu0
    %v5773 = vlaneseq
    %v5774 = vshrl.u32 %v5773, 7
    %v5775 = vsub.s32 0, %v5774
    %v5776 = vrot.slane %v5770, %v5775
    %v5777 = vsub.f32 %v5142, %v5776
    %v5778 = vmul.f32 %v5777, %v5777
    %5779 = vmatprep.subr.mxu0 0.0
    %5780 = vmatpush1.msra.mxu0 0.0
    %5781 = vmatprep.subr.mxu0 0.0
    %5782 = vmatpush1.msra.mxu0 0.0
    %5783 = vmatprep.subr.mxu0 0.0
    %5784 = vmatpush1.msra.mxu0 0.0
    %5785 = vmatprep.subr.mxu0 0.0
    %5786 = vmatpush1.msra.mxu0 0.0
    %5787 = vmatprep.subr.mxu0 0.0
    %5788 = vmatpush1.msra.mxu0 0.0
    %5789 = vmatprep.subr.mxu0 0.0
    %5790 = vmatpush1.msra.mxu0 0.0
    %5791 = vmatprep.subr.mxu0 0.0
    %5792 = vmatpush1.msra.mxu0 0.0
    %5793 = vmatprep.subr.mxu0 0.0
    %5794 = vmatpush1.msra.mxu0 0.0
    %5795 = vmatprep.subr.mxu0 0.0
    %5796 = vmatpush1.msra.mxu0 0.0
    %5797 = vmatprep.subr.mxu0 0.0
    %5798 = vmatpush1.msra.mxu0 0.0
    %5799 = vmatprep.subr.mxu0 0.0
    %5800 = vmatpush1.msra.mxu0 0.0
    %5801 = vmatprep.subr.mxu0 0.0
    %5802 = vmatpush1.msra.mxu0 0.0
    %5803 = vmatprep.subr.mxu0 0.0
    %5804 = vmatpush1.msra.mxu0 0.0
    %5805 = vmatprep.subr.mxu0 0.0
    %5806 = vmatpush1.msra.mxu0 0.0
    %5807 = vmatprep.subr.mxu0 0.0
    %5808 = vmatpush1.msra.mxu0 0.0
    %5809 = vmatprep.subr.mxu0 0.0
    %5810 = vmatpush1.msra.mxu0 %v5778
    %5811 = vmatprep.subr.mxu0 0.0
    %5812 = vmatpush2.msra.mxu0 0.0
    %5813 = vmatprep.subr.mxu0 0.0
    %5814 = vmatpush2.msra.mxu0 0.0
    %5815 = vmatprep.subr.mxu0 0.0
    %5816 = vmatpush2.msra.mxu0 0.0
    %5817 = vmatprep.subr.mxu0 0.0
    %5818 = vmatpush2.msra.mxu0 0.0
    %5819 = vmatprep.subr.mxu0 0.0
    %5820 = vmatpush2.msra.mxu0 0.0
    %5821 = vmatprep.subr.mxu0 0.0
    %5822 = vmatpush2.msra.mxu0 0.0
    %5823 = vmatprep.subr.mxu0 0.0
    %5824 = vmatpush2.msra.mxu0 0.0
    %5825 = vmatprep.subr.mxu0 0.0
    %5826 = vmatpush2.msra.mxu0 0.0
    %5827 = vmatprep.subr.mxu0 0.0
    %5828 = vmatpush2.msra.mxu0 0.0
    %5829 = vmatprep.subr.mxu0 0.0
    %5830 = vmatpush2.msra.mxu0 0.0
    %5831 = vmatprep.subr.mxu0 0.0
    %5832 = vmatpush2.msra.mxu0 0.0
    %5833 = vmatprep.subr.mxu0 0.0
    %5834 = vmatpush2.msra.mxu0 0.0
    %5835 = vmatprep.subr.mxu0 0.0
    %5836 = vmatpush2.msra.mxu0 0.0
    %5837 = vmatprep.subr.mxu0 0.0
    %5838 = vmatpush2.msra.mxu0 0.0
    %5839 = vmatprep.subr.mxu0 0.0
    %5840 = vmatpush2.msra.mxu0 0.0
    %5841 = vmatprep.subr.mxu0 0.0
    %5842 = vmatpush2.msra.mxu0 0.0
    %5843 = vmatprep.mubr.f32.mxu0 0.0
    %5844 = vmatmul.mubr.f32.gmra.mxu0 %v245
    %v5845 = vpop.f32.mrf.mxu0
    %v5846 = vadd.f32 1e-05, %v5845
    %v5847 = vpop.f32.mrf.mxu0
    %5848 = vdwg.mxu0
    %v5849 = vrsqrt.pop %v5846
    %v5850 = vlaneseq
    %v5851 = vshrl.u32 %v5850, 7
    %v5852 = vsub.s32 0, %v5851
    %v5853 = vrot.slane %v5849, %v5852
    %v5854 = vmul.f32 %v5777, %v5853
    %v5855 = vmul.f32 %v5854, %v403
    %v5856 = vadd.f32 %v5855, %v410
    %v5858 = vsel %vm413, %v5856, 0
    %5860 = vmatprep.subr.mxu0 0.0
    %5861 = vmatpush1.msra.mxu0 0.0
    %5862 = vmatprep.subr.mxu0 0.0
    %5863 = vmatpush1.msra.mxu0 0.0
    %5864 = vmatprep.subr.mxu0 0.0
    %5865 = vmatpush1.msra.mxu0 0.0
    %5866 = vmatprep.subr.mxu0 0.0
    %5867 = vmatpush1.msra.mxu0 0.0
    %5868 = vmatprep.subr.mxu0 0.0
    %5869 = vmatpush1.msra.mxu0 0.0
    %5870 = vmatprep.subr.mxu0 0.0
    %5871 = vmatpush1.msra.mxu0 0.0
    %5872 = vmatprep.subr.mxu0 0.0
    %5873 = vmatpush1.msra.mxu0 0.0
    %5874 = vmatprep.subr.mxu0 0.0
    %5875 = vmatpush1.msra.mxu0 0.0
    %5876 = vmatprep.subr.mxu0 0.0
    %5877 = vmatpush1.msra.mxu0 0.0
    %5878 = vmatprep.subr.mxu0 0.0
    %5879 = vmatpush1.msra.mxu0 0.0
    %5880 = vmatprep.subr.mxu0 0.0
    %5881 = vmatpush1.msra.mxu0 0.0
    %5882 = vmatprep.subr.mxu0 0.0
    %5883 = vmatpush1.msra.mxu0 0.0
    %5884 = vmatprep.subr.mxu0 0.0
    %5885 = vmatpush1.msra.mxu0 0.0
    %5886 = vmatprep.subr.mxu0 0.0
    %5887 = vmatpush1.msra.mxu0 0.0
    %5888 = vmatprep.subr.mxu0 0.0
    %5889 = vmatpush1.msra.mxu0 %v191
    %5890 = vmatprep.subr.mxu0 0.0
    %5891 = vmatpush1.msra.mxu0 %v190
    %5892 = vmatprep.subr.mxu0 0.0
    %5893 = vmatpush2.msra.mxu0 0.0
    %5894 = vmatprep.subr.mxu0 0.0
    %5895 = vmatpush2.msra.mxu0 0.0
    %5896 = vmatprep.subr.mxu0 0.0
    %5897 = vmatpush2.msra.mxu0 0.0
    %5898 = vmatprep.subr.mxu0 0.0
    %5899 = vmatpush2.msra.mxu0 0.0
    %5900 = vmatprep.subr.mxu0 0.0
    %5901 = vmatpush2.msra.mxu0 0.0
    %5902 = vmatprep.subr.mxu0 0.0
    %5903 = vmatpush2.msra.mxu0 0.0
    %5904 = vmatprep.subr.mxu0 0.0
    %5905 = vmatpush2.msra.mxu0 0.0
    %5906 = vmatprep.subr.mxu0 0.0
    %5907 = vmatpush2.msra.mxu0 0.0
    %5908 = vmatprep.subr.mxu0 0.0
    %5909 = vmatpush2.msra.mxu0 0.0
    %5910 = vmatprep.subr.mxu0 0.0
    %5911 = vmatpush2.msra.mxu0 0.0
    %5912 = vmatprep.subr.mxu0 0.0
    %5913 = vmatpush2.msra.mxu0 0.0
    %5914 = vmatprep.subr.mxu0 0.0
    %5915 = vmatpush2.msra.mxu0 0.0
    %5916 = vmatprep.subr.mxu0 0.0
    %5917 = vmatpush2.msra.mxu0 0.0
    %5918 = vmatprep.subr.mxu0 0.0
    %5919 = vmatpush2.msra.mxu0 0.0
    %5920 = vmatprep.subr.mxu0 0.0
    %5921 = vmatpush2.msra.mxu0 0.0
    %5922 = vmatprep.subr.mxu0 0.0
    %5923 = vmatpush2.msra.mxu0 0.0
    %5924 = vmatprep.mubr.f32.mxu0 0.0
    %5925 = vmatmul.mubr.f32.gmra.mxu0 %v5858
    %v5926 = vpop.f32.mrf.mxu0
    %v5927 = vadd.f32 0.0, %v5926
    %v5928 = vpop.f32.mrf.mxu0
    %5929 = vdwg.mxu0
    %v5931 = vsel %vm413, %v5700, 0
    %5933 = vmatprep.subr.mxu0 0.0
    %5934 = vmatpush1.msra.mxu0 0.0
    %5935 = vmatprep.subr.mxu0 0.0
    %5936 = vmatpush1.msra.mxu0 0.0
    %5937 = vmatprep.subr.mxu0 0.0
    %5938 = vmatpush1.msra.mxu0 0.0
    %5939 = vmatprep.subr.mxu0 0.0
    %5940 = vmatpush1.msra.mxu0 0.0
    %5941 = vmatprep.subr.mxu0 0.0
    %5942 = vmatpush1.msra.mxu0 0.0
    %5943 = vmatprep.subr.mxu0 0.0
    %5944 = vmatpush1.msra.mxu0 0.0
    %5945 = vmatprep.subr.mxu0 0.0
    %5946 = vmatpush1.msra.mxu0 0.0
    %5947 = vmatprep.subr.mxu0 0.0
    %5948 = vmatpush1.msra.mxu0 0.0
    %5949 = vmatprep.subr.mxu0 0.0
    %5950 = vmatpush1.msra.mxu0 0.0
    %5951 = vmatprep.subr.mxu0 0.0
    %5952 = vmatpush1.msra.mxu0 0.0
    %5953 = vmatprep.subr.mxu0 0.0
    %5954 = vmatpush1.msra.mxu0 0.0
    %5955 = vmatprep.subr.mxu0 0.0
    %5956 = vmatpush1.msra.mxu0 0.0
    %5957 = vmatprep.subr.mxu0 0.0
    %5958 = vmatpush1.msra.mxu0 0.0
    %5959 = vmatprep.subr.mxu0 0.0
    %5960 = vmatpush1.msra.mxu0 0.0
    %5961 = vmatprep.subr.mxu0 0.0
    %5962 = vmatpush1.msra.mxu0 %v189
    %5963 = vmatprep.subr.mxu0 0.0
    %5964 = vmatpush1.msra.mxu0 %v188
    %5965 = vmatprep.subr.mxu0 0.0
    %5966 = vmatpush2.msra.mxu0 0.0
    %5967 = vmatprep.subr.mxu0 0.0
    %5968 = vmatpush2.msra.mxu0 0.0
    %5969 = vmatprep.subr.mxu0 0.0
    %5970 = vmatpush2.msra.mxu0 0.0
    %5971 = vmatprep.subr.mxu0 0.0
    %5972 = vmatpush2.msra.mxu0 0.0
    %5973 = vmatprep.subr.mxu0 0.0
    %5974 = vmatpush2.msra.mxu0 0.0
    %5975 = vmatprep.subr.mxu0 0.0
    %5976 = vmatpush2.msra.mxu0 0.0
    %5977 = vmatprep.subr.mxu0 0.0
    %5978 = vmatpush2.msra.mxu0 0.0
    %5979 = vmatprep.subr.mxu0 0.0
    %5980 = vmatpush2.msra.mxu0 0.0
    %5981 = vmatprep.subr.mxu0 0.0
    %5982 = vmatpush2.msra.mxu0 0.0
    %5983 = vmatprep.subr.mxu0 0.0
    %5984 = vmatpush2.msra.mxu0 0.0
    %5985 = vmatprep.subr.mxu0 0.0
    %5986 = vmatpush2.msra.mxu0 0.0
    %5987 = vmatprep.subr.mxu0 0.0
    %5988 = vmatpush2.msra.mxu0 0.0
    %5989 = vmatprep.subr.mxu0 0.0
    %5990 = vmatpush2.msra.mxu0 0.0
    %5991 = vmatprep.subr.mxu0 0.0
    %5992 = vmatpush2.msra.mxu0 0.0
    %5993 = vmatprep.subr.mxu0 0.0
    %5994 = vmatpush2.msra.mxu0 0.0
    %5995 = vmatprep.subr.mxu0 0.0
    %5996 = vmatpush2.msra.mxu0 0.0
    %5997 = vmatprep.mubr.f32.mxu0 0.0
    %5998 = vmatmul.mubr.f32.gmra.mxu0 %v5931
    %v5999 = vpop.f32.mrf.mxu0
    %v6000 = vadd.f32 %v5927, %v5999
    %v6001 = vpop.f32.mrf.mxu0
    %6002 = vdwg.mxu0
    %v6003 = vadd.f32 %v6000, %v564
    %v6004 = vxor.u32 %v6003, 2147483648
    %v6005 = vmul.f32 %v6004, 1.442695
    %v6006 = vpow.pop %v6005
    %v6007 = vadd.f32 %v6006, 1.0
    %v6008 = vrcp.pop %v6007
    %v6009 = vmul.f32 1.0, %v6008
    %6011 = vrot.lane.b32.xlu0 %v6003, 80
    %v6012 = vpop.permute.xlu0 %6011
    %v6014 = vmul.f32 %v6009, %v6012
    %6016 = vrot.lane.b32.xlu0 %v6014, 32
    %v6017 = vpop.permute.xlu0 %6016
    %v6019 = vadd.f32 %v6003, %v6017
    %v6020 = vtanh.pop %v6019
    %v6021 = vsub.f32 1.0, %v6009
    %6023 = vrot.lane.b32.xlu0 %v6020, 112
    %v6024 = vpop.permute.xlu0 %6023
    %v6026 = vmul.f32 %v6021, %v6024
    %6027 = vrot.lane.b32.xlu0 %v5856, 16
    %v6028 = vpop.permute.xlu0 %6027
    %v6030 = vmul.f32 %v6009, %v6028
    %v6031 = vadd.f32 %v6026, %v6030
    %v6032 = vmul.f32 %v6031, 1.442695
    %v6033 = vpow.pop %v6032
    %6035 = vrot.lane.b32.xlu0 %v6033, 112
    %v6036 = vpop.permute.xlu0 %6035
    %6039 = vrot.lane.b32.xlu0 %v6031, 112
    %v6040 = vpop.permute.xlu0 %6039
    %v6042 = vsel %vm599, %v6036, %v6040
    %6044 = vrot.lane.b32.xlu0 %v5702, 24
    %v6045 = vpop.permute.xlu0 %6044
    %v6047 = vmul.f32 %v6033, %v6045
    %6049 = vrot.lane.b32.xlu0 %v6047, 120
    %v6050 = vpop.permute.xlu0 %6049
    %v6052 = vadd.f32 %v6031, %v6050
    %6054 = vrot.lane.b32.xlu0 %v6052, 112
    %v6055 = vpop.permute.xlu0 %6054
    %v6056 = vsel %vm243, %v6055, 0
    %6058 = vmatprep.subr.mxu0 0.0
    %6059 = vmatpush1.msra.mxu0 0.0
    %6060 = vmatprep.subr.mxu0 0.0
    %6061 = vmatpush1.msra.mxu0 0.0
    %6062 = vmatprep.subr.mxu0 0.0
    %6063 = vmatpush1.msra.mxu0 0.0
    %6064 = vmatprep.subr.mxu0 0.0
    %6065 = vmatpush1.msra.mxu0 0.0
    %6066 = vmatprep.subr.mxu0 0.0
    %6067 = vmatpush1.msra.mxu0 0.0
    %6068 = vmatprep.subr.mxu0 0.0
    %6069 = vmatpush1.msra.mxu0 0.0
    %6070 = vmatprep.subr.mxu0 0.0
    %6071 = vmatpush1.msra.mxu0 0.0
    %6072 = vmatprep.subr.mxu0 0.0
    %6073 = vmatpush1.msra.mxu0 0.0
    %6074 = vmatprep.subr.mxu0 0.0
    %6075 = vmatpush1.msra.mxu0 0.0
    %6076 = vmatprep.subr.mxu0 0.0
    %6077 = vmatpush1.msra.mxu0 0.0
    %6078 = vmatprep.subr.mxu0 0.0
    %6079 = vmatpush1.msra.mxu0 0.0
    %6080 = vmatprep.subr.mxu0 0.0
    %6081 = vmatpush1.msra.mxu0 0.0
    %6082 = vmatprep.subr.mxu0 0.0
    %6083 = vmatpush1.msra.mxu0 0.0
    %6084 = vmatprep.subr.mxu0 0.0
    %6085 = vmatpush1.msra.mxu0 0.0
    %6086 = vmatprep.subr.mxu0 0.0
    %6087 = vmatpush1.msra.mxu0 0.0
    %6088 = vmatprep.subr.mxu0 0.0
    %6089 = vmatpush1.msra.mxu0 %v192
    %6090 = vmatprep.subr.mxu0 0.0
    %6091 = vmatpush2.msra.mxu0 0.0
    %6092 = vmatprep.subr.mxu0 0.0
    %6093 = vmatpush2.msra.mxu0 0.0
    %6094 = vmatprep.subr.mxu0 0.0
    %6095 = vmatpush2.msra.mxu0 0.0
    %6096 = vmatprep.subr.mxu0 0.0
    %6097 = vmatpush2.msra.mxu0 0.0
    %6098 = vmatprep.subr.mxu0 0.0
    %6099 = vmatpush2.msra.mxu0 0.0
    %6100 = vmatprep.subr.mxu0 0.0
    %6101 = vmatpush2.msra.mxu0 0.0
    %6102 = vmatprep.subr.mxu0 0.0
    %6103 = vmatpush2.msra.mxu0 0.0
    %6104 = vmatprep.subr.mxu0 0.0
    %6105 = vmatpush2.msra.mxu0 0.0
    %6106 = vmatprep.subr.mxu0 0.0
    %6107 = vmatpush2.msra.mxu0 0.0
    %6108 = vmatprep.subr.mxu0 0.0
    %6109 = vmatpush2.msra.mxu0 0.0
    %6110 = vmatprep.subr.mxu0 0.0
    %6111 = vmatpush2.msra.mxu0 0.0
    %6112 = vmatprep.subr.mxu0 0.0
    %6113 = vmatpush2.msra.mxu0 0.0
    %6114 = vmatprep.subr.mxu0 0.0
    %6115 = vmatpush2.msra.mxu0 0.0
    %6116 = vmatprep.subr.mxu0 0.0
    %6117 = vmatpush2.msra.mxu0 0.0
    %6118 = vmatprep.subr.mxu0 0.0
    %6119 = vmatpush2.msra.mxu0 0.0
    %6120 = vmatprep.subr.mxu0 0.0
    %6121 = vmatpush2.msra.mxu0 0.0
    %6122 = vmatprep.mubr.f32.mxu0 0.0
    %6123 = vmatmul.mubr.f32.gmra.mxu0 %v6056
    %v6124 = vpop.f32.mrf.mxu0
    %v6125 = vadd.f32 %v623, %v6124
    %v6126 = vpop.f32.mrf.mxu0
    %6127 = vdwg.mxu0
    %v6128 = vmax.f32 %v6125, 0.0
    %v6130 = vsel %vm707, %v6128, 0
    %6132 = vmatprep.subr.mxu0 0.0
    %6133 = vmatpush1.msra.mxu0 0.0
    %6134 = vmatprep.subr.mxu0 0.0
    %6135 = vmatpush1.msra.mxu0 0.0
    %6136 = vmatprep.subr.mxu0 0.0
    %6137 = vmatpush1.msra.mxu0 0.0
    %6138 = vmatprep.subr.mxu0 0.0
    %6139 = vmatpush1.msra.mxu0 0.0
    %6140 = vmatprep.subr.mxu0 0.0
    %6141 = vmatpush1.msra.mxu0 0.0
    %6142 = vmatprep.subr.mxu0 0.0
    %6143 = vmatpush1.msra.mxu0 0.0
    %6144 = vmatprep.subr.mxu0 0.0
    %6145 = vmatpush1.msra.mxu0 0.0
    %6146 = vmatprep.subr.mxu0 0.0
    %6147 = vmatpush1.msra.mxu0 0.0
    %6148 = vmatprep.subr.mxu0 0.0
    %6149 = vmatpush1.msra.mxu0 0.0
    %6150 = vmatprep.subr.mxu0 0.0
    %6151 = vmatpush1.msra.mxu0 0.0
    %6152 = vmatprep.subr.mxu0 0.0
    %6153 = vmatpush1.msra.mxu0 0.0
    %6154 = vmatprep.subr.mxu0 0.0
    %6155 = vmatpush1.msra.mxu0 0.0
    %6156 = vmatprep.subr.mxu0 0.0
    %6157 = vmatpush1.msra.mxu0 %v196
    %6158 = vmatprep.subr.mxu0 0.0
    %6159 = vmatpush1.msra.mxu0 %v195
    %6160 = vmatprep.subr.mxu0 0.0
    %6161 = vmatpush1.msra.mxu0 %v194
    %6162 = vmatprep.subr.mxu0 0.0
    %6163 = vmatpush1.msra.mxu0 %v193
    %6164 = vmatprep.subr.mxu0 0.0
    %6165 = vmatpush2.msra.mxu0 0.0
    %6166 = vmatprep.subr.mxu0 0.0
    %6167 = vmatpush2.msra.mxu0 0.0
    %6168 = vmatprep.subr.mxu0 0.0
    %6169 = vmatpush2.msra.mxu0 0.0
    %6170 = vmatprep.subr.mxu0 0.0
    %6171 = vmatpush2.msra.mxu0 0.0
    %6172 = vmatprep.subr.mxu0 0.0
    %6173 = vmatpush2.msra.mxu0 0.0
    %6174 = vmatprep.subr.mxu0 0.0
    %6175 = vmatpush2.msra.mxu0 0.0
    %6176 = vmatprep.subr.mxu0 0.0
    %6177 = vmatpush2.msra.mxu0 0.0
    %6178 = vmatprep.subr.mxu0 0.0
    %6179 = vmatpush2.msra.mxu0 0.0
    %6180 = vmatprep.subr.mxu0 0.0
    %6181 = vmatpush2.msra.mxu0 0.0
    %6182 = vmatprep.subr.mxu0 0.0
    %6183 = vmatpush2.msra.mxu0 0.0
    %6184 = vmatprep.subr.mxu0 0.0
    %6185 = vmatpush2.msra.mxu0 0.0
    %6186 = vmatprep.subr.mxu0 0.0
    %6187 = vmatpush2.msra.mxu0 0.0
    %6188 = vmatprep.subr.mxu0 0.0
    %6189 = vmatpush2.msra.mxu0 0.0
    %6190 = vmatprep.subr.mxu0 0.0
    %6191 = vmatpush2.msra.mxu0 0.0
    %6192 = vmatprep.subr.mxu0 0.0
    %6193 = vmatpush2.msra.mxu0 0.0
    %6194 = vmatprep.subr.mxu0 0.0
    %6195 = vmatpush2.msra.mxu0 0.0
    %6196 = vmatprep.mubr.f32.mxu0 0.0
    %6197 = vmatmul.mubr.f32.gmra.mxu0 %v6130
    %v6198 = vpop.f32.mrf.mxu0
    %v6199 = vadd.f32 %v705, %v6198
    %v6200 = vpop.f32.mrf.mxu0
    %6201 = vdwg.mxu0
    %v6203 = vsel %vm707, %v6199, 0
    %6205 = vmatprep.subr.mxu0 0.0
    %6206 = vmatpush1.msra.mxu0 0.0
    %6207 = vmatprep.subr.mxu0 0.0
    %6208 = vmatpush1.msra.mxu0 0.0
    %6209 = vmatprep.subr.mxu0 0.0
    %6210 = vmatpush1.msra.mxu0 0.0
    %6211 = vmatprep.subr.mxu0 0.0
    %6212 = vmatpush1.msra.mxu0 0.0
    %6213 = vmatprep.subr.mxu0 0.0
    %6214 = vmatpush1.msra.mxu0 0.0
    %6215 = vmatprep.subr.mxu0 0.0
    %6216 = vmatpush1.msra.mxu0 0.0
    %6217 = vmatprep.subr.mxu0 0.0
    %6218 = vmatpush1.msra.mxu0 0.0
    %6219 = vmatprep.subr.mxu0 0.0
    %6220 = vmatpush1.msra.mxu0 0.0
    %6221 = vmatprep.subr.mxu0 0.0
    %6222 = vmatpush1.msra.mxu0 0.0
    %6223 = vmatprep.subr.mxu0 0.0
    %6224 = vmatpush1.msra.mxu0 0.0
    %6225 = vmatprep.subr.mxu0 0.0
    %6226 = vmatpush1.msra.mxu0 0.0
    %6227 = vmatprep.subr.mxu0 0.0
    %6228 = vmatpush1.msra.mxu0 0.0
    %6229 = vmatprep.subr.mxu0 %v204
    %6230 = vmatpush1.msra.mxu0 %v203
    %6231 = vmatprep.subr.mxu0 %v202
    %6232 = vmatpush1.msra.mxu0 %v201
    %6233 = vmatprep.subr.mxu0 %v200
    %6234 = vmatpush1.msra.mxu0 %v199
    %6235 = vmatprep.subr.mxu0 %v198
    %6236 = vmatpush1.msra.mxu0 %v197
    %6237 = vmatprep.subr.mxu0 0.0
    %6238 = vmatpush2.msra.mxu0 0.0
    %6239 = vmatprep.subr.mxu0 0.0
    %6240 = vmatpush2.msra.mxu0 0.0
    %6241 = vmatprep.subr.mxu0 0.0
    %6242 = vmatpush2.msra.mxu0 0.0
    %6243 = vmatprep.subr.mxu0 0.0
    %6244 = vmatpush2.msra.mxu0 0.0
    %6245 = vmatprep.subr.mxu0 0.0
    %6246 = vmatpush2.msra.mxu0 0.0
    %6247 = vmatprep.subr.mxu0 0.0
    %6248 = vmatpush2.msra.mxu0 0.0
    %6249 = vmatprep.subr.mxu0 0.0
    %6250 = vmatpush2.msra.mxu0 0.0
    %6251 = vmatprep.subr.mxu0 0.0
    %6252 = vmatpush2.msra.mxu0 0.0
    %6253 = vmatprep.subr.mxu0 0.0
    %6254 = vmatpush2.msra.mxu0 0.0
    %6255 = vmatprep.subr.mxu0 0.0
    %6256 = vmatpush2.msra.mxu0 0.0
    %6257 = vmatprep.subr.mxu0 0.0
    %6258 = vmatpush2.msra.mxu0 0.0
    %6259 = vmatprep.subr.mxu0 0.0
    %6260 = vmatpush2.msra.mxu0 0.0
    %6261 = vmatprep.subr.mxu0 0.0
    %6262 = vmatpush2.msra.mxu0 0.0
    %6263 = vmatprep.subr.mxu0 0.0
    %6264 = vmatpush2.msra.mxu0 0.0
    %6265 = vmatprep.subr.mxu0 0.0
    %6266 = vmatpush2.msra.mxu0 0.0
    %6267 = vmatprep.subr.mxu0 0.0
    %6268 = vmatpush2.msra.mxu0 0.0
    %6269 = vmatprep.mubr.f32.mxu0 0.0
    %6270 = vmatmul.mubr.f32.gmra.mxu0 %v6203
    %v6271 = vpop.f32.mrf.mxu0
    %v6272 = vadd.f32 %v785, %v6271
    %v6273 = vpop.f32.mrf.mxu0
    %v6274 = vadd.f32 %v789, %v6273
    %6275 = vdwg.mxu0
    %6276 = vmatprep.subr.mxu0 0.0
    %6277 = vmatpush1.msra.mxu0 0.0
    %6278 = vmatprep.subr.mxu0 0.0
    %6279 = vmatpush1.msra.mxu0 0.0
    %6280 = vmatprep.subr.mxu0 0.0
    %6281 = vmatpush1.msra.mxu0 0.0
    %6282 = vmatprep.subr.mxu0 0.0
    %6283 = vmatpush1.msra.mxu0 0.0
    %6284 = vmatprep.subr.mxu0 0.0
    %6285 = vmatpush1.msra.mxu0 0.0
    %6286 = vmatprep.subr.mxu0 0.0
    %6287 = vmatpush1.msra.mxu0 0.0
    %6288 = vmatprep.subr.mxu0 0.0
    %6289 = vmatpush1.msra.mxu0 0.0
    %6290 = vmatprep.subr.mxu0 0.0
    %6291 = vmatpush1.msra.mxu0 0.0
    %6292 = vmatprep.subr.mxu0 0.0
    %6293 = vmatpush1.msra.mxu0 0.0
    %6294 = vmatprep.subr.mxu0 0.0
    %6295 = vmatpush1.msra.mxu0 0.0
    %6296 = vmatprep.subr.mxu0 0.0
    %6297 = vmatpush1.msra.mxu0 0.0
    %6298 = vmatprep.subr.mxu0 0.0
    %6299 = vmatpush1.msra.mxu0 0.0
    %6300 = vmatprep.subr.mxu0 0.0
    %6301 = vmatpush1.msra.mxu0 %v212
    %6302 = vmatprep.subr.mxu0 0.0
    %6303 = vmatpush1.msra.mxu0 %v211
    %6304 = vmatprep.subr.mxu0 0.0
    %6305 = vmatpush1.msra.mxu0 %v210
    %6306 = vmatprep.subr.mxu0 0.0
    %6307 = vmatpush1.msra.mxu0 %v209
    %6308 = vmatprep.subr.mxu0 0.0
    %6309 = vmatpush2.msra.mxu0 0.0
    %6310 = vmatprep.subr.mxu0 0.0
    %6311 = vmatpush2.msra.mxu0 0.0
    %6312 = vmatprep.subr.mxu0 0.0
    %6313 = vmatpush2.msra.mxu0 0.0
    %6314 = vmatprep.subr.mxu0 0.0
    %6315 = vmatpush2.msra.mxu0 0.0
    %6316 = vmatprep.subr.mxu0 0.0
    %6317 = vmatpush2.msra.mxu0 0.0
    %6318 = vmatprep.subr.mxu0 0.0
    %6319 = vmatpush2.msra.mxu0 0.0
    %6320 = vmatprep.subr.mxu0 0.0
    %6321 = vmatpush2.msra.mxu0 0.0
    %6322 = vmatprep.subr.mxu0 0.0
    %6323 = vmatpush2.msra.mxu0 0.0
    %6324 = vmatprep.subr.mxu0 0.0
    %6325 = vmatpush2.msra.mxu0 0.0
    %6326 = vmatprep.subr.mxu0 0.0
    %6327 = vmatpush2.msra.mxu0 0.0
    %6328 = vmatprep.subr.mxu0 0.0
    %6329 = vmatpush2.msra.mxu0 0.0
    %6330 = vmatprep.subr.mxu0 0.0
    %6331 = vmatpush2.msra.mxu0 0.0
    %6332 = vmatprep.subr.mxu0 0.0
    %6333 = vmatpush2.msra.mxu0 0.0
    %6334 = vmatprep.subr.mxu0 0.0
    %6335 = vmatpush2.msra.mxu0 0.0
    %6336 = vmatprep.subr.mxu0 0.0
    %6337 = vmatpush2.msra.mxu0 0.0
    %6338 = vmatprep.subr.mxu0 0.0
    %6339 = vmatpush2.msra.mxu0 0.0
    %6340 = vmatprep.mubr.f32.mxu0 0.0
    %6341 = vmatmul.mubr.f32.gmra.mxu0 %v5549
    %v6342 = vpop.f32.mrf.mxu0
    %v6343 = vadd.f32 0.0, %v6342
    %v6344 = vpop.f32.mrf.mxu0
    %6345 = vdwg.mxu0
    %6346 = vrot.lane.b32.xlu0 %v5700, 112
    %v6347 = vpop.permute.xlu0 %6346
    %v6348 = vsel %vm707, %v6347, 0
    %6350 = vmatprep.subr.mxu0 0.0
    %6351 = vmatpush1.msra.mxu0 0.0
    %6352 = vmatprep.subr.mxu0 0.0
    %6353 = vmatpush1.msra.mxu0 0.0
    %6354 = vmatprep.subr.mxu0 0.0
    %6355 = vmatpush1.msra.mxu0 0.0
    %6356 = vmatprep.subr.mxu0 0.0
    %6357 = vmatpush1.msra.mxu0 0.0
    %6358 = vmatprep.subr.mxu0 0.0
    %6359 = vmatpush1.msra.mxu0 0.0
    %6360 = vmatprep.subr.mxu0 0.0
    %6361 = vmatpush1.msra.mxu0 0.0
    %6362 = vmatprep.subr.mxu0 0.0
    %6363 = vmatpush1.msra.mxu0 0.0
    %6364 = vmatprep.subr.mxu0 0.0
    %6365 = vmatpush1.msra.mxu0 0.0
    %6366 = vmatprep.subr.mxu0 0.0
    %6367 = vmatpush1.msra.mxu0 0.0
    %6368 = vmatprep.subr.mxu0 0.0
    %6369 = vmatpush1.msra.mxu0 0.0
    %6370 = vmatprep.subr.mxu0 0.0
    %6371 = vmatpush1.msra.mxu0 0.0
    %6372 = vmatprep.subr.mxu0 0.0
    %6373 = vmatpush1.msra.mxu0 0.0
    %6374 = vmatprep.subr.mxu0 0.0
    %6375 = vmatpush1.msra.mxu0 %v208
    %6376 = vmatprep.subr.mxu0 0.0
    %6377 = vmatpush1.msra.mxu0 %v207
    %6378 = vmatprep.subr.mxu0 0.0
    %6379 = vmatpush1.msra.mxu0 %v206
    %6380 = vmatprep.subr.mxu0 0.0
    %6381 = vmatpush1.msra.mxu0 %v205
    %6382 = vmatprep.subr.mxu0 0.0
    %6383 = vmatpush2.msra.mxu0 0.0
    %6384 = vmatprep.subr.mxu0 0.0
    %6385 = vmatpush2.msra.mxu0 0.0
    %6386 = vmatprep.subr.mxu0 0.0
    %6387 = vmatpush2.msra.mxu0 0.0
    %6388 = vmatprep.subr.mxu0 0.0
    %6389 = vmatpush2.msra.mxu0 0.0
    %6390 = vmatprep.subr.mxu0 0.0
    %6391 = vmatpush2.msra.mxu0 0.0
    %6392 = vmatprep.subr.mxu0 0.0
    %6393 = vmatpush2.msra.mxu0 0.0
    %6394 = vmatprep.subr.mxu0 0.0
    %6395 = vmatpush2.msra.mxu0 0.0
    %6396 = vmatprep.subr.mxu0 0.0
    %6397 = vmatpush2.msra.mxu0 0.0
    %6398 = vmatprep.subr.mxu0 0.0
    %6399 = vmatpush2.msra.mxu0 0.0
    %6400 = vmatprep.subr.mxu0 0.0
    %6401 = vmatpush2.msra.mxu0 0.0
    %6402 = vmatprep.subr.mxu0 0.0
    %6403 = vmatpush2.msra.mxu0 0.0
    %6404 = vmatprep.subr.mxu0 0.0
    %6405 = vmatpush2.msra.mxu0 0.0
    %6406 = vmatprep.subr.mxu0 0.0
    %6407 = vmatpush2.msra.mxu0 0.0
    %6408 = vmatprep.subr.mxu0 0.0
    %6409 = vmatpush2.msra.mxu0 0.0
    %6410 = vmatprep.subr.mxu0 0.0
    %6411 = vmatpush2.msra.mxu0 0.0
    %6412 = vmatprep.subr.mxu0 0.0
    %6413 = vmatpush2.msra.mxu0 0.0
    %6414 = vmatprep.mubr.f32.mxu0 0.0
    %6415 = vmatmul.mubr.f32.gmra.mxu0 %v6348
    %v6416 = vpop.f32.mrf.mxu0
    %v6417 = vadd.f32 %v6343, %v6416
    %v6418 = vpop.f32.mrf.mxu0
    %6419 = vdwg.mxu0
    %v6420 = vadd.f32 %v6417, %v1017
    %v6421 = vxor.u32 %v6420, 2147483648
    %v6422 = vmul.f32 %v6421, 1.442695
    %v6423 = vpow.pop %v6422
    %v6424 = vadd.f32 %v6423, 1.0
    %v6425 = vrcp.pop %v6424
    %v6426 = vmul.f32 1.0, %v6425
    %6428 = vrot.lane.b32.xlu0 %v6420, 32
    %v6429 = vpop.permute.xlu0 %6428
    %v6431 = vmul.f32 %v6426, %v6429
    %6433 = vrot.lane.b32.xlu0 %v6431, 64
    %v6434 = vpop.permute.xlu0 %6433
    %v6436 = vadd.f32 %v6420, %v6434
    %v6437 = vtanh.pop %v6436
    %v6438 = vsub.f32 1.0, %v6426
    %6440 = vrot.lane.b32.xlu0 %v6437, 96
    %v6441 = vpop.permute.xlu0 %6440
    %v6443 = vmul.f32 %v6438, %v6441
    %v6444 = vmul.f32 %v6426, %v5545
    %v6445 = vadd.f32 %v6443, %v6444
    %6447 = vrot.lane.b32.xlu0 %v6445, 96
    %v6448 = vpop.permute.xlu0 %6447
    %v6449 = vsel %vm707, %v6448, 0
    %6451 = vmatprep.subr.mxu0 0.0
    %6452 = vmatpush1.msra.mxu0 0.0
    %6453 = vmatprep.subr.mxu0 0.0
    %6454 = vmatpush1.msra.mxu0 0.0
    %6455 = vmatprep.subr.mxu0 0.0
    %6456 = vmatpush1.msra.mxu0 0.0
    %6457 = vmatprep.subr.mxu0 0.0
    %6458 = vmatpush1.msra.mxu0 0.0
    %6459 = vmatprep.subr.mxu0 0.0
    %6460 = vmatpush1.msra.mxu0 0.0
    %6461 = vmatprep.subr.mxu0 0.0
    %6462 = vmatpush1.msra.mxu0 0.0
    %6463 = vmatprep.subr.mxu0 0.0
    %6464 = vmatpush1.msra.mxu0 0.0
    %6465 = vmatprep.subr.mxu0 0.0
    %6466 = vmatpush1.msra.mxu0 0.0
    %6467 = vmatprep.subr.mxu0 0.0
    %6468 = vmatpush1.msra.mxu0 0.0
    %6469 = vmatprep.subr.mxu0 0.0
    %6470 = vmatpush1.msra.mxu0 0.0
    %6471 = vmatprep.subr.mxu0 0.0
    %6472 = vmatpush1.msra.mxu0 0.0
    %6473 = vmatprep.subr.mxu0 0.0
    %6474 = vmatpush1.msra.mxu0 0.0
    %6475 = vmatprep.subr.mxu0 0.0
    %6476 = vmatpush1.msra.mxu0 %v216
    %6477 = vmatprep.subr.mxu0 0.0
    %6478 = vmatpush1.msra.mxu0 %v215
    %6479 = vmatprep.subr.mxu0 0.0
    %6480 = vmatpush1.msra.mxu0 %v214
    %6481 = vmatprep.subr.mxu0 0.0
    %6482 = vmatpush1.msra.mxu0 %v213
    %6483 = vmatprep.subr.mxu0 0.0
    %6484 = vmatpush2.msra.mxu0 0.0
    %6485 = vmatprep.subr.mxu0 0.0
    %6486 = vmatpush2.msra.mxu0 0.0
    %6487 = vmatprep.subr.mxu0 0.0
    %6488 = vmatpush2.msra.mxu0 0.0
    %6489 = vmatprep.subr.mxu0 0.0
    %6490 = vmatpush2.msra.mxu0 0.0
    %6491 = vmatprep.subr.mxu0 0.0
    %6492 = vmatpush2.msra.mxu0 0.0
    %6493 = vmatprep.subr.mxu0 0.0
    %6494 = vmatpush2.msra.mxu0 0.0
    %6495 = vmatprep.subr.mxu0 0.0
    %6496 = vmatpush2.msra.mxu0 0.0
    %6497 = vmatprep.subr.mxu0 0.0
    %6498 = vmatpush2.msra.mxu0 0.0
    %6499 = vmatprep.subr.mxu0 0.0
    %6500 = vmatpush2.msra.mxu0 0.0
    %6501 = vmatprep.subr.mxu0 0.0
    %6502 = vmatpush2.msra.mxu0 0.0
    %6503 = vmatprep.subr.mxu0 0.0
    %6504 = vmatpush2.msra.mxu0 0.0
    %6505 = vmatprep.subr.mxu0 0.0
    %6506 = vmatpush2.msra.mxu0 0.0
    %6507 = vmatprep.subr.mxu0 0.0
    %6508 = vmatpush2.msra.mxu0 0.0
    %6509 = vmatprep.subr.mxu0 0.0
    %6510 = vmatpush2.msra.mxu0 0.0
    %6511 = vmatprep.subr.mxu0 0.0
    %6512 = vmatpush2.msra.mxu0 0.0
    %6513 = vmatprep.subr.mxu0 0.0
    %6514 = vmatpush2.msra.mxu0 0.0
    %6515 = vmatprep.mubr.f32.mxu0 0.0
    %6516 = vmatmul.mubr.f32.gmra.mxu0 %v6449
    %v6517 = vpop.f32.mrf.mxu0
    %v6518 = vadd.f32 0.0, %v6517
    %v6519 = vpop.f32.mrf.mxu0
    %6520 = vdwg.mxu0
    %v6521 = vmul.f32 %v6272, %v6518
    %6522 = vmatprep.subr.mxu0 0.0
    %6523 = vmatpush1.msra.mxu0 %v232
    %6524 = vmatprep.subr.mxu0 0.0
    %6525 = vmatpush1.msra.mxu0 %v231
    %6526 = vmatprep.subr.mxu0 0.0
    %6527 = vmatpush1.msra.mxu0 %v230
    %6528 = vmatprep.subr.mxu0 0.0
    %6529 = vmatpush1.msra.mxu0 %v229
    %6530 = vmatprep.subr.mxu0 0.0
    %6531 = vmatpush1.msra.mxu0 %v228
    %6532 = vmatprep.subr.mxu0 0.0
    %6533 = vmatpush1.msra.mxu0 %v227
    %6534 = vmatprep.subr.mxu0 0.0
    %6535 = vmatpush1.msra.mxu0 %v226
    %6536 = vmatprep.subr.mxu0 0.0
    %6537 = vmatpush1.msra.mxu0 %v225
    %6538 = vmatprep.subr.mxu0 0.0
    %6539 = vmatpush1.msra.mxu0 %v224
    %6540 = vmatprep.subr.mxu0 0.0
    %6541 = vmatpush1.msra.mxu0 %v223
    %6542 = vmatprep.subr.mxu0 0.0
    %6543 = vmatpush1.msra.mxu0 %v222
    %6544 = vmatprep.subr.mxu0 0.0
    %6545 = vmatpush1.msra.mxu0 %v221
    %6546 = vmatprep.subr.mxu0 0.0
    %6547 = vmatpush1.msra.mxu0 %v220
    %6548 = vmatprep.subr.mxu0 0.0
    %6549 = vmatpush1.msra.mxu0 %v219
    %6550 = vmatprep.subr.mxu0 0.0
    %6551 = vmatpush1.msra.mxu0 %v218
    %6552 = vmatprep.subr.mxu0 0.0
    %6553 = vmatpush1.msra.mxu0 %v217
    %6554 = vmatprep.subr.mxu0 0.0
    %6555 = vmatpush2.msra.mxu0 0.0
    %6556 = vmatprep.subr.mxu0 0.0
    %6557 = vmatpush2.msra.mxu0 0.0
    %6558 = vmatprep.subr.mxu0 0.0
    %6559 = vmatpush2.msra.mxu0 0.0
    %6560 = vmatprep.subr.mxu0 0.0
    %6561 = vmatpush2.msra.mxu0 0.0
    %6562 = vmatprep.subr.mxu0 0.0
    %6563 = vmatpush2.msra.mxu0 0.0
    %6564 = vmatprep.subr.mxu0 0.0
    %6565 = vmatpush2.msra.mxu0 0.0
    %6566 = vmatprep.subr.mxu0 0.0
    %6567 = vmatpush2.msra.mxu0 0.0
    %6568 = vmatprep.subr.mxu0 0.0
    %6569 = vmatpush2.msra.mxu0 0.0
    %6570 = vmatprep.subr.mxu0 0.0
    %6571 = vmatpush2.msra.mxu0 0.0
    %6572 = vmatprep.subr.mxu0 0.0
    %6573 = vmatpush2.msra.mxu0 0.0
    %6574 = vmatprep.subr.mxu0 0.0
    %6575 = vmatpush2.msra.mxu0 0.0
    %6576 = vmatprep.subr.mxu0 0.0
    %6577 = vmatpush2.msra.mxu0 0.0
    %6578 = vmatprep.subr.mxu0 0.0
    %6579 = vmatpush2.msra.mxu0 0.0
    %6580 = vmatprep.subr.mxu0 0.0
    %6581 = vmatpush2.msra.mxu0 0.0
    %6582 = vmatprep.subr.mxu0 0.0
    %6583 = vmatpush2.msra.mxu0 0.0
    %6584 = vmatprep.subr.mxu0 0.0
    %6585 = vmatpush2.msra.mxu0 0.0
    %6586 = vmatprep.mubr.f32.mxu0 0.0
    %6587 = vmatmul.mubr.f32.gmra.mxu0 %v6521
    %v6588 = vpop.f32.mrf.mxu0
    %v6589 = vadd.f32 %v6274, %v6588
    %v6590 = vpop.f32.mrf.mxu0
    %6591 = vdwg.mxu0
    %s6592 = scalar_lea.vmem %s20, 48
    %6593 = vst.msk [vmem:[%s6592] sm:$0xff] %vm1194, %v6589
    %s6595 = scalar_lea.vmem [#allocation17], 48
    %6596 = vst.msk [vmem:[%s6595] sm:$0xff] %vm707, %v6448
    %s6597 = scalar_lea.vmem [#allocation18], 48
    %6598 = vst.msk [vmem:[%s6597] sm:$0xff] %vm413, %v6042
    %s6599 = scalar_lea.vmem %s0, 56
    %v6600 = vld [vmem:[%s6599] sm:$0xff]
    %s6601 = scalar_lea.vmem %s1, 56
    %v6602 = vld [vmem:[%s6601] sm:$0xff]
    %6603 = vmatprep.subr.mxu0 0.0
    %6604 = vmatpush1.msra.mxu0 0.0
    %6605 = vmatprep.subr.mxu0 0.0
    %6606 = vmatpush1.msra.mxu0 0.0
    %6607 = vmatprep.subr.mxu0 0.0
    %6608 = vmatpush1.msra.mxu0 0.0
    %6609 = vmatprep.subr.mxu0 0.0
    %6610 = vmatpush1.msra.mxu0 0.0
    %6611 = vmatprep.subr.mxu0 0.0
    %6612 = vmatpush1.msra.mxu0 0.0
    %6613 = vmatprep.subr.mxu0 0.0
    %6614 = vmatpush1.msra.mxu0 0.0
    %6615 = vmatprep.subr.mxu0 0.0
    %6616 = vmatpush1.msra.mxu0 0.0
    %6617 = vmatprep.subr.mxu0 0.0
    %6618 = vmatpush1.msra.mxu0 0.0
    %6619 = vmatprep.subr.mxu0 0.0
    %6620 = vmatpush1.msra.mxu0 0.0
    %6621 = vmatprep.subr.mxu0 0.0
    %6622 = vmatpush1.msra.mxu0 0.0
    %6623 = vmatprep.subr.mxu0 0.0
    %6624 = vmatpush1.msra.mxu0 0.0
    %6625 = vmatprep.subr.mxu0 0.0
    %6626 = vmatpush1.msra.mxu0 0.0
    %6627 = vmatprep.subr.mxu0 0.0
    %6628 = vmatpush1.msra.mxu0 0.0
    %6629 = vmatprep.subr.mxu0 0.0
    %6630 = vmatpush1.msra.mxu0 0.0
    %6631 = vmatprep.subr.mxu0 0.0
    %6632 = vmatpush1.msra.mxu0 0.0
    %6633 = vmatprep.subr.mxu0 0.0
    %6634 = vmatpush1.msra.mxu0 %v6042
    %6635 = vmatprep.subr.mxu0 0.0
    %6636 = vmatpush2.msra.mxu0 0.0
    %6637 = vmatprep.subr.mxu0 0.0
    %6638 = vmatpush2.msra.mxu0 0.0
    %6639 = vmatprep.subr.mxu0 0.0
    %6640 = vmatpush2.msra.mxu0 0.0
    %6641 = vmatprep.subr.mxu0 0.0
    %6642 = vmatpush2.msra.mxu0 0.0
    %6643 = vmatprep.subr.mxu0 0.0
    %6644 = vmatpush2.msra.mxu0 0.0
    %6645 = vmatprep.subr.mxu0 0.0
    %6646 = vmatpush2.msra.mxu0 0.0
    %6647 = vmatprep.subr.mxu0 0.0
    %6648 = vmatpush2.msra.mxu0 0.0
    %6649 = vmatprep.subr.mxu0 0.0
    %6650 = vmatpush2.msra.mxu0 0.0
    %6651 = vmatprep.subr.mxu0 0.0
    %6652 = vmatpush2.msra.mxu0 0.0
    %6653 = vmatprep.subr.mxu0 0.0
    %6654 = vmatpush2.msra.mxu0 0.0
    %6655 = vmatprep.subr.mxu0 0.0
    %6656 = vmatpush2.msra.mxu0 0.0
    %6657 = vmatprep.subr.mxu0 0.0
    %6658 = vmatpush2.msra.mxu0 0.0
    %6659 = vmatprep.subr.mxu0 0.0
    %6660 = vmatpush2.msra.mxu0 0.0
    %6661 = vmatprep.subr.mxu0 0.0
    %6662 = vmatpush2.msra.mxu0 0.0
    %6663 = vmatprep.subr.mxu0 0.0
    %6664 = vmatpush2.msra.mxu0 0.0
    %6665 = vmatprep.subr.mxu0 0.0
    %6666 = vmatpush2.msra.mxu0 0.0
    %6667 = vmatprep.mubr.f32.mxu0 0.0
    %6668 = vmatmul.mubr.f32.gmra.mxu0 %v245
    %v6669 = vpop.f32.mrf.mxu0
    %v6670 = vadd.f32 0.0, %v6669
    %v6671 = vpop.f32.mrf.mxu0
    %6672 = vdwg.mxu0
    %v6673 = vlaneseq
    %v6674 = vshrl.u32 %v6673, 7
    %v6675 = vsub.s32 0, %v6674
    %v6676 = vrot.slane %v6670, %v6675
    %v6677 = vsub.f32 %v6042, %v6676
    %v6678 = vmul.f32 %v6677, %v6677
    %6679 = vmatprep.subr.mxu0 0.0
    %6680 = vmatpush1.msra.mxu0 0.0
    %6681 = vmatprep.subr.mxu0 0.0
    %6682 = vmatpush1.msra.mxu0 0.0
    %6683 = vmatprep.subr.mxu0 0.0
    %6684 = vmatpush1.msra.mxu0 0.0
    %6685 = vmatprep.subr.mxu0 0.0
    %6686 = vmatpush1.msra.mxu0 0.0
    %6687 = vmatprep.subr.mxu0 0.0
    %6688 = vmatpush1.msra.mxu0 0.0
    %6689 = vmatprep.subr.mxu0 0.0
    %6690 = vmatpush1.msra.mxu0 0.0
    %6691 = vmatprep.subr.mxu0 0.0
    %6692 = vmatpush1.msra.mxu0 0.0
    %6693 = vmatprep.subr.mxu0 0.0
    %6694 = vmatpush1.msra.mxu0 0.0
    %6695 = vmatprep.subr.mxu0 0.0
    %6696 = vmatpush1.msra.mxu0 0.0
    %6697 = vmatprep.subr.mxu0 0.0
    %6698 = vmatpush1.msra.mxu0 0.0
    %6699 = vmatprep.subr.mxu0 0.0
    %6700 = vmatpush1.msra.mxu0 0.0
    %6701 = vmatprep.subr.mxu0 0.0
    %6702 = vmatpush1.msra.mxu0 0.0
    %6703 = vmatprep.subr.mxu0 0.0
    %6704 = vmatpush1.msra.mxu0 0.0
    %6705 = vmatprep.subr.mxu0 0.0
    %6706 = vmatpush1.msra.mxu0 0.0
    %6707 = vmatprep.subr.mxu0 0.0
    %6708 = vmatpush1.msra.mxu0 0.0
    %6709 = vmatprep.subr.mxu0 0.0
    %6710 = vmatpush1.msra.mxu0 %v6678
    %6711 = vmatprep.subr.mxu0 0.0
    %6712 = vmatpush2.msra.mxu0 0.0
    %6713 = vmatprep.subr.mxu0 0.0
    %6714 = vmatpush2.msra.mxu0 0.0
    %6715 = vmatprep.subr.mxu0 0.0
    %6716 = vmatpush2.msra.mxu0 0.0
    %6717 = vmatprep.subr.mxu0 0.0
    %6718 = vmatpush2.msra.mxu0 0.0
    %6719 = vmatprep.subr.mxu0 0.0
    %6720 = vmatpush2.msra.mxu0 0.0
    %6721 = vmatprep.subr.mxu0 0.0
    %6722 = vmatpush2.msra.mxu0 0.0
    %6723 = vmatprep.subr.mxu0 0.0
    %6724 = vmatpush2.msra.mxu0 0.0
    %6725 = vmatprep.subr.mxu0 0.0
    %6726 = vmatpush2.msra.mxu0 0.0
    %6727 = vmatprep.subr.mxu0 0.0
    %6728 = vmatpush2.msra.mxu0 0.0
    %6729 = vmatprep.subr.mxu0 0.0
    %6730 = vmatpush2.msra.mxu0 0.0
    %6731 = vmatprep.subr.mxu0 0.0
    %6732 = vmatpush2.msra.mxu0 0.0
    %6733 = vmatprep.subr.mxu0 0.0
    %6734 = vmatpush2.msra.mxu0 0.0
    %6735 = vmatprep.subr.mxu0 0.0
    %6736 = vmatpush2.msra.mxu0 0.0
    %6737 = vmatprep.subr.mxu0 0.0
    %6738 = vmatpush2.msra.mxu0 0.0
    %6739 = vmatprep.subr.mxu0 0.0
    %6740 = vmatpush2.msra.mxu0 0.0
    %6741 = vmatprep.subr.mxu0 0.0
    %6742 = vmatpush2.msra.mxu0 0.0
    %6743 = vmatprep.mubr.f32.mxu0 0.0
    %6744 = vmatmul.mubr.f32.gmra.mxu0 %v245
    %v6745 = vpop.f32.mrf.mxu0
    %v6746 = vadd.f32 1e-05, %v6745
    %v6747 = vpop.f32.mrf.mxu0
    %6748 = vdwg.mxu0
    %v6749 = vrsqrt.pop %v6746
    %v6750 = vlaneseq
    %v6751 = vshrl.u32 %v6750, 7
    %v6752 = vsub.s32 0, %v6751
    %v6753 = vrot.slane %v6749, %v6752
    %v6754 = vmul.f32 %v6677, %v6753
    %v6755 = vmul.f32 %v6754, %v403
    %v6756 = vadd.f32 %v6755, %v410
    %v6758 = vsel %vm413, %v6756, 0
    %6760 = vmatprep.subr.mxu0 0.0
    %6761 = vmatpush1.msra.mxu0 0.0
    %6762 = vmatprep.subr.mxu0 0.0
    %6763 = vmatpush1.msra.mxu0 0.0
    %6764 = vmatprep.subr.mxu0 0.0
    %6765 = vmatpush1.msra.mxu0 0.0
    %6766 = vmatprep.subr.mxu0 0.0
    %6767 = vmatpush1.msra.mxu0 0.0
    %6768 = vmatprep.subr.mxu0 0.0
    %6769 = vmatpush1.msra.mxu0 0.0
    %6770 = vmatprep.subr.mxu0 0.0
    %6771 = vmatpush1.msra.mxu0 0.0
    %6772 = vmatprep.subr.mxu0 0.0
    %6773 = vmatpush1.msra.mxu0 0.0
    %6774 = vmatprep.subr.mxu0 0.0
    %6775 = vmatpush1.msra.mxu0 0.0
    %6776 = vmatprep.subr.mxu0 0.0
    %6777 = vmatpush1.msra.mxu0 0.0
    %6778 = vmatprep.subr.mxu0 0.0
    %6779 = vmatpush1.msra.mxu0 0.0
    %6780 = vmatprep.subr.mxu0 0.0
    %6781 = vmatpush1.msra.mxu0 0.0
    %6782 = vmatprep.subr.mxu0 0.0
    %6783 = vmatpush1.msra.mxu0 0.0
    %6784 = vmatprep.subr.mxu0 0.0
    %6785 = vmatpush1.msra.mxu0 0.0
    %6786 = vmatprep.subr.mxu0 0.0
    %6787 = vmatpush1.msra.mxu0 0.0
    %6788 = vmatprep.subr.mxu0 0.0
    %6789 = vmatpush1.msra.mxu0 %v191
    %6790 = vmatprep.subr.mxu0 0.0
    %6791 = vmatpush1.msra.mxu0 %v190
    %6792 = vmatprep.subr.mxu0 0.0
    %6793 = vmatpush2.msra.mxu0 0.0
    %6794 = vmatprep.subr.mxu0 0.0
    %6795 = vmatpush2.msra.mxu0 0.0
    %6796 = vmatprep.subr.mxu0 0.0
    %6797 = vmatpush2.msra.mxu0 0.0
    %6798 = vmatprep.subr.mxu0 0.0
    %6799 = vmatpush2.msra.mxu0 0.0
    %6800 = vmatprep.subr.mxu0 0.0
    %6801 = vmatpush2.msra.mxu0 0.0
    %6802 = vmatprep.subr.mxu0 0.0
    %6803 = vmatpush2.msra.mxu0 0.0
    %6804 = vmatprep.subr.mxu0 0.0
    %6805 = vmatpush2.msra.mxu0 0.0
    %6806 = vmatprep.subr.mxu0 0.0
    %6807 = vmatpush2.msra.mxu0 0.0
    %6808 = vmatprep.subr.mxu0 0.0
    %6809 = vmatpush2.msra.mxu0 0.0
    %6810 = vmatprep.subr.mxu0 0.0
    %6811 = vmatpush2.msra.mxu0 0.0
    %6812 = vmatprep.subr.mxu0 0.0
    %6813 = vmatpush2.msra.mxu0 0.0
    %6814 = vmatprep.subr.mxu0 0.0
    %6815 = vmatpush2.msra.mxu0 0.0
    %6816 = vmatprep.subr.mxu0 0.0
    %6817 = vmatpush2.msra.mxu0 0.0
    %6818 = vmatprep.subr.mxu0 0.0
    %6819 = vmatpush2.msra.mxu0 0.0
    %6820 = vmatprep.subr.mxu0 0.0
    %6821 = vmatpush2.msra.mxu0 0.0
    %6822 = vmatprep.subr.mxu0 0.0
    %6823 = vmatpush2.msra.mxu0 0.0
    %6824 = vmatprep.mubr.f32.mxu0 0.0
    %6825 = vmatmul.mubr.f32.gmra.mxu0 %v6758
    %v6826 = vpop.f32.mrf.mxu0
    %v6827 = vadd.f32 0.0, %v6826
    %v6828 = vpop.f32.mrf.mxu0
    %6829 = vdwg.mxu0
    %v6831 = vsel %vm413, %v6600, 0
    %6833 = vmatprep.subr.mxu0 0.0
    %6834 = vmatpush1.msra.mxu0 0.0
    %6835 = vmatprep.subr.mxu0 0.0
    %6836 = vmatpush1.msra.mxu0 0.0
    %6837 = vmatprep.subr.mxu0 0.0
    %6838 = vmatpush1.msra.mxu0 0.0
    %6839 = vmatprep.subr.mxu0 0.0
    %6840 = vmatpush1.msra.mxu0 0.0
    %6841 = vmatprep.subr.mxu0 0.0
    %6842 = vmatpush1.msra.mxu0 0.0
    %6843 = vmatprep.subr.mxu0 0.0
    %6844 = vmatpush1.msra.mxu0 0.0
    %6845 = vmatprep.subr.mxu0 0.0
    %6846 = vmatpush1.msra.mxu0 0.0
    %6847 = vmatprep.subr.mxu0 0.0
    %6848 = vmatpush1.msra.mxu0 0.0
    %6849 = vmatprep.subr.mxu0 0.0
    %6850 = vmatpush1.msra.mxu0 0.0
    %6851 = vmatprep.subr.mxu0 0.0
    %6852 = vmatpush1.msra.mxu0 0.0
    %6853 = vmatprep.subr.mxu0 0.0
    %6854 = vmatpush1.msra.mxu0 0.0
    %6855 = vmatprep.subr.mxu0 0.0
    %6856 = vmatpush1.msra.mxu0 0.0
    %6857 = vmatprep.subr.mxu0 0.0
    %6858 = vmatpush1.msra.mxu0 0.0
    %6859 = vmatprep.subr.mxu0 0.0
    %6860 = vmatpush1.msra.mxu0 0.0
    %6861 = vmatprep.subr.mxu0 0.0
    %6862 = vmatpush1.msra.mxu0 %v189
    %6863 = vmatprep.subr.mxu0 0.0
    %6864 = vmatpush1.msra.mxu0 %v188
    %6865 = vmatprep.subr.mxu0 0.0
    %6866 = vmatpush2.msra.mxu0 0.0
    %6867 = vmatprep.subr.mxu0 0.0
    %6868 = vmatpush2.msra.mxu0 0.0
    %6869 = vmatprep.subr.mxu0 0.0
    %6870 = vmatpush2.msra.mxu0 0.0
    %6871 = vmatprep.subr.mxu0 0.0
    %6872 = vmatpush2.msra.mxu0 0.0
    %6873 = vmatprep.subr.mxu0 0.0
    %6874 = vmatpush2.msra.mxu0 0.0
    %6875 = vmatprep.subr.mxu0 0.0
    %6876 = vmatpush2.msra.mxu0 0.0
    %6877 = vmatprep.subr.mxu0 0.0
    %6878 = vmatpush2.msra.mxu0 0.0
    %6879 = vmatprep.subr.mxu0 0.0
    %6880 = vmatpush2.msra.mxu0 0.0
    %6881 = vmatprep.subr.mxu0 0.0
    %6882 = vmatpush2.msra.mxu0 0.0
    %6883 = vmatprep.subr.mxu0 0.0
    %6884 = vmatpush2.msra.mxu0 0.0
    %6885 = vmatprep.subr.mxu0 0.0
    %6886 = vmatpush2.msra.mxu0 0.0
    %6887 = vmatprep.subr.mxu0 0.0
    %6888 = vmatpush2.msra.mxu0 0.0
    %6889 = vmatprep.subr.mxu0 0.0
    %6890 = vmatpush2.msra.mxu0 0.0
    %6891 = vmatprep.subr.mxu0 0.0
    %6892 = vmatpush2.msra.mxu0 0.0
    %6893 = vmatprep.subr.mxu0 0.0
    %6894 = vmatpush2.msra.mxu0 0.0
    %6895 = vmatprep.subr.mxu0 0.0
    %6896 = vmatpush2.msra.mxu0 0.0
    %6897 = vmatprep.mubr.f32.mxu0 0.0
    %6898 = vmatmul.mubr.f32.gmra.mxu0 %v6831
    %v6899 = vpop.f32.mrf.mxu0
    %v6900 = vadd.f32 %v6827, %v6899
    %v6901 = vpop.f32.mrf.mxu0
    %6902 = vdwg.mxu0
    %v6903 = vadd.f32 %v6900, %v564
    %v6904 = vxor.u32 %v6903, 2147483648
    %v6905 = vmul.f32 %v6904, 1.442695
    %v6906 = vpow.pop %v6905
    %v6907 = vadd.f32 %v6906, 1.0
    %v6908 = vrcp.pop %v6907
    %v6909 = vmul.f32 1.0, %v6908
    %6911 = vrot.lane.b32.xlu0 %v6903, 80
    %v6912 = vpop.permute.xlu0 %6911
    %v6914 = vmul.f32 %v6909, %v6912
    %6916 = vrot.lane.b32.xlu0 %v6914, 32
    %v6917 = vpop.permute.xlu0 %6916
    %v6919 = vadd.f32 %v6903, %v6917
    %v6920 = vtanh.pop %v6919
    %v6921 = vsub.f32 1.0, %v6909
    %6923 = vrot.lane.b32.xlu0 %v6920, 112
    %v6924 = vpop.permute.xlu0 %6923
    %v6926 = vmul.f32 %v6921, %v6924
    %6927 = vrot.lane.b32.xlu0 %v6756, 16
    %v6928 = vpop.permute.xlu0 %6927
    %v6930 = vmul.f32 %v6909, %v6928
    %v6931 = vadd.f32 %v6926, %v6930
    %v6932 = vmul.f32 %v6931, 1.442695
    %v6933 = vpow.pop %v6932
    %6935 = vrot.lane.b32.xlu0 %v6933, 112
    %v6936 = vpop.permute.xlu0 %6935
    %6939 = vrot.lane.b32.xlu0 %v6931, 112
    %v6940 = vpop.permute.xlu0 %6939
    %v6942 = vsel %vm599, %v6936, %v6940
    %6944 = vrot.lane.b32.xlu0 %v6602, 24
    %v6945 = vpop.permute.xlu0 %6944
    %v6947 = vmul.f32 %v6933, %v6945
    %6949 = vrot.lane.b32.xlu0 %v6947, 120
    %v6950 = vpop.permute.xlu0 %6949
    %v6952 = vadd.f32 %v6931, %v6950
    %6954 = vrot.lane.b32.xlu0 %v6952, 112
    %v6955 = vpop.permute.xlu0 %6954
    %v6956 = vsel %vm243, %v6955, 0
    %6958 = vmatprep.subr.mxu0 0.0
    %6959 = vmatpush1.msra.mxu0 0.0
    %6960 = vmatprep.subr.mxu0 0.0
    %6961 = vmatpush1.msra.mxu0 0.0
    %6962 = vmatprep.subr.mxu0 0.0
    %6963 = vmatpush1.msra.mxu0 0.0
    %6964 = vmatprep.subr.mxu0 0.0
    %6965 = vmatpush1.msra.mxu0 0.0
    %6966 = vmatprep.subr.mxu0 0.0
    %6967 = vmatpush1.msra.mxu0 0.0
    %6968 = vmatprep.subr.mxu0 0.0
    %6969 = vmatpush1.msra.mxu0 0.0
    %6970 = vmatprep.subr.mxu0 0.0
    %6971 = vmatpush1.msra.mxu0 0.0
    %6972 = vmatprep.subr.mxu0 0.0
    %6973 = vmatpush1.msra.mxu0 0.0
    %6974 = vmatprep.subr.mxu0 0.0
    %6975 = vmatpush1.msra.mxu0 0.0
    %6976 = vmatprep.subr.mxu0 0.0
    %6977 = vmatpush1.msra.mxu0 0.0
    %6978 = vmatprep.subr.mxu0 0.0
    %6979 = vmatpush1.msra.mxu0 0.0
    %6980 = vmatprep.subr.mxu0 0.0
    %6981 = vmatpush1.msra.mxu0 0.0
    %6982 = vmatprep.subr.mxu0 0.0
    %6983 = vmatpush1.msra.mxu0 0.0
    %6984 = vmatprep.subr.mxu0 0.0
    %6985 = vmatpush1.msra.mxu0 0.0
    %6986 = vmatprep.subr.mxu0 0.0
    %6987 = vmatpush1.msra.mxu0 0.0
    %6988 = vmatprep.subr.mxu0 0.0
    %6989 = vmatpush1.msra.mxu0 %v192
    %6990 = vmatprep.subr.mxu0 0.0
    %6991 = vmatpush2.msra.mxu0 0.0
    %6992 = vmatprep.subr.mxu0 0.0
    %6993 = vmatpush2.msra.mxu0 0.0
    %6994 = vmatprep.subr.mxu0 0.0
    %6995 = vmatpush2.msra.mxu0 0.0
    %6996 = vmatprep.subr.mxu0 0.0
    %6997 = vmatpush2.msra.mxu0 0.0
    %6998 = vmatprep.subr.mxu0 0.0
    %6999 = vmatpush2.msra.mxu0 0.0
    %7000 = vmatprep.subr.mxu0 0.0
    %7001 = vmatpush2.msra.mxu0 0.0
    %7002 = vmatprep.subr.mxu0 0.0
    %7003 = vmatpush2.msra.mxu0 0.0
    %7004 = vmatprep.subr.mxu0 0.0
    %7005 = vmatpush2.msra.mxu0 0.0
    %7006 = vmatprep.subr.mxu0 0.0
    %7007 = vmatpush2.msra.mxu0 0.0
    %7008 = vmatprep.subr.mxu0 0.0
    %7009 = vmatpush2.msra.mxu0 0.0
    %7010 = vmatprep.subr.mxu0 0.0
    %7011 = vmatpush2.msra.mxu0 0.0
    %7012 = vmatprep.subr.mxu0 0.0
    %7013 = vmatpush2.msra.mxu0 0.0
    %7014 = vmatprep.subr.mxu0 0.0
    %7015 = vmatpush2.msra.mxu0 0.0
    %7016 = vmatprep.subr.mxu0 0.0
    %7017 = vmatpush2.msra.mxu0 0.0
    %7018 = vmatprep.subr.mxu0 0.0
    %7019 = vmatpush2.msra.mxu0 0.0
    %7020 = vmatprep.subr.mxu0 0.0
    %7021 = vmatpush2.msra.mxu0 0.0
    %7022 = vmatprep.mubr.f32.mxu0 0.0
    %7023 = vmatmul.mubr.f32.gmra.mxu0 %v6956
    %v7024 = vpop.f32.mrf.mxu0
    %v7025 = vadd.f32 %v623, %v7024
    %v7026 = vpop.f32.mrf.mxu0
    %7027 = vdwg.mxu0
    %v7028 = vmax.f32 %v7025, 0.0
    %v7030 = vsel %vm707, %v7028, 0
    %7032 = vmatprep.subr.mxu0 0.0
    %7033 = vmatpush1.msra.mxu0 0.0
    %7034 = vmatprep.subr.mxu0 0.0
    %7035 = vmatpush1.msra.mxu0 0.0
    %7036 = vmatprep.subr.mxu0 0.0
    %7037 = vmatpush1.msra.mxu0 0.0
    %7038 = vmatprep.subr.mxu0 0.0
    %7039 = vmatpush1.msra.mxu0 0.0
    %7040 = vmatprep.subr.mxu0 0.0
    %7041 = vmatpush1.msra.mxu0 0.0
    %7042 = vmatprep.subr.mxu0 0.0
    %7043 = vmatpush1.msra.mxu0 0.0
    %7044 = vmatprep.subr.mxu0 0.0
    %7045 = vmatpush1.msra.mxu0 0.0
    %7046 = vmatprep.subr.mxu0 0.0
    %7047 = vmatpush1.msra.mxu0 0.0
    %7048 = vmatprep.subr.mxu0 0.0
    %7049 = vmatpush1.msra.mxu0 0.0
    %7050 = vmatprep.subr.mxu0 0.0
    %7051 = vmatpush1.msra.mxu0 0.0
    %7052 = vmatprep.subr.mxu0 0.0
    %7053 = vmatpush1.msra.mxu0 0.0
    %7054 = vmatprep.subr.mxu0 0.0
    %7055 = vmatpush1.msra.mxu0 0.0
    %7056 = vmatprep.subr.mxu0 0.0
    %7057 = vmatpush1.msra.mxu0 %v196
    %7058 = vmatprep.subr.mxu0 0.0
    %7059 = vmatpush1.msra.mxu0 %v195
    %7060 = vmatprep.subr.mxu0 0.0
    %7061 = vmatpush1.msra.mxu0 %v194
    %7062 = vmatprep.subr.mxu0 0.0
    %7063 = vmatpush1.msra.mxu0 %v193
    %7064 = vmatprep.subr.mxu0 0.0
    %7065 = vmatpush2.msra.mxu0 0.0
    %7066 = vmatprep.subr.mxu0 0.0
    %7067 = vmatpush2.msra.mxu0 0.0
    %7068 = vmatprep.subr.mxu0 0.0
    %7069 = vmatpush2.msra.mxu0 0.0
    %7070 = vmatprep.subr.mxu0 0.0
    %7071 = vmatpush2.msra.mxu0 0.0
    %7072 = vmatprep.subr.mxu0 0.0
    %7073 = vmatpush2.msra.mxu0 0.0
    %7074 = vmatprep.subr.mxu0 0.0
    %7075 = vmatpush2.msra.mxu0 0.0
    %7076 = vmatprep.subr.mxu0 0.0
    %7077 = vmatpush2.msra.mxu0 0.0
    %7078 = vmatprep.subr.mxu0 0.0
    %7079 = vmatpush2.msra.mxu0 0.0
    %7080 = vmatprep.subr.mxu0 0.0
    %7081 = vmatpush2.msra.mxu0 0.0
    %7082 = vmatprep.subr.mxu0 0.0
    %7083 = vmatpush2.msra.mxu0 0.0
    %7084 = vmatprep.subr.mxu0 0.0
    %7085 = vmatpush2.msra.mxu0 0.0
    %7086 = vmatprep.subr.mxu0 0.0
    %7087 = vmatpush2.msra.mxu0 0.0
    %7088 = vmatprep.subr.mxu0 0.0
    %7089 = vmatpush2.msra.mxu0 0.0
    %7090 = vmatprep.subr.mxu0 0.0
    %7091 = vmatpush2.msra.mxu0 0.0
    %7092 = vmatprep.subr.mxu0 0.0
    %7093 = vmatpush2.msra.mxu0 0.0
    %7094 = vmatprep.subr.mxu0 0.0
    %7095 = vmatpush2.msra.mxu0 0.0
    %7096 = vmatprep.mubr.f32.mxu0 0.0
    %7097 = vmatmul.mubr.f32.gmra.mxu0 %v7030
    %v7098 = vpop.f32.mrf.mxu0
    %v7099 = vadd.f32 %v705, %v7098
    %v7100 = vpop.f32.mrf.mxu0
    %7101 = vdwg.mxu0
    %v7103 = vsel %vm707, %v7099, 0
    %7105 = vmatprep.subr.mxu0 0.0
    %7106 = vmatpush1.msra.mxu0 0.0
    %7107 = vmatprep.subr.mxu0 0.0
    %7108 = vmatpush1.msra.mxu0 0.0
    %7109 = vmatprep.subr.mxu0 0.0
    %7110 = vmatpush1.msra.mxu0 0.0
    %7111 = vmatprep.subr.mxu0 0.0
    %7112 = vmatpush1.msra.mxu0 0.0
    %7113 = vmatprep.subr.mxu0 0.0
    %7114 = vmatpush1.msra.mxu0 0.0
    %7115 = vmatprep.subr.mxu0 0.0
    %7116 = vmatpush1.msra.mxu0 0.0
    %7117 = vmatprep.subr.mxu0 0.0
    %7118 = vmatpush1.msra.mxu0 0.0
    %7119 = vmatprep.subr.mxu0 0.0
    %7120 = vmatpush1.msra.mxu0 0.0
    %7121 = vmatprep.subr.mxu0 0.0
    %7122 = vmatpush1.msra.mxu0 0.0
    %7123 = vmatprep.subr.mxu0 0.0
    %7124 = vmatpush1.msra.mxu0 0.0
    %7125 = vmatprep.subr.mxu0 0.0
    %7126 = vmatpush1.msra.mxu0 0.0
    %7127 = vmatprep.subr.mxu0 0.0
    %7128 = vmatpush1.msra.mxu0 0.0
    %7129 = vmatprep.subr.mxu0 %v204
    %7130 = vmatpush1.msra.mxu0 %v203
    %7131 = vmatprep.subr.mxu0 %v202
    %7132 = vmatpush1.msra.mxu0 %v201
    %7133 = vmatprep.subr.mxu0 %v200
    %7134 = vmatpush1.msra.mxu0 %v199
    %7135 = vmatprep.subr.mxu0 %v198
    %7136 = vmatpush1.msra.mxu0 %v197
    %7137 = vmatprep.subr.mxu0 0.0
    %7138 = vmatpush2.msra.mxu0 0.0
    %7139 = vmatprep.subr.mxu0 0.0
    %7140 = vmatpush2.msra.mxu0 0.0
    %7141 = vmatprep.subr.mxu0 0.0
    %7142 = vmatpush2.msra.mxu0 0.0
    %7143 = vmatprep.subr.mxu0 0.0
    %7144 = vmatpush2.msra.mxu0 0.0
    %7145 = vmatprep.subr.mxu0 0.0
    %7146 = vmatpush2.msra.mxu0 0.0
    %7147 = vmatprep.subr.mxu0 0.0
    %7148 = vmatpush2.msra.mxu0 0.0
    %7149 = vmatprep.subr.mxu0 0.0
    %7150 = vmatpush2.msra.mxu0 0.0
    %7151 = vmatprep.subr.mxu0 0.0
    %7152 = vmatpush2.msra.mxu0 0.0
    %7153 = vmatprep.subr.mxu0 0.0
    %7154 = vmatpush2.msra.mxu0 0.0
    %7155 = vmatprep.subr.mxu0 0.0
    %7156 = vmatpush2.msra.mxu0 0.0
    %7157 = vmatprep.subr.mxu0 0.0
    %7158 = vmatpush2.msra.mxu0 0.0
    %7159 = vmatprep.subr.mxu0 0.0
    %7160 = vmatpush2.msra.mxu0 0.0
    %7161 = vmatprep.subr.mxu0 0.0
    %7162 = vmatpush2.msra.mxu0 0.0
    %7163 = vmatprep.subr.mxu0 0.0
    %7164 = vmatpush2.msra.mxu0 0.0
    %7165 = vmatprep.subr.mxu0 0.0
    %7166 = vmatpush2.msra.mxu0 0.0
    %7167 = vmatprep.subr.mxu0 0.0
    %7168 = vmatpush2.msra.mxu0 0.0
    %7169 = vmatprep.mubr.f32.mxu0 0.0
    %7170 = vmatmul.mubr.f32.gmra.mxu0 %v7103
    %v7171 = vpop.f32.mrf.mxu0
    %v7172 = vadd.f32 %v785, %v7171
    %v7173 = vpop.f32.mrf.mxu0
    %v7174 = vadd.f32 %v789, %v7173
    %7175 = vdwg.mxu0
    %7176 = vmatprep.subr.mxu0 0.0
    %7177 = vmatpush1.msra.mxu0 0.0
    %7178 = vmatprep.subr.mxu0 0.0
    %7179 = vmatpush1.msra.mxu0 0.0
    %7180 = vmatprep.subr.mxu0 0.0
    %7181 = vmatpush1.msra.mxu0 0.0
    %7182 = vmatprep.subr.mxu0 0.0
    %7183 = vmatpush1.msra.mxu0 0.0
    %7184 = vmatprep.subr.mxu0 0.0
    %7185 = vmatpush1.msra.mxu0 0.0
    %7186 = vmatprep.subr.mxu0 0.0
    %7187 = vmatpush1.msra.mxu0 0.0
    %7188 = vmatprep.subr.mxu0 0.0
    %7189 = vmatpush1.msra.mxu0 0.0
    %7190 = vmatprep.subr.mxu0 0.0
    %7191 = vmatpush1.msra.mxu0 0.0
    %7192 = vmatprep.subr.mxu0 0.0
    %7193 = vmatpush1.msra.mxu0 0.0
    %7194 = vmatprep.subr.mxu0 0.0
    %7195 = vmatpush1.msra.mxu0 0.0
    %7196 = vmatprep.subr.mxu0 0.0
    %7197 = vmatpush1.msra.mxu0 0.0
    %7198 = vmatprep.subr.mxu0 0.0
    %7199 = vmatpush1.msra.mxu0 0.0
    %7200 = vmatprep.subr.mxu0 0.0
    %7201 = vmatpush1.msra.mxu0 %v212
    %7202 = vmatprep.subr.mxu0 0.0
    %7203 = vmatpush1.msra.mxu0 %v211
    %7204 = vmatprep.subr.mxu0 0.0
    %7205 = vmatpush1.msra.mxu0 %v210
    %7206 = vmatprep.subr.mxu0 0.0
    %7207 = vmatpush1.msra.mxu0 %v209
    %7208 = vmatprep.subr.mxu0 0.0
    %7209 = vmatpush2.msra.mxu0 0.0
    %7210 = vmatprep.subr.mxu0 0.0
    %7211 = vmatpush2.msra.mxu0 0.0
    %7212 = vmatprep.subr.mxu0 0.0
    %7213 = vmatpush2.msra.mxu0 0.0
    %7214 = vmatprep.subr.mxu0 0.0
    %7215 = vmatpush2.msra.mxu0 0.0
    %7216 = vmatprep.subr.mxu0 0.0
    %7217 = vmatpush2.msra.mxu0 0.0
    %7218 = vmatprep.subr.mxu0 0.0
    %7219 = vmatpush2.msra.mxu0 0.0
    %7220 = vmatprep.subr.mxu0 0.0
    %7221 = vmatpush2.msra.mxu0 0.0
    %7222 = vmatprep.subr.mxu0 0.0
    %7223 = vmatpush2.msra.mxu0 0.0
    %7224 = vmatprep.subr.mxu0 0.0
    %7225 = vmatpush2.msra.mxu0 0.0
    %7226 = vmatprep.subr.mxu0 0.0
    %7227 = vmatpush2.msra.mxu0 0.0
    %7228 = vmatprep.subr.mxu0 0.0
    %7229 = vmatpush2.msra.mxu0 0.0
    %7230 = vmatprep.subr.mxu0 0.0
    %7231 = vmatpush2.msra.mxu0 0.0
    %7232 = vmatprep.subr.mxu0 0.0
    %7233 = vmatpush2.msra.mxu0 0.0
    %7234 = vmatprep.subr.mxu0 0.0
    %7235 = vmatpush2.msra.mxu0 0.0
    %7236 = vmatprep.subr.mxu0 0.0
    %7237 = vmatpush2.msra.mxu0 0.0
    %7238 = vmatprep.subr.mxu0 0.0
    %7239 = vmatpush2.msra.mxu0 0.0
    %7240 = vmatprep.mubr.f32.mxu0 0.0
    %7241 = vmatmul.mubr.f32.gmra.mxu0 %v6449
    %v7242 = vpop.f32.mrf.mxu0
    %v7243 = vadd.f32 0.0, %v7242
    %v7244 = vpop.f32.mrf.mxu0
    %7245 = vdwg.mxu0
    %7246 = vrot.lane.b32.xlu0 %v6600, 112
    %v7247 = vpop.permute.xlu0 %7246
    %v7248 = vsel %vm707, %v7247, 0
    %7250 = vmatprep.subr.mxu0 0.0
    %7251 = vmatpush1.msra.mxu0 0.0
    %7252 = vmatprep.subr.mxu0 0.0
    %7253 = vmatpush1.msra.mxu0 0.0
    %7254 = vmatprep.subr.mxu0 0.0
    %7255 = vmatpush1.msra.mxu0 0.0
    %7256 = vmatprep.subr.mxu0 0.0
    %7257 = vmatpush1.msra.mxu0 0.0
    %7258 = vmatprep.subr.mxu0 0.0
    %7259 = vmatpush1.msra.mxu0 0.0
    %7260 = vmatprep.subr.mxu0 0.0
    %7261 = vmatpush1.msra.mxu0 0.0
    %7262 = vmatprep.subr.mxu0 0.0
    %7263 = vmatpush1.msra.mxu0 0.0
    %7264 = vmatprep.subr.mxu0 0.0
    %7265 = vmatpush1.msra.mxu0 0.0
    %7266 = vmatprep.subr.mxu0 0.0
    %7267 = vmatpush1.msra.mxu0 0.0
    %7268 = vmatprep.subr.mxu0 0.0
    %7269 = vmatpush1.msra.mxu0 0.0
    %7270 = vmatprep.subr.mxu0 0.0
    %7271 = vmatpush1.msra.mxu0 0.0
    %7272 = vmatprep.subr.mxu0 0.0
    %7273 = vmatpush1.msra.mxu0 0.0
    %7274 = vmatprep.subr.mxu0 0.0
    %7275 = vmatpush1.msra.mxu0 %v208
    %7276 = vmatprep.subr.mxu0 0.0
    %7277 = vmatpush1.msra.mxu0 %v207
    %7278 = vmatprep.subr.mxu0 0.0
    %7279 = vmatpush1.msra.mxu0 %v206
    %7280 = vmatprep.subr.mxu0 0.0
    %7281 = vmatpush1.msra.mxu0 %v205
    %7282 = vmatprep.subr.mxu0 0.0
    %7283 = vmatpush2.msra.mxu0 0.0
    %7284 = vmatprep.subr.mxu0 0.0
    %7285 = vmatpush2.msra.mxu0 0.0
    %7286 = vmatprep.subr.mxu0 0.0
    %7287 = vmatpush2.msra.mxu0 0.0
    %7288 = vmatprep.subr.mxu0 0.0
    %7289 = vmatpush2.msra.mxu0 0.0
    %7290 = vmatprep.subr.mxu0 0.0
    %7291 = vmatpush2.msra.mxu0 0.0
    %7292 = vmatprep.subr.mxu0 0.0
    %7293 = vmatpush2.msra.mxu0 0.0
    %7294 = vmatprep.subr.mxu0 0.0
    %7295 = vmatpush2.msra.mxu0 0.0
    %7296 = vmatprep.subr.mxu0 0.0
    %7297 = vmatpush2.msra.mxu0 0.0
    %7298 = vmatprep.subr.mxu0 0.0
    %7299 = vmatpush2.msra.mxu0 0.0
    %7300 = vmatprep.subr.mxu0 0.0
    %7301 = vmatpush2.msra.mxu0 0.0
    %7302 = vmatprep.subr.mxu0 0.0
    %7303 = vmatpush2.msra.mxu0 0.0
    %7304 = vmatprep.subr.mxu0 0.0
    %7305 = vmatpush2.msra.mxu0 0.0
    %7306 = vmatprep.subr.mxu0 0.0
    %7307 = vmatpush2.msra.mxu0 0.0
    %7308 = vmatprep.subr.mxu0 0.0
    %7309 = vmatpush2.msra.mxu0 0.0
    %7310 = vmatprep.subr.mxu0 0.0
    %7311 = vmatpush2.msra.mxu0 0.0
    %7312 = vmatprep.subr.mxu0 0.0
    %7313 = vmatpush2.msra.mxu0 0.0
    %7314 = vmatprep.mubr.f32.mxu0 0.0
    %7315 = vmatmul.mubr.f32.gmra.mxu0 %v7248
    %v7316 = vpop.f32.mrf.mxu0
    %v7317 = vadd.f32 %v7243, %v7316
    %v7318 = vpop.f32.mrf.mxu0
    %7319 = vdwg.mxu0
    %v7320 = vadd.f32 %v7317, %v1017
    %v7321 = vxor.u32 %v7320, 2147483648
    %v7322 = vmul.f32 %v7321, 1.442695
    %v7323 = vpow.pop %v7322
    %v7324 = vadd.f32 %v7323, 1.0
    %v7325 = vrcp.pop %v7324
    %v7326 = vmul.f32 1.0, %v7325
    %7328 = vrot.lane.b32.xlu0 %v7320, 32
    %v7329 = vpop.permute.xlu0 %7328
    %v7331 = vmul.f32 %v7326, %v7329
    %7333 = vrot.lane.b32.xlu0 %v7331, 64
    %v7334 = vpop.permute.xlu0 %7333
    %v7336 = vadd.f32 %v7320, %v7334
    %v7337 = vtanh.pop %v7336
    %v7338 = vsub.f32 1.0, %v7326
    %7340 = vrot.lane.b32.xlu0 %v7337, 96
    %v7341 = vpop.permute.xlu0 %7340
    %v7343 = vmul.f32 %v7338, %v7341
    %v7344 = vmul.f32 %v7326, %v6445
    %v7345 = vadd.f32 %v7343, %v7344
    %7347 = vrot.lane.b32.xlu0 %v7345, 96
    %v7348 = vpop.permute.xlu0 %7347
    %v7349 = vsel %vm707, %v7348, 0
    %7351 = vmatprep.subr.mxu0 0.0
    %7352 = vmatpush1.msra.mxu0 0.0
    %7353 = vmatprep.subr.mxu0 0.0
    %7354 = vmatpush1.msra.mxu0 0.0
    %7355 = vmatprep.subr.mxu0 0.0
    %7356 = vmatpush1.msra.mxu0 0.0
    %7357 = vmatprep.subr.mxu0 0.0
    %7358 = vmatpush1.msra.mxu0 0.0
    %7359 = vmatprep.subr.mxu0 0.0
    %7360 = vmatpush1.msra.mxu0 0.0
    %7361 = vmatprep.subr.mxu0 0.0
    %7362 = vmatpush1.msra.mxu0 0.0
    %7363 = vmatprep.subr.mxu0 0.0
    %7364 = vmatpush1.msra.mxu0 0.0
    %7365 = vmatprep.subr.mxu0 0.0
    %7366 = vmatpush1.msra.mxu0 0.0
    %7367 = vmatprep.subr.mxu0 0.0
    %7368 = vmatpush1.msra.mxu0 0.0
    %7369 = vmatprep.subr.mxu0 0.0
    %7370 = vmatpush1.msra.mxu0 0.0
    %7371 = vmatprep.subr.mxu0 0.0
    %7372 = vmatpush1.msra.mxu0 0.0
    %7373 = vmatprep.subr.mxu0 0.0
    %7374 = vmatpush1.msra.mxu0 0.0
    %7375 = vmatprep.subr.mxu0 0.0
    %7376 = vmatpush1.msra.mxu0 %v216
    %7377 = vmatprep.subr.mxu0 0.0
    %7378 = vmatpush1.msra.mxu0 %v215
    %7379 = vmatprep.subr.mxu0 0.0
    %7380 = vmatpush1.msra.mxu0 %v214
    %7381 = vmatprep.subr.mxu0 0.0
    %7382 = vmatpush1.msra.mxu0 %v213
    %7383 = vmatprep.subr.mxu0 0.0
    %7384 = vmatpush2.msra.mxu0 0.0
    %7385 = vmatprep.subr.mxu0 0.0
    %7386 = vmatpush2.msra.mxu0 0.0
    %7387 = vmatprep.subr.mxu0 0.0
    %7388 = vmatpush2.msra.mxu0 0.0
    %7389 = vmatprep.subr.mxu0 0.0
    %7390 = vmatpush2.msra.mxu0 0.0
    %7391 = vmatprep.subr.mxu0 0.0
    %7392 = vmatpush2.msra.mxu0 0.0
    %7393 = vmatprep.subr.mxu0 0.0
    %7394 = vmatpush2.msra.mxu0 0.0
    %7395 = vmatprep.subr.mxu0 0.0
    %7396 = vmatpush2.msra.mxu0 0.0
    %7397 = vmatprep.subr.mxu0 0.0
    %7398 = vmatpush2.msra.mxu0 0.0
    %7399 = vmatprep.subr.mxu0 0.0
    %7400 = vmatpush2.msra.mxu0 0.0
    %7401 = vmatprep.subr.mxu0 0.0
    %7402 = vmatpush2.msra.mxu0 0.0
    %7403 = vmatprep.subr.mxu0 0.0
    %7404 = vmatpush2.msra.mxu0 0.0
    %7405 = vmatprep.subr.mxu0 0.0
    %7406 = vmatpush2.msra.mxu0 0.0
    %7407 = vmatprep.subr.mxu0 0.0
    %7408 = vmatpush2.msra.mxu0 0.0
    %7409 = vmatprep.subr.mxu0 0.0
    %7410 = vmatpush2.msra.mxu0 0.0
    %7411 = vmatprep.subr.mxu0 0.0
    %7412 = vmatpush2.msra.mxu0 0.0
    %7413 = vmatprep.subr.mxu0 0.0
    %7414 = vmatpush2.msra.mxu0 0.0
    %7415 = vmatprep.mubr.f32.mxu0 0.0
    %7416 = vmatmul.mubr.f32.gmra.mxu0 %v7349
    %v7417 = vpop.f32.mrf.mxu0
    %v7418 = vadd.f32 0.0, %v7417
    %v7419 = vpop.f32.mrf.mxu0
    %7420 = vdwg.mxu0
    %v7421 = vmul.f32 %v7172, %v7418
    %7422 = vmatprep.subr.mxu0 0.0
    %7423 = vmatpush1.msra.mxu0 %v232
    %7424 = vmatprep.subr.mxu0 0.0
    %7425 = vmatpush1.msra.mxu0 %v231
    %7426 = vmatprep.subr.mxu0 0.0
    %7427 = vmatpush1.msra.mxu0 %v230
    %7428 = vmatprep.subr.mxu0 0.0
    %7429 = vmatpush1.msra.mxu0 %v229
    %7430 = vmatprep.subr.mxu0 0.0
    %7431 = vmatpush1.msra.mxu0 %v228
    %7432 = vmatprep.subr.mxu0 0.0
    %7433 = vmatpush1.msra.mxu0 %v227
    %7434 = vmatprep.subr.mxu0 0.0
    %7435 = vmatpush1.msra.mxu0 %v226
    %7436 = vmatprep.subr.mxu0 0.0
    %7437 = vmatpush1.msra.mxu0 %v225
    %7438 = vmatprep.subr.mxu0 0.0
    %7439 = vmatpush1.msra.mxu0 %v224
    %7440 = vmatprep.subr.mxu0 0.0
    %7441 = vmatpush1.msra.mxu0 %v223
    %7442 = vmatprep.subr.mxu0 0.0
    %7443 = vmatpush1.msra.mxu0 %v222
    %7444 = vmatprep.subr.mxu0 0.0
    %7445 = vmatpush1.msra.mxu0 %v221
    %7446 = vmatprep.subr.mxu0 0.0
    %7447 = vmatpush1.msra.mxu0 %v220
    %7448 = vmatprep.subr.mxu0 0.0
    %7449 = vmatpush1.msra.mxu0 %v219
    %7450 = vmatprep.subr.mxu0 0.0
    %7451 = vmatpush1.msra.mxu0 %v218
    %7452 = vmatprep.subr.mxu0 0.0
    %7453 = vmatpush1.msra.mxu0 %v217
    %7454 = vmatprep.subr.mxu0 0.0
    %7455 = vmatpush2.msra.mxu0 0.0
    %7456 = vmatprep.subr.mxu0 0.0
    %7457 = vmatpush2.msra.mxu0 0.0
    %7458 = vmatprep.subr.mxu0 0.0
    %7459 = vmatpush2.msra.mxu0 0.0
    %7460 = vmatprep.subr.mxu0 0.0
    %7461 = vmatpush2.msra.mxu0 0.0
    %7462 = vmatprep.subr.mxu0 0.0
    %7463 = vmatpush2.msra.mxu0 0.0
    %7464 = vmatprep.subr.mxu0 0.0
    %7465 = vmatpush2.msra.mxu0 0.0
    %7466 = vmatprep.subr.mxu0 0.0
    %7467 = vmatpush2.msra.mxu0 0.0
    %7468 = vmatprep.subr.mxu0 0.0
    %7469 = vmatpush2.msra.mxu0 0.0
    %7470 = vmatprep.subr.mxu0 0.0
    %7471 = vmatpush2.msra.mxu0 0.0
    %7472 = vmatprep.subr.mxu0 0.0
    %7473 = vmatpush2.msra.mxu0 0.0
    %7474 = vmatprep.subr.mxu0 0.0
    %7475 = vmatpush2.msra.mxu0 0.0
    %7476 = vmatprep.subr.mxu0 0.0
    %7477 = vmatpush2.msra.mxu0 0.0
    %7478 = vmatprep.subr.mxu0 0.0
    %7479 = vmatpush2.msra.mxu0 0.0
    %7480 = vmatprep.subr.mxu0 0.0
    %7481 = vmatpush2.msra.mxu0 0.0
    %7482 = vmatprep.subr.mxu0 0.0
    %7483 = vmatpush2.msra.mxu0 0.0
    %7484 = vmatprep.subr.mxu0 0.0
    %7485 = vmatpush2.msra.mxu0 0.0
    %7486 = vmatprep.mubr.f32.mxu0 0.0
    %7487 = vmatmul.mubr.f32.gmra.mxu0 %v7421
    %v7488 = vpop.f32.mrf.mxu0
    %v7489 = vadd.f32 %v7174, %v7488
    %v7490 = vpop.f32.mrf.mxu0
    %7491 = vdwg.mxu0
    %s7492 = scalar_lea.vmem %s20, 56
    %7493 = vst.msk [vmem:[%s7492] sm:$0xff] %vm1194, %v7489
    %s7495 = scalar_lea.vmem [#allocation17], 56
    %7496 = vst.msk [vmem:[%s7495] sm:$0xff] %vm707, %v7348
    %s7497 = scalar_lea.vmem [#allocation18], 56
    %7498 = vst.msk [vmem:[%s7497] sm:$0xff] %vm413, %v6942
    // Predicated region
    $region118: #{tpu_custom_call.1} parent=1 // pred_check
      _
    $region119: #{tpu_custom_call.1} parent=1 // pred_check_branch
      %7500 = sbr.rel (0) target = $region121
    $region120: #{tpu_custom_call.1} parent=1 // pred_region
      _
    $region121: #{tpu_custom_call.1} parent=1 // pred_fallthru
      _
    // Predicated region
    $region122: #{tpu_custom_call.1} parent=1 // pred_check
      _
    $region123: #{tpu_custom_call.1} parent=1 // pred_check_branch
      %7502 = sbr.rel (0) target = $region125
    $region124: #{tpu_custom_call.1} parent=1 // pred_region
      %s7504 = ssub.s32 1024, 1024
      %7505 = vsyncadd [#allocation4], %s7504
      %s7506 = sshll.u32 [#allocation17], 4
      %s7507 = int_to_ptr.vmem [resolvable:$true] %s7506
      %7512 = dma.vmem_to_hbm [thread:$0]  %s7507, 1024, %s21, [#allocation4], 128, 128, 8
    $region125: #{tpu_custom_call.1} parent=1 // pred_fallthru
      _
    // Predicated region
    $region126: #{tpu_custom_call.1} parent=1 // pred_check
      _
    $region127: #{tpu_custom_call.1} parent=1 // pred_check_branch
      %7514 = sbr.rel (0) target = $region129
    $region128: #{tpu_custom_call.1} parent=1 // pred_region
      %s7516 = ssub.s32 1024, 1024
      %7517 = vsyncadd [#allocation19], %s7516
      %s7518 = sshll.u32 [#allocation18], 4
      %s7519 = int_to_ptr.vmem [resolvable:$true] %s7518
      %7524 = dma.vmem_to_hbm [thread:$0]  %s7519, 1024, %s22, [#allocation19], 128, 128, 8
    $region129: #{tpu_custom_call.1} parent=1 // pred_fallthru
      _
    // Predicated region
    $region130: #{tpu_custom_call.1} parent=1 // pred_check
      _
    $region131: #{tpu_custom_call.1} parent=1 // pred_check_branch
      %7526 = sbr.rel (0) target = $region133
    $region132: #{tpu_custom_call.1} parent=1 // pred_region
      _
    $region133: #{tpu_custom_call.1} parent=1 // pred_fallthru
      _
    // Predicated region
    $region134: #{tpu_custom_call.1} parent=1 // pred_check
      _
    $region135: #{tpu_custom_call.1} parent=1 // pred_check_branch
      %7528 = sbr.rel (0) target = $region137
    $region136: #{tpu_custom_call.1} parent=1 // pred_region
      %7529 = dma.done [#allocation4], 1024
    $region137: #{tpu_custom_call.1} parent=1 // pred_fallthru
      _
    // Predicated region
    $region138: #{tpu_custom_call.1} parent=1 // pred_check
      _
    $region139: #{tpu_custom_call.1} parent=1 // pred_check_branch
      %7531 = sbr.rel (0) target = $region141
    $region140: #{tpu_custom_call.1} parent=1 // pred_region
      %7532 = dma.done [#allocation19], 1024
    $region141: #{tpu_custom_call.1} parent=1 // pred_fallthru
      _
    %7533 = vsyncpa [#allocation3], 1
    %7534 = vsyncpa [#allocation6], 1
    %7535 = vsyncpa [#allocation9], 1
    %7536 = vsyncpa [#allocation12], 1
    %7537 = vsyncpa [#allocation15], 1
    %7538 = vsyncpa [#allocation4], 1
    %7539 = vsyncpa [#allocation19], 1

</llo_original>
